<compile_context>
chip_gen: v6e
topology: v6e:2x2x1
jax: 0.10.0
libtpu: 0.0.40
codegen_flags: <defaults>
</compile_context>

<pallas_src>
import jax
import jax.numpy as jnp
import numpy as np
from jax.experimental import pallas as pl
from jax.experimental.pallas import tpu as pltpu

# Geometry implied by the PyTorch module (fc1 = 64*4*10  =>  input 1 x 60 x 108).
H_IN, W_IN = 60, 108
H1, W1 = 14, 26            # conv1 out (k=8, s=4)
H1Q, W1Q = 7, 13           # conv1 out after 2x2 stride-parity split
H2, W2 = 6, 12             # conv2 out (k=4, s=2)
H3, W3 = 4, 10             # conv3 out (k=3, s=1)
C1, C2, C3 = 32, 64, 64
C3P = 128                  # conv3 out channels zero-padded to a full lane width
FC1 = 512

R1 = H1Q * W1Q             # 91   conv1 rows  (hq*13 + wq)
R2 = (H2 - 1) * W1Q + W2   # 77   conv2 rows  (h2*13 + w2;  w2 == 12 is junk)
R3 = (H3 - 1) * W1Q + W3   # 49   conv3 rows  (h3*13 + w3;  w3 >= 10 is junk)
K_FC = R3 * C3P            # 6272 flattened fc1 input (junk rows hit zero weights)


def _round_up(x, m):
    return (x + m - 1) // m * m


# ----------------------------------------------------------------------------
# Kernel 1: fused conv1 + conv2 + conv3  (one grid step per sample)
# ----------------------------------------------------------------------------
def _conv_stack_kernel(x1_ref, w1_ref, b1_ref, w2_ref, b2_ref, w3_ref, b3_ref,
                       o_ref, a1_scr, a2_scr):
    f32, bf16 = jnp.float32, jnp.bfloat16

    # conv1: one block-diagonal matmul over the 4 stride-parity phases.
    #   a1_scr[hq*13 + wq, (ph*2+pw)*32 + c] = relu(conv1)[c, 2*hq+ph, 2*wq+pw]
    y1 = jnp.dot(x1_ref[0], w1_ref[...], preferred_element_type=f32)     # (91,128)
    a1_scr[...] = jnp.maximum(y1 + b1_ref[...], 0.0)

    # conv2 (k=4, s=2): parities + input channels packed into K=128; one matmul
    # per residual (dh, dw) shift, the shift folded into the slab start offset.
    # acc2 row r = h2*13 + w2 (w2 == 12 column is junk).
    acc2 = jnp.zeros((R2, C2), f32)
    for d in range(4):
        dh, dw = d // 2, d % 2
        s0 = dh * W1Q + dw
        slab = a1_scr[s0:s0 + R2, :].astype(bf16)                        # (77,128)
        acc2 = acc2 + jnp.dot(slab, w2_ref[d], preferred_element_type=f32)
    a2_scr[...] = jnp.maximum(acc2 + b2_ref[...], 0.0)                   # (77,64)

    # conv3 (k=3, s=1): 9 matmuls; the (i3, j3) shift is again just a slab
    # start offset.  acc3 row r = h3*13 + w3 (w3 >= 10 columns are junk and
    # get zero fc1 weights downstream).
    acc3 = jnp.zeros((R3, C3P), f32)
    for i3 in range(3):
        for j3 in range(3):
            s1 = i3 * W1Q + j3
            slab = a2_scr[s1:s1 + R3, :].astype(bf16)                    # (49,64)
            acc3 = acc3 + jnp.dot(slab, w3_ref[i3 * 3 + j3],
                                  preferred_element_type=f32)
    o_ref[0] = jnp.maximum(acc3 + b3_ref[...], 0.0).astype(o_ref.dtype)


def conv_stack(x1, w1, b1, w2, b2, w3, b3):
    n = x1.shape[0]
    return pl.pallas_call(
        _conv_stack_kernel,
        out_shape=jax.ShapeDtypeStruct((n, R3, C3P), jnp.bfloat16),
        grid=(n,),
        in_specs=[
            pl.BlockSpec((1, R1, 256), lambda i: (i, 0, 0)),
            pl.BlockSpec((256, 128), lambda i: (0, 0)),        # resident weights
            pl.BlockSpec((1, 128), lambda i: (0, 0)),
            pl.BlockSpec((4, 4 * C1, C2), lambda i: (0, 0, 0)),
            pl.BlockSpec((1, C2), lambda i: (0, 0)),
            pl.BlockSpec((9, C2, C3P), lambda i: (0, 0, 0)),
            pl.BlockSpec((1, C3P), lambda i: (0, 0)),
        ],
        out_specs=pl.BlockSpec((1, R3, C3P), lambda i: (i, 0, 0)),
        scratch_shapes=[
            pltpu.VMEM((R1, 128), jnp.float32),    # conv1 activations (packed)
            pltpu.VMEM((R2, C2), jnp.float32),     # conv2 activations
        ],
        compiler_params=pltpu.CompilerParams(
            dimension_semantics=("parallel",)),
    )(x1, w1, b1, w2, b2, w3, b3)


# ----------------------------------------------------------------------------
# Kernel 2: fused fc1 (6272->512, ReLU) + fc2 (512->1), tiled over batch rows
# ----------------------------------------------------------------------------
def _fc_kernel(v_ref, wf1_ref, bf1_ref, wf2_ref, bf2_ref, o_ref):
    v = v_ref[...].astype(jnp.bfloat16)
    y = jnp.dot(v, wf1_ref[...], preferred_element_type=jnp.float32)
    y = jnp.maximum(y + bf1_ref[...], 0.0)                         # (tm, 512) f32
    # fc2 as an epilogue: elementwise mul + lane reduction (no 1-lane matmul).
    out = jnp.sum(y * wf2_ref[...], axis=1, keepdims=True) + bf2_ref[...]
    o_ref[...] = out.astype(o_ref.dtype)


def fc_head(v, wf1, bf1, wf2, bf2):
    m, k = v.shape
    tm = 128 if m >= 128 else _round_up(m, 8)
    m_pad = _round_up(m, tm)
    if m_pad != m:
        v = jnp.pad(v, ((0, m_pad - m), (0, 0)))
    out = pl.pallas_call(
        _fc_kernel,
        out_shape=jax.ShapeDtypeStruct((m_pad, 1), jnp.float32),
        grid=(m_pad // tm,),
        in_specs=[
            pl.BlockSpec((tm, k), lambda i: (i, 0)),
            pl.BlockSpec((k, FC1), lambda i: (0, 0)),    # 6.4 MB bf16, resident
            pl.BlockSpec((1, FC1), lambda i: (0, 0)),
            pl.BlockSpec((1, FC1), lambda i: (0, 0)),
            pl.BlockSpec((1, 1), lambda i: (0, 0)),
        ],
        out_specs=pl.BlockSpec((tm, 1), lambda i: (i, 0)),
        compiler_params=pltpu.CompilerParams(
            dimension_semantics=("parallel",),
            vmem_limit_bytes=32 * 1024 * 1024),
    )(v, wf1, bf1, wf2, bf2)
    return out[:m]


# ----------------------------------------------------------------------------
# JAX glue: conv1 im2col with a 2x2 stride-parity split, phase-packed lanes
# ----------------------------------------------------------------------------
def _conv1_im2col_packed(x):
    """x: (N, 1, 60, 108) -> (N, 91, 256).
    [n, hq*13 + wq, (ph*2+pw)*64 + i*8 + j] = x[n, 0, 4*(2hq+ph)+i, 4*(2wq+pw)+j]."""
    n = x.shape[0]
    img = x[:, 0]
    cols = []
    for i in range(8):
        for j in range(8):
            cols.append(img[:, i:i + 4 * (H1 - 1) + 1:4,
                            j:j + 4 * (W1 - 1) + 1:4])     # (N, 14, 26)
    patches = jnp.stack(cols, axis=-1)                     # (N, 14, 26, 64)
    patches = patches.reshape(n, H1Q, 2, W1Q, 2, 64)       # (n, hq, ph, wq, pw, k)
    patches = patches.transpose(0, 1, 3, 2, 4, 5)          # (n, hq, wq, ph, pw, k)
    return patches.reshape(n, R1, 256)


# ----------------------------------------------------------------------------
# Parameters: PyTorch layouts -> kernel layouts (done once)
# ----------------------------------------------------------------------------
def init_params(key):
    """PyTorch-layout parameters (Conv2d: (O,I,kh,kw), Linear: (out,in))."""
    ks = jax.random.split(key, 10)

    def u(k, shape, fan_in):
        b = 1.0 / np.sqrt(fan_in)
        return jax.random.uniform(k, shape, jnp.float32, -b, b)

    return {
        "conv1_w": u(ks[0], (C1, 1, 8, 8), 1 * 8 * 8),
        "conv1_b": u(ks[1], (C1,), 1 * 8 * 8),
        "conv2_w": u(ks[2], (C2, C1, 4, 4), C1 * 4 * 4),
        "conv2_b": u(ks[3], (C2,), C1 * 4 * 4),
        "conv3_w": u(ks[4], (C3, C2, 3, 3), C2 * 3 * 3),
        "conv3_b": u(ks[5], (C3,), C2 * 3 * 3),
        "fc1_w": u(ks[6], (FC1, C3 * H3 * W3), C3 * H3 * W3),
        "fc1_b": u(ks[7], (FC1,), C3 * H3 * W3),
        "fc2_w": u(ks[8], (1, FC1), FC1),
        "fc2_b": u(ks[9], (1,), FC1),
    }


def prepare_params(p):
    bf16 = jnp.bfloat16

    # conv1: block-diagonal (phase-preserving) weight, rows q*64+k -> cols q*32+c.
    w1 = p["conv1_w"][:, 0].transpose(1, 2, 0).reshape(64, C1)        # (i*8+j, c)
    w1bd = jnp.zeros((256, 128), jnp.float32)
    for q in range(4):
        w1bd = w1bd.at[q * 64:(q + 1) * 64, q * 32:(q + 1) * 32].set(w1)
    b1 = jnp.tile(p["conv1_b"], 4).reshape(1, 128)

    # conv2: pack (ph, pw, ci) into the contraction dim; one matrix per (dh, dw).
    w2 = p["conv2_w"].transpose(2, 3, 1, 0)                           # (kh,kw,ci,co)
    w2 = w2.reshape(2, 2, 2, 2, C1, C2)                               # (dh,ph,dw,pw,ci,co)
    w2 = w2.transpose(0, 2, 1, 3, 4, 5).reshape(4, 4 * C1, C2)        # (dh*2+dw, q*32+ci, co)

    # conv3: one (ci, co) matrix per kernel position, co padded 64 -> 128.
    w3 = p["conv3_w"].transpose(2, 3, 1, 0).reshape(9, C2, C3)
    w3 = jnp.pad(w3, ((0, 0), (0, 0), (0, C3P - C3)))
    b3 = jnp.pad(p["conv3_b"], (0, C3P - C3))

    # fc1: PyTorch flatten order is (c, h, w); the conv kernel emits rows
    # r = h3*13 + w3 with channels padded to 128.  Junk rows/channels (w3 >= 10,
    # c >= 64) simply get zero weights.
    wf1 = p["fc1_w"].reshape(FC1, C3, H3, W3).transpose(2, 3, 1, 0)   # (h, w, c, f)
    wf1 = jnp.pad(wf1, ((0, 0), (0, W1Q - W3), (0, C3P - C3), (0, 0)))
    wf1 = wf1.reshape(H3 * W1Q, C3P, FC1)[:R3].reshape(K_FC, FC1)

    return {
        "w1": w1bd.astype(bf16), "b1": b1,
        "w2": w2.astype(bf16), "b2": p["conv2_b"].reshape(1, C2),
        "w3": w3.astype(bf16), "b3": b3.reshape(1, C3P),
        "wf1": wf1.astype(bf16), "bf1": p["fc1_b"].reshape(1, FC1),
        "wf2": p["fc2_w"].reshape(1, FC1), "bf2": p["fc2_b"].reshape(1, 1),
    }


# ----------------------------------------------------------------------------
# Forward pass (2 pallas_calls total)
# ----------------------------------------------------------------------------
@jax.jit
def critic_forward(kp, x):
    n = x.shape[0]
    x1 = _conv1_im2col_packed(x).astype(jnp.bfloat16)
    a3 = conv_stack(x1, kp["w1"], kp["b1"], kp["w2"], kp["b2"],
                    kp["w3"], kp["b3"])                     # (N, 49, 128) bf16
    v = a3.reshape(n, K_FC)                                 # free row-major reshape
    return fc_head(v, kp["wf1"], kp["bf1"], kp["wf2"], kp["bf2"])


# ----------------------------------------------------------------------------
# Pure-JAX reference (same bf16 rounding of matmul inputs, f32 accumulation)
# ----------------------------------------------------------------------------
def _r16(a):
    return a.astype(jnp.bfloat16).astype(jnp.float32)


def reference_forward(p, x):
    dn = ("NCHW", "OIHW", "NCHW")
    hp = jax.lax.Precision.HIGHEST

    def conv(a, w, b, s):
        y = jax.lax.conv_general_dilated(_r16(a), _r16(w), (s, s), "VALID",
                                         dimension_numbers=dn, precision=hp)
        return jax.nn.relu(y + b.reshape(1, -1, 1, 1))

    a = conv(x, p["conv1_w"], p["conv1_b"], 4)
    a = conv(a, p["conv2_w"], p["conv2_b"], 2)
    a = conv(a, p["conv3_w"], p["conv3_b"], 1)
    v = a.reshape(a.shape[0], -1)
    y = jax.nn.relu(jnp.dot(_r16(v), _r16(p["fc1_w"]).T, precision=hp)
                    + p["fc1_b"])
    return jnp.dot(y, p["fc2_w"].T, precision=hp) + p["fc2_b"]


# TODO(synk): Adam optimizer / checkpoint save-load / device placement from the
# PyTorch module are training & I/O utilities, not part of the forward pass.

if __name__ == "__main__":
    key = jax.random.PRNGKey(0)
    pkey, xkey = jax.random.split(key)
    params = init_params(pkey)
    kparams = prepare_params(params)

    x = jax.random.normal(xkey, (2, 1, H_IN, W_IN), jnp.float32)

    out = critic_forward(kparams, x)
    out = jax.block_until_ready(out)
    assert out.shape == (2, 1), out.shape
    assert bool(jnp.all(jnp.isfinite(out)))

    ref = reference_forward(params, x)
    np.testing.assert_allclose(np.asarray(out), np.asarray(ref),
                               rtol=2e-2, atol=2e-3)
    print("KERNEL_OK")
</pallas_src>

<mosaic_0001>
module attributes {stable_mosaic.version = 11 : i64} {
  func.func @_conv_stack_kernel(%arg0: i32, %arg1: memref<1x91x256xbf16, #tpu.memory_space<vmem>>, %arg2: memref<256x128xbf16, #tpu.memory_space<vmem>>, %arg3: memref<1x128xf32, #tpu.memory_space<vmem>>, %arg4: memref<4x128x64xbf16, #tpu.memory_space<vmem>>, %arg5: memref<1x64xf32, #tpu.memory_space<vmem>>, %arg6: memref<9x64x128xbf16, #tpu.memory_space<vmem>>, %arg7: memref<1x128xf32, #tpu.memory_space<vmem>>, %arg8: memref<1x49x128xbf16, #tpu.memory_space<vmem>>, %arg9: memref<91x128xf32, #tpu.memory_space<vmem>>, %arg10: memref<77x64xf32, #tpu.memory_space<vmem>>) attributes {dimension_semantics = [#tpu.dimension_semantics<parallel>], iteration_bounds = array<i64: 2>, scalar_prefetch = 0 : i64, scratch_operands = 2 : i64, tpu.core_type = #tpu.core_type<tc>, window_params = [{transform_indices = @transform_0, window_bounds = array<i64: 1, 91, 256>}, {pipeline_mode = #tpu.pipeline_mode<synchronous>, transform_indices = @transform_1, window_bounds = array<i64: 256, 128>}, {pipeline_mode = #tpu.pipeline_mode<synchronous>, transform_indices = @transform_2, window_bounds = array<i64: 1, 128>}, {pipeline_mode = #tpu.pipeline_mode<synchronous>, transform_indices = @transform_3, window_bounds = array<i64: 4, 128, 64>}, {pipeline_mode = #tpu.pipeline_mode<synchronous>, transform_indices = @transform_4, window_bounds = array<i64: 1, 64>}, {pipeline_mode = #tpu.pipeline_mode<synchronous>, transform_indices = @transform_5, window_bounds = array<i64: 9, 64, 128>}, {pipeline_mode = #tpu.pipeline_mode<synchronous>, transform_indices = @transform_6, window_bounds = array<i64: 1, 128>}, {transform_indices = @transform_7, window_bounds = array<i64: 1, 49, 128>}]} {
    %c0 = arith.constant 0 : index
    %c0_0 = arith.constant 0 : index
    %c0_1 = arith.constant 0 : index
    %0 = vector.load %arg1[%c0, %c0_0, %c0_1] : memref<1x91x256xbf16, #tpu.memory_space<vmem>>, vector<1x91x256xbf16>
    %1 = vector.shape_cast %0 : vector<1x91x256xbf16> to vector<91x256xbf16>
    %c0_2 = arith.constant 0 : index
    %c0_3 = arith.constant 0 : index
    %2 = vector.load %arg2[%c0_2, %c0_3] : memref<256x128xbf16, #tpu.memory_space<vmem>>, vector<256x128xbf16>
    %cst = arith.constant dense<0.000000e+00> : vector<91x128xf32>
    %3 = tpu.matmul %1, %2, %cst {dimension_numbers = #tpu.dot_dimension_numbers<[1], [0], [0], [1], [0, 0, 1, 1], [], []>} : vector<91x256xbf16>, vector<256x128xbf16>, vector<91x128xf32> -> vector<91x128xf32>
    %c0_4 = arith.constant 0 : index
    %c0_5 = arith.constant 0 : index
    %4 = vector.load %arg3[%c0_4, %c0_5] : memref<1x128xf32, #tpu.memory_space<vmem>>, vector<1x128xf32>
    %5 = vector.broadcast %4 : vector<1x128xf32> to vector<91x128xf32>
    %6 = arith.addf %3, %5 : vector<91x128xf32>
    %cst_6 = arith.constant 0.000000e+00 : f32
    %7 = vector.broadcast %cst_6 : f32 to vector<91x128xf32>
    %8 = arith.maximumf %6, %7 : vector<91x128xf32>
    %c0_7 = arith.constant 0 : index
    %c0_8 = arith.constant 0 : index
    %9 = vector.load %arg9[%c0_7, %c0_8] : memref<91x128xf32, #tpu.memory_space<vmem>>, vector<91x128xf32>
    tpu.vector_store %arg9[%c0_7, %c0_8], %8 {strides = array<i32>} : memref<91x128xf32, #tpu.memory_space<vmem>>, vector<91x128xf32>,
    %cst_9 = arith.constant 0.000000e+00 : f32
    %10 = vector.broadcast %cst_9 : f32 to vector<77x64xf32>
    %c0_10 = arith.constant 0 : index
    %c0_11 = arith.constant 0 : index
    %11 = vector.load %arg9[%c0_10, %c0_11] : memref<91x128xf32, #tpu.memory_space<vmem>>, vector<77x128xf32>
    %12 = arith.truncf %11 : vector<77x128xf32> to vector<77x128xbf16>
    %c0_12 = arith.constant 0 : index
    %c0_13 = arith.constant 0 : index
    %c0_14 = arith.constant 0 : index
    %13 = vector.load %arg4[%c0_12, %c0_13, %c0_14] : memref<4x128x64xbf16, #tpu.memory_space<vmem>>, vector<1x128x64xbf16>
    %14 = vector.shape_cast %13 : vector<1x128x64xbf16> to vector<128x64xbf16>
    %cst_15 = arith.constant dense<0.000000e+00> : vector<77x64xf32>
    %15 = tpu.matmul %12, %14, %cst_15 {dimension_numbers = #tpu.dot_dimension_numbers<[1], [0], [0], [1], [0, 0, 1, 1], [], []>} : vector<77x128xbf16>, vector<128x64xbf16>, vector<77x64xf32> -> vector<77x64xf32>
    %16 = arith.addf %10, %15 : vector<77x64xf32>
    %c1 = arith.constant 1 : index
    %c0_16 = arith.constant 0 : index
    %17 = vector.load %arg9[%c1, %c0_16] : memref<91x128xf32, #tpu.memory_space<vmem>>, vector<77x128xf32>
    %18 = arith.truncf %17 : vector<77x128xf32> to vector<77x128xbf16>
    %c1_17 = arith.constant 1 : index
    %c0_18 = arith.constant 0 : index
    %c0_19 = arith.constant 0 : index
    %19 = vector.load %arg4[%c1_17, %c0_18, %c0_19] : memref<4x128x64xbf16, #tpu.memory_space<vmem>>, vector<1x128x64xbf16>
    %20 = vector.shape_cast %19 : vector<1x128x64xbf16> to vector<128x64xbf16>
    %cst_20 = arith.constant dense<0.000000e+00> : vector<77x64xf32>
    %21 = tpu.matmul %18, %20, %cst_20 {dimension_numbers = #tpu.dot_dimension_numbers<[1], [0], [0], [1], [0, 0, 1, 1], [], []>} : vector<77x128xbf16>, vector<128x64xbf16>, vector<77x64xf32> -> vector<77x64xf32>
    %22 = arith.addf %16, %21 : vector<77x64xf32>
    %c13 = arith.constant 13 : index
    %c0_21 = arith.constant 0 : index
    %23 = vector.load %arg9[%c13, %c0_21] : memref<91x128xf32, #tpu.memory_space<vmem>>, vector<77x128xf32>
    %24 = arith.truncf %23 : vector<77x128xf32> to vector<77x128xbf16>
    %c2 = arith.constant 2 : index
    %c0_22 = arith.constant 0 : index
    %c0_23 = arith.constant 0 : index
    %25 = vector.load %arg4[%c2, %c0_22, %c0_23] : memref<4x128x64xbf16, #tpu.memory_space<vmem>>, vector<1x128x64xbf16>
    %26 = vector.shape_cast %25 : vector<1x128x64xbf16> to vector<128x64xbf16>
    %cst_24 = arith.constant dense<0.000000e+00> : vector<77x64xf32>
    %27 = tpu.matmul %24, %26, %cst_24 {dimension_numbers = #tpu.dot_dimension_numbers<[1], [0], [0], [1], [0, 0, 1, 1], [], []>} : vector<77x128xbf16>, vector<128x64xbf16>, vector<77x64xf32> -> vector<77x64xf32>
    %28 = arith.addf %22, %27 : vector<77x64xf32>
    %c14 = arith.constant 14 : index
    %c0_25 = arith.constant 0 : index
    %29 = vector.load %arg9[%c14, %c0_25] : memref<91x128xf32, #tpu.memory_space<vmem>>, vector<77x128xf32>
    %30 = arith.truncf %29 : vector<77x128xf32> to vector<77x128xbf16>
    %c3 = arith.constant 3 : index
    %c0_26 = arith.constant 0 : index
    %c0_27 = arith.constant 0 : index
    %31 = vector.load %arg4[%c3, %c0_26, %c0_27] : memref<4x128x64xbf16, #tpu.memory_space<vmem>>, vector<1x128x64xbf16>
    %32 = vector.shape_cast %31 : vector<1x128x64xbf16> to vector<128x64xbf16>
    %cst_28 = arith.constant dense<0.000000e+00> : vector<77x64xf32>
    %33 = tpu.matmul %30, %32, %cst_28 {dimension_numbers = #tpu.dot_dimension_numbers<[1], [0], [0], [1], [0, 0, 1, 1], [], []>} : vector<77x128xbf16>, vector<128x64xbf16>, vector<77x64xf32> -> vector<77x64xf32>
    %34 = arith.addf %28, %33 : vector<77x64xf32>
    %c0_29 = arith.constant 0 : index
    %c0_30 = arith.constant 0 : index
    %35 = vector.load %arg5[%c0_29, %c0_30] : memref<1x64xf32, #tpu.memory_space<vmem>>, vector<1x64xf32>
    %36 = vector.broadcast %35 : vector<1x64xf32> to vector<77x64xf32>
    %37 = arith.addf %34, %36 : vector<77x64xf32>
    %cst_31 = arith.constant 0.000000e+00 : f32
    %38 = vector.broadcast %cst_31 : f32 to vector<77x64xf32>
    %39 = arith.maximumf %37, %38 : vector<77x64xf32>
    %c0_32 = arith.constant 0 : index
    %c0_33 = arith.constant 0 : index
    %40 = vector.load %arg10[%c0_32, %c0_33] : memref<77x64xf32, #tpu.memory_space<vmem>>, vector<77x64xf32>
    tpu.vector_store %arg10[%c0_32, %c0_33], %39 {strides = array<i32>} : memref<77x64xf32, #tpu.memory_space<vmem>>, vector<77x64xf32>,
    %cst_34 = arith.constant 0.000000e+00 : f32
    %41 = vector.broadcast %cst_34 : f32 to vector<49x128xf32>
    %c0_35 = arith.constant 0 : index
    %c0_36 = arith.constant 0 : index
    %42 = vector.load %arg10[%c0_35, %c0_36] : memref<77x64xf32, #tpu.memory_space<vmem>>, vector<49x64xf32>
    %43 = arith.truncf %42 : vector<49x64xf32> to vector<49x64xbf16>
    %c0_37 = arith.constant 0 : index
    %c0_38 = arith.constant 0 : index
    %c0_39 = arith.constant 0 : index
    %44 = vector.load %arg6[%c0_37, %c0_38, %c0_39] : memref<9x64x128xbf16, #tpu.memory_space<vmem>>, vector<1x64x128xbf16>
    %45 = vector.shape_cast %44 : vector<1x64x128xbf16> to vector<64x128xbf16>
    %cst_40 = arith.constant dense<0.000000e+00> : vector<49x128xf32>
    %46 = tpu.matmul %43, %45, %cst_40 {dimension_numbers = #tpu.dot_dimension_numbers<[1], [0], [0], [1], [0, 0, 1, 1], [], []>} : vector<49x64xbf16>, vector<64x128xbf16>, vector<49x128xf32> -> vector<49x128xf32>
    %47 = arith.addf %41, %46 : vector<49x128xf32>
    %c1_41 = arith.constant 1 : index
    %c0_42 = arith.constant 0 : index
    %48 = vector.load %arg10[%c1_41, %c0_42] : memref<77x64xf32, #tpu.memory_space<vmem>>, vector<49x64xf32>
    %49 = arith.truncf %48 : vector<49x64xf32> to vector<49x64xbf16>
    %c1_43 = arith.constant 1 : index
    %c0_44 = arith.constant 0 : index
    %c0_45 = arith.constant 0 : index
    %50 = vector.load %arg6[%c1_43, %c0_44, %c0_45] : memref<9x64x128xbf16, #tpu.memory_space<vmem>>, vector<1x64x128xbf16>
    %51 = vector.shape_cast %50 : vector<1x64x128xbf16> to vector<64x128xbf16>
    %cst_46 = arith.constant dense<0.000000e+00> : vector<49x128xf32>
    %52 = tpu.matmul %49, %51, %cst_46 {dimension_numbers = #tpu.dot_dimension_numbers<[1], [0], [0], [1], [0, 0, 1, 1], [], []>} : vector<49x64xbf16>, vector<64x128xbf16>, vector<49x128xf32> -> vector<49x128xf32>
    %53 = arith.addf %47, %52 : vector<49x128xf32>
    %c2_47 = arith.constant 2 : index
    %c0_48 = arith.constant 0 : index
    %54 = vector.load %arg10[%c2_47, %c0_48] : memref<77x64xf32, #tpu.memory_space<vmem>>, vector<49x64xf32>
    %55 = arith.truncf %54 : vector<49x64xf32> to vector<49x64xbf16>
    %c2_49 = arith.constant 2 : index
    %c0_50 = arith.constant 0 : index
    %c0_51 = arith.constant 0 : index
    %56 = vector.load %arg6[%c2_49, %c0_50, %c0_51] : memref<9x64x128xbf16, #tpu.memory_space<vmem>>, vector<1x64x128xbf16>
    %57 = vector.shape_cast %56 : vector<1x64x128xbf16> to vector<64x128xbf16>
    %cst_52 = arith.constant dense<0.000000e+00> : vector<49x128xf32>
    %58 = tpu.matmul %55, %57, %cst_52 {dimension_numbers = #tpu.dot_dimension_numbers<[1], [0], [0], [1], [0, 0, 1, 1], [], []>} : vector<49x64xbf16>, vector<64x128xbf16>, vector<49x128xf32> -> vector<49x128xf32>
    %59 = arith.addf %53, %58 : vector<49x128xf32>
    %c13_53 = arith.constant 13 : index
    %c0_54 = arith.constant 0 : index
    %60 = vector.load %arg10[%c13_53, %c0_54] : memref<77x64xf32, #tpu.memory_space<vmem>>, vector<49x64xf32>
    %61 = arith.truncf %60 : vector<49x64xf32> to vector<49x64xbf16>
    %c3_55 = arith.constant 3 : index
    %c0_56 = arith.constant 0 : index
    %c0_57 = arith.constant 0 : index
    %62 = vector.load %arg6[%c3_55, %c0_56, %c0_57] : memref<9x64x128xbf16, #tpu.memory_space<vmem>>, vector<1x64x128xbf16>
    %63 = vector.shape_cast %62 : vector<1x64x128xbf16> to vector<64x128xbf16>
    %cst_58 = arith.constant dense<0.000000e+00> : vector<49x128xf32>
    %64 = tpu.matmul %61, %63, %cst_58 {dimension_numbers = #tpu.dot_dimension_numbers<[1], [0], [0], [1], [0, 0, 1, 1], [], []>} : vector<49x64xbf16>, vector<64x128xbf16>, vector<49x128xf32> -> vector<49x128xf32>
    %65 = arith.addf %59, %64 : vector<49x128xf32>
    %c14_59 = arith.constant 14 : index
    %c0_60 = arith.constant 0 : index
    %66 = vector.load %arg10[%c14_59, %c0_60] : memref<77x64xf32, #tpu.memory_space<vmem>>, vector<49x64xf32>
    %67 = arith.truncf %66 : vector<49x64xf32> to vector<49x64xbf16>
    %c4 = arith.constant 4 : index
    %c0_61 = arith.constant 0 : index
    %c0_62 = arith.constant 0 : index
    %68 = vector.load %arg6[%c4, %c0_61, %c0_62] : memref<9x64x128xbf16, #tpu.memory_space<vmem>>, vector<1x64x128xbf16>
    %69 = vector.shape_cast %68 : vector<1x64x128xbf16> to vector<64x128xbf16>
    %cst_63 = arith.constant dense<0.000000e+00> : vector<49x128xf32>
    %70 = tpu.matmul %67, %69, %cst_63 {dimension_numbers = #tpu.dot_dimension_numbers<[1], [0], [0], [1], [0, 0, 1, 1], [], []>} : vector<49x64xbf16>, vector<64x128xbf16>, vector<49x128xf32> -> vector<49x128xf32>
    %71 = arith.addf %65, %70 : vector<49x128xf32>
    %c15 = arith.constant 15 : index
    %c0_64 = arith.constant 0 : index
    %72 = vector.load %arg10[%c15, %c0_64] : memref<77x64xf32, #tpu.memory_space<vmem>>, vector<49x64xf32>
    %73 = arith.truncf %72 : vector<49x64xf32> to vector<49x64xbf16>
    %c5 = arith.constant 5 : index
    %c0_65 = arith.constant 0 : index
    %c0_66 = arith.constant 0 : index
    %74 = vector.load %arg6[%c5, %c0_65, %c0_66] : memref<9x64x128xbf16, #tpu.memory_space<vmem>>, vector<1x64x128xbf16>
    %75 = vector.shape_cast %74 : vector<1x64x128xbf16> to vector<64x128xbf16>
    %cst_67 = arith.constant dense<0.000000e+00> : vector<49x128xf32>
    %76 = tpu.matmul %73, %75, %cst_67 {dimension_numbers = #tpu.dot_dimension_numbers<[1], [0], [0], [1], [0, 0, 1, 1], [], []>} : vector<49x64xbf16>, vector<64x128xbf16>, vector<49x128xf32> -> vector<49x128xf32>
    %77 = arith.addf %71, %76 : vector<49x128xf32>
    %c26 = arith.constant 26 : index
    %c0_68 = arith.constant 0 : index
    %78 = vector.load %arg10[%c26, %c0_68] : memref<77x64xf32, #tpu.memory_space<vmem>>, vector<49x64xf32>
    %79 = arith.truncf %78 : vector<49x64xf32> to vector<49x64xbf16>
    %c6 = arith.constant 6 : index
    %c0_69 = arith.constant 0 : index
    %c0_70 = arith.constant 0 : index
    %80 = vector.load %arg6[%c6, %c0_69, %c0_70] : memref<9x64x128xbf16, #tpu.memory_space<vmem>>, vector<1x64x128xbf16>
    %81 = vector.shape_cast %80 : vector<1x64x128xbf16> to vector<64x128xbf16>
    %cst_71 = arith.constant dense<0.000000e+00> : vector<49x128xf32>
    %82 = tpu.matmul %79, %81, %cst_71 {dimension_numbers = #tpu.dot_dimension_numbers<[1], [0], [0], [1], [0, 0, 1, 1], [], []>} : vector<49x64xbf16>, vector<64x128xbf16>, vector<49x128xf32> -> vector<49x128xf32>
    %83 = arith.addf %77, %82 : vector<49x128xf32>
    %c27 = arith.constant 27 : index
    %c0_72 = arith.constant 0 : index
    %84 = vector.load %arg10[%c27, %c0_72] : memref<77x64xf32, #tpu.memory_space<vmem>>, vector<49x64xf32>
    %85 = arith.truncf %84 : vector<49x64xf32> to vector<49x64xbf16>
    %c7 = arith.constant 7 : index
    %c0_73 = arith.constant 0 : index
    %c0_74 = arith.constant 0 : index
    %86 = vector.load %arg6[%c7, %c0_73, %c0_74] : memref<9x64x128xbf16, #tpu.memory_space<vmem>>, vector<1x64x128xbf16>
    %87 = vector.shape_cast %86 : vector<1x64x128xbf16> to vector<64x128xbf16>
    %cst_75 = arith.constant dense<0.000000e+00> : vector<49x128xf32>
    %88 = tpu.matmul %85, %87, %cst_75 {dimension_numbers = #tpu.dot_dimension_numbers<[1], [0], [0], [1], [0, 0, 1, 1], [], []>} : vector<49x64xbf16>, vector<64x128xbf16>, vector<49x128xf32> -> vector<49x128xf32>
    %89 = arith.addf %83, %88 : vector<49x128xf32>
    %c28 = arith.constant 28 : index
    %c0_76 = arith.constant 0 : index
    %90 = vector.load %arg10[%c28, %c0_76] : memref<77x64xf32, #tpu.memory_space<vmem>>, vector<49x64xf32>
    %91 = arith.truncf %90 : vector<49x64xf32> to vector<49x64xbf16>
    %c8 = arith.constant 8 : index
    %c0_77 = arith.constant 0 : index
    %c0_78 = arith.constant 0 : index
    %92 = vector.load %arg6[%c8, %c0_77, %c0_78] : memref<9x64x128xbf16, #tpu.memory_space<vmem>>, vector<1x64x128xbf16>
    %93 = vector.shape_cast %92 : vector<1x64x128xbf16> to vector<64x128xbf16>
    %cst_79 = arith.constant dense<0.000000e+00> : vector<49x128xf32>
    %94 = tpu.matmul %91, %93, %cst_79 {dimension_numbers = #tpu.dot_dimension_numbers<[1], [0], [0], [1], [0, 0, 1, 1], [], []>} : vector<49x64xbf16>, vector<64x128xbf16>, vector<49x128xf32> -> vector<49x128xf32>
    %95 = arith.addf %89, %94 : vector<49x128xf32>
    %c0_80 = arith.constant 0 : index
    %c0_81 = arith.constant 0 : index
    %96 = vector.load %arg7[%c0_80, %c0_81] : memref<1x128xf32, #tpu.memory_space<vmem>>, vector<1x128xf32>
    %97 = vector.broadcast %96 : vector<1x128xf32> to vector<49x128xf32>
    %98 = arith.addf %95, %97 : vector<49x128xf32>
    %cst_82 = arith.constant 0.000000e+00 : f32
    %99 = vector.broadcast %cst_82 : f32 to vector<49x128xf32>
    %100 = arith.maximumf %98, %99 : vector<49x128xf32>
    %101 = arith.truncf %100 : vector<49x128xf32> to vector<49x128xbf16>
    %c0_83 = arith.constant 0 : index
    %c0_84 = arith.constant 0 : index
    %c0_85 = arith.constant 0 : index
    %102 = vector.load %arg8[%c0_83, %c0_84, %c0_85] : memref<1x49x128xbf16, #tpu.memory_space<vmem>>, vector<1x49x128xbf16>
    %103 = vector.shape_cast %102 : vector<1x49x128xbf16> to vector<49x128xbf16>
    %104 = vector.shape_cast %101 : vector<49x128xbf16> to vector<1x49x128xbf16>
    tpu.vector_store %arg8[%c0_83, %c0_84, %c0_85], %104 {strides = array<i32>} : memref<1x49x128xbf16, #tpu.memory_space<vmem>>, vector<1x49x128xbf16>,
    return
  }
  func.func @transform_0(%arg0: i32) -> (i32, i32, i32) {
    %c0_i32 = arith.constant 0 : i32
    %c0_i32_0 = arith.constant 0 : i32
    %c0_i32_1 = arith.constant 0 : i32
    return %arg0, %c0_i32, %c0_i32_0 : i32, i32, i32
  }
  func.func @transform_1(%arg0: i32) -> (i32, i32) {
    %c0_i32 = arith.constant 0 : i32
    %c0_i32_0 = arith.constant 0 : i32
    %c0_i32_1 = arith.constant 0 : i32
    return %c0_i32, %c0_i32_0 : i32, i32
  }
  func.func @transform_2(%arg0: i32) -> (i32, i32) {
    %c0_i32 = arith.constant 0 : i32
    %c0_i32_0 = arith.constant 0 : i32
    %c0_i32_1 = arith.constant 0 : i32
    return %c0_i32, %c0_i32_0 : i32, i32
  }
  func.func @transform_3(%arg0: i32) -> (i32, i32, i32) {
    %c0_i32 = arith.constant 0 : i32
    %c0_i32_0 = arith.constant 0 : i32
    %c0_i32_1 = arith.constant 0 : i32
    %c0_i32_2 = arith.constant 0 : i32
    return %c0_i32, %c0_i32_0, %c0_i32_1 : i32, i32, i32
  }
  func.func @transform_4(%arg0: i32) -> (i32, i32) {
    %c0_i32 = arith.constant 0 : i32
    %c0_i32_0 = arith.constant 0 : i32
    %c0_i32_1 = arith.constant 0 : i32
    return %c0_i32, %c0_i32_0 : i32, i32
  }
  func.func @transform_5(%arg0: i32) -> (i32, i32, i32) {
    %c0_i32 = arith.constant 0 : i32
    %c0_i32_0 = arith.constant 0 : i32
    %c0_i32_1 = arith.constant 0 : i32
    %c0_i32_2 = arith.constant 0 : i32
    return %c0_i32, %c0_i32_0, %c0_i32_1 : i32, i32, i32
  }
  func.func @transform_6(%arg0: i32) -> (i32, i32) {
    %c0_i32 = arith.constant 0 : i32
    %c0_i32_0 = arith.constant 0 : i32
    %c0_i32_1 = arith.constant 0 : i32
    return %c0_i32, %c0_i32_0 : i32, i32
  }
  func.func @transform_7(%arg0: i32) -> (i32, i32, i32) {
    %c0_i32 = arith.constant 0 : i32
    %c0_i32_0 = arith.constant 0 : i32
    %c0_i32_1 = arith.constant 0 : i32
    return %arg0, %c0_i32, %c0_i32_0 : i32, i32, i32
  }
}

module attributes {stable_mosaic.version = 11 : i64} {
  func.func @_fc_kernel(%arg0: i32, %arg1: memref<8x6272xbf16, #tpu.memory_space<vmem>>, %arg2: memref<6272x512xbf16, #tpu.memory_space<vmem>>, %arg3: memref<1x512xf32, #tpu.memory_space<vmem>>, %arg4: memref<1x512xf32, #tpu.memory_space<vmem>>, %arg5: memref<1x1xf32, #tpu.memory_space<vmem>>, %arg6: memref<8x1xf32, #tpu.memory_space<vmem>>) attributes {dimension_semantics = [#tpu.dimension_semantics<parallel>], iteration_bounds = array<i64: 1>, scalar_prefetch = 0 : i64, scratch_operands = 0 : i64, tpu.core_type = #tpu.core_type<tc>, window_params = [{transform_indices = @transform_0, window_bounds = array<i64: 8, 6272>}, {pipeline_mode = #tpu.pipeline_mode<synchronous>, transform_indices = @transform_1, window_bounds = array<i64: 6272, 512>}, {pipeline_mode = #tpu.pipeline_mode<synchronous>, transform_indices = @transform_2, window_bounds = array<i64: 1, 512>}, {pipeline_mode = #tpu.pipeline_mode<synchronous>, transform_indices = @transform_3, window_bounds = array<i64: 1, 512>}, {pipeline_mode = #tpu.pipeline_mode<synchronous>, transform_indices = @transform_4, window_bounds = array<i64: 1, 1>}, {transform_indices = @transform_5, window_bounds = array<i64: 8, 1>}]} {
    %c0 = arith.constant 0 : index
    %c0_0 = arith.constant 0 : index
    %0 = vector.load %arg1[%c0, %c0_0] : memref<8x6272xbf16, #tpu.memory_space<vmem>>, vector<8x6272xbf16>
    %c0_1 = arith.constant 0 : index
    %c0_2 = arith.constant 0 : index
    %1 = vector.load %arg2[%c0_1, %c0_2] : memref<6272x512xbf16, #tpu.memory_space<vmem>>, vector<6272x512xbf16>
    %cst = arith.constant dense<0.000000e+00> : vector<8x512xf32>
    %2 = tpu.matmul %0, %1, %cst {dimension_numbers = #tpu.dot_dimension_numbers<[1], [0], [0], [1], [0, 0, 1, 1], [], []>} : vector<8x6272xbf16>, vector<6272x512xbf16>, vector<8x512xf32> -> vector<8x512xf32>
    %c0_3 = arith.constant 0 : index
    %c0_4 = arith.constant 0 : index
    %3 = vector.load %arg3[%c0_3, %c0_4] : memref<1x512xf32, #tpu.memory_space<vmem>>, vector<1x512xf32>
    %4 = vector.broadcast %3 : vector<1x512xf32> to vector<8x512xf32>
    %5 = arith.addf %2, %4 : vector<8x512xf32>
    %cst_5 = arith.constant 0.000000e+00 : f32
    %6 = vector.broadcast %cst_5 : f32 to vector<8x512xf32>
    %7 = arith.maximumf %5, %6 : vector<8x512xf32>
    %c0_6 = arith.constant 0 : index
    %c0_7 = arith.constant 0 : index
    %8 = vector.load %arg4[%c0_6, %c0_7] : memref<1x512xf32, #tpu.memory_space<vmem>>, vector<1x512xf32>
    %9 = vector.broadcast %8 : vector<1x512xf32> to vector<8x512xf32>
    %10 = arith.mulf %7, %9 : vector<8x512xf32>
    %cst_8 = arith.constant dense<0.000000e+00> : vector<8xf32>
    %11 = vector.multi_reduction <add>, %10, %cst_8 [1] : vector<8x512xf32> to vector<8xf32>
    %12 = vector.shape_cast %11 : vector<8xf32> to vector<8x1xf32>
    %c0_9 = arith.constant 0 : index
    %c0_10 = arith.constant 0 : index
    %13 = vector.load %arg5[%c0_9, %c0_10] : memref<1x1xf32, #tpu.memory_space<vmem>>, vector<1x1xf32>
    %14 = vector.broadcast %13 : vector<1x1xf32> to vector<8x1xf32>
    %15 = arith.addf %12, %14 : vector<8x1xf32>
    %c0_11 = arith.constant 0 : index
    %c0_12 = arith.constant 0 : index
    %16 = vector.load %arg6[%c0_11, %c0_12] : memref<8x1xf32, #tpu.memory_space<vmem>>, vector<8x1xf32>
    tpu.vector_store %arg6[%c0_11, %c0_12], %15 {strides = array<i32>} : memref<8x1xf32, #tpu.memory_space<vmem>>, vector<8x1xf32>,
    return
  }
  func.func @transform_0(%arg0: i32) -> (i32, i32) {
    %c0_i32 = arith.constant 0 : i32
    %c0_i32_0 = arith.constant 0 : i32
    return %arg0, %c0_i32 : i32, i32
  }
  func.func @transform_1(%arg0: i32) -> (i32, i32) {
    %c0_i32 = arith.constant 0 : i32
    %c0_i32_0 = arith.constant 0 : i32
    %c0_i32_1 = arith.constant 0 : i32
    return %c0_i32, %c0_i32_0 : i32, i32
  }
  func.func @transform_2(%arg0: i32) -> (i32, i32) {
    %c0_i32 = arith.constant 0 : i32
    %c0_i32_0 = arith.constant 0 : i32
    %c0_i32_1 = arith.constant 0 : i32
    return %c0_i32, %c0_i32_0 : i32, i32
  }
  func.func @transform_3(%arg0: i32) -> (i32, i32) {
    %c0_i32 = arith.constant 0 : i32
    %c0_i32_0 = arith.constant 0 : i32
    %c0_i32_1 = arith.constant 0 : i32
    return %c0_i32, %c0_i32_0 : i32, i32
  }
  func.func @transform_4(%arg0: i32) -> (i32, i32) {
    %c0_i32 = arith.constant 0 : i32
    %c0_i32_0 = arith.constant 0 : i32
    %c0_i32_1 = arith.constant 0 : i32
    return %c0_i32, %c0_i32_0 : i32, i32
  }
  func.func @transform_5(%arg0: i32) -> (i32, i32) {
    %c0_i32 = arith.constant 0 : i32
    %c0_i32_0 = arith.constant 0 : i32
    return %arg0, %c0_i32 : i32, i32
  }
}

</mosaic_0001>

<llo_original>
// kernel: critic_forward.2
$region0: #{critic_forward.2}
  #allocation0 [shape = 'u32[]', space=smem, size = 0x4, offset = 0x4, fixed_abs, tag = 'smem constant byte address 0x4 - core index']
  #allocation1 [shape = 'u32[144,128]{1,0:T(1,128)}', space=vmem, size = 0x12000, scoped, tag = 'internal scratch']
  #allocation2 [shape = 'f32[91,128]{1,0:T(8,128)}', space=vmem, size = 0xc000, scoped, tag = 'scratch operand']
  #allocation3 [shape = 'f32[77,64]{1,0:T(8,128)}', space=vmem, size = 0xa000, scoped, tag = 'scratch operand']
  %s0 = inlined_call_operand.vmem [shape: bf16[2,91,256], index: 0, kind: input, shape index: {}]
  %s1 = inlined_call_operand.vmem [shape: bf16[256,128], index: 1, kind: input, shape index: {}]
  %s2 = inlined_call_operand.vmem [shape: f32[1,128], index: 2, kind: input, shape index: {}]
  %s3 = inlined_call_operand.vmem [shape: bf16[4,128,64], index: 3, kind: input, shape index: {}]
  %s4 = inlined_call_operand.vmem [shape: f32[1,64], index: 4, kind: input, shape index: {}]
  %s5 = inlined_call_operand.vmem [shape: bf16[9,64,128], index: 5, kind: input, shape index: {}]
  %s6 = inlined_call_operand.vmem [shape: f32[1,128], index: 6, kind: input, shape index: {}]
  %s7 = inlined_call_operand.vmem [shape: bf16[2,49,128], index: 7, kind: output, shape index: {}]
  %s8 = sld [smem:[#allocation0]]
  $region61: #{critic_forward.2} parent=0
    _
  %s10 = ssub.s32 1, %s8
  %s11 = scalar_select 0, %s10, %s8
  loop: start=0, step=1, limit=4
  $region2: #{critic_forward.2} parent=0 // loop_pre_header
    _
  $region3: #{critic_forward.2} parent=0 // loop_header
    %s13 = sphi 0, %s17
    %p14 = scmp.ge.s32.totalorder %s13, 4
    %s23 = sphi 0, %s25
    %s26 = sphi 0, %s23
    %s27 = sphi 0, %s26
    %s43 = sphi 0, %s27
    %s47 = sphi 0, %s47
    %s49 = sphi 0, %s47
    %s50 = sphi 0, %s49
    %s64 = sphi 0, %s50
    %s68 = sphi 0, %s68
    %s70 = sphi 0, %s68
    %s71 = sphi 0, %s70
    %s85 = sphi 0, %s71
    %s89 = sphi 0, %s89
    %s91 = sphi 0, %s89
    %s92 = sphi 0, %s91
    %s106 = sphi 0, %s92
    %s110 = sphi 0, %s110
    %s112 = sphi 0, %s110
    %s113 = sphi 0, %s112
    %s127 = sphi 0, %s113
    %s131 = sphi 0, %s131
    %s133 = sphi 0, %s131
    %s134 = sphi 0, %s133
    %s148 = sphi 0, %s134
    %s152 = sphi 0, %s152
    %s154 = sphi 0, %s152
    %s155 = sphi 0, %s154
    %s169 = sphi 0, %s155
    %s175 = sphi 0, %s177
    %s178 = sphi 0, %s175
    %s179 = sphi 0, %s178
    %s195 = sphi 0, %s179
  $region4: #{critic_forward.2} parent=0 // loop_header_branch
    %16 = sbr.rel (%p14) target = $region8
  $region5: #{critic_forward.2} parent=0 // loop_body
    %s18 = ssub.s32 %s13, 1
    %s19 = ssub.s32 %s13, 2
    %s20 = sadd.s32 %s13, 1
    %s21 = ssub.s32 %s13, %s20
    %p22 = scmp.eq.s32.totalorder %s21, 0
    %s24 = sadd.s32 %s23, 1
    %s25 = scalar_select %p22, %s23, %s24
    %p28 = pneg %p22
    %p29 = scmp.eq.s32.totalorder %s13, 1
    %p30 = por %p28, %p29
    %p31 = scmp.ne.s32.totalorder %s23, %s26
    %p32 = scmp.eq.s32.totalorder %s13, 0
    %p33 = por %p31, %p32
    %p34 = scmp.ne.s32.totalorder %s23, %s26
    %p35 = scmp.eq.s32.totalorder %s18, 1
    %p36 = por %p34, %p35
    %p37 = scmp.ne.s32.totalorder %s26, %s27
    %p38 = scmp.eq.s32.totalorder %s18, 0
    %p39 = por %p37, %p38
    %p40 = scmp.ne.s32.totalorder %s26, %s27
    %p41 = scmp.eq.s32.totalorder %s19, 1
    %p42 = por %p40, %p41
    %p44 = scmp.ne.s32.totalorder %s27, %s43
    %p45 = scmp.eq.s32.totalorder %s19, 0
    %p46 = por %p44, %p45
    %s48 = sadd.s32 %s47, 1
    %p51 = scmp.eq.s32.totalorder %s13, 1
    %p52 = scmp.ne.s32.totalorder %s47, %s49
    %p53 = scmp.eq.s32.totalorder %s13, 0
    %p54 = por %p52, %p53
    %p55 = scmp.ne.s32.totalorder %s47, %s49
    %p56 = scmp.eq.s32.totalorder %s18, 1
    %p57 = por %p55, %p56
    %p58 = scmp.ne.s32.totalorder %s49, %s50
    %p59 = scmp.eq.s32.totalorder %s18, 0
    %p60 = por %p58, %p59
    %p61 = scmp.ne.s32.totalorder %s49, %s50
    %p62 = scmp.eq.s32.totalorder %s19, 1
    %p63 = por %p61, %p62
    %p65 = scmp.ne.s32.totalorder %s50, %s64
    %p66 = scmp.eq.s32.totalorder %s19, 0
    %p67 = por %p65, %p66
    %s69 = sadd.s32 %s68, 1
    %p72 = scmp.eq.s32.totalorder %s13, 1
    %p73 = scmp.ne.s32.totalorder %s68, %s70
    %p74 = scmp.eq.s32.totalorder %s13, 0
    %p75 = por %p73, %p74
    %p76 = scmp.ne.s32.totalorder %s68, %s70
    %p77 = scmp.eq.s32.totalorder %s18, 1
    %p78 = por %p76, %p77
    %p79 = scmp.ne.s32.totalorder %s70, %s71
    %p80 = scmp.eq.s32.totalorder %s18, 0
    %p81 = por %p79, %p80
    %p82 = scmp.ne.s32.totalorder %s70, %s71
    %p83 = scmp.eq.s32.totalorder %s19, 1
    %p84 = por %p82, %p83
    %p86 = scmp.ne.s32.totalorder %s71, %s85
    %p87 = scmp.eq.s32.totalorder %s19, 0
    %p88 = por %p86, %p87
    %s90 = sadd.s32 %s89, 1
    %p93 = scmp.eq.s32.totalorder %s13, 1
    %p94 = scmp.ne.s32.totalorder %s89, %s91
    %p95 = scmp.eq.s32.totalorder %s13, 0
    %p96 = por %p94, %p95
    %p97 = scmp.ne.s32.totalorder %s89, %s91
    %p98 = scmp.eq.s32.totalorder %s18, 1
    %p99 = por %p97, %p98
    %p100 = scmp.ne.s32.totalorder %s91, %s92
    %p101 = scmp.eq.s32.totalorder %s18, 0
    %p102 = por %p100, %p101
    %p103 = scmp.ne.s32.totalorder %s91, %s92
    %p104 = scmp.eq.s32.totalorder %s19, 1
    %p105 = por %p103, %p104
    %p107 = scmp.ne.s32.totalorder %s92, %s106
    %p108 = scmp.eq.s32.totalorder %s19, 0
    %p109 = por %p107, %p108
    %s111 = sadd.s32 %s110, 1
    %p114 = scmp.eq.s32.totalorder %s13, 1
    %p115 = scmp.ne.s32.totalorder %s110, %s112
    %p116 = scmp.eq.s32.totalorder %s13, 0
    %p117 = por %p115, %p116
    %p118 = scmp.ne.s32.totalorder %s110, %s112
    %p119 = scmp.eq.s32.totalorder %s18, 1
    %p120 = por %p118, %p119
    %p121 = scmp.ne.s32.totalorder %s112, %s113
    %p122 = scmp.eq.s32.totalorder %s18, 0
    %p123 = por %p121, %p122
    %p124 = scmp.ne.s32.totalorder %s112, %s113
    %p125 = scmp.eq.s32.totalorder %s19, 1
    %p126 = por %p124, %p125
    %p128 = scmp.ne.s32.totalorder %s113, %s127
    %p129 = scmp.eq.s32.totalorder %s19, 0
    %p130 = por %p128, %p129
    %s132 = sadd.s32 %s131, 1
    %p135 = scmp.eq.s32.totalorder %s13, 1
    %p136 = scmp.ne.s32.totalorder %s131, %s133
    %p137 = scmp.eq.s32.totalorder %s13, 0
    %p138 = por %p136, %p137
    %p139 = scmp.ne.s32.totalorder %s131, %s133
    %p140 = scmp.eq.s32.totalorder %s18, 1
    %p141 = por %p139, %p140
    %p142 = scmp.ne.s32.totalorder %s133, %s134
    %p143 = scmp.eq.s32.totalorder %s18, 0
    %p144 = por %p142, %p143
    %p145 = scmp.ne.s32.totalorder %s133, %s134
    %p146 = scmp.eq.s32.totalorder %s19, 1
    %p147 = por %p145, %p146
    %p149 = scmp.ne.s32.totalorder %s134, %s148
    %p150 = scmp.eq.s32.totalorder %s19, 0
    %p151 = por %p149, %p150
    %s153 = sadd.s32 %s152, 1
    %p156 = scmp.eq.s32.totalorder %s13, 1
    %p157 = scmp.ne.s32.totalorder %s152, %s154
    %p158 = scmp.eq.s32.totalorder %s13, 0
    %p159 = por %p157, %p158
    %p160 = scmp.ne.s32.totalorder %s152, %s154
    %p161 = scmp.eq.s32.totalorder %s18, 1
    %p162 = por %p160, %p161
    %p163 = scmp.ne.s32.totalorder %s154, %s155
    %p164 = scmp.eq.s32.totalorder %s18, 0
    %p165 = por %p163, %p164
    %p166 = scmp.ne.s32.totalorder %s154, %s155
    %p167 = scmp.eq.s32.totalorder %s19, 1
    %p168 = por %p166, %p167
    %p170 = scmp.ne.s32.totalorder %s155, %s169
    %p171 = scmp.eq.s32.totalorder %s19, 0
    %p172 = por %p170, %p171
    %s173 = ssub.s32 %s13, %s20
    %p174 = scmp.eq.s32.totalorder %s173, 0
    %s176 = sadd.s32 %s175, 1
    %s177 = scalar_select %p174, %s175, %s176
    %p180 = pneg %p174
    %p181 = scmp.eq.s32.totalorder %s13, 1
    %p182 = por %p180, %p181
    %p183 = scmp.ne.s32.totalorder %s175, %s178
    %p184 = scmp.eq.s32.totalorder %s13, 0
    %p185 = por %p183, %p184
    %p186 = scmp.ne.s32.totalorder %s175, %s178
    %p187 = scmp.eq.s32.totalorder %s18, 1
    %p188 = por %p186, %p187
    %p189 = scmp.ne.s32.totalorder %s178, %s179
    %p190 = scmp.eq.s32.totalorder %s18, 0
    %p191 = por %p189, %p190
    %p192 = scmp.ne.s32.totalorder %s178, %s179
    %p193 = scmp.eq.s32.totalorder %s19, 1
    %p194 = por %p192, %p193
    %p196 = scmp.ne.s32.totalorder %s179, %s195
    %p197 = scmp.eq.s32.totalorder %s19, 0
    %p198 = por %p196, %p197
    %p199 = scmp.le.s32.totalorder 1, %s13
    %p200 = scmp.lt.s32.totalorder %s13, 3
    %p201 = pnand %p199, %p200
    %p202 = pneg %p201
    // Predicated region
    $region9: #{critic_forward.2} parent=5 // pred_check
      _
    $region10: #{critic_forward.2} parent=5 // pred_check_branch
      %204 = sbr.rel (%p201) target = $region12
    $region11: #{critic_forward.2} parent=5 // pred_region
      %s205 = ssub.s32 %s13, 1
      // Predicated region
      $region13: #{critic_forward.2} parent=11 // pred_check
        %p206 = pneg %p60
      $region14: #{critic_forward.2} parent=11 // pred_check_branch
        %208 = sbr.rel (%p206) target = $region16
      $region15: #{critic_forward.2} parent=11 // pred_region
        _
      $region16: #{critic_forward.2} parent=11 // pred_fallthru
        _
      // Predicated region
      $region17: #{critic_forward.2} parent=11 // pred_check
        %p209 = pneg %p81
      $region18: #{critic_forward.2} parent=11 // pred_check_branch
        %211 = sbr.rel (%p209) target = $region20
      $region19: #{critic_forward.2} parent=11 // pred_region
        _
      $region20: #{critic_forward.2} parent=11 // pred_fallthru
        _
      // Predicated region
      $region21: #{critic_forward.2} parent=11 // pred_check
        %p212 = pneg %p102
      $region22: #{critic_forward.2} parent=11 // pred_check_branch
        %214 = sbr.rel (%p212) target = $region24
      $region23: #{critic_forward.2} parent=11 // pred_region
        _
      $region24: #{critic_forward.2} parent=11 // pred_fallthru
        _
      // Predicated region
      $region25: #{critic_forward.2} parent=11 // pred_check
        %p215 = pneg %p123
      $region26: #{critic_forward.2} parent=11 // pred_check_branch
        %217 = sbr.rel (%p215) target = $region28
      $region27: #{critic_forward.2} parent=11 // pred_region
        _
      $region28: #{critic_forward.2} parent=11 // pred_fallthru
        _
      // Predicated region
      $region29: #{critic_forward.2} parent=11 // pred_check
        %p218 = pneg %p144
      $region30: #{critic_forward.2} parent=11 // pred_check_branch
        %220 = sbr.rel (%p218) target = $region32
      $region31: #{critic_forward.2} parent=11 // pred_region
        _
      $region32: #{critic_forward.2} parent=11 // pred_fallthru
        _
      // Predicated region
      $region33: #{critic_forward.2} parent=11 // pred_check
        %p221 = pneg %p165
      $region34: #{critic_forward.2} parent=11 // pred_check_branch
        %223 = sbr.rel (%p221) target = $region36
      $region35: #{critic_forward.2} parent=11 // pred_region
        _
      $region36: #{critic_forward.2} parent=11 // pred_fallthru
        _
    $region12: #{critic_forward.2} parent=5 // pred_fallthru
      _
    %p224 = scmp.lt.s32.totalorder %s13, 2
    // Predicated region
    $region37: #{critic_forward.2} parent=5 // pred_check
      %p225 = pneg %p224
    $region38: #{critic_forward.2} parent=5 // pred_check_branch
      %227 = sbr.rel (%p225) target = $region40
    $region39: #{critic_forward.2} parent=5 // pred_region
      // Predicated region
      $region41: #{critic_forward.2} parent=39 // pred_check
        %p228 = pneg %p33
      $region42: #{critic_forward.2} parent=39 // pred_check_branch
        %230 = sbr.rel (%p228) target = $region44
      $region43: #{critic_forward.2} parent=39 // pred_region
        %p231 = scmp.lt.s32.totalorder %s13, 1
        %s232 = scalar_select %p231, %s13, 1
        %s233 = smul.addr %s232, 24
        %s234 = smul.addr %s233, 4
        %s235 = scalar_lea.vmem %s0, %s234
      $region44: #{critic_forward.2} parent=39 // pred_fallthru
        _
    $region40: #{critic_forward.2} parent=5 // pred_fallthru
      _
    %p236 = scmp.le.s32.totalorder 1, %s13
    %p237 = scmp.lt.s32.totalorder %s13, 3
    %p238 = pnand %p236, %p237
    %p239 = pneg %p238
    // Predicated region
    $region45: #{critic_forward.2} parent=5 // pred_check
      _
    $region46: #{critic_forward.2} parent=5 // pred_check_branch
      %241 = sbr.rel (%p238) target = $region48
    $region47: #{critic_forward.2} parent=5 // pred_region
      %s242 = ssub.s32 %s13, 1
      %p243 = scmp.lt.s32.totalorder %s18, 1
      %s244 = scalar_select %p243, %s18, 1
      %s245 = smul.addr %s244, 24
      %s246 = smul.addr %s245, 4
      %s247 = scalar_lea.vmem %s0, %s246
      %p248 = pneg %p39
      %p249 = pneg %p36
      %p250 = pneg %p60
      %p251 = pneg %p57
      %p252 = pneg %p81
      %p253 = pneg %p78
      %p254 = pneg %p102
      %p255 = pneg %p99
      %p256 = pneg %p123
      %p257 = pneg %p120
      %p258 = pneg %p144
      %p259 = pneg %p141
      %p260 = pneg %p165
      %p261 = pneg %p162
      %p262 = pneg %p191
      %p263 = pneg %p188
      %p264 = scmp.lt.s32.totalorder %s18, 1
      %s265 = scalar_select %p264, %s18, 1
      %s266 = smul.addr %s265, 7
      %s267 = smul.addr %s266, 4
      %s268 = scalar_lea.vmem %s7, %s267
      %p269 = scmp.lt.s32.totalorder %s18, 1
      %s270 = scalar_select %p269, %s18, 1
      %s271 = smul.addr %s270, 24
      %s272 = smul.addr %s271, 4
      %s273 = scalar_lea.vmem %s0, %s272
      %p274 = scmp.lt.s32.totalorder %s18, 1
      %s275 = scalar_select %p274, %s18, 1
      %s276 = smul.addr %s275, 7
      %s277 = smul.addr %s276, 4
      %s278 = scalar_lea.vmem %s7, %s277
      %v280 = vld [vmem:[%s273] sm:$0xff]
      %v281 = vld [vmem:[%s273 + $0x8] sm:$0xff]
      %v282 = vld [vmem:[%s273 + $0x10] sm:$0xff]
      %v283 = vld [vmem:[%s273 + $0x18] sm:$0xff]
      %v284 = vld [vmem:[%s273 + $0x20] sm:$0xff]
      %v285 = vld [vmem:[%s273 + $0x28] sm:$0xff]
      %v286 = vld [vmem:[%s273 + $0x30] sm:$0xff]
      %v287 = vld [vmem:[%s273 + $0x38] sm:$0xff]
      %v288 = vld [vmem:[%s273 + $0x40] sm:$0xff]
      %v289 = vld [vmem:[%s273 + $0x48] sm:$0xff]
      %v290 = vld [vmem:[%s273 + $0x50] sm:$0xff]
      %v291 = vld [vmem:[%s273 + $0x58] sm:$0x33]
      %v292 = vld [vmem:[%s1] sm:$0xf]
      %v293 = vld [vmem:[%s1 + $0x4] sm:$0xf]
      %v294 = vld [vmem:[%s1 + $0x8] sm:$0xf]
      %v295 = vld [vmem:[%s1 + $0xc] sm:$0xf]
      %v296 = vld [vmem:[%s1 + $0x10] sm:$0xf]
      %v297 = vld [vmem:[%s1 + $0x14] sm:$0xf]
      %v298 = vld [vmem:[%s1 + $0x18] sm:$0xf]
      %v299 = vld [vmem:[%s1 + $0x1c] sm:$0xf]
      %v300 = vld [vmem:[%s1 + $0x20] sm:$0xf]
      %v301 = vld [vmem:[%s1 + $0x24] sm:$0xf]
      %v302 = vld [vmem:[%s1 + $0x28] sm:$0xf]
      %v303 = vld [vmem:[%s1 + $0x2c] sm:$0xf]
      %v304 = vld [vmem:[%s1 + $0x30] sm:$0xf]
      %v305 = vld [vmem:[%s1 + $0x34] sm:$0xf]
      %v306 = vld [vmem:[%s1 + $0x38] sm:$0xf]
      %v307 = vld [vmem:[%s1 + $0x3c] sm:$0xf]
      %v308 = vld [vmem:[%s1 + $0x40] sm:$0xf]
      %v309 = vld [vmem:[%s1 + $0x44] sm:$0xf]
      %v310 = vld [vmem:[%s1 + $0x48] sm:$0xf]
      %v311 = vld [vmem:[%s1 + $0x4c] sm:$0xf]
      %v312 = vld [vmem:[%s1 + $0x50] sm:$0xf]
      %v313 = vld [vmem:[%s1 + $0x54] sm:$0xf]
      %v314 = vld [vmem:[%s1 + $0x58] sm:$0xf]
      %v315 = vld [vmem:[%s1 + $0x5c] sm:$0xf]
      %v316 = vld [vmem:[%s1 + $0x60] sm:$0xf]
      %v317 = vld [vmem:[%s1 + $0x64] sm:$0xf]
      %v318 = vld [vmem:[%s1 + $0x68] sm:$0xf]
      %v319 = vld [vmem:[%s1 + $0x6c] sm:$0xf]
      %v320 = vld [vmem:[%s1 + $0x70] sm:$0xf]
      %v321 = vld [vmem:[%s1 + $0x74] sm:$0xf]
      %v322 = vld [vmem:[%s1 + $0x78] sm:$0xf]
      %v323 = vld [vmem:[%s1 + $0x7c] sm:$0xf]
      %v324 = vld [vmem:[%s2] sm:$0x1]
      %v326 = vlaneseq
      %v327 = vshrl.u32 %v326, 7
      %v328 = vsub.s32 0, %v327
      %v329 = vrot.slane %v324, %v328
      %v343 = vunpack.c.l.b16 %v280
      %v344 = vunpack.c.h.b16 %v280
      %v345 = vunpack.c.l.b16 %v281
      %v346 = vunpack.c.h.b16 %v281
      %v347 = vunpack.c.l.b16 %v282
      %v348 = vunpack.c.h.b16 %v282
      %v349 = vunpack.c.l.b16 %v283
      %v350 = vunpack.c.h.b16 %v283
      %v351 = vunpack.c.l.b16 %v284
      %v352 = vunpack.c.h.b16 %v284
      %v353 = vunpack.c.l.b16 %v285
      %v354 = vunpack.c.h.b16 %v285
      %v355 = vunpack.c.l.b16 %v286
      %v356 = vunpack.c.h.b16 %v286
      %v357 = vunpack.c.l.b16 %v287
      %v358 = vunpack.c.h.b16 %v287
      %v359 = vunpack.c.l.b16 %v288
      %v360 = vunpack.c.h.b16 %v288
      %v361 = vunpack.c.l.b16 %v289
      %v362 = vunpack.c.h.b16 %v289
      %v363 = vunpack.c.l.b16 %v290
      %v364 = vunpack.c.h.b16 %v290
      %v365 = vunpack.c.l.b16 %v291
      %v366 = vunpack.c.h.b16 %v291
      %v367 = vpack.c.b16 %v345, %v343
      %v368 = vpack.c.b16 %v346, %v344
      %v369 = vpack.c.b16 %v349, %v347
      %v370 = vpack.c.b16 %v350, %v348
      %v371 = vpack.c.b16 %v353, %v351
      %v372 = vpack.c.b16 %v354, %v352
      %v373 = vpack.c.b16 %v357, %v355
      %v374 = vpack.c.b16 %v358, %v356
      %v375 = vpack.c.b16 %v361, %v359
      %v376 = vpack.c.b16 %v362, %v360
      %v377 = vpack.c.b16 %v365, %v363
      %v378 = vpack.c.b16 %v366, %v364
      %v423 = vunpack.c.l.b16 %v292
      %v424 = vunpack.c.l.b16 %v293
      %v425 = vunpack.c.l.b16 %v294
      %v426 = vunpack.c.l.b16 %v295
      %v427 = vunpack.c.l.b16 %v296
      %v428 = vunpack.c.l.b16 %v297
      %v429 = vunpack.c.l.b16 %v298
      %v430 = vunpack.c.l.b16 %v299
      %v431 = vunpack.c.l.b16 %v300
      %v432 = vunpack.c.l.b16 %v301
      %v433 = vunpack.c.l.b16 %v302
      %v434 = vunpack.c.l.b16 %v303
      %v435 = vunpack.c.l.b16 %v304
      %v436 = vunpack.c.l.b16 %v305
      %v437 = vunpack.c.l.b16 %v306
      %v438 = vunpack.c.l.b16 %v307
      %v439 = vunpack.c.l.b16 %v308
      %v440 = vunpack.c.l.b16 %v309
      %v441 = vunpack.c.l.b16 %v310
      %v442 = vunpack.c.l.b16 %v311
      %v443 = vunpack.c.l.b16 %v312
      %v444 = vunpack.c.l.b16 %v313
      %v445 = vunpack.c.l.b16 %v314
      %v446 = vunpack.c.l.b16 %v315
      %v447 = vunpack.c.l.b16 %v316
      %v448 = vunpack.c.l.b16 %v317
      %v449 = vunpack.c.l.b16 %v318
      %v450 = vunpack.c.l.b16 %v319
      %v451 = vunpack.c.l.b16 %v320
      %v452 = vunpack.c.l.b16 %v321
      %v453 = vunpack.c.l.b16 %v322
      %v454 = vunpack.c.l.b16 %v323
      %v455 = vpack.c.b16 %v424, %v423
      %v456 = vpack.c.b16 %v426, %v425
      %v457 = vpack.c.b16 %v428, %v427
      %v458 = vpack.c.b16 %v430, %v429
      %v459 = vpack.c.b16 %v432, %v431
      %v460 = vpack.c.b16 %v434, %v433
      %v461 = vpack.c.b16 %v436, %v435
      %v462 = vpack.c.b16 %v438, %v437
      %v463 = vpack.c.b16 %v440, %v439
      %v464 = vpack.c.b16 %v442, %v441
      %v465 = vpack.c.b16 %v444, %v443
      %v466 = vpack.c.b16 %v446, %v445
      %v467 = vpack.c.b16 %v448, %v447
      %v468 = vpack.c.b16 %v450, %v449
      %v469 = vpack.c.b16 %v452, %v451
      %v470 = vpack.c.b16 %v454, %v453
      %487 = vmatprep.subr.bf16.mxu0 0
      %488 = vmatpush1.bf16.msra.mxu0 %v462
      %489 = vmatprep.subr.bf16.mxu0 0
      %490 = vmatpush1.bf16.msra.mxu0 %v461
      %491 = vmatprep.subr.bf16.mxu0 0
      %492 = vmatpush1.bf16.msra.mxu0 %v460
      %493 = vmatprep.subr.bf16.mxu0 0
      %494 = vmatpush1.bf16.msra.mxu0 %v459
      %495 = vmatprep.subr.bf16.mxu0 0
      %496 = vmatpush1.bf16.msra.mxu0 %v458
      %497 = vmatprep.subr.bf16.mxu0 0
      %498 = vmatpush1.bf16.msra.mxu0 %v457
      %499 = vmatprep.subr.bf16.mxu0 0
      %500 = vmatpush1.bf16.msra.mxu0 %v456
      %501 = vmatprep.subr.bf16.mxu0 0
      %502 = vmatpush1.bf16.msra.mxu0 %v455
      %503 = vmatprep.subr.bf16.mxu0 0
      %504 = vmatpush2.bf16.msra.mxu0 %v470
      %505 = vmatprep.subr.bf16.mxu0 0
      %506 = vmatpush2.bf16.msra.mxu0 %v469
      %507 = vmatprep.subr.bf16.mxu0 0
      %508 = vmatpush2.bf16.msra.mxu0 %v468
      %509 = vmatprep.subr.bf16.mxu0 0
      %510 = vmatpush2.bf16.msra.mxu0 %v467
      %511 = vmatprep.subr.bf16.mxu0 0
      %512 = vmatpush2.bf16.msra.mxu0 %v466
      %513 = vmatprep.subr.bf16.mxu0 0
      %514 = vmatpush2.bf16.msra.mxu0 %v465
      %515 = vmatprep.subr.bf16.mxu0 0
      %516 = vmatpush2.bf16.msra.mxu0 %v464
      %517 = vmatprep.subr.bf16.mxu0 0
      %518 = vmatpush2.bf16.msra.mxu0 %v463
      %519 = vmatprep.mubr.bf16.mxu0 %v368
      %520 = vmatmul.mubr.bf16.gmra.mxu0 %v367
      %v521 = vpop.f32.mrf.mxu0
      %v522 = vadd.f32 %v329, %v521
      %v523 = vpop.f32.mrf.mxu0
      %v524 = vpop.f32.mrf.mxu0
      %v525 = vadd.f32 %v329, %v524
      %v526 = vpop.f32.mrf.mxu0
      %527 = vmatprep.mubr.bf16.mxu0 %v370
      %528 = vmatmul.mubr.bf16.gmra.mxu0 %v369
      %v529 = vpop.f32.mrf.mxu0
      %v530 = vadd.f32 %v329, %v529
      %v531 = vpop.f32.mrf.mxu0
      %v532 = vpop.f32.mrf.mxu0
      %v533 = vadd.f32 %v329, %v532
      %v534 = vpop.f32.mrf.mxu0
      %535 = vmatprep.mubr.bf16.mxu0 %v372
      %536 = vmatmul.mubr.bf16.gmra.mxu0 %v371
      %v537 = vpop.f32.mrf.mxu0
      %v538 = vadd.f32 %v329, %v537
      %v539 = vpop.f32.mrf.mxu0
      %v540 = vpop.f32.mrf.mxu0
      %v541 = vadd.f32 %v329, %v540
      %v542 = vpop.f32.mrf.mxu0
      %543 = vmatprep.mubr.bf16.mxu0 %v374
      %544 = vmatmul.mubr.bf16.gmra.mxu0 %v373
      %v545 = vpop.f32.mrf.mxu0
      %v546 = vadd.f32 %v329, %v545
      %v547 = vpop.f32.mrf.mxu0
      %v548 = vpop.f32.mrf.mxu0
      %v549 = vadd.f32 %v329, %v548
      %v550 = vpop.f32.mrf.mxu0
      %551 = vmatprep.mubr.bf16.mxu0 %v376
      %552 = vmatmul.mubr.bf16.gmra.mxu0 %v375
      %v553 = vpop.f32.mrf.mxu0
      %v554 = vadd.f32 %v329, %v553
      %v555 = vpop.f32.mrf.mxu0
      %v556 = vpop.f32.mrf.mxu0
      %v557 = vadd.f32 %v329, %v556
      %v558 = vpop.f32.mrf.mxu0
      %559 = vmatprep.mubr.bf16.mxu0 %v378
      %560 = vmatmul.mubr.bf16.gmra.mxu0 %v377
      %v561 = vpop.f32.mrf.mxu0
      %v562 = vadd.f32 %v329, %v561
      %v563 = vpop.f32.mrf.mxu0
      %v564 = vpop.f32.mrf.mxu0
      %v565 = vadd.f32 %v329, %v564
      %v566 = vpop.f32.mrf.mxu0
      %567 = vdwg.mxu0
      %v568 = vmax.f32 %v522, 0.0
      %v569 = vmax.f32 %v525, 0.0
      %v570 = vmax.f32 %v530, 0.0
      %v571 = vmax.f32 %v533, 0.0
      %v572 = vmax.f32 %v538, 0.0
      %v573 = vmax.f32 %v541, 0.0
      %v574 = vmax.f32 %v546, 0.0
      %v575 = vmax.f32 %v549, 0.0
      %v576 = vmax.f32 %v554, 0.0
      %v577 = vmax.f32 %v557, 0.0
      %v578 = vmax.f32 %v562, 0.0
      %v579 = vmax.f32 %v565, 0.0
      %580 = vst [vmem:[#allocation2] sm:$0xff] %v568
      %581 = vst [vmem:[#allocation2 + $0x8] sm:$0xff] %v569
      %582 = vst [vmem:[#allocation2 + $0x10] sm:$0xff] %v570
      %583 = vst [vmem:[#allocation2 + $0x18] sm:$0xff] %v571
      %584 = vst [vmem:[#allocation2 + $0x20] sm:$0xff] %v572
      %585 = vst [vmem:[#allocation2 + $0x28] sm:$0xff] %v573
      %586 = vst [vmem:[#allocation2 + $0x30] sm:$0xff] %v574
      %587 = vst [vmem:[#allocation2 + $0x38] sm:$0xff] %v575
      %588 = vst [vmem:[#allocation2 + $0x40] sm:$0xff] %v576
      %589 = vst [vmem:[#allocation2 + $0x48] sm:$0xff] %v577
      %590 = vst [vmem:[#allocation2 + $0x50] sm:$0xff] %v578
      %591 = vst [vmem:[#allocation2 + $0x58] sm:$0x7] %v579
      %v592 = vld [vmem:[#allocation2] sm:$0xff]
      %v593 = vld [vmem:[#allocation2 + $0x8] sm:$0xff]
      %v594 = vld [vmem:[#allocation2 + $0x10] sm:$0xff]
      %v595 = vld [vmem:[#allocation2 + $0x18] sm:$0xff]
      %v596 = vld [vmem:[#allocation2 + $0x20] sm:$0xff]
      %v597 = vld [vmem:[#allocation2 + $0x28] sm:$0xff]
      %v598 = vld [vmem:[#allocation2 + $0x30] sm:$0xff]
      %v599 = vld [vmem:[#allocation2 + $0x38] sm:$0xff]
      %v600 = vld [vmem:[#allocation2 + $0x40] sm:$0xff]
      %v601 = vld [vmem:[#allocation2 + $0x48] sm:$0x1f]
      %v602 = vpack.c.bf16 %v593, %v592
      %v603 = vpack.c.bf16 %v595, %v594
      %v604 = vpack.c.bf16 %v597, %v596
      %v605 = vpack.c.bf16 %v599, %v598
      %v606 = vpack.c.bf16 %v601, %v600
      %v607 = vld [vmem:[%s3] sm:$0xf]
      %v608 = vld [vmem:[%s3 + $0x4] sm:$0xf]
      %v609 = vld [vmem:[%s3 + $0x8] sm:$0xf]
      %v610 = vld [vmem:[%s3 + $0xc] sm:$0xf]
      %v611 = vld [vmem:[%s3 + $0x10] sm:$0xf]
      %v612 = vld [vmem:[%s3 + $0x14] sm:$0xf]
      %v613 = vld [vmem:[%s3 + $0x18] sm:$0xf]
      %v614 = vld [vmem:[%s3 + $0x1c] sm:$0xf]
      %v615 = vld [vmem:[%s3 + $0x20] sm:$0xf]
      %v616 = vld [vmem:[%s3 + $0x24] sm:$0xf]
      %v617 = vld [vmem:[%s3 + $0x28] sm:$0xf]
      %v618 = vld [vmem:[%s3 + $0x2c] sm:$0xf]
      %v619 = vld [vmem:[%s3 + $0x30] sm:$0xf]
      %v620 = vld [vmem:[%s3 + $0x34] sm:$0xf]
      %v621 = vld [vmem:[%s3 + $0x38] sm:$0xf]
      %v622 = vld [vmem:[%s3 + $0x3c] sm:$0xf]
      %v623 = vld [vmem:[#allocation2 + $0x1] sm:$0xff]
      %v624 = vld [vmem:[#allocation2 + $0x9] sm:$0xff]
      %v625 = vld [vmem:[#allocation2 + $0x11] sm:$0xff]
      %v626 = vld [vmem:[#allocation2 + $0x19] sm:$0xff]
      %v627 = vld [vmem:[#allocation2 + $0x21] sm:$0xff]
      %v628 = vld [vmem:[#allocation2 + $0x29] sm:$0xff]
      %v629 = vld [vmem:[#allocation2 + $0x31] sm:$0xff]
      %v630 = vld [vmem:[#allocation2 + $0x39] sm:$0xff]
      %v631 = vld [vmem:[#allocation2 + $0x41] sm:$0xff]
      %v632 = vld [vmem:[#allocation2 + $0x49] sm:$0x1f]
      %v633 = vpack.c.bf16 %v624, %v623
      %v634 = vpack.c.bf16 %v626, %v625
      %v635 = vpack.c.bf16 %v628, %v627
      %v636 = vpack.c.bf16 %v630, %v629
      %v637 = vpack.c.bf16 %v632, %v631
      %s638 = scalar_lea.vmem %s3, 64
      %v639 = vld [vmem:[%s638] sm:$0xf]
      %v640 = vld [vmem:[%s638 + $0x4] sm:$0xf]
      %v641 = vld [vmem:[%s638 + $0x8] sm:$0xf]
      %v642 = vld [vmem:[%s638 + $0xc] sm:$0xf]
      %v643 = vld [vmem:[%s638 + $0x10] sm:$0xf]
      %v644 = vld [vmem:[%s638 + $0x14] sm:$0xf]
      %v645 = vld [vmem:[%s638 + $0x18] sm:$0xf]
      %v646 = vld [vmem:[%s638 + $0x1c] sm:$0xf]
      %v647 = vld [vmem:[%s638 + $0x20] sm:$0xf]
      %v648 = vld [vmem:[%s638 + $0x24] sm:$0xf]
      %v649 = vld [vmem:[%s638 + $0x28] sm:$0xf]
      %v650 = vld [vmem:[%s638 + $0x2c] sm:$0xf]
      %v651 = vld [vmem:[%s638 + $0x30] sm:$0xf]
      %v652 = vld [vmem:[%s638 + $0x34] sm:$0xf]
      %v653 = vld [vmem:[%s638 + $0x38] sm:$0xf]
      %v654 = vld [vmem:[%s638 + $0x3c] sm:$0xf]
      %v671 = vunpack.c.l.b16 %v639
      %v672 = vunpack.c.l.b16 %v640
      %v673 = vunpack.c.l.b16 %v641
      %v674 = vunpack.c.l.b16 %v642
      %v675 = vunpack.c.l.b16 %v643
      %v676 = vunpack.c.l.b16 %v644
      %v677 = vunpack.c.l.b16 %v645
      %v678 = vunpack.c.l.b16 %v646
      %v679 = vunpack.c.l.b16 %v647
      %v680 = vunpack.c.l.b16 %v648
      %v681 = vunpack.c.l.b16 %v649
      %v682 = vunpack.c.l.b16 %v650
      %v683 = vunpack.c.l.b16 %v651
      %v684 = vunpack.c.l.b16 %v652
      %v685 = vunpack.c.l.b16 %v653
      %v686 = vunpack.c.l.b16 %v654
      %v687 = vpack.c.b16 %v672, %v671
      %v688 = vpack.c.b16 %v674, %v673
      %v689 = vpack.c.b16 %v676, %v675
      %v690 = vpack.c.b16 %v678, %v677
      %v691 = vpack.c.b16 %v680, %v679
      %v692 = vpack.c.b16 %v682, %v681
      %v693 = vpack.c.b16 %v684, %v683
      %v694 = vpack.c.b16 %v686, %v685
      %703 = vmatprep.subr.bf16.mxu0 0
      %704 = vmatpush1.bf16.msra.mxu0 %v694
      %705 = vmatprep.subr.bf16.mxu0 0
      %706 = vmatpush1.bf16.msra.mxu0 %v693
      %707 = vmatprep.subr.bf16.mxu0 0
      %708 = vmatpush1.bf16.msra.mxu0 %v692
      %709 = vmatprep.subr.bf16.mxu0 0
      %710 = vmatpush1.bf16.msra.mxu0 %v691
      %711 = vmatprep.subr.bf16.mxu0 0
      %712 = vmatpush1.bf16.msra.mxu0 %v690
      %713 = vmatprep.subr.bf16.mxu0 0
      %714 = vmatpush1.bf16.msra.mxu0 %v689
      %715 = vmatprep.subr.bf16.mxu0 0
      %716 = vmatpush1.bf16.msra.mxu0 %v688
      %717 = vmatprep.subr.bf16.mxu0 0
      %718 = vmatpush1.bf16.msra.mxu0 %v687
      %719 = vmatprep.subr.bf16.mxu0 0
      %720 = vmatpush2.bf16.msra.mxu0 0
      %721 = vmatprep.subr.bf16.mxu0 0
      %722 = vmatpush2.bf16.msra.mxu0 0
      %723 = vmatprep.subr.bf16.mxu0 0
      %724 = vmatpush2.bf16.msra.mxu0 0
      %725 = vmatprep.subr.bf16.mxu0 0
      %726 = vmatpush2.bf16.msra.mxu0 0
      %727 = vmatprep.subr.bf16.mxu0 0
      %728 = vmatpush2.bf16.msra.mxu0 0
      %729 = vmatprep.subr.bf16.mxu0 0
      %730 = vmatpush2.bf16.msra.mxu0 0
      %731 = vmatprep.subr.bf16.mxu0 0
      %732 = vmatpush2.bf16.msra.mxu0 0
      %733 = vmatprep.subr.bf16.mxu0 0
      %734 = vmatpush2.bf16.msra.mxu0 0
      %735 = vmatprep.mubr.bf16.mxu0 0
      %736 = vmatmul.mubr.bf16.gmra.mxu0 %v633
      %v737 = vpop.f32.mrf.mxu0
      %v738 = vadd.f32 0.0, %v737
      %v739 = vpop.f32.mrf.mxu0
      %v740 = vpop.f32.mrf.mxu0
      %v741 = vadd.f32 0.0, %v740
      %v742 = vpop.f32.mrf.mxu0
      %743 = vmatprep.mubr.bf16.mxu0 0
      %744 = vmatmul.mubr.bf16.gmra.mxu0 %v634
      %v745 = vpop.f32.mrf.mxu0
      %v746 = vadd.f32 0.0, %v745
      %v747 = vpop.f32.mrf.mxu0
      %v748 = vpop.f32.mrf.mxu0
      %v749 = vadd.f32 0.0, %v748
      %v750 = vpop.f32.mrf.mxu0
      %751 = vmatprep.mubr.bf16.mxu0 0
      %752 = vmatmul.mubr.bf16.gmra.mxu0 %v635
      %v753 = vpop.f32.mrf.mxu0
      %v754 = vadd.f32 0.0, %v753
      %v755 = vpop.f32.mrf.mxu0
      %v756 = vpop.f32.mrf.mxu0
      %v757 = vadd.f32 0.0, %v756
      %v758 = vpop.f32.mrf.mxu0
      %759 = vmatprep.mubr.bf16.mxu0 0
      %760 = vmatmul.mubr.bf16.gmra.mxu0 %v636
      %v761 = vpop.f32.mrf.mxu0
      %v762 = vadd.f32 0.0, %v761
      %v763 = vpop.f32.mrf.mxu0
      %v764 = vpop.f32.mrf.mxu0
      %v765 = vadd.f32 0.0, %v764
      %v766 = vpop.f32.mrf.mxu0
      %767 = vmatprep.mubr.bf16.mxu0 0
      %768 = vmatmul.mubr.bf16.gmra.mxu0 %v637
      %v769 = vpop.f32.mrf.mxu0
      %v770 = vadd.f32 0.0, %v769
      %v771 = vpop.f32.mrf.mxu0
      %v772 = vpop.f32.mrf.mxu0
      %v773 = vadd.f32 0.0, %v772
      %v774 = vpop.f32.mrf.mxu0
      %775 = vdwg.mxu0
      %v792 = vunpack.c.l.b16 %v607
      %v793 = vunpack.c.l.b16 %v608
      %v794 = vunpack.c.l.b16 %v609
      %v795 = vunpack.c.l.b16 %v610
      %v796 = vunpack.c.l.b16 %v611
      %v797 = vunpack.c.l.b16 %v612
      %v798 = vunpack.c.l.b16 %v613
      %v799 = vunpack.c.l.b16 %v614
      %v800 = vunpack.c.l.b16 %v615
      %v801 = vunpack.c.l.b16 %v616
      %v802 = vunpack.c.l.b16 %v617
      %v803 = vunpack.c.l.b16 %v618
      %v804 = vunpack.c.l.b16 %v619
      %v805 = vunpack.c.l.b16 %v620
      %v806 = vunpack.c.l.b16 %v621
      %v807 = vunpack.c.l.b16 %v622
      %v808 = vpack.c.b16 %v793, %v792
      %v809 = vpack.c.b16 %v795, %v794
      %v810 = vpack.c.b16 %v797, %v796
      %v811 = vpack.c.b16 %v799, %v798
      %v812 = vpack.c.b16 %v801, %v800
      %v813 = vpack.c.b16 %v803, %v802
      %v814 = vpack.c.b16 %v805, %v804
      %v815 = vpack.c.b16 %v807, %v806
      %824 = vmatprep.subr.bf16.mxu0 0
      %825 = vmatpush1.bf16.msra.mxu0 %v815
      %826 = vmatprep.subr.bf16.mxu0 0
      %827 = vmatpush1.bf16.msra.mxu0 %v814
      %828 = vmatprep.subr.bf16.mxu0 0
      %829 = vmatpush1.bf16.msra.mxu0 %v813
      %830 = vmatprep.subr.bf16.mxu0 0
      %831 = vmatpush1.bf16.msra.mxu0 %v812
      %832 = vmatprep.subr.bf16.mxu0 0
      %833 = vmatpush1.bf16.msra.mxu0 %v811
      %834 = vmatprep.subr.bf16.mxu0 0
      %835 = vmatpush1.bf16.msra.mxu0 %v810
      %836 = vmatprep.subr.bf16.mxu0 0
      %837 = vmatpush1.bf16.msra.mxu0 %v809
      %838 = vmatprep.subr.bf16.mxu0 0
      %839 = vmatpush1.bf16.msra.mxu0 %v808
      %840 = vmatprep.subr.bf16.mxu0 0
      %841 = vmatpush2.bf16.msra.mxu0 0
      %842 = vmatprep.subr.bf16.mxu0 0
      %843 = vmatpush2.bf16.msra.mxu0 0
      %844 = vmatprep.subr.bf16.mxu0 0
      %845 = vmatpush2.bf16.msra.mxu0 0
      %846 = vmatprep.subr.bf16.mxu0 0
      %847 = vmatpush2.bf16.msra.mxu0 0
      %848 = vmatprep.subr.bf16.mxu0 0
      %849 = vmatpush2.bf16.msra.mxu0 0
      %850 = vmatprep.subr.bf16.mxu0 0
      %851 = vmatpush2.bf16.msra.mxu0 0
      %852 = vmatprep.subr.bf16.mxu0 0
      %853 = vmatpush2.bf16.msra.mxu0 0
      %854 = vmatprep.subr.bf16.mxu0 0
      %855 = vmatpush2.bf16.msra.mxu0 0
      %856 = vmatprep.mubr.bf16.mxu0 0
      %857 = vmatmul.mubr.bf16.gmra.mxu0 %v602
      %v858 = vpop.f32.mrf.mxu0
      %v859 = vadd.f32 %v738, %v858
      %v860 = vpop.f32.mrf.mxu0
      %v861 = vpop.f32.mrf.mxu0
      %v862 = vadd.f32 %v741, %v861
      %v863 = vpop.f32.mrf.mxu0
      %864 = vmatprep.mubr.bf16.mxu0 0
      %865 = vmatmul.mubr.bf16.gmra.mxu0 %v603
      %v866 = vpop.f32.mrf.mxu0
      %v867 = vadd.f32 %v746, %v866
      %v868 = vpop.f32.mrf.mxu0
      %v869 = vpop.f32.mrf.mxu0
      %v870 = vadd.f32 %v749, %v869
      %v871 = vpop.f32.mrf.mxu0
      %872 = vmatprep.mubr.bf16.mxu0 0
      %873 = vmatmul.mubr.bf16.gmra.mxu0 %v604
      %v874 = vpop.f32.mrf.mxu0
      %v875 = vadd.f32 %v754, %v874
      %v876 = vpop.f32.mrf.mxu0
      %v877 = vpop.f32.mrf.mxu0
      %v878 = vadd.f32 %v757, %v877
      %v879 = vpop.f32.mrf.mxu0
      %880 = vmatprep.mubr.bf16.mxu0 0
      %881 = vmatmul.mubr.bf16.gmra.mxu0 %v605
      %v882 = vpop.f32.mrf.mxu0
      %v883 = vadd.f32 %v762, %v882
      %v884 = vpop.f32.mrf.mxu0
      %v885 = vpop.f32.mrf.mxu0
      %v886 = vadd.f32 %v765, %v885
      %v887 = vpop.f32.mrf.mxu0
      %888 = vmatprep.mubr.bf16.mxu0 0
      %889 = vmatmul.mubr.bf16.gmra.mxu0 %v606
      %v890 = vpop.f32.mrf.mxu0
      %v891 = vadd.f32 %v770, %v890
      %v892 = vpop.f32.mrf.mxu0
      %v893 = vpop.f32.mrf.mxu0
      %v894 = vadd.f32 %v773, %v893
      %v895 = vpop.f32.mrf.mxu0
      %896 = vdwg.mxu0
      %v897 = vld [vmem:[#allocation2 + $0xd] sm:$0xff]
      %v898 = vld [vmem:[#allocation2 + $0x15] sm:$0xff]
      %v899 = vld [vmem:[#allocation2 + $0x1d] sm:$0xff]
      %v900 = vld [vmem:[#allocation2 + $0x25] sm:$0xff]
      %v901 = vld [vmem:[#allocation2 + $0x2d] sm:$0xff]
      %v902 = vld [vmem:[#allocation2 + $0x35] sm:$0xff]
      %v903 = vld [vmem:[#allocation2 + $0x3d] sm:$0xff]
      %v904 = vld [vmem:[#allocation2 + $0x45] sm:$0xff]
      %v905 = vld [vmem:[#allocation2 + $0x4d] sm:$0xff]
      %v906 = vld [vmem:[#allocation2 + $0x55] sm:$0x1f]
      %v907 = vpack.c.bf16 %v898, %v897
      %v908 = vpack.c.bf16 %v900, %v899
      %v909 = vpack.c.bf16 %v902, %v901
      %v910 = vpack.c.bf16 %v904, %v903
      %v911 = vpack.c.bf16 %v906, %v905
      %s912 = scalar_lea.vmem %s3, 128
      %v913 = vld [vmem:[%s912] sm:$0xf]
      %v914 = vld [vmem:[%s912 + $0x4] sm:$0xf]
      %v915 = vld [vmem:[%s912 + $0x8] sm:$0xf]
      %v916 = vld [vmem:[%s912 + $0xc] sm:$0xf]
      %v917 = vld [vmem:[%s912 + $0x10] sm:$0xf]
      %v918 = vld [vmem:[%s912 + $0x14] sm:$0xf]
      %v919 = vld [vmem:[%s912 + $0x18] sm:$0xf]
      %v920 = vld [vmem:[%s912 + $0x1c] sm:$0xf]
      %v921 = vld [vmem:[%s912 + $0x20] sm:$0xf]
      %v922 = vld [vmem:[%s912 + $0x24] sm:$0xf]
      %v923 = vld [vmem:[%s912 + $0x28] sm:$0xf]
      %v924 = vld [vmem:[%s912 + $0x2c] sm:$0xf]
      %v925 = vld [vmem:[%s912 + $0x30] sm:$0xf]
      %v926 = vld [vmem:[%s912 + $0x34] sm:$0xf]
      %v927 = vld [vmem:[%s912 + $0x38] sm:$0xf]
      %v928 = vld [vmem:[%s912 + $0x3c] sm:$0xf]
      %v945 = vunpack.c.l.b16 %v913
      %v946 = vunpack.c.l.b16 %v914
      %v947 = vunpack.c.l.b16 %v915
      %v948 = vunpack.c.l.b16 %v916
      %v949 = vunpack.c.l.b16 %v917
      %v950 = vunpack.c.l.b16 %v918
      %v951 = vunpack.c.l.b16 %v919
      %v952 = vunpack.c.l.b16 %v920
      %v953 = vunpack.c.l.b16 %v921
      %v954 = vunpack.c.l.b16 %v922
      %v955 = vunpack.c.l.b16 %v923
      %v956 = vunpack.c.l.b16 %v924
      %v957 = vunpack.c.l.b16 %v925
      %v958 = vunpack.c.l.b16 %v926
      %v959 = vunpack.c.l.b16 %v927
      %v960 = vunpack.c.l.b16 %v928
      %v961 = vpack.c.b16 %v946, %v945
      %v962 = vpack.c.b16 %v948, %v947
      %v963 = vpack.c.b16 %v950, %v949
      %v964 = vpack.c.b16 %v952, %v951
      %v965 = vpack.c.b16 %v954, %v953
      %v966 = vpack.c.b16 %v956, %v955
      %v967 = vpack.c.b16 %v958, %v957
      %v968 = vpack.c.b16 %v960, %v959
      %977 = vmatprep.subr.bf16.mxu0 0
      %978 = vmatpush1.bf16.msra.mxu0 %v968
      %979 = vmatprep.subr.bf16.mxu0 0
      %980 = vmatpush1.bf16.msra.mxu0 %v967
      %981 = vmatprep.subr.bf16.mxu0 0
      %982 = vmatpush1.bf16.msra.mxu0 %v966
      %983 = vmatprep.subr.bf16.mxu0 0
      %984 = vmatpush1.bf16.msra.mxu0 %v965
      %985 = vmatprep.subr.bf16.mxu0 0
      %986 = vmatpush1.bf16.msra.mxu0 %v964
      %987 = vmatprep.subr.bf16.mxu0 0
      %988 = vmatpush1.bf16.msra.mxu0 %v963
      %989 = vmatprep.subr.bf16.mxu0 0
      %990 = vmatpush1.bf16.msra.mxu0 %v962
      %991 = vmatprep.subr.bf16.mxu0 0
      %992 = vmatpush1.bf16.msra.mxu0 %v961
      %993 = vmatprep.subr.bf16.mxu0 0
      %994 = vmatpush2.bf16.msra.mxu0 0
      %995 = vmatprep.subr.bf16.mxu0 0
      %996 = vmatpush2.bf16.msra.mxu0 0
      %997 = vmatprep.subr.bf16.mxu0 0
      %998 = vmatpush2.bf16.msra.mxu0 0
      %999 = vmatprep.subr.bf16.mxu0 0
      %1000 = vmatpush2.bf16.msra.mxu0 0
      %1001 = vmatprep.subr.bf16.mxu0 0
      %1002 = vmatpush2.bf16.msra.mxu0 0
      %1003 = vmatprep.subr.bf16.mxu0 0
      %1004 = vmatpush2.bf16.msra.mxu0 0
      %1005 = vmatprep.subr.bf16.mxu0 0
      %1006 = vmatpush2.bf16.msra.mxu0 0
      %1007 = vmatprep.subr.bf16.mxu0 0
      %1008 = vmatpush2.bf16.msra.mxu0 0
      %1009 = vmatprep.mubr.bf16.mxu0 0
      %1010 = vmatmul.mubr.bf16.gmra.mxu0 %v907
      %v1011 = vpop.f32.mrf.mxu0
      %v1012 = vadd.f32 0.0, %v1011
      %v1013 = vpop.f32.mrf.mxu0
      %v1014 = vpop.f32.mrf.mxu0
      %v1015 = vadd.f32 0.0, %v1014
      %v1016 = vpop.f32.mrf.mxu0
      %1017 = vmatprep.mubr.bf16.mxu0 0
      %1018 = vmatmul.mubr.bf16.gmra.mxu0 %v908
      %v1019 = vpop.f32.mrf.mxu0
      %v1020 = vadd.f32 0.0, %v1019
      %v1021 = vpop.f32.mrf.mxu0
      %v1022 = vpop.f32.mrf.mxu0
      %v1023 = vadd.f32 0.0, %v1022
      %v1024 = vpop.f32.mrf.mxu0
      %1025 = vmatprep.mubr.bf16.mxu0 0
      %1026 = vmatmul.mubr.bf16.gmra.mxu0 %v909
      %v1027 = vpop.f32.mrf.mxu0
      %v1028 = vadd.f32 0.0, %v1027
      %v1029 = vpop.f32.mrf.mxu0
      %v1030 = vpop.f32.mrf.mxu0
      %v1031 = vadd.f32 0.0, %v1030
      %v1032 = vpop.f32.mrf.mxu0
      %1033 = vmatprep.mubr.bf16.mxu0 0
      %1034 = vmatmul.mubr.bf16.gmra.mxu0 %v910
      %v1035 = vpop.f32.mrf.mxu0
      %v1036 = vadd.f32 0.0, %v1035
      %v1037 = vpop.f32.mrf.mxu0
      %v1038 = vpop.f32.mrf.mxu0
      %v1039 = vadd.f32 0.0, %v1038
      %v1040 = vpop.f32.mrf.mxu0
      %1041 = vmatprep.mubr.bf16.mxu0 0
      %1042 = vmatmul.mubr.bf16.gmra.mxu0 %v911
      %v1043 = vpop.f32.mrf.mxu0
      %v1044 = vadd.f32 0.0, %v1043
      %v1045 = vpop.f32.mrf.mxu0
      %v1046 = vpop.f32.mrf.mxu0
      %v1047 = vadd.f32 0.0, %v1046
      %v1048 = vpop.f32.mrf.mxu0
      %1049 = vdwg.mxu0
      %v1050 = vadd.f32 %v859, %v1012
      %v1051 = vadd.f32 %v862, %v1015
      %v1052 = vadd.f32 %v867, %v1020
      %v1053 = vadd.f32 %v870, %v1023
      %v1054 = vadd.f32 %v875, %v1028
      %v1055 = vadd.f32 %v878, %v1031
      %v1056 = vadd.f32 %v883, %v1036
      %v1057 = vadd.f32 %v886, %v1039
      %v1058 = vadd.f32 %v891, %v1044
      %v1059 = vadd.f32 %v894, %v1047
      %v1060 = vld [vmem:[#allocation2 + $0xe] sm:$0xff]
      %v1061 = vld [vmem:[#allocation2 + $0x16] sm:$0xff]
      %v1062 = vld [vmem:[#allocation2 + $0x1e] sm:$0xff]
      %v1063 = vld [vmem:[#allocation2 + $0x26] sm:$0xff]
      %v1064 = vld [vmem:[#allocation2 + $0x2e] sm:$0xff]
      %v1065 = vld [vmem:[#allocation2 + $0x36] sm:$0xff]
      %v1066 = vld [vmem:[#allocation2 + $0x3e] sm:$0xff]
      %v1067 = vld [vmem:[#allocation2 + $0x46] sm:$0xff]
      %v1068 = vld [vmem:[#allocation2 + $0x4e] sm:$0xff]
      %v1069 = vld [vmem:[#allocation2 + $0x56] sm:$0x1f]
      %v1070 = vpack.c.bf16 %v1061, %v1060
      %v1071 = vpack.c.bf16 %v1063, %v1062
      %v1072 = vpack.c.bf16 %v1065, %v1064
      %v1073 = vpack.c.bf16 %v1067, %v1066
      %v1074 = vpack.c.bf16 %v1069, %v1068
      %s1075 = scalar_lea.vmem %s3, 192
      %v1076 = vld [vmem:[%s1075] sm:$0xf]
      %v1077 = vld [vmem:[%s1075 + $0x4] sm:$0xf]
      %v1078 = vld [vmem:[%s1075 + $0x8] sm:$0xf]
      %v1079 = vld [vmem:[%s1075 + $0xc] sm:$0xf]
      %v1080 = vld [vmem:[%s1075 + $0x10] sm:$0xf]
      %v1081 = vld [vmem:[%s1075 + $0x14] sm:$0xf]
      %v1082 = vld [vmem:[%s1075 + $0x18] sm:$0xf]
      %v1083 = vld [vmem:[%s1075 + $0x1c] sm:$0xf]
      %v1084 = vld [vmem:[%s1075 + $0x20] sm:$0xf]
      %v1085 = vld [vmem:[%s1075 + $0x24] sm:$0xf]
      %v1086 = vld [vmem:[%s1075 + $0x28] sm:$0xf]
      %v1087 = vld [vmem:[%s1075 + $0x2c] sm:$0xf]
      %v1088 = vld [vmem:[%s1075 + $0x30] sm:$0xf]
      %v1089 = vld [vmem:[%s1075 + $0x34] sm:$0xf]
      %v1090 = vld [vmem:[%s1075 + $0x38] sm:$0xf]
      %v1091 = vld [vmem:[%s1075 + $0x3c] sm:$0xf]
      %v1108 = vunpack.c.l.b16 %v1076
      %v1109 = vunpack.c.l.b16 %v1077
      %v1110 = vunpack.c.l.b16 %v1078
      %v1111 = vunpack.c.l.b16 %v1079
      %v1112 = vunpack.c.l.b16 %v1080
      %v1113 = vunpack.c.l.b16 %v1081
      %v1114 = vunpack.c.l.b16 %v1082
      %v1115 = vunpack.c.l.b16 %v1083
      %v1116 = vunpack.c.l.b16 %v1084
      %v1117 = vunpack.c.l.b16 %v1085
      %v1118 = vunpack.c.l.b16 %v1086
      %v1119 = vunpack.c.l.b16 %v1087
      %v1120 = vunpack.c.l.b16 %v1088
      %v1121 = vunpack.c.l.b16 %v1089
      %v1122 = vunpack.c.l.b16 %v1090
      %v1123 = vunpack.c.l.b16 %v1091
      %v1124 = vpack.c.b16 %v1109, %v1108
      %v1125 = vpack.c.b16 %v1111, %v1110
      %v1126 = vpack.c.b16 %v1113, %v1112
      %v1127 = vpack.c.b16 %v1115, %v1114
      %v1128 = vpack.c.b16 %v1117, %v1116
      %v1129 = vpack.c.b16 %v1119, %v1118
      %v1130 = vpack.c.b16 %v1121, %v1120
      %v1131 = vpack.c.b16 %v1123, %v1122
      %1140 = vmatprep.subr.bf16.mxu0 0
      %1141 = vmatpush1.bf16.msra.mxu0 %v1131
      %1142 = vmatprep.subr.bf16.mxu0 0
      %1143 = vmatpush1.bf16.msra.mxu0 %v1130
      %1144 = vmatprep.subr.bf16.mxu0 0
      %1145 = vmatpush1.bf16.msra.mxu0 %v1129
      %1146 = vmatprep.subr.bf16.mxu0 0
      %1147 = vmatpush1.bf16.msra.mxu0 %v1128
      %1148 = vmatprep.subr.bf16.mxu0 0
      %1149 = vmatpush1.bf16.msra.mxu0 %v1127
      %1150 = vmatprep.subr.bf16.mxu0 0
      %1151 = vmatpush1.bf16.msra.mxu0 %v1126
      %1152 = vmatprep.subr.bf16.mxu0 0
      %1153 = vmatpush1.bf16.msra.mxu0 %v1125
      %1154 = vmatprep.subr.bf16.mxu0 0
      %1155 = vmatpush1.bf16.msra.mxu0 %v1124
      %1156 = vmatprep.subr.bf16.mxu0 0
      %1157 = vmatpush2.bf16.msra.mxu0 0
      %1158 = vmatprep.subr.bf16.mxu0 0
      %1159 = vmatpush2.bf16.msra.mxu0 0
      %1160 = vmatprep.subr.bf16.mxu0 0
      %1161 = vmatpush2.bf16.msra.mxu0 0
      %1162 = vmatprep.subr.bf16.mxu0 0
      %1163 = vmatpush2.bf16.msra.mxu0 0
      %1164 = vmatprep.subr.bf16.mxu0 0
      %1165 = vmatpush2.bf16.msra.mxu0 0
      %1166 = vmatprep.subr.bf16.mxu0 0
      %1167 = vmatpush2.bf16.msra.mxu0 0
      %1168 = vmatprep.subr.bf16.mxu0 0
      %1169 = vmatpush2.bf16.msra.mxu0 0
      %1170 = vmatprep.subr.bf16.mxu0 0
      %1171 = vmatpush2.bf16.msra.mxu0 0
      %1172 = vmatprep.mubr.bf16.mxu0 0
      %1173 = vmatmul.mubr.bf16.gmra.mxu0 %v1070
      %v1174 = vpop.f32.mrf.mxu0
      %v1175 = vadd.f32 0.0, %v1174
      %v1176 = vpop.f32.mrf.mxu0
      %v1177 = vpop.f32.mrf.mxu0
      %v1178 = vadd.f32 0.0, %v1177
      %v1179 = vpop.f32.mrf.mxu0
      %1180 = vmatprep.mubr.bf16.mxu0 0
      %1181 = vmatmul.mubr.bf16.gmra.mxu0 %v1071
      %v1182 = vpop.f32.mrf.mxu0
      %v1183 = vadd.f32 0.0, %v1182
      %v1184 = vpop.f32.mrf.mxu0
      %v1185 = vpop.f32.mrf.mxu0
      %v1186 = vadd.f32 0.0, %v1185
      %v1187 = vpop.f32.mrf.mxu0
      %1188 = vmatprep.mubr.bf16.mxu0 0
      %1189 = vmatmul.mubr.bf16.gmra.mxu0 %v1072
      %v1190 = vpop.f32.mrf.mxu0
      %v1191 = vadd.f32 0.0, %v1190
      %v1192 = vpop.f32.mrf.mxu0
      %v1193 = vpop.f32.mrf.mxu0
      %v1194 = vadd.f32 0.0, %v1193
      %v1195 = vpop.f32.mrf.mxu0
      %1196 = vmatprep.mubr.bf16.mxu0 0
      %1197 = vmatmul.mubr.bf16.gmra.mxu0 %v1073
      %v1198 = vpop.f32.mrf.mxu0
      %v1199 = vadd.f32 0.0, %v1198
      %v1200 = vpop.f32.mrf.mxu0
      %v1201 = vpop.f32.mrf.mxu0
      %v1202 = vadd.f32 0.0, %v1201
      %v1203 = vpop.f32.mrf.mxu0
      %1204 = vmatprep.mubr.bf16.mxu0 0
      %1205 = vmatmul.mubr.bf16.gmra.mxu0 %v1074
      %v1206 = vpop.f32.mrf.mxu0
      %v1207 = vadd.f32 0.0, %v1206
      %v1208 = vpop.f32.mrf.mxu0
      %v1209 = vpop.f32.mrf.mxu0
      %v1210 = vadd.f32 0.0, %v1209
      %v1211 = vpop.f32.mrf.mxu0
      %1212 = vdwg.mxu0
      %v1213 = vadd.f32 %v1050, %v1175
      %v1214 = vadd.f32 %v1051, %v1178
      %v1215 = vadd.f32 %v1052, %v1183
      %v1216 = vadd.f32 %v1053, %v1186
      %v1217 = vadd.f32 %v1054, %v1191
      %v1218 = vadd.f32 %v1055, %v1194
      %v1219 = vadd.f32 %v1056, %v1199
      %v1220 = vadd.f32 %v1057, %v1202
      %v1221 = vadd.f32 %v1058, %v1207
      %v1222 = vadd.f32 %v1059, %v1210
      %v1223 = vld [vmem:[%s4] sm:$0x1]
      %v1225 = vlaneseq
      %v1226 = vshrl.u32 %v1225, 7
      %v1227 = vsub.s32 0, %v1226
      %v1228 = vrot.slane %v1223, %v1227
      %v1230 = vadd.f32 %v1213, %v1228
      %v1231 = vadd.f32 %v1214, %v1228
      %v1232 = vadd.f32 %v1215, %v1228
      %v1233 = vadd.f32 %v1216, %v1228
      %v1234 = vadd.f32 %v1217, %v1228
      %v1235 = vadd.f32 %v1218, %v1228
      %v1236 = vadd.f32 %v1219, %v1228
      %v1237 = vadd.f32 %v1220, %v1228
      %v1238 = vadd.f32 %v1221, %v1228
      %v1239 = vadd.f32 %v1222, %v1228
      %v1240 = vmax.f32 %v1230, 0.0
      %v1241 = vmax.f32 %v1231, 0.0
      %v1242 = vmax.f32 %v1232, 0.0
      %v1243 = vmax.f32 %v1233, 0.0
      %v1244 = vmax.f32 %v1234, 0.0
      %v1245 = vmax.f32 %v1235, 0.0
      %v1246 = vmax.f32 %v1236, 0.0
      %v1247 = vmax.f32 %v1237, 0.0
      %v1248 = vmax.f32 %v1238, 0.0
      %v1249 = vmax.f32 %v1239, 0.0
      %vm1250 = vcmask 523264
      %1251 = vst.msk [vmem:[#allocation3] sm:$0xff] %vm1250, %v1240
      %1252 = vst.msk [vmem:[#allocation3 + $0x8] sm:$0xff] %vm1250, %v1241
      %1253 = vst.msk [vmem:[#allocation3 + $0x10] sm:$0xff] %vm1250, %v1242
      %1254 = vst.msk [vmem:[#allocation3 + $0x18] sm:$0xff] %vm1250, %v1243
      %1255 = vst.msk [vmem:[#allocation3 + $0x20] sm:$0xff] %vm1250, %v1244
      %1256 = vst.msk [vmem:[#allocation3 + $0x28] sm:$0xff] %vm1250, %v1245
      %1257 = vst.msk [vmem:[#allocation3 + $0x30] sm:$0xff] %vm1250, %v1246
      %1258 = vst.msk [vmem:[#allocation3 + $0x38] sm:$0xff] %vm1250, %v1247
      %1259 = vst.msk [vmem:[#allocation3 + $0x40] sm:$0xff] %vm1250, %v1248
      %vm1260 = vcmask 520192
      %1261 = vst.msk [vmem:[#allocation3 + $0x48] sm:$0x1f] %vm1260, %v1249
      %v1262 = vld [vmem:[#allocation3] sm:$0xff]
      %v1263 = vld [vmem:[#allocation3 + $0x8] sm:$0xff]
      %v1264 = vld [vmem:[#allocation3 + $0x10] sm:$0xff]
      %v1265 = vld [vmem:[#allocation3 + $0x18] sm:$0xff]
      %v1266 = vld [vmem:[#allocation3 + $0x20] sm:$0xff]
      %v1267 = vld [vmem:[#allocation3 + $0x28] sm:$0xff]
      %v1268 = vld [vmem:[#allocation3 + $0x30] sm:$0x1]
      %v1269 = vpack.c.bf16 %v1263, %v1262
      %v1270 = vpack.c.bf16 %v1265, %v1264
      %v1271 = vpack.c.bf16 %v1267, %v1266
      %v1272 = vpack.c.bf16 %v1268, %v1268
      %v1273 = vld [vmem:[%s5] sm:$0xf]
      %v1274 = vld [vmem:[%s5 + $0x4] sm:$0xf]
      %v1275 = vld [vmem:[%s5 + $0x8] sm:$0xf]
      %v1276 = vld [vmem:[%s5 + $0xc] sm:$0xf]
      %v1277 = vld [vmem:[%s5 + $0x10] sm:$0xf]
      %v1278 = vld [vmem:[%s5 + $0x14] sm:$0xf]
      %v1279 = vld [vmem:[%s5 + $0x18] sm:$0xf]
      %v1280 = vld [vmem:[%s5 + $0x1c] sm:$0xf]
      %v1281 = vld [vmem:[#allocation3 + $0x1] sm:$0xff]
      %v1282 = vld [vmem:[#allocation3 + $0x9] sm:$0xff]
      %v1283 = vld [vmem:[#allocation3 + $0x11] sm:$0xff]
      %v1284 = vld [vmem:[#allocation3 + $0x19] sm:$0xff]
      %v1285 = vld [vmem:[#allocation3 + $0x21] sm:$0xff]
      %v1286 = vld [vmem:[#allocation3 + $0x29] sm:$0xff]
      %v1287 = vld [vmem:[#allocation3 + $0x31] sm:$0x1]
      %v1288 = vpack.c.bf16 %v1282, %v1281
      %v1289 = vpack.c.bf16 %v1284, %v1283
      %v1290 = vpack.c.bf16 %v1286, %v1285
      %v1291 = vpack.c.bf16 %v1287, %v1287
      %s1292 = scalar_lea.vmem %s5, 32
      %v1293 = vld [vmem:[%s1292] sm:$0xf]
      %v1294 = vld [vmem:[%s1292 + $0x4] sm:$0xf]
      %v1295 = vld [vmem:[%s1292 + $0x8] sm:$0xf]
      %v1296 = vld [vmem:[%s1292 + $0xc] sm:$0xf]
      %v1297 = vld [vmem:[%s1292 + $0x10] sm:$0xf]
      %v1298 = vld [vmem:[%s1292 + $0x14] sm:$0xf]
      %v1299 = vld [vmem:[%s1292 + $0x18] sm:$0xf]
      %v1300 = vld [vmem:[%s1292 + $0x1c] sm:$0xf]
      %v1309 = vunpack.c.l.b16 %v1293
      %v1310 = vunpack.c.l.b16 %v1294
      %v1311 = vunpack.c.l.b16 %v1295
      %v1312 = vunpack.c.l.b16 %v1296
      %v1313 = vunpack.c.l.b16 %v1297
      %v1314 = vunpack.c.l.b16 %v1298
      %v1315 = vunpack.c.l.b16 %v1299
      %v1316 = vunpack.c.l.b16 %v1300
      %v1317 = vpack.c.b16 %v1310, %v1309
      %v1318 = vpack.c.b16 %v1312, %v1311
      %v1319 = vpack.c.b16 %v1314, %v1313
      %v1320 = vpack.c.b16 %v1316, %v1315
      %v1326 = vsel %vm1250, %v1288, 0
      %v1329 = vsel %vm1250, %v1289, 0
      %v1332 = vsel %vm1250, %v1290, 0
      %v1335 = vsel %vm1250, %v1291, 0
      %1337 = vmatprep.subr.bf16.mxu0 0
      %1338 = vmatpush1.bf16.msra.mxu0 0
      %1339 = vmatprep.subr.bf16.mxu0 0
      %1340 = vmatpush1.bf16.msra.mxu0 0
      %1341 = vmatprep.subr.bf16.mxu0 0
      %1342 = vmatpush1.bf16.msra.mxu0 0
      %1343 = vmatprep.subr.bf16.mxu0 0
      %1344 = vmatpush1.bf16.msra.mxu0 0
      %1345 = vmatprep.subr.bf16.mxu0 0
      %1346 = vmatpush1.bf16.msra.mxu0 %v1320
      %1347 = vmatprep.subr.bf16.mxu0 0
      %1348 = vmatpush1.bf16.msra.mxu0 %v1319
      %1349 = vmatprep.subr.bf16.mxu0 0
      %1350 = vmatpush1.bf16.msra.mxu0 %v1318
      %1351 = vmatprep.subr.bf16.mxu0 0
      %1352 = vmatpush1.bf16.msra.mxu0 %v1317
      %1353 = vmatprep.subr.bf16.mxu0 0
      %1354 = vmatpush2.bf16.msra.mxu0 0
      %1355 = vmatprep.subr.bf16.mxu0 0
      %1356 = vmatpush2.bf16.msra.mxu0 0
      %1357 = vmatprep.subr.bf16.mxu0 0
      %1358 = vmatpush2.bf16.msra.mxu0 0
      %1359 = vmatprep.subr.bf16.mxu0 0
      %1360 = vmatpush2.bf16.msra.mxu0 0
      %1361 = vmatprep.subr.bf16.mxu0 0
      %1362 = vmatpush2.bf16.msra.mxu0 0
      %1363 = vmatprep.subr.bf16.mxu0 0
      %1364 = vmatpush2.bf16.msra.mxu0 0
      %1365 = vmatprep.subr.bf16.mxu0 0
      %1366 = vmatpush2.bf16.msra.mxu0 0
      %1367 = vmatprep.subr.bf16.mxu0 0
      %1368 = vmatpush2.bf16.msra.mxu0 0
      %1369 = vmatprep.mubr.bf16.mxu0 0
      %1370 = vmatmul.mubr.bf16.gmra.mxu0 %v1326
      %v1371 = vpop.f32.mrf.mxu0
      %v1372 = vadd.f32 0.0, %v1371
      %v1373 = vpop.f32.mrf.mxu0
      %v1374 = vpop.f32.mrf.mxu0
      %v1375 = vadd.f32 0.0, %v1374
      %v1376 = vpop.f32.mrf.mxu0
      %1377 = vmatprep.mubr.bf16.mxu0 0
      %1378 = vmatmul.mubr.bf16.gmra.mxu0 %v1329
      %v1379 = vpop.f32.mrf.mxu0
      %v1380 = vadd.f32 0.0, %v1379
      %v1381 = vpop.f32.mrf.mxu0
      %v1382 = vpop.f32.mrf.mxu0
      %v1383 = vadd.f32 0.0, %v1382
      %v1384 = vpop.f32.mrf.mxu0
      %1385 = vmatprep.mubr.bf16.mxu0 0
      %1386 = vmatmul.mubr.bf16.gmra.mxu0 %v1332
      %v1387 = vpop.f32.mrf.mxu0
      %v1388 = vadd.f32 0.0, %v1387
      %v1389 = vpop.f32.mrf.mxu0
      %v1390 = vpop.f32.mrf.mxu0
      %v1391 = vadd.f32 0.0, %v1390
      %v1392 = vpop.f32.mrf.mxu0
      %1393 = vmatprep.mubr.bf16.mxu0 0
      %1394 = vmatmul.mubr.bf16.gmra.mxu0 %v1335
      %v1395 = vpop.f32.mrf.mxu0
      %v1396 = vadd.f32 0.0, %v1395
      %v1397 = vpop.f32.mrf.mxu0
      %v1398 = vpop.f32.mrf.mxu0
      %v1399 = vpop.f32.mrf.mxu0
      %1400 = vdwg.mxu0
      %v1409 = vunpack.c.l.b16 %v1273
      %v1410 = vunpack.c.l.b16 %v1274
      %v1411 = vunpack.c.l.b16 %v1275
      %v1412 = vunpack.c.l.b16 %v1276
      %v1413 = vunpack.c.l.b16 %v1277
      %v1414 = vunpack.c.l.b16 %v1278
      %v1415 = vunpack.c.l.b16 %v1279
      %v1416 = vunpack.c.l.b16 %v1280
      %v1417 = vpack.c.b16 %v1410, %v1409
      %v1418 = vpack.c.b16 %v1412, %v1411
      %v1419 = vpack.c.b16 %v1414, %v1413
      %v1420 = vpack.c.b16 %v1416, %v1415
      %v1426 = vsel %vm1250, %v1269, 0
      %v1429 = vsel %vm1250, %v1270, 0
      %v1432 = vsel %vm1250, %v1271, 0
      %v1435 = vsel %vm1250, %v1272, 0
      %1437 = vmatprep.subr.bf16.mxu0 0
      %1438 = vmatpush1.bf16.msra.mxu0 0
      %1439 = vmatprep.subr.bf16.mxu0 0
      %1440 = vmatpush1.bf16.msra.mxu0 0
      %1441 = vmatprep.subr.bf16.mxu0 0
      %1442 = vmatpush1.bf16.msra.mxu0 0
      %1443 = vmatprep.subr.bf16.mxu0 0
      %1444 = vmatpush1.bf16.msra.mxu0 0
      %1445 = vmatprep.subr.bf16.mxu0 0
      %1446 = vmatpush1.bf16.msra.mxu0 %v1420
      %1447 = vmatprep.subr.bf16.mxu0 0
      %1448 = vmatpush1.bf16.msra.mxu0 %v1419
      %1449 = vmatprep.subr.bf16.mxu0 0
      %1450 = vmatpush1.bf16.msra.mxu0 %v1418
      %1451 = vmatprep.subr.bf16.mxu0 0
      %1452 = vmatpush1.bf16.msra.mxu0 %v1417
      %1453 = vmatprep.subr.bf16.mxu0 0
      %1454 = vmatpush2.bf16.msra.mxu0 0
      %1455 = vmatprep.subr.bf16.mxu0 0
      %1456 = vmatpush2.bf16.msra.mxu0 0
      %1457 = vmatprep.subr.bf16.mxu0 0
      %1458 = vmatpush2.bf16.msra.mxu0 0
      %1459 = vmatprep.subr.bf16.mxu0 0
      %1460 = vmatpush2.bf16.msra.mxu0 0
      %1461 = vmatprep.subr.bf16.mxu0 0
      %1462 = vmatpush2.bf16.msra.mxu0 0
      %1463 = vmatprep.subr.bf16.mxu0 0
      %1464 = vmatpush2.bf16.msra.mxu0 0
      %1465 = vmatprep.subr.bf16.mxu0 0
      %1466 = vmatpush2.bf16.msra.mxu0 0
      %1467 = vmatprep.subr.bf16.mxu0 0
      %1468 = vmatpush2.bf16.msra.mxu0 0
      %1469 = vmatprep.mubr.bf16.mxu0 0
      %1470 = vmatmul.mubr.bf16.gmra.mxu0 %v1426
      %v1471 = vpop.f32.mrf.mxu0
      %v1472 = vadd.f32 %v1372, %v1471
      %v1473 = vpop.f32.mrf.mxu0
      %v1474 = vpop.f32.mrf.mxu0
      %v1475 = vadd.f32 %v1375, %v1474
      %v1476 = vpop.f32.mrf.mxu0
      %1477 = vmatprep.mubr.bf16.mxu0 0
      %1478 = vmatmul.mubr.bf16.gmra.mxu0 %v1429
      %v1479 = vpop.f32.mrf.mxu0
      %v1480 = vadd.f32 %v1380, %v1479
      %v1481 = vpop.f32.mrf.mxu0
      %v1482 = vpop.f32.mrf.mxu0
      %v1483 = vadd.f32 %v1383, %v1482
      %v1484 = vpop.f32.mrf.mxu0
      %1485 = vmatprep.mubr.bf16.mxu0 0
      %1486 = vmatmul.mubr.bf16.gmra.mxu0 %v1432
      %v1487 = vpop.f32.mrf.mxu0
      %v1488 = vadd.f32 %v1388, %v1487
      %v1489 = vpop.f32.mrf.mxu0
      %v1490 = vpop.f32.mrf.mxu0
      %v1491 = vadd.f32 %v1391, %v1490
      %v1492 = vpop.f32.mrf.mxu0
      %1493 = vmatprep.mubr.bf16.mxu0 0
      %1494 = vmatmul.mubr.bf16.gmra.mxu0 %v1435
      %v1495 = vpop.f32.mrf.mxu0
      %v1496 = vadd.f32 %v1396, %v1495
      %v1497 = vpop.f32.mrf.mxu0
      %v1498 = vpop.f32.mrf.mxu0
      %v1499 = vpop.f32.mrf.mxu0
      %1500 = vdwg.mxu0
      %v1501 = vld [vmem:[#allocation3 + $0x2] sm:$0xff]
      %v1502 = vld [vmem:[#allocation3 + $0xa] sm:$0xff]
      %v1503 = vld [vmem:[#allocation3 + $0x12] sm:$0xff]
      %v1504 = vld [vmem:[#allocation3 + $0x1a] sm:$0xff]
      %v1505 = vld [vmem:[#allocation3 + $0x22] sm:$0xff]
      %v1506 = vld [vmem:[#allocation3 + $0x2a] sm:$0xff]
      %v1507 = vld [vmem:[#allocation3 + $0x32] sm:$0x1]
      %v1508 = vpack.c.bf16 %v1502, %v1501
      %v1509 = vpack.c.bf16 %v1504, %v1503
      %v1510 = vpack.c.bf16 %v1506, %v1505
      %v1511 = vpack.c.bf16 %v1507, %v1507
      %s1512 = scalar_lea.vmem %s5, 64
      %v1513 = vld [vmem:[%s1512] sm:$0xf]
      %v1514 = vld [vmem:[%s1512 + $0x4] sm:$0xf]
      %v1515 = vld [vmem:[%s1512 + $0x8] sm:$0xf]
      %v1516 = vld [vmem:[%s1512 + $0xc] sm:$0xf]
      %v1517 = vld [vmem:[%s1512 + $0x10] sm:$0xf]
      %v1518 = vld [vmem:[%s1512 + $0x14] sm:$0xf]
      %v1519 = vld [vmem:[%s1512 + $0x18] sm:$0xf]
      %v1520 = vld [vmem:[%s1512 + $0x1c] sm:$0xf]
      %v1529 = vunpack.c.l.b16 %v1513
      %v1530 = vunpack.c.l.b16 %v1514
      %v1531 = vunpack.c.l.b16 %v1515
      %v1532 = vunpack.c.l.b16 %v1516
      %v1533 = vunpack.c.l.b16 %v1517
      %v1534 = vunpack.c.l.b16 %v1518
      %v1535 = vunpack.c.l.b16 %v1519
      %v1536 = vunpack.c.l.b16 %v1520
      %v1537 = vpack.c.b16 %v1530, %v1529
      %v1538 = vpack.c.b16 %v1532, %v1531
      %v1539 = vpack.c.b16 %v1534, %v1533
      %v1540 = vpack.c.b16 %v1536, %v1535
      %v1546 = vsel %vm1250, %v1508, 0
      %v1549 = vsel %vm1250, %v1509, 0
      %v1552 = vsel %vm1250, %v1510, 0
      %v1555 = vsel %vm1250, %v1511, 0
      %1557 = vmatprep.subr.bf16.mxu0 0
      %1558 = vmatpush1.bf16.msra.mxu0 0
      %1559 = vmatprep.subr.bf16.mxu0 0
      %1560 = vmatpush1.bf16.msra.mxu0 0
      %1561 = vmatprep.subr.bf16.mxu0 0
      %1562 = vmatpush1.bf16.msra.mxu0 0
      %1563 = vmatprep.subr.bf16.mxu0 0
      %1564 = vmatpush1.bf16.msra.mxu0 0
      %1565 = vmatprep.subr.bf16.mxu0 0
      %1566 = vmatpush1.bf16.msra.mxu0 %v1540
      %1567 = vmatprep.subr.bf16.mxu0 0
      %1568 = vmatpush1.bf16.msra.mxu0 %v1539
      %1569 = vmatprep.subr.bf16.mxu0 0
      %1570 = vmatpush1.bf16.msra.mxu0 %v1538
      %1571 = vmatprep.subr.bf16.mxu0 0
      %1572 = vmatpush1.bf16.msra.mxu0 %v1537
      %1573 = vmatprep.subr.bf16.mxu0 0
      %1574 = vmatpush2.bf16.msra.mxu0 0
      %1575 = vmatprep.subr.bf16.mxu0 0
      %1576 = vmatpush2.bf16.msra.mxu0 0
      %1577 = vmatprep.subr.bf16.mxu0 0
      %1578 = vmatpush2.bf16.msra.mxu0 0
      %1579 = vmatprep.subr.bf16.mxu0 0
      %1580 = vmatpush2.bf16.msra.mxu0 0
      %1581 = vmatprep.subr.bf16.mxu0 0
      %1582 = vmatpush2.bf16.msra.mxu0 0
      %1583 = vmatprep.subr.bf16.mxu0 0
      %1584 = vmatpush2.bf16.msra.mxu0 0
      %1585 = vmatprep.subr.bf16.mxu0 0
      %1586 = vmatpush2.bf16.msra.mxu0 0
      %1587 = vmatprep.subr.bf16.mxu0 0
      %1588 = vmatpush2.bf16.msra.mxu0 0
      %1589 = vmatprep.mubr.bf16.mxu0 0
      %1590 = vmatmul.mubr.bf16.gmra.mxu0 %v1546
      %v1591 = vpop.f32.mrf.mxu0
      %v1592 = vadd.f32 0.0, %v1591
      %v1593 = vpop.f32.mrf.mxu0
      %v1594 = vpop.f32.mrf.mxu0
      %v1595 = vadd.f32 0.0, %v1594
      %v1596 = vpop.f32.mrf.mxu0
      %1597 = vmatprep.mubr.bf16.mxu0 0
      %1598 = vmatmul.mubr.bf16.gmra.mxu0 %v1549
      %v1599 = vpop.f32.mrf.mxu0
      %v1600 = vadd.f32 0.0, %v1599
      %v1601 = vpop.f32.mrf.mxu0
      %v1602 = vpop.f32.mrf.mxu0
      %v1603 = vadd.f32 0.0, %v1602
      %v1604 = vpop.f32.mrf.mxu0
      %1605 = vmatprep.mubr.bf16.mxu0 0
      %1606 = vmatmul.mubr.bf16.gmra.mxu0 %v1552
      %v1607 = vpop.f32.mrf.mxu0
      %v1608 = vadd.f32 0.0, %v1607
      %v1609 = vpop.f32.mrf.mxu0
      %v1610 = vpop.f32.mrf.mxu0
      %v1611 = vadd.f32 0.0, %v1610
      %v1612 = vpop.f32.mrf.mxu0
      %1613 = vmatprep.mubr.bf16.mxu0 0
      %1614 = vmatmul.mubr.bf16.gmra.mxu0 %v1555
      %v1615 = vpop.f32.mrf.mxu0
      %v1616 = vadd.f32 0.0, %v1615
      %v1617 = vpop.f32.mrf.mxu0
      %v1618 = vpop.f32.mrf.mxu0
      %v1619 = vpop.f32.mrf.mxu0
      %1620 = vdwg.mxu0
      %v1621 = vadd.f32 %v1472, %v1592
      %v1622 = vadd.f32 %v1475, %v1595
      %v1623 = vadd.f32 %v1480, %v1600
      %v1624 = vadd.f32 %v1483, %v1603
      %v1625 = vadd.f32 %v1488, %v1608
      %v1626 = vadd.f32 %v1491, %v1611
      %v1627 = vadd.f32 %v1496, %v1616
      %v1628 = vld [vmem:[#allocation3 + $0xd] sm:$0xff]
      %v1629 = vld [vmem:[#allocation3 + $0x15] sm:$0xff]
      %v1630 = vld [vmem:[#allocation3 + $0x1d] sm:$0xff]
      %v1631 = vld [vmem:[#allocation3 + $0x25] sm:$0xff]
      %v1632 = vld [vmem:[#allocation3 + $0x2d] sm:$0xff]
      %v1633 = vld [vmem:[#allocation3 + $0x35] sm:$0xff]
      %v1634 = vld [vmem:[#allocation3 + $0x3d] sm:$0x1]
      %v1635 = vpack.c.bf16 %v1629, %v1628
      %v1636 = vpack.c.bf16 %v1631, %v1630
      %v1637 = vpack.c.bf16 %v1633, %v1632
      %v1638 = vpack.c.bf16 %v1634, %v1634
      %s1639 = scalar_lea.vmem %s5, 96
      %v1640 = vld [vmem:[%s1639] sm:$0xf]
      %v1641 = vld [vmem:[%s1639 + $0x4] sm:$0xf]
      %v1642 = vld [vmem:[%s1639 + $0x8] sm:$0xf]
      %v1643 = vld [vmem:[%s1639 + $0xc] sm:$0xf]
      %v1644 = vld [vmem:[%s1639 + $0x10] sm:$0xf]
      %v1645 = vld [vmem:[%s1639 + $0x14] sm:$0xf]
      %v1646 = vld [vmem:[%s1639 + $0x18] sm:$0xf]
      %v1647 = vld [vmem:[%s1639 + $0x1c] sm:$0xf]
      %v1656 = vunpack.c.l.b16 %v1640
      %v1657 = vunpack.c.l.b16 %v1641
      %v1658 = vunpack.c.l.b16 %v1642
      %v1659 = vunpack.c.l.b16 %v1643
      %v1660 = vunpack.c.l.b16 %v1644
      %v1661 = vunpack.c.l.b16 %v1645
      %v1662 = vunpack.c.l.b16 %v1646
      %v1663 = vunpack.c.l.b16 %v1647
      %v1664 = vpack.c.b16 %v1657, %v1656
      %v1665 = vpack.c.b16 %v1659, %v1658
      %v1666 = vpack.c.b16 %v1661, %v1660
      %v1667 = vpack.c.b16 %v1663, %v1662
      %v1673 = vsel %vm1250, %v1635, 0
      %v1676 = vsel %vm1250, %v1636, 0
      %v1679 = vsel %vm1250, %v1637, 0
      %v1682 = vsel %vm1250, %v1638, 0
      %1684 = vmatprep.subr.bf16.mxu0 0
      %1685 = vmatpush1.bf16.msra.mxu0 0
      %1686 = vmatprep.subr.bf16.mxu0 0
      %1687 = vmatpush1.bf16.msra.mxu0 0
      %1688 = vmatprep.subr.bf16.mxu0 0
      %1689 = vmatpush1.bf16.msra.mxu0 0
      %1690 = vmatprep.subr.bf16.mxu0 0
      %1691 = vmatpush1.bf16.msra.mxu0 0
      %1692 = vmatprep.subr.bf16.mxu0 0
      %1693 = vmatpush1.bf16.msra.mxu0 %v1667
      %1694 = vmatprep.subr.bf16.mxu0 0
      %1695 = vmatpush1.bf16.msra.mxu0 %v1666
      %1696 = vmatprep.subr.bf16.mxu0 0
      %1697 = vmatpush1.bf16.msra.mxu0 %v1665
      %1698 = vmatprep.subr.bf16.mxu0 0
      %1699 = vmatpush1.bf16.msra.mxu0 %v1664
      %1700 = vmatprep.subr.bf16.mxu0 0
      %1701 = vmatpush2.bf16.msra.mxu0 0
      %1702 = vmatprep.subr.bf16.mxu0 0
      %1703 = vmatpush2.bf16.msra.mxu0 0
      %1704 = vmatprep.subr.bf16.mxu0 0
      %1705 = vmatpush2.bf16.msra.mxu0 0
      %1706 = vmatprep.subr.bf16.mxu0 0
      %1707 = vmatpush2.bf16.msra.mxu0 0
      %1708 = vmatprep.subr.bf16.mxu0 0
      %1709 = vmatpush2.bf16.msra.mxu0 0
      %1710 = vmatprep.subr.bf16.mxu0 0
      %1711 = vmatpush2.bf16.msra.mxu0 0
      %1712 = vmatprep.subr.bf16.mxu0 0
      %1713 = vmatpush2.bf16.msra.mxu0 0
      %1714 = vmatprep.subr.bf16.mxu0 0
      %1715 = vmatpush2.bf16.msra.mxu0 0
      %1716 = vmatprep.mubr.bf16.mxu0 0
      %1717 = vmatmul.mubr.bf16.gmra.mxu0 %v1673
      %v1718 = vpop.f32.mrf.mxu0
      %v1719 = vadd.f32 0.0, %v1718
      %v1720 = vpop.f32.mrf.mxu0
      %v1721 = vpop.f32.mrf.mxu0
      %v1722 = vadd.f32 0.0, %v1721
      %v1723 = vpop.f32.mrf.mxu0
      %1724 = vmatprep.mubr.bf16.mxu0 0
      %1725 = vmatmul.mubr.bf16.gmra.mxu0 %v1676
      %v1726 = vpop.f32.mrf.mxu0
      %v1727 = vadd.f32 0.0, %v1726
      %v1728 = vpop.f32.mrf.mxu0
      %v1729 = vpop.f32.mrf.mxu0
      %v1730 = vadd.f32 0.0, %v1729
      %v1731 = vpop.f32.mrf.mxu0
      %1732 = vmatprep.mubr.bf16.mxu0 0
      %1733 = vmatmul.mubr.bf16.gmra.mxu0 %v1679
      %v1734 = vpop.f32.mrf.mxu0
      %v1735 = vadd.f32 0.0, %v1734
      %v1736 = vpop.f32.mrf.mxu0
      %v1737 = vpop.f32.mrf.mxu0
      %v1738 = vadd.f32 0.0, %v1737
      %v1739 = vpop.f32.mrf.mxu0
      %1740 = vmatprep.mubr.bf16.mxu0 0
      %1741 = vmatmul.mubr.bf16.gmra.mxu0 %v1682
      %v1742 = vpop.f32.mrf.mxu0
      %v1743 = vadd.f32 0.0, %v1742
      %v1744 = vpop.f32.mrf.mxu0
      %v1745 = vpop.f32.mrf.mxu0
      %v1746 = vpop.f32.mrf.mxu0
      %1747 = vdwg.mxu0
      %v1748 = vadd.f32 %v1621, %v1719
      %v1749 = vadd.f32 %v1622, %v1722
      %v1750 = vadd.f32 %v1623, %v1727
      %v1751 = vadd.f32 %v1624, %v1730
      %v1752 = vadd.f32 %v1625, %v1735
      %v1753 = vadd.f32 %v1626, %v1738
      %v1754 = vadd.f32 %v1627, %v1743
      %v1755 = vld [vmem:[#allocation3 + $0xe] sm:$0xff]
      %v1756 = vld [vmem:[#allocation3 + $0x16] sm:$0xff]
      %v1757 = vld [vmem:[#allocation3 + $0x1e] sm:$0xff]
      %v1758 = vld [vmem:[#allocation3 + $0x26] sm:$0xff]
      %v1759 = vld [vmem:[#allocation3 + $0x2e] sm:$0xff]
      %v1760 = vld [vmem:[#allocation3 + $0x36] sm:$0xff]
      %v1761 = vld [vmem:[#allocation3 + $0x3e] sm:$0x1]
      %v1762 = vpack.c.bf16 %v1756, %v1755
      %v1763 = vpack.c.bf16 %v1758, %v1757
      %v1764 = vpack.c.bf16 %v1760, %v1759
      %v1765 = vpack.c.bf16 %v1761, %v1761
      %s1766 = scalar_lea.vmem %s5, 128
      %v1767 = vld [vmem:[%s1766] sm:$0xf]
      %v1768 = vld [vmem:[%s1766 + $0x4] sm:$0xf]
      %v1769 = vld [vmem:[%s1766 + $0x8] sm:$0xf]
      %v1770 = vld [vmem:[%s1766 + $0xc] sm:$0xf]
      %v1771 = vld [vmem:[%s1766 + $0x10] sm:$0xf]
      %v1772 = vld [vmem:[%s1766 + $0x14] sm:$0xf]
      %v1773 = vld [vmem:[%s1766 + $0x18] sm:$0xf]
      %v1774 = vld [vmem:[%s1766 + $0x1c] sm:$0xf]
      %v1783 = vunpack.c.l.b16 %v1767
      %v1784 = vunpack.c.l.b16 %v1768
      %v1785 = vunpack.c.l.b16 %v1769
      %v1786 = vunpack.c.l.b16 %v1770
      %v1787 = vunpack.c.l.b16 %v1771
      %v1788 = vunpack.c.l.b16 %v1772
      %v1789 = vunpack.c.l.b16 %v1773
      %v1790 = vunpack.c.l.b16 %v1774
      %v1791 = vpack.c.b16 %v1784, %v1783
      %v1792 = vpack.c.b16 %v1786, %v1785
      %v1793 = vpack.c.b16 %v1788, %v1787
      %v1794 = vpack.c.b16 %v1790, %v1789
      %v1800 = vsel %vm1250, %v1762, 0
      %v1803 = vsel %vm1250, %v1763, 0
      %v1806 = vsel %vm1250, %v1764, 0
      %v1809 = vsel %vm1250, %v1765, 0
      %1811 = vmatprep.subr.bf16.mxu0 0
      %1812 = vmatpush1.bf16.msra.mxu0 0
      %1813 = vmatprep.subr.bf16.mxu0 0
      %1814 = vmatpush1.bf16.msra.mxu0 0
      %1815 = vmatprep.subr.bf16.mxu0 0
      %1816 = vmatpush1.bf16.msra.mxu0 0
      %1817 = vmatprep.subr.bf16.mxu0 0
      %1818 = vmatpush1.bf16.msra.mxu0 0
      %1819 = vmatprep.subr.bf16.mxu0 0
      %1820 = vmatpush1.bf16.msra.mxu0 %v1794
      %1821 = vmatprep.subr.bf16.mxu0 0
      %1822 = vmatpush1.bf16.msra.mxu0 %v1793
      %1823 = vmatprep.subr.bf16.mxu0 0
      %1824 = vmatpush1.bf16.msra.mxu0 %v1792
      %1825 = vmatprep.subr.bf16.mxu0 0
      %1826 = vmatpush1.bf16.msra.mxu0 %v1791
      %1827 = vmatprep.subr.bf16.mxu0 0
      %1828 = vmatpush2.bf16.msra.mxu0 0
      %1829 = vmatprep.subr.bf16.mxu0 0
      %1830 = vmatpush2.bf16.msra.mxu0 0
      %1831 = vmatprep.subr.bf16.mxu0 0
      %1832 = vmatpush2.bf16.msra.mxu0 0
      %1833 = vmatprep.subr.bf16.mxu0 0
      %1834 = vmatpush2.bf16.msra.mxu0 0
      %1835 = vmatprep.subr.bf16.mxu0 0
      %1836 = vmatpush2.bf16.msra.mxu0 0
      %1837 = vmatprep.subr.bf16.mxu0 0
      %1838 = vmatpush2.bf16.msra.mxu0 0
      %1839 = vmatprep.subr.bf16.mxu0 0
      %1840 = vmatpush2.bf16.msra.mxu0 0
      %1841 = vmatprep.subr.bf16.mxu0 0
      %1842 = vmatpush2.bf16.msra.mxu0 0
      %1843 = vmatprep.mubr.bf16.mxu0 0
      %1844 = vmatmul.mubr.bf16.gmra.mxu0 %v1800
      %v1845 = vpop.f32.mrf.mxu0
      %v1846 = vadd.f32 0.0, %v1845
      %v1847 = vpop.f32.mrf.mxu0
      %v1848 = vpop.f32.mrf.mxu0
      %v1849 = vadd.f32 0.0, %v1848
      %v1850 = vpop.f32.mrf.mxu0
      %1851 = vmatprep.mubr.bf16.mxu0 0
      %1852 = vmatmul.mubr.bf16.gmra.mxu0 %v1803
      %v1853 = vpop.f32.mrf.mxu0
      %v1854 = vadd.f32 0.0, %v1853
      %v1855 = vpop.f32.mrf.mxu0
      %v1856 = vpop.f32.mrf.mxu0
      %v1857 = vadd.f32 0.0, %v1856
      %v1858 = vpop.f32.mrf.mxu0
      %1859 = vmatprep.mubr.bf16.mxu0 0
      %1860 = vmatmul.mubr.bf16.gmra.mxu0 %v1806
      %v1861 = vpop.f32.mrf.mxu0
      %v1862 = vadd.f32 0.0, %v1861
      %v1863 = vpop.f32.mrf.mxu0
      %v1864 = vpop.f32.mrf.mxu0
      %v1865 = vadd.f32 0.0, %v1864
      %v1866 = vpop.f32.mrf.mxu0
      %1867 = vmatprep.mubr.bf16.mxu0 0
      %1868 = vmatmul.mubr.bf16.gmra.mxu0 %v1809
      %v1869 = vpop.f32.mrf.mxu0
      %v1870 = vadd.f32 0.0, %v1869
      %v1871 = vpop.f32.mrf.mxu0
      %v1872 = vpop.f32.mrf.mxu0
      %v1873 = vpop.f32.mrf.mxu0
      %1874 = vdwg.mxu0
      %v1875 = vadd.f32 %v1748, %v1846
      %v1876 = vadd.f32 %v1749, %v1849
      %v1877 = vadd.f32 %v1750, %v1854
      %v1878 = vadd.f32 %v1751, %v1857
      %v1879 = vadd.f32 %v1752, %v1862
      %v1880 = vadd.f32 %v1753, %v1865
      %v1881 = vadd.f32 %v1754, %v1870
      %v1882 = vld [vmem:[#allocation3 + $0xf] sm:$0xff]
      %v1883 = vld [vmem:[#allocation3 + $0x17] sm:$0xff]
      %v1884 = vld [vmem:[#allocation3 + $0x1f] sm:$0xff]
      %v1885 = vld [vmem:[#allocation3 + $0x27] sm:$0xff]
      %v1886 = vld [vmem:[#allocation3 + $0x2f] sm:$0xff]
      %v1887 = vld [vmem:[#allocation3 + $0x37] sm:$0xff]
      %v1888 = vld [vmem:[#allocation3 + $0x3f] sm:$0x1]
      %v1889 = vpack.c.bf16 %v1883, %v1882
      %v1890 = vpack.c.bf16 %v1885, %v1884
      %v1891 = vpack.c.bf16 %v1887, %v1886
      %v1892 = vpack.c.bf16 %v1888, %v1888
      %s1893 = scalar_lea.vmem %s5, 160
      %v1894 = vld [vmem:[%s1893] sm:$0xf]
      %v1895 = vld [vmem:[%s1893 + $0x4] sm:$0xf]
      %v1896 = vld [vmem:[%s1893 + $0x8] sm:$0xf]
      %v1897 = vld [vmem:[%s1893 + $0xc] sm:$0xf]
      %v1898 = vld [vmem:[%s1893 + $0x10] sm:$0xf]
      %v1899 = vld [vmem:[%s1893 + $0x14] sm:$0xf]
      %v1900 = vld [vmem:[%s1893 + $0x18] sm:$0xf]
      %v1901 = vld [vmem:[%s1893 + $0x1c] sm:$0xf]
      %v1910 = vunpack.c.l.b16 %v1894
      %v1911 = vunpack.c.l.b16 %v1895
      %v1912 = vunpack.c.l.b16 %v1896
      %v1913 = vunpack.c.l.b16 %v1897
      %v1914 = vunpack.c.l.b16 %v1898
      %v1915 = vunpack.c.l.b16 %v1899
      %v1916 = vunpack.c.l.b16 %v1900
      %v1917 = vunpack.c.l.b16 %v1901
      %v1918 = vpack.c.b16 %v1911, %v1910
      %v1919 = vpack.c.b16 %v1913, %v1912
      %v1920 = vpack.c.b16 %v1915, %v1914
      %v1921 = vpack.c.b16 %v1917, %v1916
      %v1927 = vsel %vm1250, %v1889, 0
      %v1930 = vsel %vm1250, %v1890, 0
      %v1933 = vsel %vm1250, %v1891, 0
      %v1936 = vsel %vm1250, %v1892, 0
      %1938 = vmatprep.subr.bf16.mxu0 0
      %1939 = vmatpush1.bf16.msra.mxu0 0
      %1940 = vmatprep.subr.bf16.mxu0 0
      %1941 = vmatpush1.bf16.msra.mxu0 0
      %1942 = vmatprep.subr.bf16.mxu0 0
      %1943 = vmatpush1.bf16.msra.mxu0 0
      %1944 = vmatprep.subr.bf16.mxu0 0
      %1945 = vmatpush1.bf16.msra.mxu0 0
      %1946 = vmatprep.subr.bf16.mxu0 0
      %1947 = vmatpush1.bf16.msra.mxu0 %v1921
      %1948 = vmatprep.subr.bf16.mxu0 0
      %1949 = vmatpush1.bf16.msra.mxu0 %v1920
      %1950 = vmatprep.subr.bf16.mxu0 0
      %1951 = vmatpush1.bf16.msra.mxu0 %v1919
      %1952 = vmatprep.subr.bf16.mxu0 0
      %1953 = vmatpush1.bf16.msra.mxu0 %v1918
      %1954 = vmatprep.subr.bf16.mxu0 0
      %1955 = vmatpush2.bf16.msra.mxu0 0
      %1956 = vmatprep.subr.bf16.mxu0 0
      %1957 = vmatpush2.bf16.msra.mxu0 0
      %1958 = vmatprep.subr.bf16.mxu0 0
      %1959 = vmatpush2.bf16.msra.mxu0 0
      %1960 = vmatprep.subr.bf16.mxu0 0
      %1961 = vmatpush2.bf16.msra.mxu0 0
      %1962 = vmatprep.subr.bf16.mxu0 0
      %1963 = vmatpush2.bf16.msra.mxu0 0
      %1964 = vmatprep.subr.bf16.mxu0 0
      %1965 = vmatpush2.bf16.msra.mxu0 0
      %1966 = vmatprep.subr.bf16.mxu0 0
      %1967 = vmatpush2.bf16.msra.mxu0 0
      %1968 = vmatprep.subr.bf16.mxu0 0
      %1969 = vmatpush2.bf16.msra.mxu0 0
      %1970 = vmatprep.mubr.bf16.mxu0 0
      %1971 = vmatmul.mubr.bf16.gmra.mxu0 %v1927
      %v1972 = vpop.f32.mrf.mxu0
      %v1973 = vadd.f32 0.0, %v1972
      %v1974 = vpop.f32.mrf.mxu0
      %v1975 = vpop.f32.mrf.mxu0
      %v1976 = vadd.f32 0.0, %v1975
      %v1977 = vpop.f32.mrf.mxu0
      %1978 = vmatprep.mubr.bf16.mxu0 0
      %1979 = vmatmul.mubr.bf16.gmra.mxu0 %v1930
      %v1980 = vpop.f32.mrf.mxu0
      %v1981 = vadd.f32 0.0, %v1980
      %v1982 = vpop.f32.mrf.mxu0
      %v1983 = vpop.f32.mrf.mxu0
      %v1984 = vadd.f32 0.0, %v1983
      %v1985 = vpop.f32.mrf.mxu0
      %1986 = vmatprep.mubr.bf16.mxu0 0
      %1987 = vmatmul.mubr.bf16.gmra.mxu0 %v1933
      %v1988 = vpop.f32.mrf.mxu0
      %v1989 = vadd.f32 0.0, %v1988
      %v1990 = vpop.f32.mrf.mxu0
      %v1991 = vpop.f32.mrf.mxu0
      %v1992 = vadd.f32 0.0, %v1991
      %v1993 = vpop.f32.mrf.mxu0
      %1994 = vmatprep.mubr.bf16.mxu0 0
      %1995 = vmatmul.mubr.bf16.gmra.mxu0 %v1936
      %v1996 = vpop.f32.mrf.mxu0
      %v1997 = vadd.f32 0.0, %v1996
      %v1998 = vpop.f32.mrf.mxu0
      %v1999 = vpop.f32.mrf.mxu0
      %v2000 = vpop.f32.mrf.mxu0
      %2001 = vdwg.mxu0
      %v2002 = vadd.f32 %v1875, %v1973
      %v2003 = vadd.f32 %v1876, %v1976
      %v2004 = vadd.f32 %v1877, %v1981
      %v2005 = vadd.f32 %v1878, %v1984
      %v2006 = vadd.f32 %v1879, %v1989
      %v2007 = vadd.f32 %v1880, %v1992
      %v2008 = vadd.f32 %v1881, %v1997
      %v2009 = vld [vmem:[#allocation3 + $0x1a] sm:$0xff]
      %v2010 = vld [vmem:[#allocation3 + $0x22] sm:$0xff]
      %v2011 = vld [vmem:[#allocation3 + $0x2a] sm:$0xff]
      %v2012 = vld [vmem:[#allocation3 + $0x32] sm:$0xff]
      %v2013 = vld [vmem:[#allocation3 + $0x3a] sm:$0xff]
      %v2014 = vld [vmem:[#allocation3 + $0x42] sm:$0xff]
      %v2015 = vld [vmem:[#allocation3 + $0x4a] sm:$0x1]
      %v2016 = vpack.c.bf16 %v2010, %v2009
      %v2017 = vpack.c.bf16 %v2012, %v2011
      %v2018 = vpack.c.bf16 %v2014, %v2013
      %v2019 = vpack.c.bf16 %v2015, %v2015
      %s2020 = scalar_lea.vmem %s5, 192
      %v2021 = vld [vmem:[%s2020] sm:$0xf]
      %v2022 = vld [vmem:[%s2020 + $0x4] sm:$0xf]
      %v2023 = vld [vmem:[%s2020 + $0x8] sm:$0xf]
      %v2024 = vld [vmem:[%s2020 + $0xc] sm:$0xf]
      %v2025 = vld [vmem:[%s2020 + $0x10] sm:$0xf]
      %v2026 = vld [vmem:[%s2020 + $0x14] sm:$0xf]
      %v2027 = vld [vmem:[%s2020 + $0x18] sm:$0xf]
      %v2028 = vld [vmem:[%s2020 + $0x1c] sm:$0xf]
      %v2037 = vunpack.c.l.b16 %v2021
      %v2038 = vunpack.c.l.b16 %v2022
      %v2039 = vunpack.c.l.b16 %v2023
      %v2040 = vunpack.c.l.b16 %v2024
      %v2041 = vunpack.c.l.b16 %v2025
      %v2042 = vunpack.c.l.b16 %v2026
      %v2043 = vunpack.c.l.b16 %v2027
      %v2044 = vunpack.c.l.b16 %v2028
      %v2045 = vpack.c.b16 %v2038, %v2037
      %v2046 = vpack.c.b16 %v2040, %v2039
      %v2047 = vpack.c.b16 %v2042, %v2041
      %v2048 = vpack.c.b16 %v2044, %v2043
      %v2054 = vsel %vm1250, %v2016, 0
      %v2057 = vsel %vm1250, %v2017, 0
      %v2060 = vsel %vm1250, %v2018, 0
      %v2063 = vsel %vm1250, %v2019, 0
      %2065 = vmatprep.subr.bf16.mxu0 0
      %2066 = vmatpush1.bf16.msra.mxu0 0
      %2067 = vmatprep.subr.bf16.mxu0 0
      %2068 = vmatpush1.bf16.msra.mxu0 0
      %2069 = vmatprep.subr.bf16.mxu0 0
      %2070 = vmatpush1.bf16.msra.mxu0 0
      %2071 = vmatprep.subr.bf16.mxu0 0
      %2072 = vmatpush1.bf16.msra.mxu0 0
      %2073 = vmatprep.subr.bf16.mxu0 0
      %2074 = vmatpush1.bf16.msra.mxu0 %v2048
      %2075 = vmatprep.subr.bf16.mxu0 0
      %2076 = vmatpush1.bf16.msra.mxu0 %v2047
      %2077 = vmatprep.subr.bf16.mxu0 0
      %2078 = vmatpush1.bf16.msra.mxu0 %v2046
      %2079 = vmatprep.subr.bf16.mxu0 0
      %2080 = vmatpush1.bf16.msra.mxu0 %v2045
      %2081 = vmatprep.subr.bf16.mxu0 0
      %2082 = vmatpush2.bf16.msra.mxu0 0
      %2083 = vmatprep.subr.bf16.mxu0 0
      %2084 = vmatpush2.bf16.msra.mxu0 0
      %2085 = vmatprep.subr.bf16.mxu0 0
      %2086 = vmatpush2.bf16.msra.mxu0 0
      %2087 = vmatprep.subr.bf16.mxu0 0
      %2088 = vmatpush2.bf16.msra.mxu0 0
      %2089 = vmatprep.subr.bf16.mxu0 0
      %2090 = vmatpush2.bf16.msra.mxu0 0
      %2091 = vmatprep.subr.bf16.mxu0 0
      %2092 = vmatpush2.bf16.msra.mxu0 0
      %2093 = vmatprep.subr.bf16.mxu0 0
      %2094 = vmatpush2.bf16.msra.mxu0 0
      %2095 = vmatprep.subr.bf16.mxu0 0
      %2096 = vmatpush2.bf16.msra.mxu0 0
      %2097 = vmatprep.mubr.bf16.mxu0 0
      %2098 = vmatmul.mubr.bf16.gmra.mxu0 %v2054
      %v2099 = vpop.f32.mrf.mxu0
      %v2100 = vadd.f32 0.0, %v2099
      %v2101 = vpop.f32.mrf.mxu0
      %v2102 = vpop.f32.mrf.mxu0
      %v2103 = vadd.f32 0.0, %v2102
      %v2104 = vpop.f32.mrf.mxu0
      %2105 = vmatprep.mubr.bf16.mxu0 0
      %2106 = vmatmul.mubr.bf16.gmra.mxu0 %v2057
      %v2107 = vpop.f32.mrf.mxu0
      %v2108 = vadd.f32 0.0, %v2107
      %v2109 = vpop.f32.mrf.mxu0
      %v2110 = vpop.f32.mrf.mxu0
      %v2111 = vadd.f32 0.0, %v2110
      %v2112 = vpop.f32.mrf.mxu0
      %2113 = vmatprep.mubr.bf16.mxu0 0
      %2114 = vmatmul.mubr.bf16.gmra.mxu0 %v2060
      %v2115 = vpop.f32.mrf.mxu0
      %v2116 = vadd.f32 0.0, %v2115
      %v2117 = vpop.f32.mrf.mxu0
      %v2118 = vpop.f32.mrf.mxu0
      %v2119 = vadd.f32 0.0, %v2118
      %v2120 = vpop.f32.mrf.mxu0
      %2121 = vmatprep.mubr.bf16.mxu0 0
      %2122 = vmatmul.mubr.bf16.gmra.mxu0 %v2063
      %v2123 = vpop.f32.mrf.mxu0
      %v2124 = vadd.f32 0.0, %v2123
      %v2125 = vpop.f32.mrf.mxu0
      %v2126 = vpop.f32.mrf.mxu0
      %v2127 = vpop.f32.mrf.mxu0
      %2128 = vdwg.mxu0
      %v2129 = vadd.f32 %v2002, %v2100
      %v2130 = vadd.f32 %v2003, %v2103
      %v2131 = vadd.f32 %v2004, %v2108
      %v2132 = vadd.f32 %v2005, %v2111
      %v2133 = vadd.f32 %v2006, %v2116
      %v2134 = vadd.f32 %v2007, %v2119
      %v2135 = vadd.f32 %v2008, %v2124
      %v2136 = vld [vmem:[#allocation3 + $0x1b] sm:$0xff]
      %v2137 = vld [vmem:[#allocation3 + $0x23] sm:$0xff]
      %v2138 = vld [vmem:[#allocation3 + $0x2b] sm:$0xff]
      %v2139 = vld [vmem:[#allocation3 + $0x33] sm:$0xff]
      %v2140 = vld [vmem:[#allocation3 + $0x3b] sm:$0xff]
      %v2141 = vld [vmem:[#allocation3 + $0x43] sm:$0xff]
      %v2142 = vld [vmem:[#allocation3 + $0x4b] sm:$0x1]
      %v2143 = vpack.c.bf16 %v2137, %v2136
      %v2144 = vpack.c.bf16 %v2139, %v2138
      %v2145 = vpack.c.bf16 %v2141, %v2140
      %v2146 = vpack.c.bf16 %v2142, %v2142
      %s2147 = scalar_lea.vmem %s5, 224
      %v2148 = vld [vmem:[%s2147] sm:$0xf]
      %v2149 = vld [vmem:[%s2147 + $0x4] sm:$0xf]
      %v2150 = vld [vmem:[%s2147 + $0x8] sm:$0xf]
      %v2151 = vld [vmem:[%s2147 + $0xc] sm:$0xf]
      %v2152 = vld [vmem:[%s2147 + $0x10] sm:$0xf]
      %v2153 = vld [vmem:[%s2147 + $0x14] sm:$0xf]
      %v2154 = vld [vmem:[%s2147 + $0x18] sm:$0xf]
      %v2155 = vld [vmem:[%s2147 + $0x1c] sm:$0xf]
      %v2164 = vunpack.c.l.b16 %v2148
      %v2165 = vunpack.c.l.b16 %v2149
      %v2166 = vunpack.c.l.b16 %v2150
      %v2167 = vunpack.c.l.b16 %v2151
      %v2168 = vunpack.c.l.b16 %v2152
      %v2169 = vunpack.c.l.b16 %v2153
      %v2170 = vunpack.c.l.b16 %v2154
      %v2171 = vunpack.c.l.b16 %v2155
      %v2172 = vpack.c.b16 %v2165, %v2164
      %v2173 = vpack.c.b16 %v2167, %v2166
      %v2174 = vpack.c.b16 %v2169, %v2168
      %v2175 = vpack.c.b16 %v2171, %v2170
      %v2181 = vsel %vm1250, %v2143, 0
      %v2184 = vsel %vm1250, %v2144, 0
      %v2187 = vsel %vm1250, %v2145, 0
      %v2190 = vsel %vm1250, %v2146, 0
      %2192 = vmatprep.subr.bf16.mxu0 0
      %2193 = vmatpush1.bf16.msra.mxu0 0
      %2194 = vmatprep.subr.bf16.mxu0 0
      %2195 = vmatpush1.bf16.msra.mxu0 0
      %2196 = vmatprep.subr.bf16.mxu0 0
      %2197 = vmatpush1.bf16.msra.mxu0 0
      %2198 = vmatprep.subr.bf16.mxu0 0
      %2199 = vmatpush1.bf16.msra.mxu0 0
      %2200 = vmatprep.subr.bf16.mxu0 0
      %2201 = vmatpush1.bf16.msra.mxu0 %v2175
      %2202 = vmatprep.subr.bf16.mxu0 0
      %2203 = vmatpush1.bf16.msra.mxu0 %v2174
      %2204 = vmatprep.subr.bf16.mxu0 0
      %2205 = vmatpush1.bf16.msra.mxu0 %v2173
      %2206 = vmatprep.subr.bf16.mxu0 0
      %2207 = vmatpush1.bf16.msra.mxu0 %v2172
      %2208 = vmatprep.subr.bf16.mxu0 0
      %2209 = vmatpush2.bf16.msra.mxu0 0
      %2210 = vmatprep.subr.bf16.mxu0 0
      %2211 = vmatpush2.bf16.msra.mxu0 0
      %2212 = vmatprep.subr.bf16.mxu0 0
      %2213 = vmatpush2.bf16.msra.mxu0 0
      %2214 = vmatprep.subr.bf16.mxu0 0
      %2215 = vmatpush2.bf16.msra.mxu0 0
      %2216 = vmatprep.subr.bf16.mxu0 0
      %2217 = vmatpush2.bf16.msra.mxu0 0
      %2218 = vmatprep.subr.bf16.mxu0 0
      %2219 = vmatpush2.bf16.msra.mxu0 0
      %2220 = vmatprep.subr.bf16.mxu0 0
      %2221 = vmatpush2.bf16.msra.mxu0 0
      %2222 = vmatprep.subr.bf16.mxu0 0
      %2223 = vmatpush2.bf16.msra.mxu0 0
      %2224 = vmatprep.mubr.bf16.mxu0 0
      %2225 = vmatmul.mubr.bf16.gmra.mxu0 %v2181
      %v2226 = vpop.f32.mrf.mxu0
      %v2227 = vadd.f32 0.0, %v2226
      %v2228 = vpop.f32.mrf.mxu0
      %v2229 = vpop.f32.mrf.mxu0
      %v2230 = vadd.f32 0.0, %v2229
      %v2231 = vpop.f32.mrf.mxu0
      %2232 = vmatprep.mubr.bf16.mxu0 0
      %2233 = vmatmul.mubr.bf16.gmra.mxu0 %v2184
      %v2234 = vpop.f32.mrf.mxu0
      %v2235 = vadd.f32 0.0, %v2234
      %v2236 = vpop.f32.mrf.mxu0
      %v2237 = vpop.f32.mrf.mxu0
      %v2238 = vadd.f32 0.0, %v2237
      %v2239 = vpop.f32.mrf.mxu0
      %2240 = vmatprep.mubr.bf16.mxu0 0
      %2241 = vmatmul.mubr.bf16.gmra.mxu0 %v2187
      %v2242 = vpop.f32.mrf.mxu0
      %v2243 = vadd.f32 0.0, %v2242
      %v2244 = vpop.f32.mrf.mxu0
      %v2245 = vpop.f32.mrf.mxu0
      %v2246 = vadd.f32 0.0, %v2245
      %v2247 = vpop.f32.mrf.mxu0
      %2248 = vmatprep.mubr.bf16.mxu0 0
      %2249 = vmatmul.mubr.bf16.gmra.mxu0 %v2190
      %v2250 = vpop.f32.mrf.mxu0
      %v2251 = vadd.f32 0.0, %v2250
      %v2252 = vpop.f32.mrf.mxu0
      %v2253 = vpop.f32.mrf.mxu0
      %v2254 = vpop.f32.mrf.mxu0
      %2255 = vdwg.mxu0
      %v2256 = vadd.f32 %v2129, %v2227
      %v2257 = vadd.f32 %v2130, %v2230
      %v2258 = vadd.f32 %v2131, %v2235
      %v2259 = vadd.f32 %v2132, %v2238
      %v2260 = vadd.f32 %v2133, %v2243
      %v2261 = vadd.f32 %v2134, %v2246
      %v2262 = vadd.f32 %v2135, %v2251
      %v2263 = vld [vmem:[#allocation3 + $0x1c] sm:$0xff]
      %v2264 = vld [vmem:[#allocation3 + $0x24] sm:$0xff]
      %v2265 = vld [vmem:[#allocation3 + $0x2c] sm:$0xff]
      %v2266 = vld [vmem:[#allocation3 + $0x34] sm:$0xff]
      %v2267 = vld [vmem:[#allocation3 + $0x3c] sm:$0xff]
      %v2268 = vld [vmem:[#allocation3 + $0x44] sm:$0xff]
      %v2269 = vld [vmem:[#allocation3 + $0x4c] sm:$0x1]
      %v2270 = vpack.c.bf16 %v2264, %v2263
      %v2271 = vpack.c.bf16 %v2266, %v2265
      %v2272 = vpack.c.bf16 %v2268, %v2267
      %v2273 = vpack.c.bf16 %v2269, %v2269
      %s2274 = scalar_lea.vmem %s5, 256
      %v2275 = vld [vmem:[%s2274] sm:$0xf]
      %v2276 = vld [vmem:[%s2274 + $0x4] sm:$0xf]
      %v2277 = vld [vmem:[%s2274 + $0x8] sm:$0xf]
      %v2278 = vld [vmem:[%s2274 + $0xc] sm:$0xf]
      %v2279 = vld [vmem:[%s2274 + $0x10] sm:$0xf]
      %v2280 = vld [vmem:[%s2274 + $0x14] sm:$0xf]
      %v2281 = vld [vmem:[%s2274 + $0x18] sm:$0xf]
      %v2282 = vld [vmem:[%s2274 + $0x1c] sm:$0xf]
      %v2291 = vunpack.c.l.b16 %v2275
      %v2292 = vunpack.c.l.b16 %v2276
      %v2293 = vunpack.c.l.b16 %v2277
      %v2294 = vunpack.c.l.b16 %v2278
      %v2295 = vunpack.c.l.b16 %v2279
      %v2296 = vunpack.c.l.b16 %v2280
      %v2297 = vunpack.c.l.b16 %v2281
      %v2298 = vunpack.c.l.b16 %v2282
      %v2299 = vpack.c.b16 %v2292, %v2291
      %v2300 = vpack.c.b16 %v2294, %v2293
      %v2301 = vpack.c.b16 %v2296, %v2295
      %v2302 = vpack.c.b16 %v2298, %v2297
      %v2308 = vsel %vm1250, %v2270, 0
      %v2311 = vsel %vm1250, %v2271, 0
      %v2314 = vsel %vm1250, %v2272, 0
      %v2317 = vsel %vm1250, %v2273, 0
      %2319 = vmatprep.subr.bf16.mxu0 0
      %2320 = vmatpush1.bf16.msra.mxu0 0
      %2321 = vmatprep.subr.bf16.mxu0 0
      %2322 = vmatpush1.bf16.msra.mxu0 0
      %2323 = vmatprep.subr.bf16.mxu0 0
      %2324 = vmatpush1.bf16.msra.mxu0 0
      %2325 = vmatprep.subr.bf16.mxu0 0
      %2326 = vmatpush1.bf16.msra.mxu0 0
      %2327 = vmatprep.subr.bf16.mxu0 0
      %2328 = vmatpush1.bf16.msra.mxu0 %v2302
      %2329 = vmatprep.subr.bf16.mxu0 0
      %2330 = vmatpush1.bf16.msra.mxu0 %v2301
      %2331 = vmatprep.subr.bf16.mxu0 0
      %2332 = vmatpush1.bf16.msra.mxu0 %v2300
      %2333 = vmatprep.subr.bf16.mxu0 0
      %2334 = vmatpush1.bf16.msra.mxu0 %v2299
      %2335 = vmatprep.subr.bf16.mxu0 0
      %2336 = vmatpush2.bf16.msra.mxu0 0
      %2337 = vmatprep.subr.bf16.mxu0 0
      %2338 = vmatpush2.bf16.msra.mxu0 0
      %2339 = vmatprep.subr.bf16.mxu0 0
      %2340 = vmatpush2.bf16.msra.mxu0 0
      %2341 = vmatprep.subr.bf16.mxu0 0
      %2342 = vmatpush2.bf16.msra.mxu0 0
      %2343 = vmatprep.subr.bf16.mxu0 0
      %2344 = vmatpush2.bf16.msra.mxu0 0
      %2345 = vmatprep.subr.bf16.mxu0 0
      %2346 = vmatpush2.bf16.msra.mxu0 0
      %2347 = vmatprep.subr.bf16.mxu0 0
      %2348 = vmatpush2.bf16.msra.mxu0 0
      %2349 = vmatprep.subr.bf16.mxu0 0
      %2350 = vmatpush2.bf16.msra.mxu0 0
      %2351 = vmatprep.mubr.bf16.mxu0 0
      %2352 = vmatmul.mubr.bf16.gmra.mxu0 %v2308
      %v2353 = vpop.f32.mrf.mxu0
      %v2354 = vadd.f32 0.0, %v2353
      %v2355 = vpop.f32.mrf.mxu0
      %v2356 = vpop.f32.mrf.mxu0
      %v2357 = vadd.f32 0.0, %v2356
      %v2358 = vpop.f32.mrf.mxu0
      %2359 = vmatprep.mubr.bf16.mxu0 0
      %2360 = vmatmul.mubr.bf16.gmra.mxu0 %v2311
      %v2361 = vpop.f32.mrf.mxu0
      %v2362 = vadd.f32 0.0, %v2361
      %v2363 = vpop.f32.mrf.mxu0
      %v2364 = vpop.f32.mrf.mxu0
      %v2365 = vadd.f32 0.0, %v2364
      %v2366 = vpop.f32.mrf.mxu0
      %2367 = vmatprep.mubr.bf16.mxu0 0
      %2368 = vmatmul.mubr.bf16.gmra.mxu0 %v2314
      %v2369 = vpop.f32.mrf.mxu0
      %v2370 = vadd.f32 0.0, %v2369
      %v2371 = vpop.f32.mrf.mxu0
      %v2372 = vpop.f32.mrf.mxu0
      %v2373 = vadd.f32 0.0, %v2372
      %v2374 = vpop.f32.mrf.mxu0
      %2375 = vmatprep.mubr.bf16.mxu0 0
      %2376 = vmatmul.mubr.bf16.gmra.mxu0 %v2317
      %v2377 = vpop.f32.mrf.mxu0
      %v2378 = vadd.f32 0.0, %v2377
      %v2379 = vpop.f32.mrf.mxu0
      %v2380 = vpop.f32.mrf.mxu0
      %v2381 = vpop.f32.mrf.mxu0
      %2382 = vdwg.mxu0
      %v2383 = vadd.f32 %v2256, %v2354
      %v2384 = vadd.f32 %v2257, %v2357
      %v2385 = vadd.f32 %v2258, %v2362
      %v2386 = vadd.f32 %v2259, %v2365
      %v2387 = vadd.f32 %v2260, %v2370
      %v2388 = vadd.f32 %v2261, %v2373
      %v2389 = vadd.f32 %v2262, %v2378
      %v2390 = vld [vmem:[%s6] sm:$0x1]
      %v2392 = vlaneseq
      %v2393 = vshrl.u32 %v2392, 7
      %v2394 = vsub.s32 0, %v2393
      %v2395 = vrot.slane %v2390, %v2394
      %v2397 = vadd.f32 %v2383, %v2395
      %v2398 = vadd.f32 %v2384, %v2395
      %v2399 = vadd.f32 %v2385, %v2395
      %v2400 = vadd.f32 %v2386, %v2395
      %v2401 = vadd.f32 %v2387, %v2395
      %v2402 = vadd.f32 %v2388, %v2395
      %v2403 = vadd.f32 %v2389, %v2395
      %v2404 = vmax.f32 %v2397, 0.0
      %v2405 = vmax.f32 %v2398, 0.0
      %v2406 = vmax.f32 %v2399, 0.0
      %v2407 = vmax.f32 %v2400, 0.0
      %v2408 = vmax.f32 %v2401, 0.0
      %v2409 = vmax.f32 %v2402, 0.0
      %v2410 = vmax.f32 %v2403, 0.0
      %v2411 = vpack.c.bf16 %v2405, %v2404
      %v2412 = vpack.c.bf16 %v2407, %v2406
      %v2413 = vpack.c.bf16 %v2409, %v2408
      %v2414 = vpack.c.bf16 %v2410, %v2410
      %v2419 = vunpack.c.l.b16 %v2411
      %v2420 = vunpack.c.h.b16 %v2411
      %v2421 = vunpack.c.l.b16 %v2412
      %v2422 = vunpack.c.h.b16 %v2412
      %v2423 = vunpack.c.l.b16 %v2413
      %v2424 = vunpack.c.h.b16 %v2413
      %v2425 = vunpack.c.l.b16 %v2414
      %v2426 = vpack.c.b16 %v2419, %v2419
      %v2427 = vpack.c.b16 %v2420, %v2420
      %v2428 = vpack.c.b16 %v2421, %v2421
      %v2429 = vpack.c.b16 %v2422, %v2422
      %v2430 = vpack.c.b16 %v2423, %v2423
      %v2431 = vpack.c.b16 %v2424, %v2424
      %v2432 = vpack.c.b16 %v2425, %v2425
      %2440 = vst [vmem:[%s278] sm:$0xf] %v2426
      %2441 = vst [vmem:[%s278 + $0x4] sm:$0xf] %v2427
      %2442 = vst [vmem:[%s278 + $0x8] sm:$0xf] %v2428
      %2443 = vst [vmem:[%s278 + $0xc] sm:$0xf] %v2429
      %2444 = vst [vmem:[%s278 + $0x10] sm:$0xf] %v2430
      %2445 = vst [vmem:[%s278 + $0x14] sm:$0xf] %v2431
      %vm2446 = vcmask 1040384
      %vm2447 = vsmask.f32 256
      %vm2448 = vmand %vm2446, %vm2447
      %v2449 = vld [vmem:[%s278 + $0x18] sm:$0x1]
      %v2450 = vsel %vm2448, %v2432, %v2449
      %2451 = vst [vmem:[%s278 + $0x18] sm:$0x1] %v2450
      %p2452 = scmp.lt.s32.totalorder %s18, 1
      %s2453 = scalar_select %p2452, %s18, 1
      %s2454 = smul.addr %s2453, 7
      %s2455 = smul.addr %s2454, 4
      %s2456 = scalar_lea.vmem %s7, %s2455
      // Predicated region
      $region49: #{critic_forward.2} parent=47 // pred_check
        %p2457 = pneg %p188
      $region50: #{critic_forward.2} parent=47 // pred_check_branch
        %2459 = sbr.rel (%p2457) target = $region52
      $region51: #{critic_forward.2} parent=47 // pred_region
        _
      $region52: #{critic_forward.2} parent=47 // pred_fallthru
        _
    $region48: #{critic_forward.2} parent=5 // pred_fallthru
      _
    %p2460 = scmp.le.s32.totalorder 2, %s13
    // Predicated region
    $region53: #{critic_forward.2} parent=5 // pred_check
      %p2461 = pneg %p2460
    $region54: #{critic_forward.2} parent=5 // pred_check_branch
      %2463 = sbr.rel (%p2461) target = $region56
    $region55: #{critic_forward.2} parent=5 // pred_region
      %s2464 = ssub.s32 %s13, 2
      // Predicated region
      $region57: #{critic_forward.2} parent=55 // pred_check
        %p2465 = pneg %p194
      $region58: #{critic_forward.2} parent=55 // pred_check_branch
        %2467 = sbr.rel (%p2465) target = $region60
      $region59: #{critic_forward.2} parent=55 // pred_region
        %p2468 = scmp.lt.s32.totalorder %s19, 1
        %s2469 = scalar_select %p2468, %s19, 1
        %s2470 = smul.addr %s2469, 7
        %s2471 = smul.addr %s2470, 4
        %s2472 = scalar_lea.vmem %s7, %s2471
      $region60: #{critic_forward.2} parent=55 // pred_fallthru
        _
    $region56: #{critic_forward.2} parent=5 // pred_fallthru
      _
  $region6: #{critic_forward.2} parent=0 // loop_footer
    %s17 = sadd.s32 1, %s13
  $region7: #{critic_forward.2} parent=0 // loop_footer_branch
    %12 = sbr.rel target = $region3
  $region8: #{critic_forward.2} parent=0 // loop_exit
    _

// kernel: critic_forward.3
$region0: #{critic_forward.3}
  #allocation0 [shape = 'u32[]', space=smem, size = 0x4, offset = 0x4, fixed_abs, tag = 'smem constant byte address 0x4 - core index']
  #allocation1 [shape = 'u32[144,128]{1,0:T(1,128)}', space=vmem, size = 0x12000, scoped, tag = 'internal scratch']
  #allocation2 [shape = 'f32[1,1]{1,0:T(1,128)S(1)}', space=vmem, size = 0x200, scoped, tag = 'scoped memory for critic_forward.3']
  %s0 = inlined_call_operand.vmem [shape: bf16[8,6272], index: 0, kind: input, shape index: {}]
  %s1 = inlined_call_operand.vmem [shape: bf16[6272,512], index: 1, kind: input, shape index: {}]
  %s2 = inlined_call_operand.vmem [shape: f32[1,512], index: 2, kind: input, shape index: {}]
  %s3 = inlined_call_operand.vmem [shape: f32[1,512], index: 3, kind: input, shape index: {}]
  %s4 = inlined_call_operand.<no memory space> [shape: f32[1,1], index: 4, kind: input, shape index: {}]
  %s5 = inlined_call_operand.vmem [shape: f32[8,1], index: 5, kind: output, shape index: {}]
  %s6 = sld [smem:[#allocation0]]
  $region30: #{critic_forward.3} parent=0
    _
  %s8 = ssub.s32 1, %s6
  %s9 = scalar_select 0, %s8, %s6
  %v10 = vstv %s4
  %11 = vst [vmem:[#allocation2] sm:$0x1] %v10
  // Predicated region
  $region2: #{critic_forward.3} parent=0 // pred_check
    _
  $region3: #{critic_forward.3} parent=0 // pred_check_branch
    %13 = sbr.rel (0) target = $region5
  $region4: #{critic_forward.3} parent=0 // pred_region
    _
  $region5: #{critic_forward.3} parent=0 // pred_fallthru
    _
  // Predicated region
  $region6: #{critic_forward.3} parent=0 // pred_check
    _
  $region7: #{critic_forward.3} parent=0 // pred_check_branch
    %15 = sbr.rel (0) target = $region9
  $region8: #{critic_forward.3} parent=0 // pred_region
    _
  $region9: #{critic_forward.3} parent=0 // pred_fallthru
    _
  // Predicated region
  $region10: #{critic_forward.3} parent=0 // pred_check
    _
  $region11: #{critic_forward.3} parent=0 // pred_check_branch
    %17 = sbr.rel (0) target = $region13
  $region12: #{critic_forward.3} parent=0 // pred_region
    _
  $region13: #{critic_forward.3} parent=0 // pred_fallthru
    _
  // Predicated region
  $region14: #{critic_forward.3} parent=0 // pred_check
    _
  $region15: #{critic_forward.3} parent=0 // pred_check_branch
    %19 = sbr.rel (0) target = $region17
  $region16: #{critic_forward.3} parent=0 // pred_region
    _
  $region17: #{critic_forward.3} parent=0 // pred_fallthru
    _
  // Predicated region
  $region18: #{critic_forward.3} parent=0 // pred_check
    _
  $region19: #{critic_forward.3} parent=0 // pred_check_branch
    %21 = sbr.rel (0) target = $region21
  $region20: #{critic_forward.3} parent=0 // pred_region
    _
  $region21: #{critic_forward.3} parent=0 // pred_fallthru
    _
  %v23 = vld [vmem:[%s0] sm:$0xff]
  %v24 = vld [vmem:[%s0 + $0x8] sm:$0xff]
  %v25 = vld [vmem:[%s0 + $0x10] sm:$0xff]
  %v26 = vld [vmem:[%s0 + $0x18] sm:$0xff]
  %v27 = vld [vmem:[%s0 + $0x20] sm:$0xff]
  %v28 = vld [vmem:[%s0 + $0x28] sm:$0xff]
  %v29 = vld [vmem:[%s0 + $0x30] sm:$0xff]
  %v30 = vld [vmem:[%s0 + $0x38] sm:$0xff]
  %v31 = vld [vmem:[%s0 + $0x40] sm:$0xff]
  %v32 = vld [vmem:[%s0 + $0x48] sm:$0xff]
  %v33 = vld [vmem:[%s0 + $0x50] sm:$0xff]
  %v34 = vld [vmem:[%s0 + $0x58] sm:$0xff]
  %v35 = vld [vmem:[%s0 + $0x60] sm:$0xff]
  %v36 = vld [vmem:[%s0 + $0x68] sm:$0xff]
  %v37 = vld [vmem:[%s0 + $0x70] sm:$0xff]
  %v38 = vld [vmem:[%s0 + $0x78] sm:$0xff]
  %v39 = vld [vmem:[%s0 + $0x80] sm:$0xff]
  %v40 = vld [vmem:[%s0 + $0x88] sm:$0xff]
  %v41 = vld [vmem:[%s0 + $0x90] sm:$0xff]
  %v42 = vld [vmem:[%s0 + $0x98] sm:$0xff]
  %v43 = vld [vmem:[%s0 + $0xa0] sm:$0xff]
  %v44 = vld [vmem:[%s0 + $0xa8] sm:$0xff]
  %v45 = vld [vmem:[%s0 + $0xb0] sm:$0xff]
  %v46 = vld [vmem:[%s0 + $0xb8] sm:$0xff]
  %v47 = vld [vmem:[%s0 + $0xc0] sm:$0xf]
  %v48 = vld [vmem:[%s1] sm:$0xff]
  %v49 = vld [vmem:[%s1 + $0x8] sm:$0xff]
  %v50 = vld [vmem:[%s1 + $0x10] sm:$0xff]
  %v51 = vld [vmem:[%s1 + $0x18] sm:$0xff]
  %v52 = vld [vmem:[%s1 + $0x20] sm:$0xff]
  %v53 = vld [vmem:[%s1 + $0x28] sm:$0xff]
  %v54 = vld [vmem:[%s1 + $0x30] sm:$0xff]
  %v55 = vld [vmem:[%s1 + $0x38] sm:$0xff]
  %v56 = vld [vmem:[%s1 + $0x40] sm:$0xff]
  %v57 = vld [vmem:[%s1 + $0x48] sm:$0xff]
  %v58 = vld [vmem:[%s1 + $0x50] sm:$0xff]
  %v59 = vld [vmem:[%s1 + $0x58] sm:$0xff]
  %v60 = vld [vmem:[%s1 + $0x60] sm:$0xff]
  %v61 = vld [vmem:[%s1 + $0x68] sm:$0xff]
  %v62 = vld [vmem:[%s1 + $0x70] sm:$0xff]
  %v63 = vld [vmem:[%s1 + $0x78] sm:$0xff]
  %v64 = vld [vmem:[%s1 + $0x80] sm:$0xff]
  %v65 = vld [vmem:[%s1 + $0x88] sm:$0xff]
  %v66 = vld [vmem:[%s1 + $0x90] sm:$0xff]
  %v67 = vld [vmem:[%s1 + $0x98] sm:$0xff]
  %v68 = vld [vmem:[%s1 + $0xa0] sm:$0xff]
  %v69 = vld [vmem:[%s1 + $0xa8] sm:$0xff]
  %v70 = vld [vmem:[%s1 + $0xb0] sm:$0xff]
  %v71 = vld [vmem:[%s1 + $0xb8] sm:$0xff]
  %v72 = vld [vmem:[%s1 + $0xc0] sm:$0xff]
  %v73 = vld [vmem:[%s1 + $0xc8] sm:$0xff]
  %v74 = vld [vmem:[%s1 + $0xd0] sm:$0xff]
  %v75 = vld [vmem:[%s1 + $0xd8] sm:$0xff]
  %v76 = vld [vmem:[%s1 + $0xe0] sm:$0xff]
  %v77 = vld [vmem:[%s1 + $0xe8] sm:$0xff]
  %v78 = vld [vmem:[%s1 + $0xf0] sm:$0xff]
  %v79 = vld [vmem:[%s1 + $0xf8] sm:$0xff]
  %v80 = vld [vmem:[%s1 + $0x100] sm:$0xff]
  %v81 = vld [vmem:[%s1 + $0x108] sm:$0xff]
  %v82 = vld [vmem:[%s1 + $0x110] sm:$0xff]
  %v83 = vld [vmem:[%s1 + $0x118] sm:$0xff]
  %v84 = vld [vmem:[%s1 + $0x120] sm:$0xff]
  %v85 = vld [vmem:[%s1 + $0x128] sm:$0xff]
  %v86 = vld [vmem:[%s1 + $0x130] sm:$0xff]
  %v87 = vld [vmem:[%s1 + $0x138] sm:$0xff]
  %v88 = vld [vmem:[%s1 + $0x140] sm:$0xff]
  %v89 = vld [vmem:[%s1 + $0x148] sm:$0xff]
  %v90 = vld [vmem:[%s1 + $0x150] sm:$0xff]
  %v91 = vld [vmem:[%s1 + $0x158] sm:$0xff]
  %v92 = vld [vmem:[%s1 + $0x160] sm:$0xff]
  %v93 = vld [vmem:[%s1 + $0x168] sm:$0xff]
  %v94 = vld [vmem:[%s1 + $0x170] sm:$0xff]
  %v95 = vld [vmem:[%s1 + $0x178] sm:$0xff]
  %v96 = vld [vmem:[%s1 + $0x180] sm:$0xff]
  %v97 = vld [vmem:[%s1 + $0x188] sm:$0xff]
  %v98 = vld [vmem:[%s1 + $0x190] sm:$0xff]
  %v99 = vld [vmem:[%s1 + $0x198] sm:$0xff]
  %v100 = vld [vmem:[%s1 + $0x1a0] sm:$0xff]
  %v101 = vld [vmem:[%s1 + $0x1a8] sm:$0xff]
  %v102 = vld [vmem:[%s1 + $0x1b0] sm:$0xff]
  %v103 = vld [vmem:[%s1 + $0x1b8] sm:$0xff]
  %v104 = vld [vmem:[%s1 + $0x1c0] sm:$0xff]
  %v105 = vld [vmem:[%s1 + $0x1c8] sm:$0xff]
  %v106 = vld [vmem:[%s1 + $0x1d0] sm:$0xff]
  %v107 = vld [vmem:[%s1 + $0x1d8] sm:$0xff]
  %v108 = vld [vmem:[%s1 + $0x1e0] sm:$0xff]
  %v109 = vld [vmem:[%s1 + $0x1e8] sm:$0xff]
  %v110 = vld [vmem:[%s1 + $0x1f0] sm:$0xff]
  %v111 = vld [vmem:[%s1 + $0x1f8] sm:$0xff]
  %v112 = vld [vmem:[%s1 + $0x200] sm:$0xff]
  %v113 = vld [vmem:[%s1 + $0x208] sm:$0xff]
  %v114 = vld [vmem:[%s1 + $0x210] sm:$0xff]
  %v115 = vld [vmem:[%s1 + $0x218] sm:$0xff]
  %v116 = vld [vmem:[%s1 + $0x220] sm:$0xff]
  %v117 = vld [vmem:[%s1 + $0x228] sm:$0xff]
  %v118 = vld [vmem:[%s1 + $0x230] sm:$0xff]
  %v119 = vld [vmem:[%s1 + $0x238] sm:$0xff]
  %v120 = vld [vmem:[%s1 + $0x240] sm:$0xff]
  %v121 = vld [vmem:[%s1 + $0x248] sm:$0xff]
  %v122 = vld [vmem:[%s1 + $0x250] sm:$0xff]
  %v123 = vld [vmem:[%s1 + $0x258] sm:$0xff]
  %v124 = vld [vmem:[%s1 + $0x260] sm:$0xff]
  %v125 = vld [vmem:[%s1 + $0x268] sm:$0xff]
  %v126 = vld [vmem:[%s1 + $0x270] sm:$0xff]
  %v127 = vld [vmem:[%s1 + $0x278] sm:$0xff]
  %v128 = vld [vmem:[%s1 + $0x280] sm:$0xff]
  %v129 = vld [vmem:[%s1 + $0x288] sm:$0xff]
  %v130 = vld [vmem:[%s1 + $0x290] sm:$0xff]
  %v131 = vld [vmem:[%s1 + $0x298] sm:$0xff]
  %v132 = vld [vmem:[%s1 + $0x2a0] sm:$0xff]
  %v133 = vld [vmem:[%s1 + $0x2a8] sm:$0xff]
  %v134 = vld [vmem:[%s1 + $0x2b0] sm:$0xff]
  %v135 = vld [vmem:[%s1 + $0x2b8] sm:$0xff]
  %v136 = vld [vmem:[%s1 + $0x2c0] sm:$0xff]
  %v137 = vld [vmem:[%s1 + $0x2c8] sm:$0xff]
  %v138 = vld [vmem:[%s1 + $0x2d0] sm:$0xff]
  %v139 = vld [vmem:[%s1 + $0x2d8] sm:$0xff]
  %v140 = vld [vmem:[%s1 + $0x2e0] sm:$0xff]
  %v141 = vld [vmem:[%s1 + $0x2e8] sm:$0xff]
  %v142 = vld [vmem:[%s1 + $0x2f0] sm:$0xff]
  %v143 = vld [vmem:[%s1 + $0x2f8] sm:$0xff]
  %v144 = vld [vmem:[%s1 + $0x300] sm:$0xff]
  %v145 = vld [vmem:[%s1 + $0x308] sm:$0xff]
  %v146 = vld [vmem:[%s1 + $0x310] sm:$0xff]
  %v147 = vld [vmem:[%s1 + $0x318] sm:$0xff]
  %v148 = vld [vmem:[%s1 + $0x320] sm:$0xff]
  %v149 = vld [vmem:[%s1 + $0x328] sm:$0xff]
  %v150 = vld [vmem:[%s1 + $0x330] sm:$0xff]
  %v151 = vld [vmem:[%s1 + $0x338] sm:$0xff]
  %v152 = vld [vmem:[%s1 + $0x340] sm:$0xff]
  %v153 = vld [vmem:[%s1 + $0x348] sm:$0xff]
  %v154 = vld [vmem:[%s1 + $0x350] sm:$0xff]
  %v155 = vld [vmem:[%s1 + $0x358] sm:$0xff]
  %v156 = vld [vmem:[%s1 + $0x360] sm:$0xff]
  %v157 = vld [vmem:[%s1 + $0x368] sm:$0xff]
  %v158 = vld [vmem:[%s1 + $0x370] sm:$0xff]
  %v159 = vld [vmem:[%s1 + $0x378] sm:$0xff]
  %v160 = vld [vmem:[%s1 + $0x380] sm:$0xff]
  %v161 = vld [vmem:[%s1 + $0x388] sm:$0xff]
  %v162 = vld [vmem:[%s1 + $0x390] sm:$0xff]
  %v163 = vld [vmem:[%s1 + $0x398] sm:$0xff]
  %v164 = vld [vmem:[%s1 + $0x3a0] sm:$0xff]
  %v165 = vld [vmem:[%s1 + $0x3a8] sm:$0xff]
  %v166 = vld [vmem:[%s1 + $0x3b0] sm:$0xff]
  %v167 = vld [vmem:[%s1 + $0x3b8] sm:$0xff]
  %v168 = vld [vmem:[%s1 + $0x3c0] sm:$0xff]
  %v169 = vld [vmem:[%s1 + $0x3c8] sm:$0xff]
  %v170 = vld [vmem:[%s1 + $0x3d0] sm:$0xff]
  %v171 = vld [vmem:[%s1 + $0x3d8] sm:$0xff]
  %v172 = vld [vmem:[%s1 + $0x3e0] sm:$0xff]
  %v173 = vld [vmem:[%s1 + $0x3e8] sm:$0xff]
  %v174 = vld [vmem:[%s1 + $0x3f0] sm:$0xff]
  %v175 = vld [vmem:[%s1 + $0x3f8] sm:$0xff]
  %v176 = vld [vmem:[%s1 + $0x400] sm:$0xff]
  %v177 = vld [vmem:[%s1 + $0x408] sm:$0xff]
  %v178 = vld [vmem:[%s1 + $0x410] sm:$0xff]
  %v179 = vld [vmem:[%s1 + $0x418] sm:$0xff]
  %v180 = vld [vmem:[%s1 + $0x420] sm:$0xff]
  %v181 = vld [vmem:[%s1 + $0x428] sm:$0xff]
  %v182 = vld [vmem:[%s1 + $0x430] sm:$0xff]
  %v183 = vld [vmem:[%s1 + $0x438] sm:$0xff]
  %v184 = vld [vmem:[%s1 + $0x440] sm:$0xff]
  %v185 = vld [vmem:[%s1 + $0x448] sm:$0xff]
  %v186 = vld [vmem:[%s1 + $0x450] sm:$0xff]
  %v187 = vld [vmem:[%s1 + $0x458] sm:$0xff]
  %v188 = vld [vmem:[%s1 + $0x460] sm:$0xff]
  %v189 = vld [vmem:[%s1 + $0x468] sm:$0xff]
  %v190 = vld [vmem:[%s1 + $0x470] sm:$0xff]
  %v191 = vld [vmem:[%s1 + $0x478] sm:$0xff]
  %v192 = vld [vmem:[%s1 + $0x480] sm:$0xff]
  %v193 = vld [vmem:[%s1 + $0x488] sm:$0xff]
  %v194 = vld [vmem:[%s1 + $0x490] sm:$0xff]
  %v195 = vld [vmem:[%s1 + $0x498] sm:$0xff]
  %v196 = vld [vmem:[%s1 + $0x4a0] sm:$0xff]
  %v197 = vld [vmem:[%s1 + $0x4a8] sm:$0xff]
  %v198 = vld [vmem:[%s1 + $0x4b0] sm:$0xff]
  %v199 = vld [vmem:[%s1 + $0x4b8] sm:$0xff]
  %v200 = vld [vmem:[%s1 + $0x4c0] sm:$0xff]
  %v201 = vld [vmem:[%s1 + $0x4c8] sm:$0xff]
  %v202 = vld [vmem:[%s1 + $0x4d0] sm:$0xff]
  %v203 = vld [vmem:[%s1 + $0x4d8] sm:$0xff]
  %v204 = vld [vmem:[%s1 + $0x4e0] sm:$0xff]
  %v205 = vld [vmem:[%s1 + $0x4e8] sm:$0xff]
  %v206 = vld [vmem:[%s1 + $0x4f0] sm:$0xff]
  %v207 = vld [vmem:[%s1 + $0x4f8] sm:$0xff]
  %v208 = vld [vmem:[%s1 + $0x500] sm:$0xff]
  %v209 = vld [vmem:[%s1 + $0x508] sm:$0xff]
  %v210 = vld [vmem:[%s1 + $0x510] sm:$0xff]
  %v211 = vld [vmem:[%s1 + $0x518] sm:$0xff]
  %v212 = vld [vmem:[%s1 + $0x520] sm:$0xff]
  %v213 = vld [vmem:[%s1 + $0x528] sm:$0xff]
  %v214 = vld [vmem:[%s1 + $0x530] sm:$0xff]
  %v215 = vld [vmem:[%s1 + $0x538] sm:$0xff]
  %v216 = vld [vmem:[%s1 + $0x540] sm:$0xff]
  %v217 = vld [vmem:[%s1 + $0x548] sm:$0xff]
  %v218 = vld [vmem:[%s1 + $0x550] sm:$0xff]
  %v219 = vld [vmem:[%s1 + $0x558] sm:$0xff]
  %v220 = vld [vmem:[%s1 + $0x560] sm:$0xff]
  %v221 = vld [vmem:[%s1 + $0x568] sm:$0xff]
  %v222 = vld [vmem:[%s1 + $0x570] sm:$0xff]
  %v223 = vld [vmem:[%s1 + $0x578] sm:$0xff]
  %v224 = vld [vmem:[%s1 + $0x580] sm:$0xff]
  %v225 = vld [vmem:[%s1 + $0x588] sm:$0xff]
  %v226 = vld [vmem:[%s1 + $0x590] sm:$0xff]
  %v227 = vld [vmem:[%s1 + $0x598] sm:$0xff]
  %v228 = vld [vmem:[%s1 + $0x5a0] sm:$0xff]
  %v229 = vld [vmem:[%s1 + $0x5a8] sm:$0xff]
  %v230 = vld [vmem:[%s1 + $0x5b0] sm:$0xff]
  %v231 = vld [vmem:[%s1 + $0x5b8] sm:$0xff]
  %v232 = vld [vmem:[%s1 + $0x5c0] sm:$0xff]
  %v233 = vld [vmem:[%s1 + $0x5c8] sm:$0xff]
  %v234 = vld [vmem:[%s1 + $0x5d0] sm:$0xff]
  %v235 = vld [vmem:[%s1 + $0x5d8] sm:$0xff]
  %v236 = vld [vmem:[%s1 + $0x5e0] sm:$0xff]
  %v237 = vld [vmem:[%s1 + $0x5e8] sm:$0xff]
  %v238 = vld [vmem:[%s1 + $0x5f0] sm:$0xff]
  %v239 = vld [vmem:[%s1 + $0x5f8] sm:$0xff]
  %v240 = vld [vmem:[%s1 + $0x600] sm:$0xff]
  %v241 = vld [vmem:[%s1 + $0x608] sm:$0xff]
  %v242 = vld [vmem:[%s1 + $0x610] sm:$0xff]
  %v243 = vld [vmem:[%s1 + $0x618] sm:$0xff]
  %v244 = vld [vmem:[%s1 + $0x620] sm:$0xff]
  %v245 = vld [vmem:[%s1 + $0x628] sm:$0xff]
  %v246 = vld [vmem:[%s1 + $0x630] sm:$0xff]
  %v247 = vld [vmem:[%s1 + $0x638] sm:$0xff]
  %v248 = vld [vmem:[%s1 + $0x640] sm:$0xff]
  %v249 = vld [vmem:[%s1 + $0x648] sm:$0xff]
  %v250 = vld [vmem:[%s1 + $0x650] sm:$0xff]
  %v251 = vld [vmem:[%s1 + $0x658] sm:$0xff]
  %v252 = vld [vmem:[%s1 + $0x660] sm:$0xff]
  %v253 = vld [vmem:[%s1 + $0x668] sm:$0xff]
  %v254 = vld [vmem:[%s1 + $0x670] sm:$0xff]
  %v255 = vld [vmem:[%s1 + $0x678] sm:$0xff]
  %v256 = vld [vmem:[%s1 + $0x680] sm:$0xff]
  %v257 = vld [vmem:[%s1 + $0x688] sm:$0xff]
  %v258 = vld [vmem:[%s1 + $0x690] sm:$0xff]
  %v259 = vld [vmem:[%s1 + $0x698] sm:$0xff]
  %v260 = vld [vmem:[%s1 + $0x6a0] sm:$0xff]
  %v261 = vld [vmem:[%s1 + $0x6a8] sm:$0xff]
  %v262 = vld [vmem:[%s1 + $0x6b0] sm:$0xff]
  %v263 = vld [vmem:[%s1 + $0x6b8] sm:$0xff]
  %v264 = vld [vmem:[%s1 + $0x6c0] sm:$0xff]
  %v265 = vld [vmem:[%s1 + $0x6c8] sm:$0xff]
  %v266 = vld [vmem:[%s1 + $0x6d0] sm:$0xff]
  %v267 = vld [vmem:[%s1 + $0x6d8] sm:$0xff]
  %v268 = vld [vmem:[%s1 + $0x6e0] sm:$0xff]
  %v269 = vld [vmem:[%s1 + $0x6e8] sm:$0xff]
  %v270 = vld [vmem:[%s1 + $0x6f0] sm:$0xff]
  %v271 = vld [vmem:[%s1 + $0x6f8] sm:$0xff]
  %v272 = vld [vmem:[%s1 + $0x700] sm:$0xff]
  %v273 = vld [vmem:[%s1 + $0x708] sm:$0xff]
  %v274 = vld [vmem:[%s1 + $0x710] sm:$0xff]
  %v275 = vld [vmem:[%s1 + $0x718] sm:$0xff]
  %v276 = vld [vmem:[%s1 + $0x720] sm:$0xff]
  %v277 = vld [vmem:[%s1 + $0x728] sm:$0xff]
  %v278 = vld [vmem:[%s1 + $0x730] sm:$0xff]
  %v279 = vld [vmem:[%s1 + $0x738] sm:$0xff]
  %v280 = vld [vmem:[%s1 + $0x740] sm:$0xff]
  %v281 = vld [vmem:[%s1 + $0x748] sm:$0xff]
  %v282 = vld [vmem:[%s1 + $0x750] sm:$0xff]
  %v283 = vld [vmem:[%s1 + $0x758] sm:$0xff]
  %v284 = vld [vmem:[%s1 + $0x760] sm:$0xff]
  %v285 = vld [vmem:[%s1 + $0x768] sm:$0xff]
  %v286 = vld [vmem:[%s1 + $0x770] sm:$0xff]
  %v287 = vld [vmem:[%s1 + $0x778] sm:$0xff]
  %v288 = vld [vmem:[%s1 + $0x780] sm:$0xff]
  %v289 = vld [vmem:[%s1 + $0x788] sm:$0xff]
  %v290 = vld [vmem:[%s1 + $0x790] sm:$0xff]
  %v291 = vld [vmem:[%s1 + $0x798] sm:$0xff]
  %v292 = vld [vmem:[%s1 + $0x7a0] sm:$0xff]
  %v293 = vld [vmem:[%s1 + $0x7a8] sm:$0xff]
  %v294 = vld [vmem:[%s1 + $0x7b0] sm:$0xff]
  %v295 = vld [vmem:[%s1 + $0x7b8] sm:$0xff]
  %v296 = vld [vmem:[%s1 + $0x7c0] sm:$0xff]
  %v297 = vld [vmem:[%s1 + $0x7c8] sm:$0xff]
  %v298 = vld [vmem:[%s1 + $0x7d0] sm:$0xff]
  %v299 = vld [vmem:[%s1 + $0x7d8] sm:$0xff]
  %v300 = vld [vmem:[%s1 + $0x7e0] sm:$0xff]
  %v301 = vld [vmem:[%s1 + $0x7e8] sm:$0xff]
  %v302 = vld [vmem:[%s1 + $0x7f0] sm:$0xff]
  %v303 = vld [vmem:[%s1 + $0x7f8] sm:$0xff]
  %v304 = vld [vmem:[%s1 + $0x800] sm:$0xff]
  %v305 = vld [vmem:[%s1 + $0x808] sm:$0xff]
  %v306 = vld [vmem:[%s1 + $0x810] sm:$0xff]
  %v307 = vld [vmem:[%s1 + $0x818] sm:$0xff]
  %v308 = vld [vmem:[%s1 + $0x820] sm:$0xff]
  %v309 = vld [vmem:[%s1 + $0x828] sm:$0xff]
  %v310 = vld [vmem:[%s1 + $0x830] sm:$0xff]
  %v311 = vld [vmem:[%s1 + $0x838] sm:$0xff]
  %v312 = vld [vmem:[%s1 + $0x840] sm:$0xff]
  %v313 = vld [vmem:[%s1 + $0x848] sm:$0xff]
  %v314 = vld [vmem:[%s1 + $0x850] sm:$0xff]
  %v315 = vld [vmem:[%s1 + $0x858] sm:$0xff]
  %v316 = vld [vmem:[%s1 + $0x860] sm:$0xff]
  %v317 = vld [vmem:[%s1 + $0x868] sm:$0xff]
  %v318 = vld [vmem:[%s1 + $0x870] sm:$0xff]
  %v319 = vld [vmem:[%s1 + $0x878] sm:$0xff]
  %v320 = vld [vmem:[%s1 + $0x880] sm:$0xff]
  %v321 = vld [vmem:[%s1 + $0x888] sm:$0xff]
  %v322 = vld [vmem:[%s1 + $0x890] sm:$0xff]
  %v323 = vld [vmem:[%s1 + $0x898] sm:$0xff]
  %v324 = vld [vmem:[%s1 + $0x8a0] sm:$0xff]
  %v325 = vld [vmem:[%s1 + $0x8a8] sm:$0xff]
  %v326 = vld [vmem:[%s1 + $0x8b0] sm:$0xff]
  %v327 = vld [vmem:[%s1 + $0x8b8] sm:$0xff]
  %v328 = vld [vmem:[%s1 + $0x8c0] sm:$0xff]
  %v329 = vld [vmem:[%s1 + $0x8c8] sm:$0xff]
  %v330 = vld [vmem:[%s1 + $0x8d0] sm:$0xff]
  %v331 = vld [vmem:[%s1 + $0x8d8] sm:$0xff]
  %v332 = vld [vmem:[%s1 + $0x8e0] sm:$0xff]
  %v333 = vld [vmem:[%s1 + $0x8e8] sm:$0xff]
  %v334 = vld [vmem:[%s1 + $0x8f0] sm:$0xff]
  %v335 = vld [vmem:[%s1 + $0x8f8] sm:$0xff]
  %v336 = vld [vmem:[%s1 + $0x900] sm:$0xff]
  %v337 = vld [vmem:[%s1 + $0x908] sm:$0xff]
  %v338 = vld [vmem:[%s1 + $0x910] sm:$0xff]
  %v339 = vld [vmem:[%s1 + $0x918] sm:$0xff]
  %v340 = vld [vmem:[%s1 + $0x920] sm:$0xff]
  %v341 = vld [vmem:[%s1 + $0x928] sm:$0xff]
  %v342 = vld [vmem:[%s1 + $0x930] sm:$0xff]
  %v343 = vld [vmem:[%s1 + $0x938] sm:$0xff]
  %v344 = vld [vmem:[%s1 + $0x940] sm:$0xff]
  %v345 = vld [vmem:[%s1 + $0x948] sm:$0xff]
  %v346 = vld [vmem:[%s1 + $0x950] sm:$0xff]
  %v347 = vld [vmem:[%s1 + $0x958] sm:$0xff]
  %v348 = vld [vmem:[%s1 + $0x960] sm:$0xff]
  %v349 = vld [vmem:[%s1 + $0x968] sm:$0xff]
  %v350 = vld [vmem:[%s1 + $0x970] sm:$0xff]
  %v351 = vld [vmem:[%s1 + $0x978] sm:$0xff]
  %v352 = vld [vmem:[%s1 + $0x980] sm:$0xff]
  %v353 = vld [vmem:[%s1 + $0x988] sm:$0xff]
  %v354 = vld [vmem:[%s1 + $0x990] sm:$0xff]
  %v355 = vld [vmem:[%s1 + $0x998] sm:$0xff]
  %v356 = vld [vmem:[%s1 + $0x9a0] sm:$0xff]
  %v357 = vld [vmem:[%s1 + $0x9a8] sm:$0xff]
  %v358 = vld [vmem:[%s1 + $0x9b0] sm:$0xff]
  %v359 = vld [vmem:[%s1 + $0x9b8] sm:$0xff]
  %v360 = vld [vmem:[%s1 + $0x9c0] sm:$0xff]
  %v361 = vld [vmem:[%s1 + $0x9c8] sm:$0xff]
  %v362 = vld [vmem:[%s1 + $0x9d0] sm:$0xff]
  %v363 = vld [vmem:[%s1 + $0x9d8] sm:$0xff]
  %v364 = vld [vmem:[%s1 + $0x9e0] sm:$0xff]
  %v365 = vld [vmem:[%s1 + $0x9e8] sm:$0xff]
  %v366 = vld [vmem:[%s1 + $0x9f0] sm:$0xff]
  %v367 = vld [vmem:[%s1 + $0x9f8] sm:$0xff]
  %v368 = vld [vmem:[%s1 + $0xa00] sm:$0xff]
  %v369 = vld [vmem:[%s1 + $0xa08] sm:$0xff]
  %v370 = vld [vmem:[%s1 + $0xa10] sm:$0xff]
  %v371 = vld [vmem:[%s1 + $0xa18] sm:$0xff]
  %v372 = vld [vmem:[%s1 + $0xa20] sm:$0xff]
  %v373 = vld [vmem:[%s1 + $0xa28] sm:$0xff]
  %v374 = vld [vmem:[%s1 + $0xa30] sm:$0xff]
  %v375 = vld [vmem:[%s1 + $0xa38] sm:$0xff]
  %v376 = vld [vmem:[%s1 + $0xa40] sm:$0xff]
  %v377 = vld [vmem:[%s1 + $0xa48] sm:$0xff]
  %v378 = vld [vmem:[%s1 + $0xa50] sm:$0xff]
  %v379 = vld [vmem:[%s1 + $0xa58] sm:$0xff]
  %v380 = vld [vmem:[%s1 + $0xa60] sm:$0xff]
  %v381 = vld [vmem:[%s1 + $0xa68] sm:$0xff]
  %v382 = vld [vmem:[%s1 + $0xa70] sm:$0xff]
  %v383 = vld [vmem:[%s1 + $0xa78] sm:$0xff]
  %v384 = vld [vmem:[%s1 + $0xa80] sm:$0xff]
  %v385 = vld [vmem:[%s1 + $0xa88] sm:$0xff]
  %v386 = vld [vmem:[%s1 + $0xa90] sm:$0xff]
  %v387 = vld [vmem:[%s1 + $0xa98] sm:$0xff]
  %v388 = vld [vmem:[%s1 + $0xaa0] sm:$0xff]
  %v389 = vld [vmem:[%s1 + $0xaa8] sm:$0xff]
  %v390 = vld [vmem:[%s1 + $0xab0] sm:$0xff]
  %v391 = vld [vmem:[%s1 + $0xab8] sm:$0xff]
  %v392 = vld [vmem:[%s1 + $0xac0] sm:$0xff]
  %v393 = vld [vmem:[%s1 + $0xac8] sm:$0xff]
  %v394 = vld [vmem:[%s1 + $0xad0] sm:$0xff]
  %v395 = vld [vmem:[%s1 + $0xad8] sm:$0xff]
  %v396 = vld [vmem:[%s1 + $0xae0] sm:$0xff]
  %v397 = vld [vmem:[%s1 + $0xae8] sm:$0xff]
  %v398 = vld [vmem:[%s1 + $0xaf0] sm:$0xff]
  %v399 = vld [vmem:[%s1 + $0xaf8] sm:$0xff]
  %v400 = vld [vmem:[%s1 + $0xb00] sm:$0xff]
  %v401 = vld [vmem:[%s1 + $0xb08] sm:$0xff]
  %v402 = vld [vmem:[%s1 + $0xb10] sm:$0xff]
  %v403 = vld [vmem:[%s1 + $0xb18] sm:$0xff]
  %v404 = vld [vmem:[%s1 + $0xb20] sm:$0xff]
  %v405 = vld [vmem:[%s1 + $0xb28] sm:$0xff]
  %v406 = vld [vmem:[%s1 + $0xb30] sm:$0xff]
  %v407 = vld [vmem:[%s1 + $0xb38] sm:$0xff]
  %v408 = vld [vmem:[%s1 + $0xb40] sm:$0xff]
  %v409 = vld [vmem:[%s1 + $0xb48] sm:$0xff]
  %v410 = vld [vmem:[%s1 + $0xb50] sm:$0xff]
  %v411 = vld [vmem:[%s1 + $0xb58] sm:$0xff]
  %v412 = vld [vmem:[%s1 + $0xb60] sm:$0xff]
  %v413 = vld [vmem:[%s1 + $0xb68] sm:$0xff]
  %v414 = vld [vmem:[%s1 + $0xb70] sm:$0xff]
  %v415 = vld [vmem:[%s1 + $0xb78] sm:$0xff]
  %v416 = vld [vmem:[%s1 + $0xb80] sm:$0xff]
  %v417 = vld [vmem:[%s1 + $0xb88] sm:$0xff]
  %v418 = vld [vmem:[%s1 + $0xb90] sm:$0xff]
  %v419 = vld [vmem:[%s1 + $0xb98] sm:$0xff]
  %v420 = vld [vmem:[%s1 + $0xba0] sm:$0xff]
  %v421 = vld [vmem:[%s1 + $0xba8] sm:$0xff]
  %v422 = vld [vmem:[%s1 + $0xbb0] sm:$0xff]
  %v423 = vld [vmem:[%s1 + $0xbb8] sm:$0xff]
  %v424 = vld [vmem:[%s1 + $0xbc0] sm:$0xff]
  %v425 = vld [vmem:[%s1 + $0xbc8] sm:$0xff]
  %v426 = vld [vmem:[%s1 + $0xbd0] sm:$0xff]
  %v427 = vld [vmem:[%s1 + $0xbd8] sm:$0xff]
  %v428 = vld [vmem:[%s1 + $0xbe0] sm:$0xff]
  %v429 = vld [vmem:[%s1 + $0xbe8] sm:$0xff]
  %v430 = vld [vmem:[%s1 + $0xbf0] sm:$0xff]
  %v431 = vld [vmem:[%s1 + $0xbf8] sm:$0xff]
  %v432 = vld [vmem:[%s1 + $0xc00] sm:$0xff]
  %v433 = vld [vmem:[%s1 + $0xc08] sm:$0xff]
  %v434 = vld [vmem:[%s1 + $0xc10] sm:$0xff]
  %v435 = vld [vmem:[%s1 + $0xc18] sm:$0xff]
  %v436 = vld [vmem:[%s1 + $0xc20] sm:$0xff]
  %v437 = vld [vmem:[%s1 + $0xc28] sm:$0xff]
  %v438 = vld [vmem:[%s1 + $0xc30] sm:$0xff]
  %v439 = vld [vmem:[%s1 + $0xc38] sm:$0xff]
  %v440 = vld [vmem:[%s1 + $0xc40] sm:$0xff]
  %v441 = vld [vmem:[%s1 + $0xc48] sm:$0xff]
  %v442 = vld [vmem:[%s1 + $0xc50] sm:$0xff]
  %v443 = vld [vmem:[%s1 + $0xc58] sm:$0xff]
  %v444 = vld [vmem:[%s1 + $0xc60] sm:$0xff]
  %v445 = vld [vmem:[%s1 + $0xc68] sm:$0xff]
  %v446 = vld [vmem:[%s1 + $0xc70] sm:$0xff]
  %v447 = vld [vmem:[%s1 + $0xc78] sm:$0xff]
  %v448 = vld [vmem:[%s1 + $0xc80] sm:$0xff]
  %v449 = vld [vmem:[%s1 + $0xc88] sm:$0xff]
  %v450 = vld [vmem:[%s1 + $0xc90] sm:$0xff]
  %v451 = vld [vmem:[%s1 + $0xc98] sm:$0xff]
  %v452 = vld [vmem:[%s1 + $0xca0] sm:$0xff]
  %v453 = vld [vmem:[%s1 + $0xca8] sm:$0xff]
  %v454 = vld [vmem:[%s1 + $0xcb0] sm:$0xff]
  %v455 = vld [vmem:[%s1 + $0xcb8] sm:$0xff]
  %v456 = vld [vmem:[%s1 + $0xcc0] sm:$0xff]
  %v457 = vld [vmem:[%s1 + $0xcc8] sm:$0xff]
  %v458 = vld [vmem:[%s1 + $0xcd0] sm:$0xff]
  %v459 = vld [vmem:[%s1 + $0xcd8] sm:$0xff]
  %v460 = vld [vmem:[%s1 + $0xce0] sm:$0xff]
  %v461 = vld [vmem:[%s1 + $0xce8] sm:$0xff]
  %v462 = vld [vmem:[%s1 + $0xcf0] sm:$0xff]
  %v463 = vld [vmem:[%s1 + $0xcf8] sm:$0xff]
  %v464 = vld [vmem:[%s1 + $0xd00] sm:$0xff]
  %v465 = vld [vmem:[%s1 + $0xd08] sm:$0xff]
  %v466 = vld [vmem:[%s1 + $0xd10] sm:$0xff]
  %v467 = vld [vmem:[%s1 + $0xd18] sm:$0xff]
  %v468 = vld [vmem:[%s1 + $0xd20] sm:$0xff]
  %v469 = vld [vmem:[%s1 + $0xd28] sm:$0xff]
  %v470 = vld [vmem:[%s1 + $0xd30] sm:$0xff]
  %v471 = vld [vmem:[%s1 + $0xd38] sm:$0xff]
  %v472 = vld [vmem:[%s1 + $0xd40] sm:$0xff]
  %v473 = vld [vmem:[%s1 + $0xd48] sm:$0xff]
  %v474 = vld [vmem:[%s1 + $0xd50] sm:$0xff]
  %v475 = vld [vmem:[%s1 + $0xd58] sm:$0xff]
  %v476 = vld [vmem:[%s1 + $0xd60] sm:$0xff]
  %v477 = vld [vmem:[%s1 + $0xd68] sm:$0xff]
  %v478 = vld [vmem:[%s1 + $0xd70] sm:$0xff]
  %v479 = vld [vmem:[%s1 + $0xd78] sm:$0xff]
  %v480 = vld [vmem:[%s1 + $0xd80] sm:$0xff]
  %v481 = vld [vmem:[%s1 + $0xd88] sm:$0xff]
  %v482 = vld [vmem:[%s1 + $0xd90] sm:$0xff]
  %v483 = vld [vmem:[%s1 + $0xd98] sm:$0xff]
  %v484 = vld [vmem:[%s1 + $0xda0] sm:$0xff]
  %v485 = vld [vmem:[%s1 + $0xda8] sm:$0xff]
  %v486 = vld [vmem:[%s1 + $0xdb0] sm:$0xff]
  %v487 = vld [vmem:[%s1 + $0xdb8] sm:$0xff]
  %v488 = vld [vmem:[%s1 + $0xdc0] sm:$0xff]
  %v489 = vld [vmem:[%s1 + $0xdc8] sm:$0xff]
  %v490 = vld [vmem:[%s1 + $0xdd0] sm:$0xff]
  %v491 = vld [vmem:[%s1 + $0xdd8] sm:$0xff]
  %v492 = vld [vmem:[%s1 + $0xde0] sm:$0xff]
  %v493 = vld [vmem:[%s1 + $0xde8] sm:$0xff]
  %v494 = vld [vmem:[%s1 + $0xdf0] sm:$0xff]
  %v495 = vld [vmem:[%s1 + $0xdf8] sm:$0xff]
  %v496 = vld [vmem:[%s1 + $0xe00] sm:$0xff]
  %v497 = vld [vmem:[%s1 + $0xe08] sm:$0xff]
  %v498 = vld [vmem:[%s1 + $0xe10] sm:$0xff]
  %v499 = vld [vmem:[%s1 + $0xe18] sm:$0xff]
  %v500 = vld [vmem:[%s1 + $0xe20] sm:$0xff]
  %v501 = vld [vmem:[%s1 + $0xe28] sm:$0xff]
  %v502 = vld [vmem:[%s1 + $0xe30] sm:$0xff]
  %v503 = vld [vmem:[%s1 + $0xe38] sm:$0xff]
  %v504 = vld [vmem:[%s1 + $0xe40] sm:$0xff]
  %v505 = vld [vmem:[%s1 + $0xe48] sm:$0xff]
  %v506 = vld [vmem:[%s1 + $0xe50] sm:$0xff]
  %v507 = vld [vmem:[%s1 + $0xe58] sm:$0xff]
  %v508 = vld [vmem:[%s1 + $0xe60] sm:$0xff]
  %v509 = vld [vmem:[%s1 + $0xe68] sm:$0xff]
  %v510 = vld [vmem:[%s1 + $0xe70] sm:$0xff]
  %v511 = vld [vmem:[%s1 + $0xe78] sm:$0xff]
  %v512 = vld [vmem:[%s1 + $0xe80] sm:$0xff]
  %v513 = vld [vmem:[%s1 + $0xe88] sm:$0xff]
  %v514 = vld [vmem:[%s1 + $0xe90] sm:$0xff]
  %v515 = vld [vmem:[%s1 + $0xe98] sm:$0xff]
  %v516 = vld [vmem:[%s1 + $0xea0] sm:$0xff]
  %v517 = vld [vmem:[%s1 + $0xea8] sm:$0xff]
  %v518 = vld [vmem:[%s1 + $0xeb0] sm:$0xff]
  %v519 = vld [vmem:[%s1 + $0xeb8] sm:$0xff]
  %v520 = vld [vmem:[%s1 + $0xec0] sm:$0xff]
  %v521 = vld [vmem:[%s1 + $0xec8] sm:$0xff]
  %v522 = vld [vmem:[%s1 + $0xed0] sm:$0xff]
  %v523 = vld [vmem:[%s1 + $0xed8] sm:$0xff]
  %v524 = vld [vmem:[%s1 + $0xee0] sm:$0xff]
  %v525 = vld [vmem:[%s1 + $0xee8] sm:$0xff]
  %v526 = vld [vmem:[%s1 + $0xef0] sm:$0xff]
  %v527 = vld [vmem:[%s1 + $0xef8] sm:$0xff]
  %v528 = vld [vmem:[%s1 + $0xf00] sm:$0xff]
  %v529 = vld [vmem:[%s1 + $0xf08] sm:$0xff]
  %v530 = vld [vmem:[%s1 + $0xf10] sm:$0xff]
  %v531 = vld [vmem:[%s1 + $0xf18] sm:$0xff]
  %v532 = vld [vmem:[%s1 + $0xf20] sm:$0xff]
  %v533 = vld [vmem:[%s1 + $0xf28] sm:$0xff]
  %v534 = vld [vmem:[%s1 + $0xf30] sm:$0xff]
  %v535 = vld [vmem:[%s1 + $0xf38] sm:$0xff]
  %v536 = vld [vmem:[%s1 + $0xf40] sm:$0xff]
  %v537 = vld [vmem:[%s1 + $0xf48] sm:$0xff]
  %v538 = vld [vmem:[%s1 + $0xf50] sm:$0xff]
  %v539 = vld [vmem:[%s1 + $0xf58] sm:$0xff]
  %v540 = vld [vmem:[%s1 + $0xf60] sm:$0xff]
  %v541 = vld [vmem:[%s1 + $0xf68] sm:$0xff]
  %v542 = vld [vmem:[%s1 + $0xf70] sm:$0xff]
  %v543 = vld [vmem:[%s1 + $0xf78] sm:$0xff]
  %v544 = vld [vmem:[%s1 + $0xf80] sm:$0xff]
  %v545 = vld [vmem:[%s1 + $0xf88] sm:$0xff]
  %v546 = vld [vmem:[%s1 + $0xf90] sm:$0xff]
  %v547 = vld [vmem:[%s1 + $0xf98] sm:$0xff]
  %v548 = vld [vmem:[%s1 + $0xfa0] sm:$0xff]
  %v549 = vld [vmem:[%s1 + $0xfa8] sm:$0xff]
  %v550 = vld [vmem:[%s1 + $0xfb0] sm:$0xff]
  %v551 = vld [vmem:[%s1 + $0xfb8] sm:$0xff]
  %v552 = vld [vmem:[%s1 + $0xfc0] sm:$0xff]
  %v553 = vld [vmem:[%s1 + $0xfc8] sm:$0xff]
  %v554 = vld [vmem:[%s1 + $0xfd0] sm:$0xff]
  %v555 = vld [vmem:[%s1 + $0xfd8] sm:$0xff]
  %v556 = vld [vmem:[%s1 + $0xfe0] sm:$0xff]
  %v557 = vld [vmem:[%s1 + $0xfe8] sm:$0xff]
  %v558 = vld [vmem:[%s1 + $0xff0] sm:$0xff]
  %v559 = vld [vmem:[%s1 + $0xff8] sm:$0xff]
  %v560 = vld [vmem:[%s1 + $0x1000] sm:$0xff]
  %v561 = vld [vmem:[%s1 + $0x1008] sm:$0xff]
  %v562 = vld [vmem:[%s1 + $0x1010] sm:$0xff]
  %v563 = vld [vmem:[%s1 + $0x1018] sm:$0xff]
  %v564 = vld [vmem:[%s1 + $0x1020] sm:$0xff]
  %v565 = vld [vmem:[%s1 + $0x1028] sm:$0xff]
  %v566 = vld [vmem:[%s1 + $0x1030] sm:$0xff]
  %v567 = vld [vmem:[%s1 + $0x1038] sm:$0xff]
  %v568 = vld [vmem:[%s1 + $0x1040] sm:$0xff]
  %v569 = vld [vmem:[%s1 + $0x1048] sm:$0xff]
  %v570 = vld [vmem:[%s1 + $0x1050] sm:$0xff]
  %v571 = vld [vmem:[%s1 + $0x1058] sm:$0xff]
  %v572 = vld [vmem:[%s1 + $0x1060] sm:$0xff]
  %v573 = vld [vmem:[%s1 + $0x1068] sm:$0xff]
  %v574 = vld [vmem:[%s1 + $0x1070] sm:$0xff]
  %v575 = vld [vmem:[%s1 + $0x1078] sm:$0xff]
  %v576 = vld [vmem:[%s1 + $0x1080] sm:$0xff]
  %v577 = vld [vmem:[%s1 + $0x1088] sm:$0xff]
  %v578 = vld [vmem:[%s1 + $0x1090] sm:$0xff]
  %v579 = vld [vmem:[%s1 + $0x1098] sm:$0xff]
  %v580 = vld [vmem:[%s1 + $0x10a0] sm:$0xff]
  %v581 = vld [vmem:[%s1 + $0x10a8] sm:$0xff]
  %v582 = vld [vmem:[%s1 + $0x10b0] sm:$0xff]
  %v583 = vld [vmem:[%s1 + $0x10b8] sm:$0xff]
  %v584 = vld [vmem:[%s1 + $0x10c0] sm:$0xff]
  %v585 = vld [vmem:[%s1 + $0x10c8] sm:$0xff]
  %v586 = vld [vmem:[%s1 + $0x10d0] sm:$0xff]
  %v587 = vld [vmem:[%s1 + $0x10d8] sm:$0xff]
  %v588 = vld [vmem:[%s1 + $0x10e0] sm:$0xff]
  %v589 = vld [vmem:[%s1 + $0x10e8] sm:$0xff]
  %v590 = vld [vmem:[%s1 + $0x10f0] sm:$0xff]
  %v591 = vld [vmem:[%s1 + $0x10f8] sm:$0xff]
  %v592 = vld [vmem:[%s1 + $0x1100] sm:$0xff]
  %v593 = vld [vmem:[%s1 + $0x1108] sm:$0xff]
  %v594 = vld [vmem:[%s1 + $0x1110] sm:$0xff]
  %v595 = vld [vmem:[%s1 + $0x1118] sm:$0xff]
  %v596 = vld [vmem:[%s1 + $0x1120] sm:$0xff]
  %v597 = vld [vmem:[%s1 + $0x1128] sm:$0xff]
  %v598 = vld [vmem:[%s1 + $0x1130] sm:$0xff]
  %v599 = vld [vmem:[%s1 + $0x1138] sm:$0xff]
  %v600 = vld [vmem:[%s1 + $0x1140] sm:$0xff]
  %v601 = vld [vmem:[%s1 + $0x1148] sm:$0xff]
  %v602 = vld [vmem:[%s1 + $0x1150] sm:$0xff]
  %v603 = vld [vmem:[%s1 + $0x1158] sm:$0xff]
  %v604 = vld [vmem:[%s1 + $0x1160] sm:$0xff]
  %v605 = vld [vmem:[%s1 + $0x1168] sm:$0xff]
  %v606 = vld [vmem:[%s1 + $0x1170] sm:$0xff]
  %v607 = vld [vmem:[%s1 + $0x1178] sm:$0xff]
  %v608 = vld [vmem:[%s1 + $0x1180] sm:$0xff]
  %v609 = vld [vmem:[%s1 + $0x1188] sm:$0xff]
  %v610 = vld [vmem:[%s1 + $0x1190] sm:$0xff]
  %v611 = vld [vmem:[%s1 + $0x1198] sm:$0xff]
  %v612 = vld [vmem:[%s1 + $0x11a0] sm:$0xff]
  %v613 = vld [vmem:[%s1 + $0x11a8] sm:$0xff]
  %v614 = vld [vmem:[%s1 + $0x11b0] sm:$0xff]
  %v615 = vld [vmem:[%s1 + $0x11b8] sm:$0xff]
  %v616 = vld [vmem:[%s1 + $0x11c0] sm:$0xff]
  %v617 = vld [vmem:[%s1 + $0x11c8] sm:$0xff]
  %v618 = vld [vmem:[%s1 + $0x11d0] sm:$0xff]
  %v619 = vld [vmem:[%s1 + $0x11d8] sm:$0xff]
  %v620 = vld [vmem:[%s1 + $0x11e0] sm:$0xff]
  %v621 = vld [vmem:[%s1 + $0x11e8] sm:$0xff]
  %v622 = vld [vmem:[%s1 + $0x11f0] sm:$0xff]
  %v623 = vld [vmem:[%s1 + $0x11f8] sm:$0xff]
  %v624 = vld [vmem:[%s1 + $0x1200] sm:$0xff]
  %v625 = vld [vmem:[%s1 + $0x1208] sm:$0xff]
  %v626 = vld [vmem:[%s1 + $0x1210] sm:$0xff]
  %v627 = vld [vmem:[%s1 + $0x1218] sm:$0xff]
  %v628 = vld [vmem:[%s1 + $0x1220] sm:$0xff]
  %v629 = vld [vmem:[%s1 + $0x1228] sm:$0xff]
  %v630 = vld [vmem:[%s1 + $0x1230] sm:$0xff]
  %v631 = vld [vmem:[%s1 + $0x1238] sm:$0xff]
  %v632 = vld [vmem:[%s1 + $0x1240] sm:$0xff]
  %v633 = vld [vmem:[%s1 + $0x1248] sm:$0xff]
  %v634 = vld [vmem:[%s1 + $0x1250] sm:$0xff]
  %v635 = vld [vmem:[%s1 + $0x1258] sm:$0xff]
  %v636 = vld [vmem:[%s1 + $0x1260] sm:$0xff]
  %v637 = vld [vmem:[%s1 + $0x1268] sm:$0xff]
  %v638 = vld [vmem:[%s1 + $0x1270] sm:$0xff]
  %v639 = vld [vmem:[%s1 + $0x1278] sm:$0xff]
  %v640 = vld [vmem:[%s1 + $0x1280] sm:$0xff]
  %v641 = vld [vmem:[%s1 + $0x1288] sm:$0xff]
  %v642 = vld [vmem:[%s1 + $0x1290] sm:$0xff]
  %v643 = vld [vmem:[%s1 + $0x1298] sm:$0xff]
  %v644 = vld [vmem:[%s1 + $0x12a0] sm:$0xff]
  %v645 = vld [vmem:[%s1 + $0x12a8] sm:$0xff]
  %v646 = vld [vmem:[%s1 + $0x12b0] sm:$0xff]
  %v647 = vld [vmem:[%s1 + $0x12b8] sm:$0xff]
  %v648 = vld [vmem:[%s1 + $0x12c0] sm:$0xff]
  %v649 = vld [vmem:[%s1 + $0x12c8] sm:$0xff]
  %v650 = vld [vmem:[%s1 + $0x12d0] sm:$0xff]
  %v651 = vld [vmem:[%s1 + $0x12d8] sm:$0xff]
  %v652 = vld [vmem:[%s1 + $0x12e0] sm:$0xff]
  %v653 = vld [vmem:[%s1 + $0x12e8] sm:$0xff]
  %v654 = vld [vmem:[%s1 + $0x12f0] sm:$0xff]
  %v655 = vld [vmem:[%s1 + $0x12f8] sm:$0xff]
  %v656 = vld [vmem:[%s1 + $0x1300] sm:$0xff]
  %v657 = vld [vmem:[%s1 + $0x1308] sm:$0xff]
  %v658 = vld [vmem:[%s1 + $0x1310] sm:$0xff]
  %v659 = vld [vmem:[%s1 + $0x1318] sm:$0xff]
  %v660 = vld [vmem:[%s1 + $0x1320] sm:$0xff]
  %v661 = vld [vmem:[%s1 + $0x1328] sm:$0xff]
  %v662 = vld [vmem:[%s1 + $0x1330] sm:$0xff]
  %v663 = vld [vmem:[%s1 + $0x1338] sm:$0xff]
  %v664 = vld [vmem:[%s1 + $0x1340] sm:$0xff]
  %v665 = vld [vmem:[%s1 + $0x1348] sm:$0xff]
  %v666 = vld [vmem:[%s1 + $0x1350] sm:$0xff]
  %v667 = vld [vmem:[%s1 + $0x1358] sm:$0xff]
  %v668 = vld [vmem:[%s1 + $0x1360] sm:$0xff]
  %v669 = vld [vmem:[%s1 + $0x1368] sm:$0xff]
  %v670 = vld [vmem:[%s1 + $0x1370] sm:$0xff]
  %v671 = vld [vmem:[%s1 + $0x1378] sm:$0xff]
  %v672 = vld [vmem:[%s1 + $0x1380] sm:$0xff]
  %v673 = vld [vmem:[%s1 + $0x1388] sm:$0xff]
  %v674 = vld [vmem:[%s1 + $0x1390] sm:$0xff]
  %v675 = vld [vmem:[%s1 + $0x1398] sm:$0xff]
  %v676 = vld [vmem:[%s1 + $0x13a0] sm:$0xff]
  %v677 = vld [vmem:[%s1 + $0x13a8] sm:$0xff]
  %v678 = vld [vmem:[%s1 + $0x13b0] sm:$0xff]
  %v679 = vld [vmem:[%s1 + $0x13b8] sm:$0xff]
  %v680 = vld [vmem:[%s1 + $0x13c0] sm:$0xff]
  %v681 = vld [vmem:[%s1 + $0x13c8] sm:$0xff]
  %v682 = vld [vmem:[%s1 + $0x13d0] sm:$0xff]
  %v683 = vld [vmem:[%s1 + $0x13d8] sm:$0xff]
  %v684 = vld [vmem:[%s1 + $0x13e0] sm:$0xff]
  %v685 = vld [vmem:[%s1 + $0x13e8] sm:$0xff]
  %v686 = vld [vmem:[%s1 + $0x13f0] sm:$0xff]
  %v687 = vld [vmem:[%s1 + $0x13f8] sm:$0xff]
  %v688 = vld [vmem:[%s1 + $0x1400] sm:$0xff]
  %v689 = vld [vmem:[%s1 + $0x1408] sm:$0xff]
  %v690 = vld [vmem:[%s1 + $0x1410] sm:$0xff]
  %v691 = vld [vmem:[%s1 + $0x1418] sm:$0xff]
  %v692 = vld [vmem:[%s1 + $0x1420] sm:$0xff]
  %v693 = vld [vmem:[%s1 + $0x1428] sm:$0xff]
  %v694 = vld [vmem:[%s1 + $0x1430] sm:$0xff]
  %v695 = vld [vmem:[%s1 + $0x1438] sm:$0xff]
  %v696 = vld [vmem:[%s1 + $0x1440] sm:$0xff]
  %v697 = vld [vmem:[%s1 + $0x1448] sm:$0xff]
  %v698 = vld [vmem:[%s1 + $0x1450] sm:$0xff]
  %v699 = vld [vmem:[%s1 + $0x1458] sm:$0xff]
  %v700 = vld [vmem:[%s1 + $0x1460] sm:$0xff]
  %v701 = vld [vmem:[%s1 + $0x1468] sm:$0xff]
  %v702 = vld [vmem:[%s1 + $0x1470] sm:$0xff]
  %v703 = vld [vmem:[%s1 + $0x1478] sm:$0xff]
  %v704 = vld [vmem:[%s1 + $0x1480] sm:$0xff]
  %v705 = vld [vmem:[%s1 + $0x1488] sm:$0xff]
  %v706 = vld [vmem:[%s1 + $0x1490] sm:$0xff]
  %v707 = vld [vmem:[%s1 + $0x1498] sm:$0xff]
  %v708 = vld [vmem:[%s1 + $0x14a0] sm:$0xff]
  %v709 = vld [vmem:[%s1 + $0x14a8] sm:$0xff]
  %v710 = vld [vmem:[%s1 + $0x14b0] sm:$0xff]
  %v711 = vld [vmem:[%s1 + $0x14b8] sm:$0xff]
  %v712 = vld [vmem:[%s1 + $0x14c0] sm:$0xff]
  %v713 = vld [vmem:[%s1 + $0x14c8] sm:$0xff]
  %v714 = vld [vmem:[%s1 + $0x14d0] sm:$0xff]
  %v715 = vld [vmem:[%s1 + $0x14d8] sm:$0xff]
  %v716 = vld [vmem:[%s1 + $0x14e0] sm:$0xff]
  %v717 = vld [vmem:[%s1 + $0x14e8] sm:$0xff]
  %v718 = vld [vmem:[%s1 + $0x14f0] sm:$0xff]
  %v719 = vld [vmem:[%s1 + $0x14f8] sm:$0xff]
  %v720 = vld [vmem:[%s1 + $0x1500] sm:$0xff]
  %v721 = vld [vmem:[%s1 + $0x1508] sm:$0xff]
  %v722 = vld [vmem:[%s1 + $0x1510] sm:$0xff]
  %v723 = vld [vmem:[%s1 + $0x1518] sm:$0xff]
  %v724 = vld [vmem:[%s1 + $0x1520] sm:$0xff]
  %v725 = vld [vmem:[%s1 + $0x1528] sm:$0xff]
  %v726 = vld [vmem:[%s1 + $0x1530] sm:$0xff]
  %v727 = vld [vmem:[%s1 + $0x1538] sm:$0xff]
  %v728 = vld [vmem:[%s1 + $0x1540] sm:$0xff]
  %v729 = vld [vmem:[%s1 + $0x1548] sm:$0xff]
  %v730 = vld [vmem:[%s1 + $0x1550] sm:$0xff]
  %v731 = vld [vmem:[%s1 + $0x1558] sm:$0xff]
  %v732 = vld [vmem:[%s1 + $0x1560] sm:$0xff]
  %v733 = vld [vmem:[%s1 + $0x1568] sm:$0xff]
  %v734 = vld [vmem:[%s1 + $0x1570] sm:$0xff]
  %v735 = vld [vmem:[%s1 + $0x1578] sm:$0xff]
  %v736 = vld [vmem:[%s1 + $0x1580] sm:$0xff]
  %v737 = vld [vmem:[%s1 + $0x1588] sm:$0xff]
  %v738 = vld [vmem:[%s1 + $0x1590] sm:$0xff]
  %v739 = vld [vmem:[%s1 + $0x1598] sm:$0xff]
  %v740 = vld [vmem:[%s1 + $0x15a0] sm:$0xff]
  %v741 = vld [vmem:[%s1 + $0x15a8] sm:$0xff]
  %v742 = vld [vmem:[%s1 + $0x15b0] sm:$0xff]
  %v743 = vld [vmem:[%s1 + $0x15b8] sm:$0xff]
  %v744 = vld [vmem:[%s1 + $0x15c0] sm:$0xff]
  %v745 = vld [vmem:[%s1 + $0x15c8] sm:$0xff]
  %v746 = vld [vmem:[%s1 + $0x15d0] sm:$0xff]
  %v747 = vld [vmem:[%s1 + $0x15d8] sm:$0xff]
  %v748 = vld [vmem:[%s1 + $0x15e0] sm:$0xff]
  %v749 = vld [vmem:[%s1 + $0x15e8] sm:$0xff]
  %v750 = vld [vmem:[%s1 + $0x15f0] sm:$0xff]
  %v751 = vld [vmem:[%s1 + $0x15f8] sm:$0xff]
  %v752 = vld [vmem:[%s1 + $0x1600] sm:$0xff]
  %v753 = vld [vmem:[%s1 + $0x1608] sm:$0xff]
  %v754 = vld [vmem:[%s1 + $0x1610] sm:$0xff]
  %v755 = vld [vmem:[%s1 + $0x1618] sm:$0xff]
  %v756 = vld [vmem:[%s1 + $0x1620] sm:$0xff]
  %v757 = vld [vmem:[%s1 + $0x1628] sm:$0xff]
  %v758 = vld [vmem:[%s1 + $0x1630] sm:$0xff]
  %v759 = vld [vmem:[%s1 + $0x1638] sm:$0xff]
  %v760 = vld [vmem:[%s1 + $0x1640] sm:$0xff]
  %v761 = vld [vmem:[%s1 + $0x1648] sm:$0xff]
  %v762 = vld [vmem:[%s1 + $0x1650] sm:$0xff]
  %v763 = vld [vmem:[%s1 + $0x1658] sm:$0xff]
  %v764 = vld [vmem:[%s1 + $0x1660] sm:$0xff]
  %v765 = vld [vmem:[%s1 + $0x1668] sm:$0xff]
  %v766 = vld [vmem:[%s1 + $0x1670] sm:$0xff]
  %v767 = vld [vmem:[%s1 + $0x1678] sm:$0xff]
  %v768 = vld [vmem:[%s1 + $0x1680] sm:$0xff]
  %v769 = vld [vmem:[%s1 + $0x1688] sm:$0xff]
  %v770 = vld [vmem:[%s1 + $0x1690] sm:$0xff]
  %v771 = vld [vmem:[%s1 + $0x1698] sm:$0xff]
  %v772 = vld [vmem:[%s1 + $0x16a0] sm:$0xff]
  %v773 = vld [vmem:[%s1 + $0x16a8] sm:$0xff]
  %v774 = vld [vmem:[%s1 + $0x16b0] sm:$0xff]
  %v775 = vld [vmem:[%s1 + $0x16b8] sm:$0xff]
  %v776 = vld [vmem:[%s1 + $0x16c0] sm:$0xff]
  %v777 = vld [vmem:[%s1 + $0x16c8] sm:$0xff]
  %v778 = vld [vmem:[%s1 + $0x16d0] sm:$0xff]
  %v779 = vld [vmem:[%s1 + $0x16d8] sm:$0xff]
  %v780 = vld [vmem:[%s1 + $0x16e0] sm:$0xff]
  %v781 = vld [vmem:[%s1 + $0x16e8] sm:$0xff]
  %v782 = vld [vmem:[%s1 + $0x16f0] sm:$0xff]
  %v783 = vld [vmem:[%s1 + $0x16f8] sm:$0xff]
  %v784 = vld [vmem:[%s1 + $0x1700] sm:$0xff]
  %v785 = vld [vmem:[%s1 + $0x1708] sm:$0xff]
  %v786 = vld [vmem:[%s1 + $0x1710] sm:$0xff]
  %v787 = vld [vmem:[%s1 + $0x1718] sm:$0xff]
  %v788 = vld [vmem:[%s1 + $0x1720] sm:$0xff]
  %v789 = vld [vmem:[%s1 + $0x1728] sm:$0xff]
  %v790 = vld [vmem:[%s1 + $0x1730] sm:$0xff]
  %v791 = vld [vmem:[%s1 + $0x1738] sm:$0xff]
  %v792 = vld [vmem:[%s1 + $0x1740] sm:$0xff]
  %v793 = vld [vmem:[%s1 + $0x1748] sm:$0xff]
  %v794 = vld [vmem:[%s1 + $0x1750] sm:$0xff]
  %v795 = vld [vmem:[%s1 + $0x1758] sm:$0xff]
  %v796 = vld [vmem:[%s1 + $0x1760] sm:$0xff]
  %v797 = vld [vmem:[%s1 + $0x1768] sm:$0xff]
  %v798 = vld [vmem:[%s1 + $0x1770] sm:$0xff]
  %v799 = vld [vmem:[%s1 + $0x1778] sm:$0xff]
  %v800 = vld [vmem:[%s1 + $0x1780] sm:$0xff]
  %v801 = vld [vmem:[%s1 + $0x1788] sm:$0xff]
  %v802 = vld [vmem:[%s1 + $0x1790] sm:$0xff]
  %v803 = vld [vmem:[%s1 + $0x1798] sm:$0xff]
  %v804 = vld [vmem:[%s1 + $0x17a0] sm:$0xff]
  %v805 = vld [vmem:[%s1 + $0x17a8] sm:$0xff]
  %v806 = vld [vmem:[%s1 + $0x17b0] sm:$0xff]
  %v807 = vld [vmem:[%s1 + $0x17b8] sm:$0xff]
  %v808 = vld [vmem:[%s1 + $0x17c0] sm:$0xff]
  %v809 = vld [vmem:[%s1 + $0x17c8] sm:$0xff]
  %v810 = vld [vmem:[%s1 + $0x17d0] sm:$0xff]
  %v811 = vld [vmem:[%s1 + $0x17d8] sm:$0xff]
  %v812 = vld [vmem:[%s1 + $0x17e0] sm:$0xff]
  %v813 = vld [vmem:[%s1 + $0x17e8] sm:$0xff]
  %v814 = vld [vmem:[%s1 + $0x17f0] sm:$0xff]
  %v815 = vld [vmem:[%s1 + $0x17f8] sm:$0xff]
  %v816 = vld [vmem:[%s1 + $0x1800] sm:$0xff]
  %v817 = vld [vmem:[%s1 + $0x1808] sm:$0xff]
  %v818 = vld [vmem:[%s1 + $0x1810] sm:$0xff]
  %v819 = vld [vmem:[%s1 + $0x1818] sm:$0xff]
  %v820 = vld [vmem:[%s1 + $0x1820] sm:$0xff]
  %v821 = vld [vmem:[%s1 + $0x1828] sm:$0xff]
  %v822 = vld [vmem:[%s1 + $0x1830] sm:$0xff]
  %v823 = vld [vmem:[%s1 + $0x1838] sm:$0xff]
  %v824 = vld [vmem:[%s1 + $0x1840] sm:$0xff]
  %v825 = vld [vmem:[%s1 + $0x1848] sm:$0xff]
  %v826 = vld [vmem:[%s1 + $0x1850] sm:$0xff]
  %v827 = vld [vmem:[%s1 + $0x1858] sm:$0xff]
  %v828 = vld [vmem:[%s1 + $0x1860] sm:$0xff]
  %v829 = vld [vmem:[%s1 + $0x1868] sm:$0xff]
  %v830 = vld [vmem:[%s1 + $0x1870] sm:$0xff]
  %v831 = vld [vmem:[%s1 + $0x1878] sm:$0xff]
  %v832 = vld [vmem:[%s1 + $0x1880] sm:$0xff]
  %v833 = vld [vmem:[%s1 + $0x1888] sm:$0xff]
  %v834 = vld [vmem:[%s1 + $0x1890] sm:$0xff]
  %v835 = vld [vmem:[%s1 + $0x1898] sm:$0xff]
  %v836 = vld [vmem:[%s1 + $0x18a0] sm:$0xff]
  %v837 = vld [vmem:[%s1 + $0x18a8] sm:$0xff]
  %v838 = vld [vmem:[%s1 + $0x18b0] sm:$0xff]
  %v839 = vld [vmem:[%s1 + $0x18b8] sm:$0xff]
  %v840 = vld [vmem:[%s1 + $0x18c0] sm:$0xff]
  %v841 = vld [vmem:[%s1 + $0x18c8] sm:$0xff]
  %v842 = vld [vmem:[%s1 + $0x18d0] sm:$0xff]
  %v843 = vld [vmem:[%s1 + $0x18d8] sm:$0xff]
  %v844 = vld [vmem:[%s1 + $0x18e0] sm:$0xff]
  %v845 = vld [vmem:[%s1 + $0x18e8] sm:$0xff]
  %v846 = vld [vmem:[%s1 + $0x18f0] sm:$0xff]
  %v847 = vld [vmem:[%s1 + $0x18f8] sm:$0xff]
  %v848 = vld [vmem:[%s1 + $0x1900] sm:$0xff]
  %v849 = vld [vmem:[%s1 + $0x1908] sm:$0xff]
  %v850 = vld [vmem:[%s1 + $0x1910] sm:$0xff]
  %v851 = vld [vmem:[%s1 + $0x1918] sm:$0xff]
  %v852 = vld [vmem:[%s1 + $0x1920] sm:$0xff]
  %v853 = vld [vmem:[%s1 + $0x1928] sm:$0xff]
  %v854 = vld [vmem:[%s1 + $0x1930] sm:$0xff]
  %v855 = vld [vmem:[%s1 + $0x1938] sm:$0xff]
  %v856 = vld [vmem:[%s1 + $0x1940] sm:$0xff]
  %v857 = vld [vmem:[%s1 + $0x1948] sm:$0xff]
  %v858 = vld [vmem:[%s1 + $0x1950] sm:$0xff]
  %v859 = vld [vmem:[%s1 + $0x1958] sm:$0xff]
  %v860 = vld [vmem:[%s1 + $0x1960] sm:$0xff]
  %v861 = vld [vmem:[%s1 + $0x1968] sm:$0xff]
  %v862 = vld [vmem:[%s1 + $0x1970] sm:$0xff]
  %v863 = vld [vmem:[%s1 + $0x1978] sm:$0xff]
  %v864 = vld [vmem:[%s1 + $0x1980] sm:$0xff]
  %v865 = vld [vmem:[%s1 + $0x1988] sm:$0xff]
  %v866 = vld [vmem:[%s1 + $0x1990] sm:$0xff]
  %v867 = vld [vmem:[%s1 + $0x1998] sm:$0xff]
  %v868 = vld [vmem:[%s1 + $0x19a0] sm:$0xff]
  %v869 = vld [vmem:[%s1 + $0x19a8] sm:$0xff]
  %v870 = vld [vmem:[%s1 + $0x19b0] sm:$0xff]
  %v871 = vld [vmem:[%s1 + $0x19b8] sm:$0xff]
  %v872 = vld [vmem:[%s1 + $0x19c0] sm:$0xff]
  %v873 = vld [vmem:[%s1 + $0x19c8] sm:$0xff]
  %v874 = vld [vmem:[%s1 + $0x19d0] sm:$0xff]
  %v875 = vld [vmem:[%s1 + $0x19d8] sm:$0xff]
  %v876 = vld [vmem:[%s1 + $0x19e0] sm:$0xff]
  %v877 = vld [vmem:[%s1 + $0x19e8] sm:$0xff]
  %v878 = vld [vmem:[%s1 + $0x19f0] sm:$0xff]
  %v879 = vld [vmem:[%s1 + $0x19f8] sm:$0xff]
  %v880 = vld [vmem:[%s1 + $0x1a00] sm:$0xff]
  %v881 = vld [vmem:[%s1 + $0x1a08] sm:$0xff]
  %v882 = vld [vmem:[%s1 + $0x1a10] sm:$0xff]
  %v883 = vld [vmem:[%s1 + $0x1a18] sm:$0xff]
  %v884 = vld [vmem:[%s1 + $0x1a20] sm:$0xff]
  %v885 = vld [vmem:[%s1 + $0x1a28] sm:$0xff]
  %v886 = vld [vmem:[%s1 + $0x1a30] sm:$0xff]
  %v887 = vld [vmem:[%s1 + $0x1a38] sm:$0xff]
  %v888 = vld [vmem:[%s1 + $0x1a40] sm:$0xff]
  %v889 = vld [vmem:[%s1 + $0x1a48] sm:$0xff]
  %v890 = vld [vmem:[%s1 + $0x1a50] sm:$0xff]
  %v891 = vld [vmem:[%s1 + $0x1a58] sm:$0xff]
  %v892 = vld [vmem:[%s1 + $0x1a60] sm:$0xff]
  %v893 = vld [vmem:[%s1 + $0x1a68] sm:$0xff]
  %v894 = vld [vmem:[%s1 + $0x1a70] sm:$0xff]
  %v895 = vld [vmem:[%s1 + $0x1a78] sm:$0xff]
  %v896 = vld [vmem:[%s1 + $0x1a80] sm:$0xff]
  %v897 = vld [vmem:[%s1 + $0x1a88] sm:$0xff]
  %v898 = vld [vmem:[%s1 + $0x1a90] sm:$0xff]
  %v899 = vld [vmem:[%s1 + $0x1a98] sm:$0xff]
  %v900 = vld [vmem:[%s1 + $0x1aa0] sm:$0xff]
  %v901 = vld [vmem:[%s1 + $0x1aa8] sm:$0xff]
  %v902 = vld [vmem:[%s1 + $0x1ab0] sm:$0xff]
  %v903 = vld [vmem:[%s1 + $0x1ab8] sm:$0xff]
  %v904 = vld [vmem:[%s1 + $0x1ac0] sm:$0xff]
  %v905 = vld [vmem:[%s1 + $0x1ac8] sm:$0xff]
  %v906 = vld [vmem:[%s1 + $0x1ad0] sm:$0xff]
  %v907 = vld [vmem:[%s1 + $0x1ad8] sm:$0xff]
  %v908 = vld [vmem:[%s1 + $0x1ae0] sm:$0xff]
  %v909 = vld [vmem:[%s1 + $0x1ae8] sm:$0xff]
  %v910 = vld [vmem:[%s1 + $0x1af0] sm:$0xff]
  %v911 = vld [vmem:[%s1 + $0x1af8] sm:$0xff]
  %v912 = vld [vmem:[%s1 + $0x1b00] sm:$0xff]
  %v913 = vld [vmem:[%s1 + $0x1b08] sm:$0xff]
  %v914 = vld [vmem:[%s1 + $0x1b10] sm:$0xff]
  %v915 = vld [vmem:[%s1 + $0x1b18] sm:$0xff]
  %v916 = vld [vmem:[%s1 + $0x1b20] sm:$0xff]
  %v917 = vld [vmem:[%s1 + $0x1b28] sm:$0xff]
  %v918 = vld [vmem:[%s1 + $0x1b30] sm:$0xff]
  %v919 = vld [vmem:[%s1 + $0x1b38] sm:$0xff]
  %v920 = vld [vmem:[%s1 + $0x1b40] sm:$0xff]
  %v921 = vld [vmem:[%s1 + $0x1b48] sm:$0xff]
  %v922 = vld [vmem:[%s1 + $0x1b50] sm:$0xff]
  %v923 = vld [vmem:[%s1 + $0x1b58] sm:$0xff]
  %v924 = vld [vmem:[%s1 + $0x1b60] sm:$0xff]
  %v925 = vld [vmem:[%s1 + $0x1b68] sm:$0xff]
  %v926 = vld [vmem:[%s1 + $0x1b70] sm:$0xff]
  %v927 = vld [vmem:[%s1 + $0x1b78] sm:$0xff]
  %v928 = vld [vmem:[%s1 + $0x1b80] sm:$0xff]
  %v929 = vld [vmem:[%s1 + $0x1b88] sm:$0xff]
  %v930 = vld [vmem:[%s1 + $0x1b90] sm:$0xff]
  %v931 = vld [vmem:[%s1 + $0x1b98] sm:$0xff]
  %v932 = vld [vmem:[%s1 + $0x1ba0] sm:$0xff]
  %v933 = vld [vmem:[%s1 + $0x1ba8] sm:$0xff]
  %v934 = vld [vmem:[%s1 + $0x1bb0] sm:$0xff]
  %v935 = vld [vmem:[%s1 + $0x1bb8] sm:$0xff]
  %v936 = vld [vmem:[%s1 + $0x1bc0] sm:$0xff]
  %v937 = vld [vmem:[%s1 + $0x1bc8] sm:$0xff]
  %v938 = vld [vmem:[%s1 + $0x1bd0] sm:$0xff]
  %v939 = vld [vmem:[%s1 + $0x1bd8] sm:$0xff]
  %v940 = vld [vmem:[%s1 + $0x1be0] sm:$0xff]
  %v941 = vld [vmem:[%s1 + $0x1be8] sm:$0xff]
  %v942 = vld [vmem:[%s1 + $0x1bf0] sm:$0xff]
  %v943 = vld [vmem:[%s1 + $0x1bf8] sm:$0xff]
  %v944 = vld [vmem:[%s1 + $0x1c00] sm:$0xff]
  %v945 = vld [vmem:[%s1 + $0x1c08] sm:$0xff]
  %v946 = vld [vmem:[%s1 + $0x1c10] sm:$0xff]
  %v947 = vld [vmem:[%s1 + $0x1c18] sm:$0xff]
  %v948 = vld [vmem:[%s1 + $0x1c20] sm:$0xff]
  %v949 = vld [vmem:[%s1 + $0x1c28] sm:$0xff]
  %v950 = vld [vmem:[%s1 + $0x1c30] sm:$0xff]
  %v951 = vld [vmem:[%s1 + $0x1c38] sm:$0xff]
  %v952 = vld [vmem:[%s1 + $0x1c40] sm:$0xff]
  %v953 = vld [vmem:[%s1 + $0x1c48] sm:$0xff]
  %v954 = vld [vmem:[%s1 + $0x1c50] sm:$0xff]
  %v955 = vld [vmem:[%s1 + $0x1c58] sm:$0xff]
  %v956 = vld [vmem:[%s1 + $0x1c60] sm:$0xff]
  %v957 = vld [vmem:[%s1 + $0x1c68] sm:$0xff]
  %v958 = vld [vmem:[%s1 + $0x1c70] sm:$0xff]
  %v959 = vld [vmem:[%s1 + $0x1c78] sm:$0xff]
  %v960 = vld [vmem:[%s1 + $0x1c80] sm:$0xff]
  %v961 = vld [vmem:[%s1 + $0x1c88] sm:$0xff]
  %v962 = vld [vmem:[%s1 + $0x1c90] sm:$0xff]
  %v963 = vld [vmem:[%s1 + $0x1c98] sm:$0xff]
  %v964 = vld [vmem:[%s1 + $0x1ca0] sm:$0xff]
  %v965 = vld [vmem:[%s1 + $0x1ca8] sm:$0xff]
  %v966 = vld [vmem:[%s1 + $0x1cb0] sm:$0xff]
  %v967 = vld [vmem:[%s1 + $0x1cb8] sm:$0xff]
  %v968 = vld [vmem:[%s1 + $0x1cc0] sm:$0xff]
  %v969 = vld [vmem:[%s1 + $0x1cc8] sm:$0xff]
  %v970 = vld [vmem:[%s1 + $0x1cd0] sm:$0xff]
  %v971 = vld [vmem:[%s1 + $0x1cd8] sm:$0xff]
  %v972 = vld [vmem:[%s1 + $0x1ce0] sm:$0xff]
  %v973 = vld [vmem:[%s1 + $0x1ce8] sm:$0xff]
  %v974 = vld [vmem:[%s1 + $0x1cf0] sm:$0xff]
  %v975 = vld [vmem:[%s1 + $0x1cf8] sm:$0xff]
  %v976 = vld [vmem:[%s1 + $0x1d00] sm:$0xff]
  %v977 = vld [vmem:[%s1 + $0x1d08] sm:$0xff]
  %v978 = vld [vmem:[%s1 + $0x1d10] sm:$0xff]
  %v979 = vld [vmem:[%s1 + $0x1d18] sm:$0xff]
  %v980 = vld [vmem:[%s1 + $0x1d20] sm:$0xff]
  %v981 = vld [vmem:[%s1 + $0x1d28] sm:$0xff]
  %v982 = vld [vmem:[%s1 + $0x1d30] sm:$0xff]
  %v983 = vld [vmem:[%s1 + $0x1d38] sm:$0xff]
  %v984 = vld [vmem:[%s1 + $0x1d40] sm:$0xff]
  %v985 = vld [vmem:[%s1 + $0x1d48] sm:$0xff]
  %v986 = vld [vmem:[%s1 + $0x1d50] sm:$0xff]
  %v987 = vld [vmem:[%s1 + $0x1d58] sm:$0xff]
  %v988 = vld [vmem:[%s1 + $0x1d60] sm:$0xff]
  %v989 = vld [vmem:[%s1 + $0x1d68] sm:$0xff]
  %v990 = vld [vmem:[%s1 + $0x1d70] sm:$0xff]
  %v991 = vld [vmem:[%s1 + $0x1d78] sm:$0xff]
  %v992 = vld [vmem:[%s1 + $0x1d80] sm:$0xff]
  %v993 = vld [vmem:[%s1 + $0x1d88] sm:$0xff]
  %v994 = vld [vmem:[%s1 + $0x1d90] sm:$0xff]
  %v995 = vld [vmem:[%s1 + $0x1d98] sm:$0xff]
  %v996 = vld [vmem:[%s1 + $0x1da0] sm:$0xff]
  %v997 = vld [vmem:[%s1 + $0x1da8] sm:$0xff]
  %v998 = vld [vmem:[%s1 + $0x1db0] sm:$0xff]
  %v999 = vld [vmem:[%s1 + $0x1db8] sm:$0xff]
  %v1000 = vld [vmem:[%s1 + $0x1dc0] sm:$0xff]
  %v1001 = vld [vmem:[%s1 + $0x1dc8] sm:$0xff]
  %v1002 = vld [vmem:[%s1 + $0x1dd0] sm:$0xff]
  %v1003 = vld [vmem:[%s1 + $0x1dd8] sm:$0xff]
  %v1004 = vld [vmem:[%s1 + $0x1de0] sm:$0xff]
  %v1005 = vld [vmem:[%s1 + $0x1de8] sm:$0xff]
  %v1006 = vld [vmem:[%s1 + $0x1df0] sm:$0xff]
  %v1007 = vld [vmem:[%s1 + $0x1df8] sm:$0xff]
  %v1008 = vld [vmem:[%s1 + $0x1e00] sm:$0xff]
  %v1009 = vld [vmem:[%s1 + $0x1e08] sm:$0xff]
  %v1010 = vld [vmem:[%s1 + $0x1e10] sm:$0xff]
  %v1011 = vld [vmem:[%s1 + $0x1e18] sm:$0xff]
  %v1012 = vld [vmem:[%s1 + $0x1e20] sm:$0xff]
  %v1013 = vld [vmem:[%s1 + $0x1e28] sm:$0xff]
  %v1014 = vld [vmem:[%s1 + $0x1e30] sm:$0xff]
  %v1015 = vld [vmem:[%s1 + $0x1e38] sm:$0xff]
  %v1016 = vld [vmem:[%s1 + $0x1e40] sm:$0xff]
  %v1017 = vld [vmem:[%s1 + $0x1e48] sm:$0xff]
  %v1018 = vld [vmem:[%s1 + $0x1e50] sm:$0xff]
  %v1019 = vld [vmem:[%s1 + $0x1e58] sm:$0xff]
  %v1020 = vld [vmem:[%s1 + $0x1e60] sm:$0xff]
  %v1021 = vld [vmem:[%s1 + $0x1e68] sm:$0xff]
  %v1022 = vld [vmem:[%s1 + $0x1e70] sm:$0xff]
  %v1023 = vld [vmem:[%s1 + $0x1e78] sm:$0xff]
  %v1024 = vld [vmem:[%s1 + $0x1e80] sm:$0xff]
  %v1025 = vld [vmem:[%s1 + $0x1e88] sm:$0xff]
  %v1026 = vld [vmem:[%s1 + $0x1e90] sm:$0xff]
  %v1027 = vld [vmem:[%s1 + $0x1e98] sm:$0xff]
  %v1028 = vld [vmem:[%s1 + $0x1ea0] sm:$0xff]
  %v1029 = vld [vmem:[%s1 + $0x1ea8] sm:$0xff]
  %v1030 = vld [vmem:[%s1 + $0x1eb0] sm:$0xff]
  %v1031 = vld [vmem:[%s1 + $0x1eb8] sm:$0xff]
  %v1032 = vld [vmem:[%s1 + $0x1ec0] sm:$0xff]
  %v1033 = vld [vmem:[%s1 + $0x1ec8] sm:$0xff]
  %v1034 = vld [vmem:[%s1 + $0x1ed0] sm:$0xff]
  %v1035 = vld [vmem:[%s1 + $0x1ed8] sm:$0xff]
  %v1036 = vld [vmem:[%s1 + $0x1ee0] sm:$0xff]
  %v1037 = vld [vmem:[%s1 + $0x1ee8] sm:$0xff]
  %v1038 = vld [vmem:[%s1 + $0x1ef0] sm:$0xff]
  %v1039 = vld [vmem:[%s1 + $0x1ef8] sm:$0xff]
  %v1040 = vld [vmem:[%s1 + $0x1f00] sm:$0xff]
  %v1041 = vld [vmem:[%s1 + $0x1f08] sm:$0xff]
  %v1042 = vld [vmem:[%s1 + $0x1f10] sm:$0xff]
  %v1043 = vld [vmem:[%s1 + $0x1f18] sm:$0xff]
  %v1044 = vld [vmem:[%s1 + $0x1f20] sm:$0xff]
  %v1045 = vld [vmem:[%s1 + $0x1f28] sm:$0xff]
  %v1046 = vld [vmem:[%s1 + $0x1f30] sm:$0xff]
  %v1047 = vld [vmem:[%s1 + $0x1f38] sm:$0xff]
  %v1048 = vld [vmem:[%s1 + $0x1f40] sm:$0xff]
  %v1049 = vld [vmem:[%s1 + $0x1f48] sm:$0xff]
  %v1050 = vld [vmem:[%s1 + $0x1f50] sm:$0xff]
  %v1051 = vld [vmem:[%s1 + $0x1f58] sm:$0xff]
  %v1052 = vld [vmem:[%s1 + $0x1f60] sm:$0xff]
  %v1053 = vld [vmem:[%s1 + $0x1f68] sm:$0xff]
  %v1054 = vld [vmem:[%s1 + $0x1f70] sm:$0xff]
  %v1055 = vld [vmem:[%s1 + $0x1f78] sm:$0xff]
  %v1056 = vld [vmem:[%s1 + $0x1f80] sm:$0xff]
  %v1057 = vld [vmem:[%s1 + $0x1f88] sm:$0xff]
  %v1058 = vld [vmem:[%s1 + $0x1f90] sm:$0xff]
  %v1059 = vld [vmem:[%s1 + $0x1f98] sm:$0xff]
  %v1060 = vld [vmem:[%s1 + $0x1fa0] sm:$0xff]
  %v1061 = vld [vmem:[%s1 + $0x1fa8] sm:$0xff]
  %v1062 = vld [vmem:[%s1 + $0x1fb0] sm:$0xff]
  %v1063 = vld [vmem:[%s1 + $0x1fb8] sm:$0xff]
  %v1064 = vld [vmem:[%s1 + $0x1fc0] sm:$0xff]
  %v1065 = vld [vmem:[%s1 + $0x1fc8] sm:$0xff]
  %v1066 = vld [vmem:[%s1 + $0x1fd0] sm:$0xff]
  %v1067 = vld [vmem:[%s1 + $0x1fd8] sm:$0xff]
  %v1068 = vld [vmem:[%s1 + $0x1fe0] sm:$0xff]
  %v1069 = vld [vmem:[%s1 + $0x1fe8] sm:$0xff]
  %v1070 = vld [vmem:[%s1 + $0x1ff0] sm:$0xff]
  %v1071 = vld [vmem:[%s1 + $0x1ff8] sm:$0xff]
  %v1072 = vld [vmem:[%s1 + $0x2000] sm:$0xff]
  %v1073 = vld [vmem:[%s1 + $0x2008] sm:$0xff]
  %v1074 = vld [vmem:[%s1 + $0x2010] sm:$0xff]
  %v1075 = vld [vmem:[%s1 + $0x2018] sm:$0xff]
  %v1076 = vld [vmem:[%s1 + $0x2020] sm:$0xff]
  %v1077 = vld [vmem:[%s1 + $0x2028] sm:$0xff]
  %v1078 = vld [vmem:[%s1 + $0x2030] sm:$0xff]
  %v1079 = vld [vmem:[%s1 + $0x2038] sm:$0xff]
  %v1080 = vld [vmem:[%s1 + $0x2040] sm:$0xff]
  %v1081 = vld [vmem:[%s1 + $0x2048] sm:$0xff]
  %v1082 = vld [vmem:[%s1 + $0x2050] sm:$0xff]
  %v1083 = vld [vmem:[%s1 + $0x2058] sm:$0xff]
  %v1084 = vld [vmem:[%s1 + $0x2060] sm:$0xff]
  %v1085 = vld [vmem:[%s1 + $0x2068] sm:$0xff]
  %v1086 = vld [vmem:[%s1 + $0x2070] sm:$0xff]
  %v1087 = vld [vmem:[%s1 + $0x2078] sm:$0xff]
  %v1088 = vld [vmem:[%s1 + $0x2080] sm:$0xff]
  %v1089 = vld [vmem:[%s1 + $0x2088] sm:$0xff]
  %v1090 = vld [vmem:[%s1 + $0x2090] sm:$0xff]
  %v1091 = vld [vmem:[%s1 + $0x2098] sm:$0xff]
  %v1092 = vld [vmem:[%s1 + $0x20a0] sm:$0xff]
  %v1093 = vld [vmem:[%s1 + $0x20a8] sm:$0xff]
  %v1094 = vld [vmem:[%s1 + $0x20b0] sm:$0xff]
  %v1095 = vld [vmem:[%s1 + $0x20b8] sm:$0xff]
  %v1096 = vld [vmem:[%s1 + $0x20c0] sm:$0xff]
  %v1097 = vld [vmem:[%s1 + $0x20c8] sm:$0xff]
  %v1098 = vld [vmem:[%s1 + $0x20d0] sm:$0xff]
  %v1099 = vld [vmem:[%s1 + $0x20d8] sm:$0xff]
  %v1100 = vld [vmem:[%s1 + $0x20e0] sm:$0xff]
  %v1101 = vld [vmem:[%s1 + $0x20e8] sm:$0xff]
  %v1102 = vld [vmem:[%s1 + $0x20f0] sm:$0xff]
  %v1103 = vld [vmem:[%s1 + $0x20f8] sm:$0xff]
  %v1104 = vld [vmem:[%s1 + $0x2100] sm:$0xff]
  %v1105 = vld [vmem:[%s1 + $0x2108] sm:$0xff]
  %v1106 = vld [vmem:[%s1 + $0x2110] sm:$0xff]
  %v1107 = vld [vmem:[%s1 + $0x2118] sm:$0xff]
  %v1108 = vld [vmem:[%s1 + $0x2120] sm:$0xff]
  %v1109 = vld [vmem:[%s1 + $0x2128] sm:$0xff]
  %v1110 = vld [vmem:[%s1 + $0x2130] sm:$0xff]
  %v1111 = vld [vmem:[%s1 + $0x2138] sm:$0xff]
  %v1112 = vld [vmem:[%s1 + $0x2140] sm:$0xff]
  %v1113 = vld [vmem:[%s1 + $0x2148] sm:$0xff]
  %v1114 = vld [vmem:[%s1 + $0x2150] sm:$0xff]
  %v1115 = vld [vmem:[%s1 + $0x2158] sm:$0xff]
  %v1116 = vld [vmem:[%s1 + $0x2160] sm:$0xff]
  %v1117 = vld [vmem:[%s1 + $0x2168] sm:$0xff]
  %v1118 = vld [vmem:[%s1 + $0x2170] sm:$0xff]
  %v1119 = vld [vmem:[%s1 + $0x2178] sm:$0xff]
  %v1120 = vld [vmem:[%s1 + $0x2180] sm:$0xff]
  %v1121 = vld [vmem:[%s1 + $0x2188] sm:$0xff]
  %v1122 = vld [vmem:[%s1 + $0x2190] sm:$0xff]
  %v1123 = vld [vmem:[%s1 + $0x2198] sm:$0xff]
  %v1124 = vld [vmem:[%s1 + $0x21a0] sm:$0xff]
  %v1125 = vld [vmem:[%s1 + $0x21a8] sm:$0xff]
  %v1126 = vld [vmem:[%s1 + $0x21b0] sm:$0xff]
  %v1127 = vld [vmem:[%s1 + $0x21b8] sm:$0xff]
  %v1128 = vld [vmem:[%s1 + $0x21c0] sm:$0xff]
  %v1129 = vld [vmem:[%s1 + $0x21c8] sm:$0xff]
  %v1130 = vld [vmem:[%s1 + $0x21d0] sm:$0xff]
  %v1131 = vld [vmem:[%s1 + $0x21d8] sm:$0xff]
  %v1132 = vld [vmem:[%s1 + $0x21e0] sm:$0xff]
  %v1133 = vld [vmem:[%s1 + $0x21e8] sm:$0xff]
  %v1134 = vld [vmem:[%s1 + $0x21f0] sm:$0xff]
  %v1135 = vld [vmem:[%s1 + $0x21f8] sm:$0xff]
  %v1136 = vld [vmem:[%s1 + $0x2200] sm:$0xff]
  %v1137 = vld [vmem:[%s1 + $0x2208] sm:$0xff]
  %v1138 = vld [vmem:[%s1 + $0x2210] sm:$0xff]
  %v1139 = vld [vmem:[%s1 + $0x2218] sm:$0xff]
  %v1140 = vld [vmem:[%s1 + $0x2220] sm:$0xff]
  %v1141 = vld [vmem:[%s1 + $0x2228] sm:$0xff]
  %v1142 = vld [vmem:[%s1 + $0x2230] sm:$0xff]
  %v1143 = vld [vmem:[%s1 + $0x2238] sm:$0xff]
  %v1144 = vld [vmem:[%s1 + $0x2240] sm:$0xff]
  %v1145 = vld [vmem:[%s1 + $0x2248] sm:$0xff]
  %v1146 = vld [vmem:[%s1 + $0x2250] sm:$0xff]
  %v1147 = vld [vmem:[%s1 + $0x2258] sm:$0xff]
  %v1148 = vld [vmem:[%s1 + $0x2260] sm:$0xff]
  %v1149 = vld [vmem:[%s1 + $0x2268] sm:$0xff]
  %v1150 = vld [vmem:[%s1 + $0x2270] sm:$0xff]
  %v1151 = vld [vmem:[%s1 + $0x2278] sm:$0xff]
  %v1152 = vld [vmem:[%s1 + $0x2280] sm:$0xff]
  %v1153 = vld [vmem:[%s1 + $0x2288] sm:$0xff]
  %v1154 = vld [vmem:[%s1 + $0x2290] sm:$0xff]
  %v1155 = vld [vmem:[%s1 + $0x2298] sm:$0xff]
  %v1156 = vld [vmem:[%s1 + $0x22a0] sm:$0xff]
  %v1157 = vld [vmem:[%s1 + $0x22a8] sm:$0xff]
  %v1158 = vld [vmem:[%s1 + $0x22b0] sm:$0xff]
  %v1159 = vld [vmem:[%s1 + $0x22b8] sm:$0xff]
  %v1160 = vld [vmem:[%s1 + $0x22c0] sm:$0xff]
  %v1161 = vld [vmem:[%s1 + $0x22c8] sm:$0xff]
  %v1162 = vld [vmem:[%s1 + $0x22d0] sm:$0xff]
  %v1163 = vld [vmem:[%s1 + $0x22d8] sm:$0xff]
  %v1164 = vld [vmem:[%s1 + $0x22e0] sm:$0xff]
  %v1165 = vld [vmem:[%s1 + $0x22e8] sm:$0xff]
  %v1166 = vld [vmem:[%s1 + $0x22f0] sm:$0xff]
  %v1167 = vld [vmem:[%s1 + $0x22f8] sm:$0xff]
  %v1168 = vld [vmem:[%s1 + $0x2300] sm:$0xff]
  %v1169 = vld [vmem:[%s1 + $0x2308] sm:$0xff]
  %v1170 = vld [vmem:[%s1 + $0x2310] sm:$0xff]
  %v1171 = vld [vmem:[%s1 + $0x2318] sm:$0xff]
  %v1172 = vld [vmem:[%s1 + $0x2320] sm:$0xff]
  %v1173 = vld [vmem:[%s1 + $0x2328] sm:$0xff]
  %v1174 = vld [vmem:[%s1 + $0x2330] sm:$0xff]
  %v1175 = vld [vmem:[%s1 + $0x2338] sm:$0xff]
  %v1176 = vld [vmem:[%s1 + $0x2340] sm:$0xff]
  %v1177 = vld [vmem:[%s1 + $0x2348] sm:$0xff]
  %v1178 = vld [vmem:[%s1 + $0x2350] sm:$0xff]
  %v1179 = vld [vmem:[%s1 + $0x2358] sm:$0xff]
  %v1180 = vld [vmem:[%s1 + $0x2360] sm:$0xff]
  %v1181 = vld [vmem:[%s1 + $0x2368] sm:$0xff]
  %v1182 = vld [vmem:[%s1 + $0x2370] sm:$0xff]
  %v1183 = vld [vmem:[%s1 + $0x2378] sm:$0xff]
  %v1184 = vld [vmem:[%s1 + $0x2380] sm:$0xff]
  %v1185 = vld [vmem:[%s1 + $0x2388] sm:$0xff]
  %v1186 = vld [vmem:[%s1 + $0x2390] sm:$0xff]
  %v1187 = vld [vmem:[%s1 + $0x2398] sm:$0xff]
  %v1188 = vld [vmem:[%s1 + $0x23a0] sm:$0xff]
  %v1189 = vld [vmem:[%s1 + $0x23a8] sm:$0xff]
  %v1190 = vld [vmem:[%s1 + $0x23b0] sm:$0xff]
  %v1191 = vld [vmem:[%s1 + $0x23b8] sm:$0xff]
  %v1192 = vld [vmem:[%s1 + $0x23c0] sm:$0xff]
  %v1193 = vld [vmem:[%s1 + $0x23c8] sm:$0xff]
  %v1194 = vld [vmem:[%s1 + $0x23d0] sm:$0xff]
  %v1195 = vld [vmem:[%s1 + $0x23d8] sm:$0xff]
  %v1196 = vld [vmem:[%s1 + $0x23e0] sm:$0xff]
  %v1197 = vld [vmem:[%s1 + $0x23e8] sm:$0xff]
  %v1198 = vld [vmem:[%s1 + $0x23f0] sm:$0xff]
  %v1199 = vld [vmem:[%s1 + $0x23f8] sm:$0xff]
  %v1200 = vld [vmem:[%s1 + $0x2400] sm:$0xff]
  %v1201 = vld [vmem:[%s1 + $0x2408] sm:$0xff]
  %v1202 = vld [vmem:[%s1 + $0x2410] sm:$0xff]
  %v1203 = vld [vmem:[%s1 + $0x2418] sm:$0xff]
  %v1204 = vld [vmem:[%s1 + $0x2420] sm:$0xff]
  %v1205 = vld [vmem:[%s1 + $0x2428] sm:$0xff]
  %v1206 = vld [vmem:[%s1 + $0x2430] sm:$0xff]
  %v1207 = vld [vmem:[%s1 + $0x2438] sm:$0xff]
  %v1208 = vld [vmem:[%s1 + $0x2440] sm:$0xff]
  %v1209 = vld [vmem:[%s1 + $0x2448] sm:$0xff]
  %v1210 = vld [vmem:[%s1 + $0x2450] sm:$0xff]
  %v1211 = vld [vmem:[%s1 + $0x2458] sm:$0xff]
  %v1212 = vld [vmem:[%s1 + $0x2460] sm:$0xff]
  %v1213 = vld [vmem:[%s1 + $0x2468] sm:$0xff]
  %v1214 = vld [vmem:[%s1 + $0x2470] sm:$0xff]
  %v1215 = vld [vmem:[%s1 + $0x2478] sm:$0xff]
  %v1216 = vld [vmem:[%s1 + $0x2480] sm:$0xff]
  %v1217 = vld [vmem:[%s1 + $0x2488] sm:$0xff]
  %v1218 = vld [vmem:[%s1 + $0x2490] sm:$0xff]
  %v1219 = vld [vmem:[%s1 + $0x2498] sm:$0xff]
  %v1220 = vld [vmem:[%s1 + $0x24a0] sm:$0xff]
  %v1221 = vld [vmem:[%s1 + $0x24a8] sm:$0xff]
  %v1222 = vld [vmem:[%s1 + $0x24b0] sm:$0xff]
  %v1223 = vld [vmem:[%s1 + $0x24b8] sm:$0xff]
  %v1224 = vld [vmem:[%s1 + $0x24c0] sm:$0xff]
  %v1225 = vld [vmem:[%s1 + $0x24c8] sm:$0xff]
  %v1226 = vld [vmem:[%s1 + $0x24d0] sm:$0xff]
  %v1227 = vld [vmem:[%s1 + $0x24d8] sm:$0xff]
  %v1228 = vld [vmem:[%s1 + $0x24e0] sm:$0xff]
  %v1229 = vld [vmem:[%s1 + $0x24e8] sm:$0xff]
  %v1230 = vld [vmem:[%s1 + $0x24f0] sm:$0xff]
  %v1231 = vld [vmem:[%s1 + $0x24f8] sm:$0xff]
  %v1232 = vld [vmem:[%s1 + $0x2500] sm:$0xff]
  %v1233 = vld [vmem:[%s1 + $0x2508] sm:$0xff]
  %v1234 = vld [vmem:[%s1 + $0x2510] sm:$0xff]
  %v1235 = vld [vmem:[%s1 + $0x2518] sm:$0xff]
  %v1236 = vld [vmem:[%s1 + $0x2520] sm:$0xff]
  %v1237 = vld [vmem:[%s1 + $0x2528] sm:$0xff]
  %v1238 = vld [vmem:[%s1 + $0x2530] sm:$0xff]
  %v1239 = vld [vmem:[%s1 + $0x2538] sm:$0xff]
  %v1240 = vld [vmem:[%s1 + $0x2540] sm:$0xff]
  %v1241 = vld [vmem:[%s1 + $0x2548] sm:$0xff]
  %v1242 = vld [vmem:[%s1 + $0x2550] sm:$0xff]
  %v1243 = vld [vmem:[%s1 + $0x2558] sm:$0xff]
  %v1244 = vld [vmem:[%s1 + $0x2560] sm:$0xff]
  %v1245 = vld [vmem:[%s1 + $0x2568] sm:$0xff]
  %v1246 = vld [vmem:[%s1 + $0x2570] sm:$0xff]
  %v1247 = vld [vmem:[%s1 + $0x2578] sm:$0xff]
  %v1248 = vld [vmem:[%s1 + $0x2580] sm:$0xff]
  %v1249 = vld [vmem:[%s1 + $0x2588] sm:$0xff]
  %v1250 = vld [vmem:[%s1 + $0x2590] sm:$0xff]
  %v1251 = vld [vmem:[%s1 + $0x2598] sm:$0xff]
  %v1252 = vld [vmem:[%s1 + $0x25a0] sm:$0xff]
  %v1253 = vld [vmem:[%s1 + $0x25a8] sm:$0xff]
  %v1254 = vld [vmem:[%s1 + $0x25b0] sm:$0xff]
  %v1255 = vld [vmem:[%s1 + $0x25b8] sm:$0xff]
  %v1256 = vld [vmem:[%s1 + $0x25c0] sm:$0xff]
  %v1257 = vld [vmem:[%s1 + $0x25c8] sm:$0xff]
  %v1258 = vld [vmem:[%s1 + $0x25d0] sm:$0xff]
  %v1259 = vld [vmem:[%s1 + $0x25d8] sm:$0xff]
  %v1260 = vld [vmem:[%s1 + $0x25e0] sm:$0xff]
  %v1261 = vld [vmem:[%s1 + $0x25e8] sm:$0xff]
  %v1262 = vld [vmem:[%s1 + $0x25f0] sm:$0xff]
  %v1263 = vld [vmem:[%s1 + $0x25f8] sm:$0xff]
  %v1264 = vld [vmem:[%s1 + $0x2600] sm:$0xff]
  %v1265 = vld [vmem:[%s1 + $0x2608] sm:$0xff]
  %v1266 = vld [vmem:[%s1 + $0x2610] sm:$0xff]
  %v1267 = vld [vmem:[%s1 + $0x2618] sm:$0xff]
  %v1268 = vld [vmem:[%s1 + $0x2620] sm:$0xff]
  %v1269 = vld [vmem:[%s1 + $0x2628] sm:$0xff]
  %v1270 = vld [vmem:[%s1 + $0x2630] sm:$0xff]
  %v1271 = vld [vmem:[%s1 + $0x2638] sm:$0xff]
  %v1272 = vld [vmem:[%s1 + $0x2640] sm:$0xff]
  %v1273 = vld [vmem:[%s1 + $0x2648] sm:$0xff]
  %v1274 = vld [vmem:[%s1 + $0x2650] sm:$0xff]
  %v1275 = vld [vmem:[%s1 + $0x2658] sm:$0xff]
  %v1276 = vld [vmem:[%s1 + $0x2660] sm:$0xff]
  %v1277 = vld [vmem:[%s1 + $0x2668] sm:$0xff]
  %v1278 = vld [vmem:[%s1 + $0x2670] sm:$0xff]
  %v1279 = vld [vmem:[%s1 + $0x2678] sm:$0xff]
  %v1280 = vld [vmem:[%s1 + $0x2680] sm:$0xff]
  %v1281 = vld [vmem:[%s1 + $0x2688] sm:$0xff]
  %v1282 = vld [vmem:[%s1 + $0x2690] sm:$0xff]
  %v1283 = vld [vmem:[%s1 + $0x2698] sm:$0xff]
  %v1284 = vld [vmem:[%s1 + $0x26a0] sm:$0xff]
  %v1285 = vld [vmem:[%s1 + $0x26a8] sm:$0xff]
  %v1286 = vld [vmem:[%s1 + $0x26b0] sm:$0xff]
  %v1287 = vld [vmem:[%s1 + $0x26b8] sm:$0xff]
  %v1288 = vld [vmem:[%s1 + $0x26c0] sm:$0xff]
  %v1289 = vld [vmem:[%s1 + $0x26c8] sm:$0xff]
  %v1290 = vld [vmem:[%s1 + $0x26d0] sm:$0xff]
  %v1291 = vld [vmem:[%s1 + $0x26d8] sm:$0xff]
  %v1292 = vld [vmem:[%s1 + $0x26e0] sm:$0xff]
  %v1293 = vld [vmem:[%s1 + $0x26e8] sm:$0xff]
  %v1294 = vld [vmem:[%s1 + $0x26f0] sm:$0xff]
  %v1295 = vld [vmem:[%s1 + $0x26f8] sm:$0xff]
  %v1296 = vld [vmem:[%s1 + $0x2700] sm:$0xff]
  %v1297 = vld [vmem:[%s1 + $0x2708] sm:$0xff]
  %v1298 = vld [vmem:[%s1 + $0x2710] sm:$0xff]
  %v1299 = vld [vmem:[%s1 + $0x2718] sm:$0xff]
  %v1300 = vld [vmem:[%s1 + $0x2720] sm:$0xff]
  %v1301 = vld [vmem:[%s1 + $0x2728] sm:$0xff]
  %v1302 = vld [vmem:[%s1 + $0x2730] sm:$0xff]
  %v1303 = vld [vmem:[%s1 + $0x2738] sm:$0xff]
  %v1304 = vld [vmem:[%s1 + $0x2740] sm:$0xff]
  %v1305 = vld [vmem:[%s1 + $0x2748] sm:$0xff]
  %v1306 = vld [vmem:[%s1 + $0x2750] sm:$0xff]
  %v1307 = vld [vmem:[%s1 + $0x2758] sm:$0xff]
  %v1308 = vld [vmem:[%s1 + $0x2760] sm:$0xff]
  %v1309 = vld [vmem:[%s1 + $0x2768] sm:$0xff]
  %v1310 = vld [vmem:[%s1 + $0x2770] sm:$0xff]
  %v1311 = vld [vmem:[%s1 + $0x2778] sm:$0xff]
  %v1312 = vld [vmem:[%s1 + $0x2780] sm:$0xff]
  %v1313 = vld [vmem:[%s1 + $0x2788] sm:$0xff]
  %v1314 = vld [vmem:[%s1 + $0x2790] sm:$0xff]
  %v1315 = vld [vmem:[%s1 + $0x2798] sm:$0xff]
  %v1316 = vld [vmem:[%s1 + $0x27a0] sm:$0xff]
  %v1317 = vld [vmem:[%s1 + $0x27a8] sm:$0xff]
  %v1318 = vld [vmem:[%s1 + $0x27b0] sm:$0xff]
  %v1319 = vld [vmem:[%s1 + $0x27b8] sm:$0xff]
  %v1320 = vld [vmem:[%s1 + $0x27c0] sm:$0xff]
  %v1321 = vld [vmem:[%s1 + $0x27c8] sm:$0xff]
  %v1322 = vld [vmem:[%s1 + $0x27d0] sm:$0xff]
  %v1323 = vld [vmem:[%s1 + $0x27d8] sm:$0xff]
  %v1324 = vld [vmem:[%s1 + $0x27e0] sm:$0xff]
  %v1325 = vld [vmem:[%s1 + $0x27e8] sm:$0xff]
  %v1326 = vld [vmem:[%s1 + $0x27f0] sm:$0xff]
  %v1327 = vld [vmem:[%s1 + $0x27f8] sm:$0xff]
  %v1328 = vld [vmem:[%s1 + $0x2800] sm:$0xff]
  %v1329 = vld [vmem:[%s1 + $0x2808] sm:$0xff]
  %v1330 = vld [vmem:[%s1 + $0x2810] sm:$0xff]
  %v1331 = vld [vmem:[%s1 + $0x2818] sm:$0xff]
  %v1332 = vld [vmem:[%s1 + $0x2820] sm:$0xff]
  %v1333 = vld [vmem:[%s1 + $0x2828] sm:$0xff]
  %v1334 = vld [vmem:[%s1 + $0x2830] sm:$0xff]
  %v1335 = vld [vmem:[%s1 + $0x2838] sm:$0xff]
  %v1336 = vld [vmem:[%s1 + $0x2840] sm:$0xff]
  %v1337 = vld [vmem:[%s1 + $0x2848] sm:$0xff]
  %v1338 = vld [vmem:[%s1 + $0x2850] sm:$0xff]
  %v1339 = vld [vmem:[%s1 + $0x2858] sm:$0xff]
  %v1340 = vld [vmem:[%s1 + $0x2860] sm:$0xff]
  %v1341 = vld [vmem:[%s1 + $0x2868] sm:$0xff]
  %v1342 = vld [vmem:[%s1 + $0x2870] sm:$0xff]
  %v1343 = vld [vmem:[%s1 + $0x2878] sm:$0xff]
  %v1344 = vld [vmem:[%s1 + $0x2880] sm:$0xff]
  %v1345 = vld [vmem:[%s1 + $0x2888] sm:$0xff]
  %v1346 = vld [vmem:[%s1 + $0x2890] sm:$0xff]
  %v1347 = vld [vmem:[%s1 + $0x2898] sm:$0xff]
  %v1348 = vld [vmem:[%s1 + $0x28a0] sm:$0xff]
  %v1349 = vld [vmem:[%s1 + $0x28a8] sm:$0xff]
  %v1350 = vld [vmem:[%s1 + $0x28b0] sm:$0xff]
  %v1351 = vld [vmem:[%s1 + $0x28b8] sm:$0xff]
  %v1352 = vld [vmem:[%s1 + $0x28c0] sm:$0xff]
  %v1353 = vld [vmem:[%s1 + $0x28c8] sm:$0xff]
  %v1354 = vld [vmem:[%s1 + $0x28d0] sm:$0xff]
  %v1355 = vld [vmem:[%s1 + $0x28d8] sm:$0xff]
  %v1356 = vld [vmem:[%s1 + $0x28e0] sm:$0xff]
  %v1357 = vld [vmem:[%s1 + $0x28e8] sm:$0xff]
  %v1358 = vld [vmem:[%s1 + $0x28f0] sm:$0xff]
  %v1359 = vld [vmem:[%s1 + $0x28f8] sm:$0xff]
  %v1360 = vld [vmem:[%s1 + $0x2900] sm:$0xff]
  %v1361 = vld [vmem:[%s1 + $0x2908] sm:$0xff]
  %v1362 = vld [vmem:[%s1 + $0x2910] sm:$0xff]
  %v1363 = vld [vmem:[%s1 + $0x2918] sm:$0xff]
  %v1364 = vld [vmem:[%s1 + $0x2920] sm:$0xff]
  %v1365 = vld [vmem:[%s1 + $0x2928] sm:$0xff]
  %v1366 = vld [vmem:[%s1 + $0x2930] sm:$0xff]
  %v1367 = vld [vmem:[%s1 + $0x2938] sm:$0xff]
  %v1368 = vld [vmem:[%s1 + $0x2940] sm:$0xff]
  %v1369 = vld [vmem:[%s1 + $0x2948] sm:$0xff]
  %v1370 = vld [vmem:[%s1 + $0x2950] sm:$0xff]
  %v1371 = vld [vmem:[%s1 + $0x2958] sm:$0xff]
  %v1372 = vld [vmem:[%s1 + $0x2960] sm:$0xff]
  %v1373 = vld [vmem:[%s1 + $0x2968] sm:$0xff]
  %v1374 = vld [vmem:[%s1 + $0x2970] sm:$0xff]
  %v1375 = vld [vmem:[%s1 + $0x2978] sm:$0xff]
  %v1376 = vld [vmem:[%s1 + $0x2980] sm:$0xff]
  %v1377 = vld [vmem:[%s1 + $0x2988] sm:$0xff]
  %v1378 = vld [vmem:[%s1 + $0x2990] sm:$0xff]
  %v1379 = vld [vmem:[%s1 + $0x2998] sm:$0xff]
  %v1380 = vld [vmem:[%s1 + $0x29a0] sm:$0xff]
  %v1381 = vld [vmem:[%s1 + $0x29a8] sm:$0xff]
  %v1382 = vld [vmem:[%s1 + $0x29b0] sm:$0xff]
  %v1383 = vld [vmem:[%s1 + $0x29b8] sm:$0xff]
  %v1384 = vld [vmem:[%s1 + $0x29c0] sm:$0xff]
  %v1385 = vld [vmem:[%s1 + $0x29c8] sm:$0xff]
  %v1386 = vld [vmem:[%s1 + $0x29d0] sm:$0xff]
  %v1387 = vld [vmem:[%s1 + $0x29d8] sm:$0xff]
  %v1388 = vld [vmem:[%s1 + $0x29e0] sm:$0xff]
  %v1389 = vld [vmem:[%s1 + $0x29e8] sm:$0xff]
  %v1390 = vld [vmem:[%s1 + $0x29f0] sm:$0xff]
  %v1391 = vld [vmem:[%s1 + $0x29f8] sm:$0xff]
  %v1392 = vld [vmem:[%s1 + $0x2a00] sm:$0xff]
  %v1393 = vld [vmem:[%s1 + $0x2a08] sm:$0xff]
  %v1394 = vld [vmem:[%s1 + $0x2a10] sm:$0xff]
  %v1395 = vld [vmem:[%s1 + $0x2a18] sm:$0xff]
  %v1396 = vld [vmem:[%s1 + $0x2a20] sm:$0xff]
  %v1397 = vld [vmem:[%s1 + $0x2a28] sm:$0xff]
  %v1398 = vld [vmem:[%s1 + $0x2a30] sm:$0xff]
  %v1399 = vld [vmem:[%s1 + $0x2a38] sm:$0xff]
  %v1400 = vld [vmem:[%s1 + $0x2a40] sm:$0xff]
  %v1401 = vld [vmem:[%s1 + $0x2a48] sm:$0xff]
  %v1402 = vld [vmem:[%s1 + $0x2a50] sm:$0xff]
  %v1403 = vld [vmem:[%s1 + $0x2a58] sm:$0xff]
  %v1404 = vld [vmem:[%s1 + $0x2a60] sm:$0xff]
  %v1405 = vld [vmem:[%s1 + $0x2a68] sm:$0xff]
  %v1406 = vld [vmem:[%s1 + $0x2a70] sm:$0xff]
  %v1407 = vld [vmem:[%s1 + $0x2a78] sm:$0xff]
  %v1408 = vld [vmem:[%s1 + $0x2a80] sm:$0xff]
  %v1409 = vld [vmem:[%s1 + $0x2a88] sm:$0xff]
  %v1410 = vld [vmem:[%s1 + $0x2a90] sm:$0xff]
  %v1411 = vld [vmem:[%s1 + $0x2a98] sm:$0xff]
  %v1412 = vld [vmem:[%s1 + $0x2aa0] sm:$0xff]
  %v1413 = vld [vmem:[%s1 + $0x2aa8] sm:$0xff]
  %v1414 = vld [vmem:[%s1 + $0x2ab0] sm:$0xff]
  %v1415 = vld [vmem:[%s1 + $0x2ab8] sm:$0xff]
  %v1416 = vld [vmem:[%s1 + $0x2ac0] sm:$0xff]
  %v1417 = vld [vmem:[%s1 + $0x2ac8] sm:$0xff]
  %v1418 = vld [vmem:[%s1 + $0x2ad0] sm:$0xff]
  %v1419 = vld [vmem:[%s1 + $0x2ad8] sm:$0xff]
  %v1420 = vld [vmem:[%s1 + $0x2ae0] sm:$0xff]
  %v1421 = vld [vmem:[%s1 + $0x2ae8] sm:$0xff]
  %v1422 = vld [vmem:[%s1 + $0x2af0] sm:$0xff]
  %v1423 = vld [vmem:[%s1 + $0x2af8] sm:$0xff]
  %v1424 = vld [vmem:[%s1 + $0x2b00] sm:$0xff]
  %v1425 = vld [vmem:[%s1 + $0x2b08] sm:$0xff]
  %v1426 = vld [vmem:[%s1 + $0x2b10] sm:$0xff]
  %v1427 = vld [vmem:[%s1 + $0x2b18] sm:$0xff]
  %v1428 = vld [vmem:[%s1 + $0x2b20] sm:$0xff]
  %v1429 = vld [vmem:[%s1 + $0x2b28] sm:$0xff]
  %v1430 = vld [vmem:[%s1 + $0x2b30] sm:$0xff]
  %v1431 = vld [vmem:[%s1 + $0x2b38] sm:$0xff]
  %v1432 = vld [vmem:[%s1 + $0x2b40] sm:$0xff]
  %v1433 = vld [vmem:[%s1 + $0x2b48] sm:$0xff]
  %v1434 = vld [vmem:[%s1 + $0x2b50] sm:$0xff]
  %v1435 = vld [vmem:[%s1 + $0x2b58] sm:$0xff]
  %v1436 = vld [vmem:[%s1 + $0x2b60] sm:$0xff]
  %v1437 = vld [vmem:[%s1 + $0x2b68] sm:$0xff]
  %v1438 = vld [vmem:[%s1 + $0x2b70] sm:$0xff]
  %v1439 = vld [vmem:[%s1 + $0x2b78] sm:$0xff]
  %v1440 = vld [vmem:[%s1 + $0x2b80] sm:$0xff]
  %v1441 = vld [vmem:[%s1 + $0x2b88] sm:$0xff]
  %v1442 = vld [vmem:[%s1 + $0x2b90] sm:$0xff]
  %v1443 = vld [vmem:[%s1 + $0x2b98] sm:$0xff]
  %v1444 = vld [vmem:[%s1 + $0x2ba0] sm:$0xff]
  %v1445 = vld [vmem:[%s1 + $0x2ba8] sm:$0xff]
  %v1446 = vld [vmem:[%s1 + $0x2bb0] sm:$0xff]
  %v1447 = vld [vmem:[%s1 + $0x2bb8] sm:$0xff]
  %v1448 = vld [vmem:[%s1 + $0x2bc0] sm:$0xff]
  %v1449 = vld [vmem:[%s1 + $0x2bc8] sm:$0xff]
  %v1450 = vld [vmem:[%s1 + $0x2bd0] sm:$0xff]
  %v1451 = vld [vmem:[%s1 + $0x2bd8] sm:$0xff]
  %v1452 = vld [vmem:[%s1 + $0x2be0] sm:$0xff]
  %v1453 = vld [vmem:[%s1 + $0x2be8] sm:$0xff]
  %v1454 = vld [vmem:[%s1 + $0x2bf0] sm:$0xff]
  %v1455 = vld [vmem:[%s1 + $0x2bf8] sm:$0xff]
  %v1456 = vld [vmem:[%s1 + $0x2c00] sm:$0xff]
  %v1457 = vld [vmem:[%s1 + $0x2c08] sm:$0xff]
  %v1458 = vld [vmem:[%s1 + $0x2c10] sm:$0xff]
  %v1459 = vld [vmem:[%s1 + $0x2c18] sm:$0xff]
  %v1460 = vld [vmem:[%s1 + $0x2c20] sm:$0xff]
  %v1461 = vld [vmem:[%s1 + $0x2c28] sm:$0xff]
  %v1462 = vld [vmem:[%s1 + $0x2c30] sm:$0xff]
  %v1463 = vld [vmem:[%s1 + $0x2c38] sm:$0xff]
  %v1464 = vld [vmem:[%s1 + $0x2c40] sm:$0xff]
  %v1465 = vld [vmem:[%s1 + $0x2c48] sm:$0xff]
  %v1466 = vld [vmem:[%s1 + $0x2c50] sm:$0xff]
  %v1467 = vld [vmem:[%s1 + $0x2c58] sm:$0xff]
  %v1468 = vld [vmem:[%s1 + $0x2c60] sm:$0xff]
  %v1469 = vld [vmem:[%s1 + $0x2c68] sm:$0xff]
  %v1470 = vld [vmem:[%s1 + $0x2c70] sm:$0xff]
  %v1471 = vld [vmem:[%s1 + $0x2c78] sm:$0xff]
  %v1472 = vld [vmem:[%s1 + $0x2c80] sm:$0xff]
  %v1473 = vld [vmem:[%s1 + $0x2c88] sm:$0xff]
  %v1474 = vld [vmem:[%s1 + $0x2c90] sm:$0xff]
  %v1475 = vld [vmem:[%s1 + $0x2c98] sm:$0xff]
  %v1476 = vld [vmem:[%s1 + $0x2ca0] sm:$0xff]
  %v1477 = vld [vmem:[%s1 + $0x2ca8] sm:$0xff]
  %v1478 = vld [vmem:[%s1 + $0x2cb0] sm:$0xff]
  %v1479 = vld [vmem:[%s1 + $0x2cb8] sm:$0xff]
  %v1480 = vld [vmem:[%s1 + $0x2cc0] sm:$0xff]
  %v1481 = vld [vmem:[%s1 + $0x2cc8] sm:$0xff]
  %v1482 = vld [vmem:[%s1 + $0x2cd0] sm:$0xff]
  %v1483 = vld [vmem:[%s1 + $0x2cd8] sm:$0xff]
  %v1484 = vld [vmem:[%s1 + $0x2ce0] sm:$0xff]
  %v1485 = vld [vmem:[%s1 + $0x2ce8] sm:$0xff]
  %v1486 = vld [vmem:[%s1 + $0x2cf0] sm:$0xff]
  %v1487 = vld [vmem:[%s1 + $0x2cf8] sm:$0xff]
  %v1488 = vld [vmem:[%s1 + $0x2d00] sm:$0xff]
  %v1489 = vld [vmem:[%s1 + $0x2d08] sm:$0xff]
  %v1490 = vld [vmem:[%s1 + $0x2d10] sm:$0xff]
  %v1491 = vld [vmem:[%s1 + $0x2d18] sm:$0xff]
  %v1492 = vld [vmem:[%s1 + $0x2d20] sm:$0xff]
  %v1493 = vld [vmem:[%s1 + $0x2d28] sm:$0xff]
  %v1494 = vld [vmem:[%s1 + $0x2d30] sm:$0xff]
  %v1495 = vld [vmem:[%s1 + $0x2d38] sm:$0xff]
  %v1496 = vld [vmem:[%s1 + $0x2d40] sm:$0xff]
  %v1497 = vld [vmem:[%s1 + $0x2d48] sm:$0xff]
  %v1498 = vld [vmem:[%s1 + $0x2d50] sm:$0xff]
  %v1499 = vld [vmem:[%s1 + $0x2d58] sm:$0xff]
  %v1500 = vld [vmem:[%s1 + $0x2d60] sm:$0xff]
  %v1501 = vld [vmem:[%s1 + $0x2d68] sm:$0xff]
  %v1502 = vld [vmem:[%s1 + $0x2d70] sm:$0xff]
  %v1503 = vld [vmem:[%s1 + $0x2d78] sm:$0xff]
  %v1504 = vld [vmem:[%s1 + $0x2d80] sm:$0xff]
  %v1505 = vld [vmem:[%s1 + $0x2d88] sm:$0xff]
  %v1506 = vld [vmem:[%s1 + $0x2d90] sm:$0xff]
  %v1507 = vld [vmem:[%s1 + $0x2d98] sm:$0xff]
  %v1508 = vld [vmem:[%s1 + $0x2da0] sm:$0xff]
  %v1509 = vld [vmem:[%s1 + $0x2da8] sm:$0xff]
  %v1510 = vld [vmem:[%s1 + $0x2db0] sm:$0xff]
  %v1511 = vld [vmem:[%s1 + $0x2db8] sm:$0xff]
  %v1512 = vld [vmem:[%s1 + $0x2dc0] sm:$0xff]
  %v1513 = vld [vmem:[%s1 + $0x2dc8] sm:$0xff]
  %v1514 = vld [vmem:[%s1 + $0x2dd0] sm:$0xff]
  %v1515 = vld [vmem:[%s1 + $0x2dd8] sm:$0xff]
  %v1516 = vld [vmem:[%s1 + $0x2de0] sm:$0xff]
  %v1517 = vld [vmem:[%s1 + $0x2de8] sm:$0xff]
  %v1518 = vld [vmem:[%s1 + $0x2df0] sm:$0xff]
  %v1519 = vld [vmem:[%s1 + $0x2df8] sm:$0xff]
  %v1520 = vld [vmem:[%s1 + $0x2e00] sm:$0xff]
  %v1521 = vld [vmem:[%s1 + $0x2e08] sm:$0xff]
  %v1522 = vld [vmem:[%s1 + $0x2e10] sm:$0xff]
  %v1523 = vld [vmem:[%s1 + $0x2e18] sm:$0xff]
  %v1524 = vld [vmem:[%s1 + $0x2e20] sm:$0xff]
  %v1525 = vld [vmem:[%s1 + $0x2e28] sm:$0xff]
  %v1526 = vld [vmem:[%s1 + $0x2e30] sm:$0xff]
  %v1527 = vld [vmem:[%s1 + $0x2e38] sm:$0xff]
  %v1528 = vld [vmem:[%s1 + $0x2e40] sm:$0xff]
  %v1529 = vld [vmem:[%s1 + $0x2e48] sm:$0xff]
  %v1530 = vld [vmem:[%s1 + $0x2e50] sm:$0xff]
  %v1531 = vld [vmem:[%s1 + $0x2e58] sm:$0xff]
  %v1532 = vld [vmem:[%s1 + $0x2e60] sm:$0xff]
  %v1533 = vld [vmem:[%s1 + $0x2e68] sm:$0xff]
  %v1534 = vld [vmem:[%s1 + $0x2e70] sm:$0xff]
  %v1535 = vld [vmem:[%s1 + $0x2e78] sm:$0xff]
  %v1536 = vld [vmem:[%s1 + $0x2e80] sm:$0xff]
  %v1537 = vld [vmem:[%s1 + $0x2e88] sm:$0xff]
  %v1538 = vld [vmem:[%s1 + $0x2e90] sm:$0xff]
  %v1539 = vld [vmem:[%s1 + $0x2e98] sm:$0xff]
  %v1540 = vld [vmem:[%s1 + $0x2ea0] sm:$0xff]
  %v1541 = vld [vmem:[%s1 + $0x2ea8] sm:$0xff]
  %v1542 = vld [vmem:[%s1 + $0x2eb0] sm:$0xff]
  %v1543 = vld [vmem:[%s1 + $0x2eb8] sm:$0xff]
  %v1544 = vld [vmem:[%s1 + $0x2ec0] sm:$0xff]
  %v1545 = vld [vmem:[%s1 + $0x2ec8] sm:$0xff]
  %v1546 = vld [vmem:[%s1 + $0x2ed0] sm:$0xff]
  %v1547 = vld [vmem:[%s1 + $0x2ed8] sm:$0xff]
  %v1548 = vld [vmem:[%s1 + $0x2ee0] sm:$0xff]
  %v1549 = vld [vmem:[%s1 + $0x2ee8] sm:$0xff]
  %v1550 = vld [vmem:[%s1 + $0x2ef0] sm:$0xff]
  %v1551 = vld [vmem:[%s1 + $0x2ef8] sm:$0xff]
  %v1552 = vld [vmem:[%s1 + $0x2f00] sm:$0xff]
  %v1553 = vld [vmem:[%s1 + $0x2f08] sm:$0xff]
  %v1554 = vld [vmem:[%s1 + $0x2f10] sm:$0xff]
  %v1555 = vld [vmem:[%s1 + $0x2f18] sm:$0xff]
  %v1556 = vld [vmem:[%s1 + $0x2f20] sm:$0xff]
  %v1557 = vld [vmem:[%s1 + $0x2f28] sm:$0xff]
  %v1558 = vld [vmem:[%s1 + $0x2f30] sm:$0xff]
  %v1559 = vld [vmem:[%s1 + $0x2f38] sm:$0xff]
  %v1560 = vld [vmem:[%s1 + $0x2f40] sm:$0xff]
  %v1561 = vld [vmem:[%s1 + $0x2f48] sm:$0xff]
  %v1562 = vld [vmem:[%s1 + $0x2f50] sm:$0xff]
  %v1563 = vld [vmem:[%s1 + $0x2f58] sm:$0xff]
  %v1564 = vld [vmem:[%s1 + $0x2f60] sm:$0xff]
  %v1565 = vld [vmem:[%s1 + $0x2f68] sm:$0xff]
  %v1566 = vld [vmem:[%s1 + $0x2f70] sm:$0xff]
  %v1567 = vld [vmem:[%s1 + $0x2f78] sm:$0xff]
  %v1568 = vld [vmem:[%s1 + $0x2f80] sm:$0xff]
  %v1569 = vld [vmem:[%s1 + $0x2f88] sm:$0xff]
  %v1570 = vld [vmem:[%s1 + $0x2f90] sm:$0xff]
  %v1571 = vld [vmem:[%s1 + $0x2f98] sm:$0xff]
  %v1572 = vld [vmem:[%s1 + $0x2fa0] sm:$0xff]
  %v1573 = vld [vmem:[%s1 + $0x2fa8] sm:$0xff]
  %v1574 = vld [vmem:[%s1 + $0x2fb0] sm:$0xff]
  %v1575 = vld [vmem:[%s1 + $0x2fb8] sm:$0xff]
  %v1576 = vld [vmem:[%s1 + $0x2fc0] sm:$0xff]
  %v1577 = vld [vmem:[%s1 + $0x2fc8] sm:$0xff]
  %v1578 = vld [vmem:[%s1 + $0x2fd0] sm:$0xff]
  %v1579 = vld [vmem:[%s1 + $0x2fd8] sm:$0xff]
  %v1580 = vld [vmem:[%s1 + $0x2fe0] sm:$0xff]
  %v1581 = vld [vmem:[%s1 + $0x2fe8] sm:$0xff]
  %v1582 = vld [vmem:[%s1 + $0x2ff0] sm:$0xff]
  %v1583 = vld [vmem:[%s1 + $0x2ff8] sm:$0xff]
  %v1584 = vld [vmem:[%s1 + $0x3000] sm:$0xff]
  %v1585 = vld [vmem:[%s1 + $0x3008] sm:$0xff]
  %v1586 = vld [vmem:[%s1 + $0x3010] sm:$0xff]
  %v1587 = vld [vmem:[%s1 + $0x3018] sm:$0xff]
  %v1588 = vld [vmem:[%s1 + $0x3020] sm:$0xff]
  %v1589 = vld [vmem:[%s1 + $0x3028] sm:$0xff]
  %v1590 = vld [vmem:[%s1 + $0x3030] sm:$0xff]
  %v1591 = vld [vmem:[%s1 + $0x3038] sm:$0xff]
  %v1592 = vld [vmem:[%s1 + $0x3040] sm:$0xff]
  %v1593 = vld [vmem:[%s1 + $0x3048] sm:$0xff]
  %v1594 = vld [vmem:[%s1 + $0x3050] sm:$0xff]
  %v1595 = vld [vmem:[%s1 + $0x3058] sm:$0xff]
  %v1596 = vld [vmem:[%s1 + $0x3060] sm:$0xff]
  %v1597 = vld [vmem:[%s1 + $0x3068] sm:$0xff]
  %v1598 = vld [vmem:[%s1 + $0x3070] sm:$0xff]
  %v1599 = vld [vmem:[%s1 + $0x3078] sm:$0xff]
  %v1600 = vld [vmem:[%s1 + $0x3080] sm:$0xff]
  %v1601 = vld [vmem:[%s1 + $0x3088] sm:$0xff]
  %v1602 = vld [vmem:[%s1 + $0x3090] sm:$0xff]
  %v1603 = vld [vmem:[%s1 + $0x3098] sm:$0xff]
  %v1604 = vld [vmem:[%s1 + $0x30a0] sm:$0xff]
  %v1605 = vld [vmem:[%s1 + $0x30a8] sm:$0xff]
  %v1606 = vld [vmem:[%s1 + $0x30b0] sm:$0xff]
  %v1607 = vld [vmem:[%s1 + $0x30b8] sm:$0xff]
  %v1608 = vld [vmem:[%s1 + $0x30c0] sm:$0xff]
  %v1609 = vld [vmem:[%s1 + $0x30c8] sm:$0xff]
  %v1610 = vld [vmem:[%s1 + $0x30d0] sm:$0xff]
  %v1611 = vld [vmem:[%s1 + $0x30d8] sm:$0xff]
  %v1612 = vld [vmem:[%s1 + $0x30e0] sm:$0xff]
  %v1613 = vld [vmem:[%s1 + $0x30e8] sm:$0xff]
  %v1614 = vld [vmem:[%s1 + $0x30f0] sm:$0xff]
  %v1615 = vld [vmem:[%s1 + $0x30f8] sm:$0xff]
  %v1616 = vld [vmem:[%s2] sm:$0xf]
  %v1618 = vlaneseq
  %v1619 = vshrl.u32 %v1618, 7
  %v1620 = vsub.s32 0, %v1619
  %v1621 = vrot.slane %v1616, %v1620
  %v1622 = vlaneseq
  %v1623 = vshrl.u32 %v1622, 7
  %v1624 = vsub.s32 1, %v1623
  %v1625 = vrot.slane %v1616, %v1624
  %v1626 = vlaneseq
  %v1627 = vshrl.u32 %v1626, 7
  %v1628 = vsub.s32 2, %v1627
  %v1629 = vrot.slane %v1616, %v1628
  %v1630 = vlaneseq
  %v1631 = vshrl.u32 %v1630, 7
  %v1632 = vsub.s32 3, %v1631
  %v1633 = vrot.slane %v1616, %v1632
  %v1663 = vunpack.c.l.b16 %v23
  %v1664 = vunpack.c.h.b16 %v23
  %v1665 = vunpack.c.l.b16 %v24
  %v1666 = vunpack.c.h.b16 %v24
  %v1667 = vunpack.c.l.b16 %v25
  %v1668 = vunpack.c.h.b16 %v25
  %v1669 = vunpack.c.l.b16 %v26
  %v1670 = vunpack.c.h.b16 %v26
  %v1671 = vunpack.c.l.b16 %v27
  %v1672 = vunpack.c.h.b16 %v27
  %v1673 = vunpack.c.l.b16 %v28
  %v1674 = vunpack.c.h.b16 %v28
  %v1675 = vunpack.c.l.b16 %v29
  %v1676 = vunpack.c.h.b16 %v29
  %v1677 = vunpack.c.l.b16 %v30
  %v1678 = vunpack.c.h.b16 %v30
  %v1679 = vunpack.c.l.b16 %v31
  %v1680 = vunpack.c.h.b16 %v31
  %v1681 = vunpack.c.l.b16 %v32
  %v1682 = vunpack.c.h.b16 %v32
  %v1683 = vunpack.c.l.b16 %v33
  %v1684 = vunpack.c.h.b16 %v33
  %v1685 = vunpack.c.l.b16 %v34
  %v1686 = vunpack.c.h.b16 %v34
  %v1687 = vunpack.c.l.b16 %v35
  %v1688 = vunpack.c.h.b16 %v35
  %v1689 = vunpack.c.l.b16 %v36
  %v1690 = vunpack.c.h.b16 %v36
  %v1691 = vunpack.c.l.b16 %v37
  %v1692 = vunpack.c.h.b16 %v37
  %v1693 = vunpack.c.l.b16 %v38
  %v1694 = vunpack.c.h.b16 %v38
  %v1695 = vunpack.c.l.b16 %v39
  %v1696 = vunpack.c.h.b16 %v39
  %v1697 = vunpack.c.l.b16 %v40
  %v1698 = vunpack.c.h.b16 %v40
  %v1699 = vunpack.c.l.b16 %v41
  %v1700 = vunpack.c.h.b16 %v41
  %v1701 = vunpack.c.l.b16 %v42
  %v1702 = vunpack.c.h.b16 %v42
  %v1703 = vunpack.c.l.b16 %v43
  %v1704 = vunpack.c.h.b16 %v43
  %v1705 = vunpack.c.l.b16 %v44
  %v1706 = vunpack.c.h.b16 %v44
  %v1707 = vunpack.c.l.b16 %v45
  %v1708 = vunpack.c.h.b16 %v45
  %v1709 = vunpack.c.l.b16 %v46
  %v1710 = vunpack.c.h.b16 %v46
  %v1711 = vunpack.c.l.b16 %v47
  %v1712 = vpack.c.b16 %v1663, %v1663
  %v1713 = vpack.c.b16 %v1664, %v1664
  %v1714 = vpack.c.b16 %v1665, %v1665
  %v1715 = vpack.c.b16 %v1666, %v1666
  %v1716 = vpack.c.b16 %v1667, %v1667
  %v1717 = vpack.c.b16 %v1668, %v1668
  %v1718 = vpack.c.b16 %v1669, %v1669
  %v1719 = vpack.c.b16 %v1670, %v1670
  %v1720 = vpack.c.b16 %v1671, %v1671
  %v1721 = vpack.c.b16 %v1672, %v1672
  %v1722 = vpack.c.b16 %v1673, %v1673
  %v1723 = vpack.c.b16 %v1674, %v1674
  %v1724 = vpack.c.b16 %v1675, %v1675
  %v1725 = vpack.c.b16 %v1676, %v1676
  %v1726 = vpack.c.b16 %v1677, %v1677
  %v1727 = vpack.c.b16 %v1678, %v1678
  %v1728 = vpack.c.b16 %v1679, %v1679
  %v1729 = vpack.c.b16 %v1680, %v1680
  %v1730 = vpack.c.b16 %v1681, %v1681
  %v1731 = vpack.c.b16 %v1682, %v1682
  %v1732 = vpack.c.b16 %v1683, %v1683
  %v1733 = vpack.c.b16 %v1684, %v1684
  %v1734 = vpack.c.b16 %v1685, %v1685
  %v1735 = vpack.c.b16 %v1686, %v1686
  %v1736 = vpack.c.b16 %v1687, %v1687
  %v1737 = vpack.c.b16 %v1688, %v1688
  %v1738 = vpack.c.b16 %v1689, %v1689
  %v1739 = vpack.c.b16 %v1690, %v1690
  %v1740 = vpack.c.b16 %v1691, %v1691
  %v1741 = vpack.c.b16 %v1692, %v1692
  %v1742 = vpack.c.b16 %v1693, %v1693
  %v1743 = vpack.c.b16 %v1694, %v1694
  %v1744 = vpack.c.b16 %v1695, %v1695
  %v1745 = vpack.c.b16 %v1696, %v1696
  %v1746 = vpack.c.b16 %v1697, %v1697
  %v1747 = vpack.c.b16 %v1698, %v1698
  %v1748 = vpack.c.b16 %v1699, %v1699
  %v1749 = vpack.c.b16 %v1700, %v1700
  %v1750 = vpack.c.b16 %v1701, %v1701
  %v1751 = vpack.c.b16 %v1702, %v1702
  %v1752 = vpack.c.b16 %v1703, %v1703
  %v1753 = vpack.c.b16 %v1704, %v1704
  %v1754 = vpack.c.b16 %v1705, %v1705
  %v1755 = vpack.c.b16 %v1706, %v1706
  %v1756 = vpack.c.b16 %v1707, %v1707
  %v1757 = vpack.c.b16 %v1708, %v1708
  %v1758 = vpack.c.b16 %v1709, %v1709
  %v1759 = vpack.c.b16 %v1710, %v1710
  %v1760 = vpack.c.b16 %v1711, %v1711
  %v3378 = vunpack.c.l.b16 %v48
  %v3379 = vunpack.c.h.b16 %v48
  %v3380 = vunpack.c.l.b16 %v49
  %v3381 = vunpack.c.h.b16 %v49
  %v3382 = vunpack.c.l.b16 %v50
  %v3383 = vunpack.c.h.b16 %v50
  %v3384 = vunpack.c.l.b16 %v51
  %v3385 = vunpack.c.h.b16 %v51
  %v3386 = vunpack.c.l.b16 %v52
  %v3387 = vunpack.c.h.b16 %v52
  %v3388 = vunpack.c.l.b16 %v53
  %v3389 = vunpack.c.h.b16 %v53
  %v3390 = vunpack.c.l.b16 %v54
  %v3391 = vunpack.c.h.b16 %v54
  %v3392 = vunpack.c.l.b16 %v55
  %v3393 = vunpack.c.h.b16 %v55
  %v3394 = vunpack.c.l.b16 %v56
  %v3395 = vunpack.c.h.b16 %v56
  %v3396 = vunpack.c.l.b16 %v57
  %v3397 = vunpack.c.h.b16 %v57
  %v3398 = vunpack.c.l.b16 %v58
  %v3399 = vunpack.c.h.b16 %v58
  %v3400 = vunpack.c.l.b16 %v59
  %v3401 = vunpack.c.h.b16 %v59
  %v3402 = vunpack.c.l.b16 %v60
  %v3403 = vunpack.c.h.b16 %v60
  %v3404 = vunpack.c.l.b16 %v61
  %v3405 = vunpack.c.h.b16 %v61
  %v3406 = vunpack.c.l.b16 %v62
  %v3407 = vunpack.c.h.b16 %v62
  %v3408 = vunpack.c.l.b16 %v63
  %v3409 = vunpack.c.h.b16 %v63
  %v3410 = vunpack.c.l.b16 %v64
  %v3411 = vunpack.c.h.b16 %v64
  %v3412 = vunpack.c.l.b16 %v65
  %v3413 = vunpack.c.h.b16 %v65
  %v3414 = vunpack.c.l.b16 %v66
  %v3415 = vunpack.c.h.b16 %v66
  %v3416 = vunpack.c.l.b16 %v67
  %v3417 = vunpack.c.h.b16 %v67
  %v3418 = vunpack.c.l.b16 %v68
  %v3419 = vunpack.c.h.b16 %v68
  %v3420 = vunpack.c.l.b16 %v69
  %v3421 = vunpack.c.h.b16 %v69
  %v3422 = vunpack.c.l.b16 %v70
  %v3423 = vunpack.c.h.b16 %v70
  %v3424 = vunpack.c.l.b16 %v71
  %v3425 = vunpack.c.h.b16 %v71
  %v3426 = vunpack.c.l.b16 %v72
  %v3427 = vunpack.c.h.b16 %v72
  %v3428 = vunpack.c.l.b16 %v73
  %v3429 = vunpack.c.h.b16 %v73
  %v3430 = vunpack.c.l.b16 %v74
  %v3431 = vunpack.c.h.b16 %v74
  %v3432 = vunpack.c.l.b16 %v75
  %v3433 = vunpack.c.h.b16 %v75
  %v3434 = vunpack.c.l.b16 %v76
  %v3435 = vunpack.c.h.b16 %v76
  %v3436 = vunpack.c.l.b16 %v77
  %v3437 = vunpack.c.h.b16 %v77
  %v3438 = vunpack.c.l.b16 %v78
  %v3439 = vunpack.c.h.b16 %v78
  %v3440 = vunpack.c.l.b16 %v79
  %v3441 = vunpack.c.h.b16 %v79
  %v3442 = vunpack.c.l.b16 %v80
  %v3443 = vunpack.c.h.b16 %v80
  %v3444 = vunpack.c.l.b16 %v81
  %v3445 = vunpack.c.h.b16 %v81
  %v3446 = vunpack.c.l.b16 %v82
  %v3447 = vunpack.c.h.b16 %v82
  %v3448 = vunpack.c.l.b16 %v83
  %v3449 = vunpack.c.h.b16 %v83
  %v3450 = vunpack.c.l.b16 %v84
  %v3451 = vunpack.c.h.b16 %v84
  %v3452 = vunpack.c.l.b16 %v85
  %v3453 = vunpack.c.h.b16 %v85
  %v3454 = vunpack.c.l.b16 %v86
  %v3455 = vunpack.c.h.b16 %v86
  %v3456 = vunpack.c.l.b16 %v87
  %v3457 = vunpack.c.h.b16 %v87
  %v3458 = vunpack.c.l.b16 %v88
  %v3459 = vunpack.c.h.b16 %v88
  %v3460 = vunpack.c.l.b16 %v89
  %v3461 = vunpack.c.h.b16 %v89
  %v3462 = vunpack.c.l.b16 %v90
  %v3463 = vunpack.c.h.b16 %v90
  %v3464 = vunpack.c.l.b16 %v91
  %v3465 = vunpack.c.h.b16 %v91
  %v3466 = vunpack.c.l.b16 %v92
  %v3467 = vunpack.c.h.b16 %v92
  %v3468 = vunpack.c.l.b16 %v93
  %v3469 = vunpack.c.h.b16 %v93
  %v3470 = vunpack.c.l.b16 %v94
  %v3471 = vunpack.c.h.b16 %v94
  %v3472 = vunpack.c.l.b16 %v95
  %v3473 = vunpack.c.h.b16 %v95
  %v3474 = vunpack.c.l.b16 %v96
  %v3475 = vunpack.c.h.b16 %v96
  %v3476 = vunpack.c.l.b16 %v97
  %v3477 = vunpack.c.h.b16 %v97
  %v3478 = vunpack.c.l.b16 %v98
  %v3479 = vunpack.c.h.b16 %v98
  %v3480 = vunpack.c.l.b16 %v99
  %v3481 = vunpack.c.h.b16 %v99
  %v3482 = vunpack.c.l.b16 %v100
  %v3483 = vunpack.c.h.b16 %v100
  %v3484 = vunpack.c.l.b16 %v101
  %v3485 = vunpack.c.h.b16 %v101
  %v3486 = vunpack.c.l.b16 %v102
  %v3487 = vunpack.c.h.b16 %v102
  %v3488 = vunpack.c.l.b16 %v103
  %v3489 = vunpack.c.h.b16 %v103
  %v3490 = vunpack.c.l.b16 %v104
  %v3491 = vunpack.c.h.b16 %v104
  %v3492 = vunpack.c.l.b16 %v105
  %v3493 = vunpack.c.h.b16 %v105
  %v3494 = vunpack.c.l.b16 %v106
  %v3495 = vunpack.c.h.b16 %v106
  %v3496 = vunpack.c.l.b16 %v107
  %v3497 = vunpack.c.h.b16 %v107
  %v3498 = vunpack.c.l.b16 %v108
  %v3499 = vunpack.c.h.b16 %v108
  %v3500 = vunpack.c.l.b16 %v109
  %v3501 = vunpack.c.h.b16 %v109
  %v3502 = vunpack.c.l.b16 %v110
  %v3503 = vunpack.c.h.b16 %v110
  %v3504 = vunpack.c.l.b16 %v111
  %v3505 = vunpack.c.h.b16 %v111
  %v3506 = vunpack.c.l.b16 %v112
  %v3507 = vunpack.c.h.b16 %v112
  %v3508 = vunpack.c.l.b16 %v113
  %v3509 = vunpack.c.h.b16 %v113
  %v3510 = vunpack.c.l.b16 %v114
  %v3511 = vunpack.c.h.b16 %v114
  %v3512 = vunpack.c.l.b16 %v115
  %v3513 = vunpack.c.h.b16 %v115
  %v3514 = vunpack.c.l.b16 %v116
  %v3515 = vunpack.c.h.b16 %v116
  %v3516 = vunpack.c.l.b16 %v117
  %v3517 = vunpack.c.h.b16 %v117
  %v3518 = vunpack.c.l.b16 %v118
  %v3519 = vunpack.c.h.b16 %v118
  %v3520 = vunpack.c.l.b16 %v119
  %v3521 = vunpack.c.h.b16 %v119
  %v3522 = vunpack.c.l.b16 %v120
  %v3523 = vunpack.c.h.b16 %v120
  %v3524 = vunpack.c.l.b16 %v121
  %v3525 = vunpack.c.h.b16 %v121
  %v3526 = vunpack.c.l.b16 %v122
  %v3527 = vunpack.c.h.b16 %v122
  %v3528 = vunpack.c.l.b16 %v123
  %v3529 = vunpack.c.h.b16 %v123
  %v3530 = vunpack.c.l.b16 %v124
  %v3531 = vunpack.c.h.b16 %v124
  %v3532 = vunpack.c.l.b16 %v125
  %v3533 = vunpack.c.h.b16 %v125
  %v3534 = vunpack.c.l.b16 %v126
  %v3535 = vunpack.c.h.b16 %v126
  %v3536 = vunpack.c.l.b16 %v127
  %v3537 = vunpack.c.h.b16 %v127
  %v3538 = vunpack.c.l.b16 %v128
  %v3539 = vunpack.c.h.b16 %v128
  %v3540 = vunpack.c.l.b16 %v129
  %v3541 = vunpack.c.h.b16 %v129
  %v3542 = vunpack.c.l.b16 %v130
  %v3543 = vunpack.c.h.b16 %v130
  %v3544 = vunpack.c.l.b16 %v131
  %v3545 = vunpack.c.h.b16 %v131
  %v3546 = vunpack.c.l.b16 %v132
  %v3547 = vunpack.c.h.b16 %v132
  %v3548 = vunpack.c.l.b16 %v133
  %v3549 = vunpack.c.h.b16 %v133
  %v3550 = vunpack.c.l.b16 %v134
  %v3551 = vunpack.c.h.b16 %v134
  %v3552 = vunpack.c.l.b16 %v135
  %v3553 = vunpack.c.h.b16 %v135
  %v3554 = vunpack.c.l.b16 %v136
  %v3555 = vunpack.c.h.b16 %v136
  %v3556 = vunpack.c.l.b16 %v137
  %v3557 = vunpack.c.h.b16 %v137
  %v3558 = vunpack.c.l.b16 %v138
  %v3559 = vunpack.c.h.b16 %v138
  %v3560 = vunpack.c.l.b16 %v139
  %v3561 = vunpack.c.h.b16 %v139
  %v3562 = vunpack.c.l.b16 %v140
  %v3563 = vunpack.c.h.b16 %v140
  %v3564 = vunpack.c.l.b16 %v141
  %v3565 = vunpack.c.h.b16 %v141
  %v3566 = vunpack.c.l.b16 %v142
  %v3567 = vunpack.c.h.b16 %v142
  %v3568 = vunpack.c.l.b16 %v143
  %v3569 = vunpack.c.h.b16 %v143
  %v3570 = vunpack.c.l.b16 %v144
  %v3571 = vunpack.c.h.b16 %v144
  %v3572 = vunpack.c.l.b16 %v145
  %v3573 = vunpack.c.h.b16 %v145
  %v3574 = vunpack.c.l.b16 %v146
  %v3575 = vunpack.c.h.b16 %v146
  %v3576 = vunpack.c.l.b16 %v147
  %v3577 = vunpack.c.h.b16 %v147
  %v3578 = vunpack.c.l.b16 %v148
  %v3579 = vunpack.c.h.b16 %v148
  %v3580 = vunpack.c.l.b16 %v149
  %v3581 = vunpack.c.h.b16 %v149
  %v3582 = vunpack.c.l.b16 %v150
  %v3583 = vunpack.c.h.b16 %v150
  %v3584 = vunpack.c.l.b16 %v151
  %v3585 = vunpack.c.h.b16 %v151
  %v3586 = vunpack.c.l.b16 %v152
  %v3587 = vunpack.c.h.b16 %v152
  %v3588 = vunpack.c.l.b16 %v153
  %v3589 = vunpack.c.h.b16 %v153
  %v3590 = vunpack.c.l.b16 %v154
  %v3591 = vunpack.c.h.b16 %v154
  %v3592 = vunpack.c.l.b16 %v155
  %v3593 = vunpack.c.h.b16 %v155
  %v3594 = vunpack.c.l.b16 %v156
  %v3595 = vunpack.c.h.b16 %v156
  %v3596 = vunpack.c.l.b16 %v157
  %v3597 = vunpack.c.h.b16 %v157
  %v3598 = vunpack.c.l.b16 %v158
  %v3599 = vunpack.c.h.b16 %v158
  %v3600 = vunpack.c.l.b16 %v159
  %v3601 = vunpack.c.h.b16 %v159
  %v3602 = vunpack.c.l.b16 %v160
  %v3603 = vunpack.c.h.b16 %v160
  %v3604 = vunpack.c.l.b16 %v161
  %v3605 = vunpack.c.h.b16 %v161
  %v3606 = vunpack.c.l.b16 %v162
  %v3607 = vunpack.c.h.b16 %v162
  %v3608 = vunpack.c.l.b16 %v163
  %v3609 = vunpack.c.h.b16 %v163
  %v3610 = vunpack.c.l.b16 %v164
  %v3611 = vunpack.c.h.b16 %v164
  %v3612 = vunpack.c.l.b16 %v165
  %v3613 = vunpack.c.h.b16 %v165
  %v3614 = vunpack.c.l.b16 %v166
  %v3615 = vunpack.c.h.b16 %v166
  %v3616 = vunpack.c.l.b16 %v167
  %v3617 = vunpack.c.h.b16 %v167
  %v3618 = vunpack.c.l.b16 %v168
  %v3619 = vunpack.c.h.b16 %v168
  %v3620 = vunpack.c.l.b16 %v169
  %v3621 = vunpack.c.h.b16 %v169
  %v3622 = vunpack.c.l.b16 %v170
  %v3623 = vunpack.c.h.b16 %v170
  %v3624 = vunpack.c.l.b16 %v171
  %v3625 = vunpack.c.h.b16 %v171
  %v3626 = vunpack.c.l.b16 %v172
  %v3627 = vunpack.c.h.b16 %v172
  %v3628 = vunpack.c.l.b16 %v173
  %v3629 = vunpack.c.h.b16 %v173
  %v3630 = vunpack.c.l.b16 %v174
  %v3631 = vunpack.c.h.b16 %v174
  %v3632 = vunpack.c.l.b16 %v175
  %v3633 = vunpack.c.h.b16 %v175
  %v3634 = vunpack.c.l.b16 %v176
  %v3635 = vunpack.c.h.b16 %v176
  %v3636 = vunpack.c.l.b16 %v177
  %v3637 = vunpack.c.h.b16 %v177
  %v3638 = vunpack.c.l.b16 %v178
  %v3639 = vunpack.c.h.b16 %v178
  %v3640 = vunpack.c.l.b16 %v179
  %v3641 = vunpack.c.h.b16 %v179
  %v3642 = vunpack.c.l.b16 %v180
  %v3643 = vunpack.c.h.b16 %v180
  %v3644 = vunpack.c.l.b16 %v181
  %v3645 = vunpack.c.h.b16 %v181
  %v3646 = vunpack.c.l.b16 %v182
  %v3647 = vunpack.c.h.b16 %v182
  %v3648 = vunpack.c.l.b16 %v183
  %v3649 = vunpack.c.h.b16 %v183
  %v3650 = vunpack.c.l.b16 %v184
  %v3651 = vunpack.c.h.b16 %v184
  %v3652 = vunpack.c.l.b16 %v185
  %v3653 = vunpack.c.h.b16 %v185
  %v3654 = vunpack.c.l.b16 %v186
  %v3655 = vunpack.c.h.b16 %v186
  %v3656 = vunpack.c.l.b16 %v187
  %v3657 = vunpack.c.h.b16 %v187
  %v3658 = vunpack.c.l.b16 %v188
  %v3659 = vunpack.c.h.b16 %v188
  %v3660 = vunpack.c.l.b16 %v189
  %v3661 = vunpack.c.h.b16 %v189
  %v3662 = vunpack.c.l.b16 %v190
  %v3663 = vunpack.c.h.b16 %v190
  %v3664 = vunpack.c.l.b16 %v191
  %v3665 = vunpack.c.h.b16 %v191
  %v3666 = vunpack.c.l.b16 %v192
  %v3667 = vunpack.c.h.b16 %v192
  %v3668 = vunpack.c.l.b16 %v193
  %v3669 = vunpack.c.h.b16 %v193
  %v3670 = vunpack.c.l.b16 %v194
  %v3671 = vunpack.c.h.b16 %v194
  %v3672 = vunpack.c.l.b16 %v195
  %v3673 = vunpack.c.h.b16 %v195
  %v3674 = vunpack.c.l.b16 %v196
  %v3675 = vunpack.c.h.b16 %v196
  %v3676 = vunpack.c.l.b16 %v197
  %v3677 = vunpack.c.h.b16 %v197
  %v3678 = vunpack.c.l.b16 %v198
  %v3679 = vunpack.c.h.b16 %v198
  %v3680 = vunpack.c.l.b16 %v199
  %v3681 = vunpack.c.h.b16 %v199
  %v3682 = vunpack.c.l.b16 %v200
  %v3683 = vunpack.c.h.b16 %v200
  %v3684 = vunpack.c.l.b16 %v201
  %v3685 = vunpack.c.h.b16 %v201
  %v3686 = vunpack.c.l.b16 %v202
  %v3687 = vunpack.c.h.b16 %v202
  %v3688 = vunpack.c.l.b16 %v203
  %v3689 = vunpack.c.h.b16 %v203
  %v3690 = vunpack.c.l.b16 %v204
  %v3691 = vunpack.c.h.b16 %v204
  %v3692 = vunpack.c.l.b16 %v205
  %v3693 = vunpack.c.h.b16 %v205
  %v3694 = vunpack.c.l.b16 %v206
  %v3695 = vunpack.c.h.b16 %v206
  %v3696 = vunpack.c.l.b16 %v207
  %v3697 = vunpack.c.h.b16 %v207
  %v3698 = vunpack.c.l.b16 %v208
  %v3699 = vunpack.c.h.b16 %v208
  %v3700 = vunpack.c.l.b16 %v209
  %v3701 = vunpack.c.h.b16 %v209
  %v3702 = vunpack.c.l.b16 %v210
  %v3703 = vunpack.c.h.b16 %v210
  %v3704 = vunpack.c.l.b16 %v211
  %v3705 = vunpack.c.h.b16 %v211
  %v3706 = vunpack.c.l.b16 %v212
  %v3707 = vunpack.c.h.b16 %v212
  %v3708 = vunpack.c.l.b16 %v213
  %v3709 = vunpack.c.h.b16 %v213
  %v3710 = vunpack.c.l.b16 %v214
  %v3711 = vunpack.c.h.b16 %v214
  %v3712 = vunpack.c.l.b16 %v215
  %v3713 = vunpack.c.h.b16 %v215
  %v3714 = vunpack.c.l.b16 %v216
  %v3715 = vunpack.c.h.b16 %v216
  %v3716 = vunpack.c.l.b16 %v217
  %v3717 = vunpack.c.h.b16 %v217
  %v3718 = vunpack.c.l.b16 %v218
  %v3719 = vunpack.c.h.b16 %v218
  %v3720 = vunpack.c.l.b16 %v219
  %v3721 = vunpack.c.h.b16 %v219
  %v3722 = vunpack.c.l.b16 %v220
  %v3723 = vunpack.c.h.b16 %v220
  %v3724 = vunpack.c.l.b16 %v221
  %v3725 = vunpack.c.h.b16 %v221
  %v3726 = vunpack.c.l.b16 %v222
  %v3727 = vunpack.c.h.b16 %v222
  %v3728 = vunpack.c.l.b16 %v223
  %v3729 = vunpack.c.h.b16 %v223
  %v3730 = vunpack.c.l.b16 %v224
  %v3731 = vunpack.c.h.b16 %v224
  %v3732 = vunpack.c.l.b16 %v225
  %v3733 = vunpack.c.h.b16 %v225
  %v3734 = vunpack.c.l.b16 %v226
  %v3735 = vunpack.c.h.b16 %v226
  %v3736 = vunpack.c.l.b16 %v227
  %v3737 = vunpack.c.h.b16 %v227
  %v3738 = vunpack.c.l.b16 %v228
  %v3739 = vunpack.c.h.b16 %v228
  %v3740 = vunpack.c.l.b16 %v229
  %v3741 = vunpack.c.h.b16 %v229
  %v3742 = vunpack.c.l.b16 %v230
  %v3743 = vunpack.c.h.b16 %v230
  %v3744 = vunpack.c.l.b16 %v231
  %v3745 = vunpack.c.h.b16 %v231
  %v3746 = vunpack.c.l.b16 %v232
  %v3747 = vunpack.c.h.b16 %v232
  %v3748 = vunpack.c.l.b16 %v233
  %v3749 = vunpack.c.h.b16 %v233
  %v3750 = vunpack.c.l.b16 %v234
  %v3751 = vunpack.c.h.b16 %v234
  %v3752 = vunpack.c.l.b16 %v235
  %v3753 = vunpack.c.h.b16 %v235
  %v3754 = vunpack.c.l.b16 %v236
  %v3755 = vunpack.c.h.b16 %v236
  %v3756 = vunpack.c.l.b16 %v237
  %v3757 = vunpack.c.h.b16 %v237
  %v3758 = vunpack.c.l.b16 %v238
  %v3759 = vunpack.c.h.b16 %v238
  %v3760 = vunpack.c.l.b16 %v239
  %v3761 = vunpack.c.h.b16 %v239
  %v3762 = vunpack.c.l.b16 %v240
  %v3763 = vunpack.c.h.b16 %v240
  %v3764 = vunpack.c.l.b16 %v241
  %v3765 = vunpack.c.h.b16 %v241
  %v3766 = vunpack.c.l.b16 %v242
  %v3767 = vunpack.c.h.b16 %v242
  %v3768 = vunpack.c.l.b16 %v243
  %v3769 = vunpack.c.h.b16 %v243
  %v3770 = vunpack.c.l.b16 %v244
  %v3771 = vunpack.c.h.b16 %v244
  %v3772 = vunpack.c.l.b16 %v245
  %v3773 = vunpack.c.h.b16 %v245
  %v3774 = vunpack.c.l.b16 %v246
  %v3775 = vunpack.c.h.b16 %v246
  %v3776 = vunpack.c.l.b16 %v247
  %v3777 = vunpack.c.h.b16 %v247
  %v3778 = vunpack.c.l.b16 %v248
  %v3779 = vunpack.c.h.b16 %v248
  %v3780 = vunpack.c.l.b16 %v249
  %v3781 = vunpack.c.h.b16 %v249
  %v3782 = vunpack.c.l.b16 %v250
  %v3783 = vunpack.c.h.b16 %v250
  %v3784 = vunpack.c.l.b16 %v251
  %v3785 = vunpack.c.h.b16 %v251
  %v3786 = vunpack.c.l.b16 %v252
  %v3787 = vunpack.c.h.b16 %v252
  %v3788 = vunpack.c.l.b16 %v253
  %v3789 = vunpack.c.h.b16 %v253
  %v3790 = vunpack.c.l.b16 %v254
  %v3791 = vunpack.c.h.b16 %v254
  %v3792 = vunpack.c.l.b16 %v255
  %v3793 = vunpack.c.h.b16 %v255
  %v3794 = vunpack.c.l.b16 %v256
  %v3795 = vunpack.c.h.b16 %v256
  %v3796 = vunpack.c.l.b16 %v257
  %v3797 = vunpack.c.h.b16 %v257
  %v3798 = vunpack.c.l.b16 %v258
  %v3799 = vunpack.c.h.b16 %v258
  %v3800 = vunpack.c.l.b16 %v259
  %v3801 = vunpack.c.h.b16 %v259
  %v3802 = vunpack.c.l.b16 %v260
  %v3803 = vunpack.c.h.b16 %v260
  %v3804 = vunpack.c.l.b16 %v261
  %v3805 = vunpack.c.h.b16 %v261
  %v3806 = vunpack.c.l.b16 %v262
  %v3807 = vunpack.c.h.b16 %v262
  %v3808 = vunpack.c.l.b16 %v263
  %v3809 = vunpack.c.h.b16 %v263
  %v3810 = vunpack.c.l.b16 %v264
  %v3811 = vunpack.c.h.b16 %v264
  %v3812 = vunpack.c.l.b16 %v265
  %v3813 = vunpack.c.h.b16 %v265
  %v3814 = vunpack.c.l.b16 %v266
  %v3815 = vunpack.c.h.b16 %v266
  %v3816 = vunpack.c.l.b16 %v267
  %v3817 = vunpack.c.h.b16 %v267
  %v3818 = vunpack.c.l.b16 %v268
  %v3819 = vunpack.c.h.b16 %v268
  %v3820 = vunpack.c.l.b16 %v269
  %v3821 = vunpack.c.h.b16 %v269
  %v3822 = vunpack.c.l.b16 %v270
  %v3823 = vunpack.c.h.b16 %v270
  %v3824 = vunpack.c.l.b16 %v271
  %v3825 = vunpack.c.h.b16 %v271
  %v3826 = vunpack.c.l.b16 %v272
  %v3827 = vunpack.c.h.b16 %v272
  %v3828 = vunpack.c.l.b16 %v273
  %v3829 = vunpack.c.h.b16 %v273
  %v3830 = vunpack.c.l.b16 %v274
  %v3831 = vunpack.c.h.b16 %v274
  %v3832 = vunpack.c.l.b16 %v275
  %v3833 = vunpack.c.h.b16 %v275
  %v3834 = vunpack.c.l.b16 %v276
  %v3835 = vunpack.c.h.b16 %v276
  %v3836 = vunpack.c.l.b16 %v277
  %v3837 = vunpack.c.h.b16 %v277
  %v3838 = vunpack.c.l.b16 %v278
  %v3839 = vunpack.c.h.b16 %v278
  %v3840 = vunpack.c.l.b16 %v279
  %v3841 = vunpack.c.h.b16 %v279
  %v3842 = vunpack.c.l.b16 %v280
  %v3843 = vunpack.c.h.b16 %v280
  %v3844 = vunpack.c.l.b16 %v281
  %v3845 = vunpack.c.h.b16 %v281
  %v3846 = vunpack.c.l.b16 %v282
  %v3847 = vunpack.c.h.b16 %v282
  %v3848 = vunpack.c.l.b16 %v283
  %v3849 = vunpack.c.h.b16 %v283
  %v3850 = vunpack.c.l.b16 %v284
  %v3851 = vunpack.c.h.b16 %v284
  %v3852 = vunpack.c.l.b16 %v285
  %v3853 = vunpack.c.h.b16 %v285
  %v3854 = vunpack.c.l.b16 %v286
  %v3855 = vunpack.c.h.b16 %v286
  %v3856 = vunpack.c.l.b16 %v287
  %v3857 = vunpack.c.h.b16 %v287
  %v3858 = vunpack.c.l.b16 %v288
  %v3859 = vunpack.c.h.b16 %v288
  %v3860 = vunpack.c.l.b16 %v289
  %v3861 = vunpack.c.h.b16 %v289
  %v3862 = vunpack.c.l.b16 %v290
  %v3863 = vunpack.c.h.b16 %v290
  %v3864 = vunpack.c.l.b16 %v291
  %v3865 = vunpack.c.h.b16 %v291
  %v3866 = vunpack.c.l.b16 %v292
  %v3867 = vunpack.c.h.b16 %v292
  %v3868 = vunpack.c.l.b16 %v293
  %v3869 = vunpack.c.h.b16 %v293
  %v3870 = vunpack.c.l.b16 %v294
  %v3871 = vunpack.c.h.b16 %v294
  %v3872 = vunpack.c.l.b16 %v295
  %v3873 = vunpack.c.h.b16 %v295
  %v3874 = vunpack.c.l.b16 %v296
  %v3875 = vunpack.c.h.b16 %v296
  %v3876 = vunpack.c.l.b16 %v297
  %v3877 = vunpack.c.h.b16 %v297
  %v3878 = vunpack.c.l.b16 %v298
  %v3879 = vunpack.c.h.b16 %v298
  %v3880 = vunpack.c.l.b16 %v299
  %v3881 = vunpack.c.h.b16 %v299
  %v3882 = vunpack.c.l.b16 %v300
  %v3883 = vunpack.c.h.b16 %v300
  %v3884 = vunpack.c.l.b16 %v301
  %v3885 = vunpack.c.h.b16 %v301
  %v3886 = vunpack.c.l.b16 %v302
  %v3887 = vunpack.c.h.b16 %v302
  %v3888 = vunpack.c.l.b16 %v303
  %v3889 = vunpack.c.h.b16 %v303
  %v3890 = vunpack.c.l.b16 %v304
  %v3891 = vunpack.c.h.b16 %v304
  %v3892 = vunpack.c.l.b16 %v305
  %v3893 = vunpack.c.h.b16 %v305
  %v3894 = vunpack.c.l.b16 %v306
  %v3895 = vunpack.c.h.b16 %v306
  %v3896 = vunpack.c.l.b16 %v307
  %v3897 = vunpack.c.h.b16 %v307
  %v3898 = vunpack.c.l.b16 %v308
  %v3899 = vunpack.c.h.b16 %v308
  %v3900 = vunpack.c.l.b16 %v309
  %v3901 = vunpack.c.h.b16 %v309
  %v3902 = vunpack.c.l.b16 %v310
  %v3903 = vunpack.c.h.b16 %v310
  %v3904 = vunpack.c.l.b16 %v311
  %v3905 = vunpack.c.h.b16 %v311
  %v3906 = vunpack.c.l.b16 %v312
  %v3907 = vunpack.c.h.b16 %v312
  %v3908 = vunpack.c.l.b16 %v313
  %v3909 = vunpack.c.h.b16 %v313
  %v3910 = vunpack.c.l.b16 %v314
  %v3911 = vunpack.c.h.b16 %v314
  %v3912 = vunpack.c.l.b16 %v315
  %v3913 = vunpack.c.h.b16 %v315
  %v3914 = vunpack.c.l.b16 %v316
  %v3915 = vunpack.c.h.b16 %v316
  %v3916 = vunpack.c.l.b16 %v317
  %v3917 = vunpack.c.h.b16 %v317
  %v3918 = vunpack.c.l.b16 %v318
  %v3919 = vunpack.c.h.b16 %v318
  %v3920 = vunpack.c.l.b16 %v319
  %v3921 = vunpack.c.h.b16 %v319
  %v3922 = vunpack.c.l.b16 %v320
  %v3923 = vunpack.c.h.b16 %v320
  %v3924 = vunpack.c.l.b16 %v321
  %v3925 = vunpack.c.h.b16 %v321
  %v3926 = vunpack.c.l.b16 %v322
  %v3927 = vunpack.c.h.b16 %v322
  %v3928 = vunpack.c.l.b16 %v323
  %v3929 = vunpack.c.h.b16 %v323
  %v3930 = vunpack.c.l.b16 %v324
  %v3931 = vunpack.c.h.b16 %v324
  %v3932 = vunpack.c.l.b16 %v325
  %v3933 = vunpack.c.h.b16 %v325
  %v3934 = vunpack.c.l.b16 %v326
  %v3935 = vunpack.c.h.b16 %v326
  %v3936 = vunpack.c.l.b16 %v327
  %v3937 = vunpack.c.h.b16 %v327
  %v3938 = vunpack.c.l.b16 %v328
  %v3939 = vunpack.c.h.b16 %v328
  %v3940 = vunpack.c.l.b16 %v329
  %v3941 = vunpack.c.h.b16 %v329
  %v3942 = vunpack.c.l.b16 %v330
  %v3943 = vunpack.c.h.b16 %v330
  %v3944 = vunpack.c.l.b16 %v331
  %v3945 = vunpack.c.h.b16 %v331
  %v3946 = vunpack.c.l.b16 %v332
  %v3947 = vunpack.c.h.b16 %v332
  %v3948 = vunpack.c.l.b16 %v333
  %v3949 = vunpack.c.h.b16 %v333
  %v3950 = vunpack.c.l.b16 %v334
  %v3951 = vunpack.c.h.b16 %v334
  %v3952 = vunpack.c.l.b16 %v335
  %v3953 = vunpack.c.h.b16 %v335
  %v3954 = vunpack.c.l.b16 %v336
  %v3955 = vunpack.c.h.b16 %v336
  %v3956 = vunpack.c.l.b16 %v337
  %v3957 = vunpack.c.h.b16 %v337
  %v3958 = vunpack.c.l.b16 %v338
  %v3959 = vunpack.c.h.b16 %v338
  %v3960 = vunpack.c.l.b16 %v339
  %v3961 = vunpack.c.h.b16 %v339
  %v3962 = vunpack.c.l.b16 %v340
  %v3963 = vunpack.c.h.b16 %v340
  %v3964 = vunpack.c.l.b16 %v341
  %v3965 = vunpack.c.h.b16 %v341
  %v3966 = vunpack.c.l.b16 %v342
  %v3967 = vunpack.c.h.b16 %v342
  %v3968 = vunpack.c.l.b16 %v343
  %v3969 = vunpack.c.h.b16 %v343
  %v3970 = vunpack.c.l.b16 %v344
  %v3971 = vunpack.c.h.b16 %v344
  %v3972 = vunpack.c.l.b16 %v345
  %v3973 = vunpack.c.h.b16 %v345
  %v3974 = vunpack.c.l.b16 %v346
  %v3975 = vunpack.c.h.b16 %v346
  %v3976 = vunpack.c.l.b16 %v347
  %v3977 = vunpack.c.h.b16 %v347
  %v3978 = vunpack.c.l.b16 %v348
  %v3979 = vunpack.c.h.b16 %v348
  %v3980 = vunpack.c.l.b16 %v349
  %v3981 = vunpack.c.h.b16 %v349
  %v3982 = vunpack.c.l.b16 %v350
  %v3983 = vunpack.c.h.b16 %v350
  %v3984 = vunpack.c.l.b16 %v351
  %v3985 = vunpack.c.h.b16 %v351
  %v3986 = vunpack.c.l.b16 %v352
  %v3987 = vunpack.c.h.b16 %v352
  %v3988 = vunpack.c.l.b16 %v353
  %v3989 = vunpack.c.h.b16 %v353
  %v3990 = vunpack.c.l.b16 %v354
  %v3991 = vunpack.c.h.b16 %v354
  %v3992 = vunpack.c.l.b16 %v355
  %v3993 = vunpack.c.h.b16 %v355
  %v3994 = vunpack.c.l.b16 %v356
  %v3995 = vunpack.c.h.b16 %v356
  %v3996 = vunpack.c.l.b16 %v357
  %v3997 = vunpack.c.h.b16 %v357
  %v3998 = vunpack.c.l.b16 %v358
  %v3999 = vunpack.c.h.b16 %v358
  %v4000 = vunpack.c.l.b16 %v359
  %v4001 = vunpack.c.h.b16 %v359
  %v4002 = vunpack.c.l.b16 %v360
  %v4003 = vunpack.c.h.b16 %v360
  %v4004 = vunpack.c.l.b16 %v361
  %v4005 = vunpack.c.h.b16 %v361
  %v4006 = vunpack.c.l.b16 %v362
  %v4007 = vunpack.c.h.b16 %v362
  %v4008 = vunpack.c.l.b16 %v363
  %v4009 = vunpack.c.h.b16 %v363
  %v4010 = vunpack.c.l.b16 %v364
  %v4011 = vunpack.c.h.b16 %v364
  %v4012 = vunpack.c.l.b16 %v365
  %v4013 = vunpack.c.h.b16 %v365
  %v4014 = vunpack.c.l.b16 %v366
  %v4015 = vunpack.c.h.b16 %v366
  %v4016 = vunpack.c.l.b16 %v367
  %v4017 = vunpack.c.h.b16 %v367
  %v4018 = vunpack.c.l.b16 %v368
  %v4019 = vunpack.c.h.b16 %v368
  %v4020 = vunpack.c.l.b16 %v369
  %v4021 = vunpack.c.h.b16 %v369
  %v4022 = vunpack.c.l.b16 %v370
  %v4023 = vunpack.c.h.b16 %v370
  %v4024 = vunpack.c.l.b16 %v371
  %v4025 = vunpack.c.h.b16 %v371
  %v4026 = vunpack.c.l.b16 %v372
  %v4027 = vunpack.c.h.b16 %v372
  %v4028 = vunpack.c.l.b16 %v373
  %v4029 = vunpack.c.h.b16 %v373
  %v4030 = vunpack.c.l.b16 %v374
  %v4031 = vunpack.c.h.b16 %v374
  %v4032 = vunpack.c.l.b16 %v375
  %v4033 = vunpack.c.h.b16 %v375
  %v4034 = vunpack.c.l.b16 %v376
  %v4035 = vunpack.c.h.b16 %v376
  %v4036 = vunpack.c.l.b16 %v377
  %v4037 = vunpack.c.h.b16 %v377
  %v4038 = vunpack.c.l.b16 %v378
  %v4039 = vunpack.c.h.b16 %v378
  %v4040 = vunpack.c.l.b16 %v379
  %v4041 = vunpack.c.h.b16 %v379
  %v4042 = vunpack.c.l.b16 %v380
  %v4043 = vunpack.c.h.b16 %v380
  %v4044 = vunpack.c.l.b16 %v381
  %v4045 = vunpack.c.h.b16 %v381
  %v4046 = vunpack.c.l.b16 %v382
  %v4047 = vunpack.c.h.b16 %v382
  %v4048 = vunpack.c.l.b16 %v383
  %v4049 = vunpack.c.h.b16 %v383
  %v4050 = vunpack.c.l.b16 %v384
  %v4051 = vunpack.c.h.b16 %v384
  %v4052 = vunpack.c.l.b16 %v385
  %v4053 = vunpack.c.h.b16 %v385
  %v4054 = vunpack.c.l.b16 %v386
  %v4055 = vunpack.c.h.b16 %v386
  %v4056 = vunpack.c.l.b16 %v387
  %v4057 = vunpack.c.h.b16 %v387
  %v4058 = vunpack.c.l.b16 %v388
  %v4059 = vunpack.c.h.b16 %v388
  %v4060 = vunpack.c.l.b16 %v389
  %v4061 = vunpack.c.h.b16 %v389
  %v4062 = vunpack.c.l.b16 %v390
  %v4063 = vunpack.c.h.b16 %v390
  %v4064 = vunpack.c.l.b16 %v391
  %v4065 = vunpack.c.h.b16 %v391
  %v4066 = vunpack.c.l.b16 %v392
  %v4067 = vunpack.c.h.b16 %v392
  %v4068 = vunpack.c.l.b16 %v393
  %v4069 = vunpack.c.h.b16 %v393
  %v4070 = vunpack.c.l.b16 %v394
  %v4071 = vunpack.c.h.b16 %v394
  %v4072 = vunpack.c.l.b16 %v395
  %v4073 = vunpack.c.h.b16 %v395
  %v4074 = vunpack.c.l.b16 %v396
  %v4075 = vunpack.c.h.b16 %v396
  %v4076 = vunpack.c.l.b16 %v397
  %v4077 = vunpack.c.h.b16 %v397
  %v4078 = vunpack.c.l.b16 %v398
  %v4079 = vunpack.c.h.b16 %v398
  %v4080 = vunpack.c.l.b16 %v399
  %v4081 = vunpack.c.h.b16 %v399
  %v4082 = vunpack.c.l.b16 %v400
  %v4083 = vunpack.c.h.b16 %v400
  %v4084 = vunpack.c.l.b16 %v401
  %v4085 = vunpack.c.h.b16 %v401
  %v4086 = vunpack.c.l.b16 %v402
  %v4087 = vunpack.c.h.b16 %v402
  %v4088 = vunpack.c.l.b16 %v403
  %v4089 = vunpack.c.h.b16 %v403
  %v4090 = vunpack.c.l.b16 %v404
  %v4091 = vunpack.c.h.b16 %v404
  %v4092 = vunpack.c.l.b16 %v405
  %v4093 = vunpack.c.h.b16 %v405
  %v4094 = vunpack.c.l.b16 %v406
  %v4095 = vunpack.c.h.b16 %v406
  %v4096 = vunpack.c.l.b16 %v407
  %v4097 = vunpack.c.h.b16 %v407
  %v4098 = vunpack.c.l.b16 %v408
  %v4099 = vunpack.c.h.b16 %v408
  %v4100 = vunpack.c.l.b16 %v409
  %v4101 = vunpack.c.h.b16 %v409
  %v4102 = vunpack.c.l.b16 %v410
  %v4103 = vunpack.c.h.b16 %v410
  %v4104 = vunpack.c.l.b16 %v411
  %v4105 = vunpack.c.h.b16 %v411
  %v4106 = vunpack.c.l.b16 %v412
  %v4107 = vunpack.c.h.b16 %v412
  %v4108 = vunpack.c.l.b16 %v413
  %v4109 = vunpack.c.h.b16 %v413
  %v4110 = vunpack.c.l.b16 %v414
  %v4111 = vunpack.c.h.b16 %v414
  %v4112 = vunpack.c.l.b16 %v415
  %v4113 = vunpack.c.h.b16 %v415
  %v4114 = vunpack.c.l.b16 %v416
  %v4115 = vunpack.c.h.b16 %v416
  %v4116 = vunpack.c.l.b16 %v417
  %v4117 = vunpack.c.h.b16 %v417
  %v4118 = vunpack.c.l.b16 %v418
  %v4119 = vunpack.c.h.b16 %v418
  %v4120 = vunpack.c.l.b16 %v419
  %v4121 = vunpack.c.h.b16 %v419
  %v4122 = vunpack.c.l.b16 %v420
  %v4123 = vunpack.c.h.b16 %v420
  %v4124 = vunpack.c.l.b16 %v421
  %v4125 = vunpack.c.h.b16 %v421
  %v4126 = vunpack.c.l.b16 %v422
  %v4127 = vunpack.c.h.b16 %v422
  %v4128 = vunpack.c.l.b16 %v423
  %v4129 = vunpack.c.h.b16 %v423
  %v4130 = vunpack.c.l.b16 %v424
  %v4131 = vunpack.c.h.b16 %v424
  %v4132 = vunpack.c.l.b16 %v425
  %v4133 = vunpack.c.h.b16 %v425
  %v4134 = vunpack.c.l.b16 %v426
  %v4135 = vunpack.c.h.b16 %v426
  %v4136 = vunpack.c.l.b16 %v427
  %v4137 = vunpack.c.h.b16 %v427
  %v4138 = vunpack.c.l.b16 %v428
  %v4139 = vunpack.c.h.b16 %v428
  %v4140 = vunpack.c.l.b16 %v429
  %v4141 = vunpack.c.h.b16 %v429
  %v4142 = vunpack.c.l.b16 %v430
  %v4143 = vunpack.c.h.b16 %v430
  %v4144 = vunpack.c.l.b16 %v431
  %v4145 = vunpack.c.h.b16 %v431
  %v4146 = vunpack.c.l.b16 %v432
  %v4147 = vunpack.c.h.b16 %v432
  %v4148 = vunpack.c.l.b16 %v433
  %v4149 = vunpack.c.h.b16 %v433
  %v4150 = vunpack.c.l.b16 %v434
  %v4151 = vunpack.c.h.b16 %v434
  %v4152 = vunpack.c.l.b16 %v435
  %v4153 = vunpack.c.h.b16 %v435
  %v4154 = vunpack.c.l.b16 %v436
  %v4155 = vunpack.c.h.b16 %v436
  %v4156 = vunpack.c.l.b16 %v437
  %v4157 = vunpack.c.h.b16 %v437
  %v4158 = vunpack.c.l.b16 %v438
  %v4159 = vunpack.c.h.b16 %v438
  %v4160 = vunpack.c.l.b16 %v439
  %v4161 = vunpack.c.h.b16 %v439
  %v4162 = vunpack.c.l.b16 %v440
  %v4163 = vunpack.c.h.b16 %v440
  %v4164 = vunpack.c.l.b16 %v441
  %v4165 = vunpack.c.h.b16 %v441
  %v4166 = vunpack.c.l.b16 %v442
  %v4167 = vunpack.c.h.b16 %v442
  %v4168 = vunpack.c.l.b16 %v443
  %v4169 = vunpack.c.h.b16 %v443
  %v4170 = vunpack.c.l.b16 %v444
  %v4171 = vunpack.c.h.b16 %v444
  %v4172 = vunpack.c.l.b16 %v445
  %v4173 = vunpack.c.h.b16 %v445
  %v4174 = vunpack.c.l.b16 %v446
  %v4175 = vunpack.c.h.b16 %v446
  %v4176 = vunpack.c.l.b16 %v447
  %v4177 = vunpack.c.h.b16 %v447
  %v4178 = vunpack.c.l.b16 %v448
  %v4179 = vunpack.c.h.b16 %v448
  %v4180 = vunpack.c.l.b16 %v449
  %v4181 = vunpack.c.h.b16 %v449
  %v4182 = vunpack.c.l.b16 %v450
  %v4183 = vunpack.c.h.b16 %v450
  %v4184 = vunpack.c.l.b16 %v451
  %v4185 = vunpack.c.h.b16 %v451
  %v4186 = vunpack.c.l.b16 %v452
  %v4187 = vunpack.c.h.b16 %v452
  %v4188 = vunpack.c.l.b16 %v453
  %v4189 = vunpack.c.h.b16 %v453
  %v4190 = vunpack.c.l.b16 %v454
  %v4191 = vunpack.c.h.b16 %v454
  %v4192 = vunpack.c.l.b16 %v455
  %v4193 = vunpack.c.h.b16 %v455
  %v4194 = vunpack.c.l.b16 %v456
  %v4195 = vunpack.c.h.b16 %v456
  %v4196 = vunpack.c.l.b16 %v457
  %v4197 = vunpack.c.h.b16 %v457
  %v4198 = vunpack.c.l.b16 %v458
  %v4199 = vunpack.c.h.b16 %v458
  %v4200 = vunpack.c.l.b16 %v459
  %v4201 = vunpack.c.h.b16 %v459
  %v4202 = vunpack.c.l.b16 %v460
  %v4203 = vunpack.c.h.b16 %v460
  %v4204 = vunpack.c.l.b16 %v461
  %v4205 = vunpack.c.h.b16 %v461
  %v4206 = vunpack.c.l.b16 %v462
  %v4207 = vunpack.c.h.b16 %v462
  %v4208 = vunpack.c.l.b16 %v463
  %v4209 = vunpack.c.h.b16 %v463
  %v4210 = vunpack.c.l.b16 %v464
  %v4211 = vunpack.c.h.b16 %v464
  %v4212 = vunpack.c.l.b16 %v465
  %v4213 = vunpack.c.h.b16 %v465
  %v4214 = vunpack.c.l.b16 %v466
  %v4215 = vunpack.c.h.b16 %v466
  %v4216 = vunpack.c.l.b16 %v467
  %v4217 = vunpack.c.h.b16 %v467
  %v4218 = vunpack.c.l.b16 %v468
  %v4219 = vunpack.c.h.b16 %v468
  %v4220 = vunpack.c.l.b16 %v469
  %v4221 = vunpack.c.h.b16 %v469
  %v4222 = vunpack.c.l.b16 %v470
  %v4223 = vunpack.c.h.b16 %v470
  %v4224 = vunpack.c.l.b16 %v471
  %v4225 = vunpack.c.h.b16 %v471
  %v4226 = vunpack.c.l.b16 %v472
  %v4227 = vunpack.c.h.b16 %v472
  %v4228 = vunpack.c.l.b16 %v473
  %v4229 = vunpack.c.h.b16 %v473
  %v4230 = vunpack.c.l.b16 %v474
  %v4231 = vunpack.c.h.b16 %v474
  %v4232 = vunpack.c.l.b16 %v475
  %v4233 = vunpack.c.h.b16 %v475
  %v4234 = vunpack.c.l.b16 %v476
  %v4235 = vunpack.c.h.b16 %v476
  %v4236 = vunpack.c.l.b16 %v477
  %v4237 = vunpack.c.h.b16 %v477
  %v4238 = vunpack.c.l.b16 %v478
  %v4239 = vunpack.c.h.b16 %v478
  %v4240 = vunpack.c.l.b16 %v479
  %v4241 = vunpack.c.h.b16 %v479
  %v4242 = vunpack.c.l.b16 %v480
  %v4243 = vunpack.c.h.b16 %v480
  %v4244 = vunpack.c.l.b16 %v481
  %v4245 = vunpack.c.h.b16 %v481
  %v4246 = vunpack.c.l.b16 %v482
  %v4247 = vunpack.c.h.b16 %v482
  %v4248 = vunpack.c.l.b16 %v483
  %v4249 = vunpack.c.h.b16 %v483
  %v4250 = vunpack.c.l.b16 %v484
  %v4251 = vunpack.c.h.b16 %v484
  %v4252 = vunpack.c.l.b16 %v485
  %v4253 = vunpack.c.h.b16 %v485
  %v4254 = vunpack.c.l.b16 %v486
  %v4255 = vunpack.c.h.b16 %v486
  %v4256 = vunpack.c.l.b16 %v487
  %v4257 = vunpack.c.h.b16 %v487
  %v4258 = vunpack.c.l.b16 %v488
  %v4259 = vunpack.c.h.b16 %v488
  %v4260 = vunpack.c.l.b16 %v489
  %v4261 = vunpack.c.h.b16 %v489
  %v4262 = vunpack.c.l.b16 %v490
  %v4263 = vunpack.c.h.b16 %v490
  %v4264 = vunpack.c.l.b16 %v491
  %v4265 = vunpack.c.h.b16 %v491
  %v4266 = vunpack.c.l.b16 %v492
  %v4267 = vunpack.c.h.b16 %v492
  %v4268 = vunpack.c.l.b16 %v493
  %v4269 = vunpack.c.h.b16 %v493
  %v4270 = vunpack.c.l.b16 %v494
  %v4271 = vunpack.c.h.b16 %v494
  %v4272 = vunpack.c.l.b16 %v495
  %v4273 = vunpack.c.h.b16 %v495
  %v4274 = vunpack.c.l.b16 %v496
  %v4275 = vunpack.c.h.b16 %v496
  %v4276 = vunpack.c.l.b16 %v497
  %v4277 = vunpack.c.h.b16 %v497
  %v4278 = vunpack.c.l.b16 %v498
  %v4279 = vunpack.c.h.b16 %v498
  %v4280 = vunpack.c.l.b16 %v499
  %v4281 = vunpack.c.h.b16 %v499
  %v4282 = vunpack.c.l.b16 %v500
  %v4283 = vunpack.c.h.b16 %v500
  %v4284 = vunpack.c.l.b16 %v501
  %v4285 = vunpack.c.h.b16 %v501
  %v4286 = vunpack.c.l.b16 %v502
  %v4287 = vunpack.c.h.b16 %v502
  %v4288 = vunpack.c.l.b16 %v503
  %v4289 = vunpack.c.h.b16 %v503
  %v4290 = vunpack.c.l.b16 %v504
  %v4291 = vunpack.c.h.b16 %v504
  %v4292 = vunpack.c.l.b16 %v505
  %v4293 = vunpack.c.h.b16 %v505
  %v4294 = vunpack.c.l.b16 %v506
  %v4295 = vunpack.c.h.b16 %v506
  %v4296 = vunpack.c.l.b16 %v507
  %v4297 = vunpack.c.h.b16 %v507
  %v4298 = vunpack.c.l.b16 %v508
  %v4299 = vunpack.c.h.b16 %v508
  %v4300 = vunpack.c.l.b16 %v509
  %v4301 = vunpack.c.h.b16 %v509
  %v4302 = vunpack.c.l.b16 %v510
  %v4303 = vunpack.c.h.b16 %v510
  %v4304 = vunpack.c.l.b16 %v511
  %v4305 = vunpack.c.h.b16 %v511
  %v4306 = vunpack.c.l.b16 %v512
  %v4307 = vunpack.c.h.b16 %v512
  %v4308 = vunpack.c.l.b16 %v513
  %v4309 = vunpack.c.h.b16 %v513
  %v4310 = vunpack.c.l.b16 %v514
  %v4311 = vunpack.c.h.b16 %v514
  %v4312 = vunpack.c.l.b16 %v515
  %v4313 = vunpack.c.h.b16 %v515
  %v4314 = vunpack.c.l.b16 %v516
  %v4315 = vunpack.c.h.b16 %v516
  %v4316 = vunpack.c.l.b16 %v517
  %v4317 = vunpack.c.h.b16 %v517
  %v4318 = vunpack.c.l.b16 %v518
  %v4319 = vunpack.c.h.b16 %v518
  %v4320 = vunpack.c.l.b16 %v519
  %v4321 = vunpack.c.h.b16 %v519
  %v4322 = vunpack.c.l.b16 %v520
  %v4323 = vunpack.c.h.b16 %v520
  %v4324 = vunpack.c.l.b16 %v521
  %v4325 = vunpack.c.h.b16 %v521
  %v4326 = vunpack.c.l.b16 %v522
  %v4327 = vunpack.c.h.b16 %v522
  %v4328 = vunpack.c.l.b16 %v523
  %v4329 = vunpack.c.h.b16 %v523
  %v4330 = vunpack.c.l.b16 %v524
  %v4331 = vunpack.c.h.b16 %v524
  %v4332 = vunpack.c.l.b16 %v525
  %v4333 = vunpack.c.h.b16 %v525
  %v4334 = vunpack.c.l.b16 %v526
  %v4335 = vunpack.c.h.b16 %v526
  %v4336 = vunpack.c.l.b16 %v527
  %v4337 = vunpack.c.h.b16 %v527
  %v4338 = vunpack.c.l.b16 %v528
  %v4339 = vunpack.c.h.b16 %v528
  %v4340 = vunpack.c.l.b16 %v529
  %v4341 = vunpack.c.h.b16 %v529
  %v4342 = vunpack.c.l.b16 %v530
  %v4343 = vunpack.c.h.b16 %v530
  %v4344 = vunpack.c.l.b16 %v531
  %v4345 = vunpack.c.h.b16 %v531
  %v4346 = vunpack.c.l.b16 %v532
  %v4347 = vunpack.c.h.b16 %v532
  %v4348 = vunpack.c.l.b16 %v533
  %v4349 = vunpack.c.h.b16 %v533
  %v4350 = vunpack.c.l.b16 %v534
  %v4351 = vunpack.c.h.b16 %v534
  %v4352 = vunpack.c.l.b16 %v535
  %v4353 = vunpack.c.h.b16 %v535
  %v4354 = vunpack.c.l.b16 %v536
  %v4355 = vunpack.c.h.b16 %v536
  %v4356 = vunpack.c.l.b16 %v537
  %v4357 = vunpack.c.h.b16 %v537
  %v4358 = vunpack.c.l.b16 %v538
  %v4359 = vunpack.c.h.b16 %v538
  %v4360 = vunpack.c.l.b16 %v539
  %v4361 = vunpack.c.h.b16 %v539
  %v4362 = vunpack.c.l.b16 %v540
  %v4363 = vunpack.c.h.b16 %v540
  %v4364 = vunpack.c.l.b16 %v541
  %v4365 = vunpack.c.h.b16 %v541
  %v4366 = vunpack.c.l.b16 %v542
  %v4367 = vunpack.c.h.b16 %v542
  %v4368 = vunpack.c.l.b16 %v543
  %v4369 = vunpack.c.h.b16 %v543
  %v4370 = vunpack.c.l.b16 %v544
  %v4371 = vunpack.c.h.b16 %v544
  %v4372 = vunpack.c.l.b16 %v545
  %v4373 = vunpack.c.h.b16 %v545
  %v4374 = vunpack.c.l.b16 %v546
  %v4375 = vunpack.c.h.b16 %v546
  %v4376 = vunpack.c.l.b16 %v547
  %v4377 = vunpack.c.h.b16 %v547
  %v4378 = vunpack.c.l.b16 %v548
  %v4379 = vunpack.c.h.b16 %v548
  %v4380 = vunpack.c.l.b16 %v549
  %v4381 = vunpack.c.h.b16 %v549
  %v4382 = vunpack.c.l.b16 %v550
  %v4383 = vunpack.c.h.b16 %v550
  %v4384 = vunpack.c.l.b16 %v551
  %v4385 = vunpack.c.h.b16 %v551
  %v4386 = vunpack.c.l.b16 %v552
  %v4387 = vunpack.c.h.b16 %v552
  %v4388 = vunpack.c.l.b16 %v553
  %v4389 = vunpack.c.h.b16 %v553
  %v4390 = vunpack.c.l.b16 %v554
  %v4391 = vunpack.c.h.b16 %v554
  %v4392 = vunpack.c.l.b16 %v555
  %v4393 = vunpack.c.h.b16 %v555
  %v4394 = vunpack.c.l.b16 %v556
  %v4395 = vunpack.c.h.b16 %v556
  %v4396 = vunpack.c.l.b16 %v557
  %v4397 = vunpack.c.h.b16 %v557
  %v4398 = vunpack.c.l.b16 %v558
  %v4399 = vunpack.c.h.b16 %v558
  %v4400 = vunpack.c.l.b16 %v559
  %v4401 = vunpack.c.h.b16 %v559
  %v4402 = vunpack.c.l.b16 %v560
  %v4403 = vunpack.c.h.b16 %v560
  %v4404 = vunpack.c.l.b16 %v561
  %v4405 = vunpack.c.h.b16 %v561
  %v4406 = vunpack.c.l.b16 %v562
  %v4407 = vunpack.c.h.b16 %v562
  %v4408 = vunpack.c.l.b16 %v563
  %v4409 = vunpack.c.h.b16 %v563
  %v4410 = vunpack.c.l.b16 %v564
  %v4411 = vunpack.c.h.b16 %v564
  %v4412 = vunpack.c.l.b16 %v565
  %v4413 = vunpack.c.h.b16 %v565
  %v4414 = vunpack.c.l.b16 %v566
  %v4415 = vunpack.c.h.b16 %v566
  %v4416 = vunpack.c.l.b16 %v567
  %v4417 = vunpack.c.h.b16 %v567
  %v4418 = vunpack.c.l.b16 %v568
  %v4419 = vunpack.c.h.b16 %v568
  %v4420 = vunpack.c.l.b16 %v569
  %v4421 = vunpack.c.h.b16 %v569
  %v4422 = vunpack.c.l.b16 %v570
  %v4423 = vunpack.c.h.b16 %v570
  %v4424 = vunpack.c.l.b16 %v571
  %v4425 = vunpack.c.h.b16 %v571
  %v4426 = vunpack.c.l.b16 %v572
  %v4427 = vunpack.c.h.b16 %v572
  %v4428 = vunpack.c.l.b16 %v573
  %v4429 = vunpack.c.h.b16 %v573
  %v4430 = vunpack.c.l.b16 %v574
  %v4431 = vunpack.c.h.b16 %v574
  %v4432 = vunpack.c.l.b16 %v575
  %v4433 = vunpack.c.h.b16 %v575
  %v4434 = vunpack.c.l.b16 %v576
  %v4435 = vunpack.c.h.b16 %v576
  %v4436 = vunpack.c.l.b16 %v577
  %v4437 = vunpack.c.h.b16 %v577
  %v4438 = vunpack.c.l.b16 %v578
  %v4439 = vunpack.c.h.b16 %v578
  %v4440 = vunpack.c.l.b16 %v579
  %v4441 = vunpack.c.h.b16 %v579
  %v4442 = vunpack.c.l.b16 %v580
  %v4443 = vunpack.c.h.b16 %v580
  %v4444 = vunpack.c.l.b16 %v581
  %v4445 = vunpack.c.h.b16 %v581
  %v4446 = vunpack.c.l.b16 %v582
  %v4447 = vunpack.c.h.b16 %v582
  %v4448 = vunpack.c.l.b16 %v583
  %v4449 = vunpack.c.h.b16 %v583
  %v4450 = vunpack.c.l.b16 %v584
  %v4451 = vunpack.c.h.b16 %v584
  %v4452 = vunpack.c.l.b16 %v585
  %v4453 = vunpack.c.h.b16 %v585
  %v4454 = vunpack.c.l.b16 %v586
  %v4455 = vunpack.c.h.b16 %v586
  %v4456 = vunpack.c.l.b16 %v587
  %v4457 = vunpack.c.h.b16 %v587
  %v4458 = vunpack.c.l.b16 %v588
  %v4459 = vunpack.c.h.b16 %v588
  %v4460 = vunpack.c.l.b16 %v589
  %v4461 = vunpack.c.h.b16 %v589
  %v4462 = vunpack.c.l.b16 %v590
  %v4463 = vunpack.c.h.b16 %v590
  %v4464 = vunpack.c.l.b16 %v591
  %v4465 = vunpack.c.h.b16 %v591
  %v4466 = vunpack.c.l.b16 %v592
  %v4467 = vunpack.c.h.b16 %v592
  %v4468 = vunpack.c.l.b16 %v593
  %v4469 = vunpack.c.h.b16 %v593
  %v4470 = vunpack.c.l.b16 %v594
  %v4471 = vunpack.c.h.b16 %v594
  %v4472 = vunpack.c.l.b16 %v595
  %v4473 = vunpack.c.h.b16 %v595
  %v4474 = vunpack.c.l.b16 %v596
  %v4475 = vunpack.c.h.b16 %v596
  %v4476 = vunpack.c.l.b16 %v597
  %v4477 = vunpack.c.h.b16 %v597
  %v4478 = vunpack.c.l.b16 %v598
  %v4479 = vunpack.c.h.b16 %v598
  %v4480 = vunpack.c.l.b16 %v599
  %v4481 = vunpack.c.h.b16 %v599
  %v4482 = vunpack.c.l.b16 %v600
  %v4483 = vunpack.c.h.b16 %v600
  %v4484 = vunpack.c.l.b16 %v601
  %v4485 = vunpack.c.h.b16 %v601
  %v4486 = vunpack.c.l.b16 %v602
  %v4487 = vunpack.c.h.b16 %v602
  %v4488 = vunpack.c.l.b16 %v603
  %v4489 = vunpack.c.h.b16 %v603
  %v4490 = vunpack.c.l.b16 %v604
  %v4491 = vunpack.c.h.b16 %v604
  %v4492 = vunpack.c.l.b16 %v605
  %v4493 = vunpack.c.h.b16 %v605
  %v4494 = vunpack.c.l.b16 %v606
  %v4495 = vunpack.c.h.b16 %v606
  %v4496 = vunpack.c.l.b16 %v607
  %v4497 = vunpack.c.h.b16 %v607
  %v4498 = vunpack.c.l.b16 %v608
  %v4499 = vunpack.c.h.b16 %v608
  %v4500 = vunpack.c.l.b16 %v609
  %v4501 = vunpack.c.h.b16 %v609
  %v4502 = vunpack.c.l.b16 %v610
  %v4503 = vunpack.c.h.b16 %v610
  %v4504 = vunpack.c.l.b16 %v611
  %v4505 = vunpack.c.h.b16 %v611
  %v4506 = vunpack.c.l.b16 %v612
  %v4507 = vunpack.c.h.b16 %v612
  %v4508 = vunpack.c.l.b16 %v613
  %v4509 = vunpack.c.h.b16 %v613
  %v4510 = vunpack.c.l.b16 %v614
  %v4511 = vunpack.c.h.b16 %v614
  %v4512 = vunpack.c.l.b16 %v615
  %v4513 = vunpack.c.h.b16 %v615
  %v4514 = vunpack.c.l.b16 %v616
  %v4515 = vunpack.c.h.b16 %v616
  %v4516 = vunpack.c.l.b16 %v617
  %v4517 = vunpack.c.h.b16 %v617
  %v4518 = vunpack.c.l.b16 %v618
  %v4519 = vunpack.c.h.b16 %v618
  %v4520 = vunpack.c.l.b16 %v619
  %v4521 = vunpack.c.h.b16 %v619
  %v4522 = vunpack.c.l.b16 %v620
  %v4523 = vunpack.c.h.b16 %v620
  %v4524 = vunpack.c.l.b16 %v621
  %v4525 = vunpack.c.h.b16 %v621
  %v4526 = vunpack.c.l.b16 %v622
  %v4527 = vunpack.c.h.b16 %v622
  %v4528 = vunpack.c.l.b16 %v623
  %v4529 = vunpack.c.h.b16 %v623
  %v4530 = vunpack.c.l.b16 %v624
  %v4531 = vunpack.c.h.b16 %v624
  %v4532 = vunpack.c.l.b16 %v625
  %v4533 = vunpack.c.h.b16 %v625
  %v4534 = vunpack.c.l.b16 %v626
  %v4535 = vunpack.c.h.b16 %v626
  %v4536 = vunpack.c.l.b16 %v627
  %v4537 = vunpack.c.h.b16 %v627
  %v4538 = vunpack.c.l.b16 %v628
  %v4539 = vunpack.c.h.b16 %v628
  %v4540 = vunpack.c.l.b16 %v629
  %v4541 = vunpack.c.h.b16 %v629
  %v4542 = vunpack.c.l.b16 %v630
  %v4543 = vunpack.c.h.b16 %v630
  %v4544 = vunpack.c.l.b16 %v631
  %v4545 = vunpack.c.h.b16 %v631
  %v4546 = vunpack.c.l.b16 %v632
  %v4547 = vunpack.c.h.b16 %v632
  %v4548 = vunpack.c.l.b16 %v633
  %v4549 = vunpack.c.h.b16 %v633
  %v4550 = vunpack.c.l.b16 %v634
  %v4551 = vunpack.c.h.b16 %v634
  %v4552 = vunpack.c.l.b16 %v635
  %v4553 = vunpack.c.h.b16 %v635
  %v4554 = vunpack.c.l.b16 %v636
  %v4555 = vunpack.c.h.b16 %v636
  %v4556 = vunpack.c.l.b16 %v637
  %v4557 = vunpack.c.h.b16 %v637
  %v4558 = vunpack.c.l.b16 %v638
  %v4559 = vunpack.c.h.b16 %v638
  %v4560 = vunpack.c.l.b16 %v639
  %v4561 = vunpack.c.h.b16 %v639
  %v4562 = vunpack.c.l.b16 %v640
  %v4563 = vunpack.c.h.b16 %v640
  %v4564 = vunpack.c.l.b16 %v641
  %v4565 = vunpack.c.h.b16 %v641
  %v4566 = vunpack.c.l.b16 %v642
  %v4567 = vunpack.c.h.b16 %v642
  %v4568 = vunpack.c.l.b16 %v643
  %v4569 = vunpack.c.h.b16 %v643
  %v4570 = vunpack.c.l.b16 %v644
  %v4571 = vunpack.c.h.b16 %v644
  %v4572 = vunpack.c.l.b16 %v645
  %v4573 = vunpack.c.h.b16 %v645
  %v4574 = vunpack.c.l.b16 %v646
  %v4575 = vunpack.c.h.b16 %v646
  %v4576 = vunpack.c.l.b16 %v647
  %v4577 = vunpack.c.h.b16 %v647
  %v4578 = vunpack.c.l.b16 %v648
  %v4579 = vunpack.c.h.b16 %v648
  %v4580 = vunpack.c.l.b16 %v649
  %v4581 = vunpack.c.h.b16 %v649
  %v4582 = vunpack.c.l.b16 %v650
  %v4583 = vunpack.c.h.b16 %v650
  %v4584 = vunpack.c.l.b16 %v651
  %v4585 = vunpack.c.h.b16 %v651
  %v4586 = vunpack.c.l.b16 %v652
  %v4587 = vunpack.c.h.b16 %v652
  %v4588 = vunpack.c.l.b16 %v653
  %v4589 = vunpack.c.h.b16 %v653
  %v4590 = vunpack.c.l.b16 %v654
  %v4591 = vunpack.c.h.b16 %v654
  %v4592 = vunpack.c.l.b16 %v655
  %v4593 = vunpack.c.h.b16 %v655
  %v4594 = vunpack.c.l.b16 %v656
  %v4595 = vunpack.c.h.b16 %v656
  %v4596 = vunpack.c.l.b16 %v657
  %v4597 = vunpack.c.h.b16 %v657
  %v4598 = vunpack.c.l.b16 %v658
  %v4599 = vunpack.c.h.b16 %v658
  %v4600 = vunpack.c.l.b16 %v659
  %v4601 = vunpack.c.h.b16 %v659
  %v4602 = vunpack.c.l.b16 %v660
  %v4603 = vunpack.c.h.b16 %v660
  %v4604 = vunpack.c.l.b16 %v661
  %v4605 = vunpack.c.h.b16 %v661
  %v4606 = vunpack.c.l.b16 %v662
  %v4607 = vunpack.c.h.b16 %v662
  %v4608 = vunpack.c.l.b16 %v663
  %v4609 = vunpack.c.h.b16 %v663
  %v4610 = vunpack.c.l.b16 %v664
  %v4611 = vunpack.c.h.b16 %v664
  %v4612 = vunpack.c.l.b16 %v665
  %v4613 = vunpack.c.h.b16 %v665
  %v4614 = vunpack.c.l.b16 %v666
  %v4615 = vunpack.c.h.b16 %v666
  %v4616 = vunpack.c.l.b16 %v667
  %v4617 = vunpack.c.h.b16 %v667
  %v4618 = vunpack.c.l.b16 %v668
  %v4619 = vunpack.c.h.b16 %v668
  %v4620 = vunpack.c.l.b16 %v669
  %v4621 = vunpack.c.h.b16 %v669
  %v4622 = vunpack.c.l.b16 %v670
  %v4623 = vunpack.c.h.b16 %v670
  %v4624 = vunpack.c.l.b16 %v671
  %v4625 = vunpack.c.h.b16 %v671
  %v4626 = vunpack.c.l.b16 %v672
  %v4627 = vunpack.c.h.b16 %v672
  %v4628 = vunpack.c.l.b16 %v673
  %v4629 = vunpack.c.h.b16 %v673
  %v4630 = vunpack.c.l.b16 %v674
  %v4631 = vunpack.c.h.b16 %v674
  %v4632 = vunpack.c.l.b16 %v675
  %v4633 = vunpack.c.h.b16 %v675
  %v4634 = vunpack.c.l.b16 %v676
  %v4635 = vunpack.c.h.b16 %v676
  %v4636 = vunpack.c.l.b16 %v677
  %v4637 = vunpack.c.h.b16 %v677
  %v4638 = vunpack.c.l.b16 %v678
  %v4639 = vunpack.c.h.b16 %v678
  %v4640 = vunpack.c.l.b16 %v679
  %v4641 = vunpack.c.h.b16 %v679
  %v4642 = vunpack.c.l.b16 %v680
  %v4643 = vunpack.c.h.b16 %v680
  %v4644 = vunpack.c.l.b16 %v681
  %v4645 = vunpack.c.h.b16 %v681
  %v4646 = vunpack.c.l.b16 %v682
  %v4647 = vunpack.c.h.b16 %v682
  %v4648 = vunpack.c.l.b16 %v683
  %v4649 = vunpack.c.h.b16 %v683
  %v4650 = vunpack.c.l.b16 %v684
  %v4651 = vunpack.c.h.b16 %v684
  %v4652 = vunpack.c.l.b16 %v685
  %v4653 = vunpack.c.h.b16 %v685
  %v4654 = vunpack.c.l.b16 %v686
  %v4655 = vunpack.c.h.b16 %v686
  %v4656 = vunpack.c.l.b16 %v687
  %v4657 = vunpack.c.h.b16 %v687
  %v4658 = vunpack.c.l.b16 %v688
  %v4659 = vunpack.c.h.b16 %v688
  %v4660 = vunpack.c.l.b16 %v689
  %v4661 = vunpack.c.h.b16 %v689
  %v4662 = vunpack.c.l.b16 %v690
  %v4663 = vunpack.c.h.b16 %v690
  %v4664 = vunpack.c.l.b16 %v691
  %v4665 = vunpack.c.h.b16 %v691
  %v4666 = vunpack.c.l.b16 %v692
  %v4667 = vunpack.c.h.b16 %v692
  %v4668 = vunpack.c.l.b16 %v693
  %v4669 = vunpack.c.h.b16 %v693
  %v4670 = vunpack.c.l.b16 %v694
  %v4671 = vunpack.c.h.b16 %v694
  %v4672 = vunpack.c.l.b16 %v695
  %v4673 = vunpack.c.h.b16 %v695
  %v4674 = vunpack.c.l.b16 %v696
  %v4675 = vunpack.c.h.b16 %v696
  %v4676 = vunpack.c.l.b16 %v697
  %v4677 = vunpack.c.h.b16 %v697
  %v4678 = vunpack.c.l.b16 %v698
  %v4679 = vunpack.c.h.b16 %v698
  %v4680 = vunpack.c.l.b16 %v699
  %v4681 = vunpack.c.h.b16 %v699
  %v4682 = vunpack.c.l.b16 %v700
  %v4683 = vunpack.c.h.b16 %v700
  %v4684 = vunpack.c.l.b16 %v701
  %v4685 = vunpack.c.h.b16 %v701
  %v4686 = vunpack.c.l.b16 %v702
  %v4687 = vunpack.c.h.b16 %v702
  %v4688 = vunpack.c.l.b16 %v703
  %v4689 = vunpack.c.h.b16 %v703
  %v4690 = vunpack.c.l.b16 %v704
  %v4691 = vunpack.c.h.b16 %v704
  %v4692 = vunpack.c.l.b16 %v705
  %v4693 = vunpack.c.h.b16 %v705
  %v4694 = vunpack.c.l.b16 %v706
  %v4695 = vunpack.c.h.b16 %v706
  %v4696 = vunpack.c.l.b16 %v707
  %v4697 = vunpack.c.h.b16 %v707
  %v4698 = vunpack.c.l.b16 %v708
  %v4699 = vunpack.c.h.b16 %v708
  %v4700 = vunpack.c.l.b16 %v709
  %v4701 = vunpack.c.h.b16 %v709
  %v4702 = vunpack.c.l.b16 %v710
  %v4703 = vunpack.c.h.b16 %v710
  %v4704 = vunpack.c.l.b16 %v711
  %v4705 = vunpack.c.h.b16 %v711
  %v4706 = vunpack.c.l.b16 %v712
  %v4707 = vunpack.c.h.b16 %v712
  %v4708 = vunpack.c.l.b16 %v713
  %v4709 = vunpack.c.h.b16 %v713
  %v4710 = vunpack.c.l.b16 %v714
  %v4711 = vunpack.c.h.b16 %v714
  %v4712 = vunpack.c.l.b16 %v715
  %v4713 = vunpack.c.h.b16 %v715
  %v4714 = vunpack.c.l.b16 %v716
  %v4715 = vunpack.c.h.b16 %v716
  %v4716 = vunpack.c.l.b16 %v717
  %v4717 = vunpack.c.h.b16 %v717
  %v4718 = vunpack.c.l.b16 %v718
  %v4719 = vunpack.c.h.b16 %v718
  %v4720 = vunpack.c.l.b16 %v719
  %v4721 = vunpack.c.h.b16 %v719
  %v4722 = vunpack.c.l.b16 %v720
  %v4723 = vunpack.c.h.b16 %v720
  %v4724 = vunpack.c.l.b16 %v721
  %v4725 = vunpack.c.h.b16 %v721
  %v4726 = vunpack.c.l.b16 %v722
  %v4727 = vunpack.c.h.b16 %v722
  %v4728 = vunpack.c.l.b16 %v723
  %v4729 = vunpack.c.h.b16 %v723
  %v4730 = vunpack.c.l.b16 %v724
  %v4731 = vunpack.c.h.b16 %v724
  %v4732 = vunpack.c.l.b16 %v725
  %v4733 = vunpack.c.h.b16 %v725
  %v4734 = vunpack.c.l.b16 %v726
  %v4735 = vunpack.c.h.b16 %v726
  %v4736 = vunpack.c.l.b16 %v727
  %v4737 = vunpack.c.h.b16 %v727
  %v4738 = vunpack.c.l.b16 %v728
  %v4739 = vunpack.c.h.b16 %v728
  %v4740 = vunpack.c.l.b16 %v729
  %v4741 = vunpack.c.h.b16 %v729
  %v4742 = vunpack.c.l.b16 %v730
  %v4743 = vunpack.c.h.b16 %v730
  %v4744 = vunpack.c.l.b16 %v731
  %v4745 = vunpack.c.h.b16 %v731
  %v4746 = vunpack.c.l.b16 %v732
  %v4747 = vunpack.c.h.b16 %v732
  %v4748 = vunpack.c.l.b16 %v733
  %v4749 = vunpack.c.h.b16 %v733
  %v4750 = vunpack.c.l.b16 %v734
  %v4751 = vunpack.c.h.b16 %v734
  %v4752 = vunpack.c.l.b16 %v735
  %v4753 = vunpack.c.h.b16 %v735
  %v4754 = vunpack.c.l.b16 %v736
  %v4755 = vunpack.c.h.b16 %v736
  %v4756 = vunpack.c.l.b16 %v737
  %v4757 = vunpack.c.h.b16 %v737
  %v4758 = vunpack.c.l.b16 %v738
  %v4759 = vunpack.c.h.b16 %v738
  %v4760 = vunpack.c.l.b16 %v739
  %v4761 = vunpack.c.h.b16 %v739
  %v4762 = vunpack.c.l.b16 %v740
  %v4763 = vunpack.c.h.b16 %v740
  %v4764 = vunpack.c.l.b16 %v741
  %v4765 = vunpack.c.h.b16 %v741
  %v4766 = vunpack.c.l.b16 %v742
  %v4767 = vunpack.c.h.b16 %v742
  %v4768 = vunpack.c.l.b16 %v743
  %v4769 = vunpack.c.h.b16 %v743
  %v4770 = vunpack.c.l.b16 %v744
  %v4771 = vunpack.c.h.b16 %v744
  %v4772 = vunpack.c.l.b16 %v745
  %v4773 = vunpack.c.h.b16 %v745
  %v4774 = vunpack.c.l.b16 %v746
  %v4775 = vunpack.c.h.b16 %v746
  %v4776 = vunpack.c.l.b16 %v747
  %v4777 = vunpack.c.h.b16 %v747
  %v4778 = vunpack.c.l.b16 %v748
  %v4779 = vunpack.c.h.b16 %v748
  %v4780 = vunpack.c.l.b16 %v749
  %v4781 = vunpack.c.h.b16 %v749
  %v4782 = vunpack.c.l.b16 %v750
  %v4783 = vunpack.c.h.b16 %v750
  %v4784 = vunpack.c.l.b16 %v751
  %v4785 = vunpack.c.h.b16 %v751
  %v4786 = vunpack.c.l.b16 %v752
  %v4787 = vunpack.c.h.b16 %v752
  %v4788 = vunpack.c.l.b16 %v753
  %v4789 = vunpack.c.h.b16 %v753
  %v4790 = vunpack.c.l.b16 %v754
  %v4791 = vunpack.c.h.b16 %v754
  %v4792 = vunpack.c.l.b16 %v755
  %v4793 = vunpack.c.h.b16 %v755
  %v4794 = vunpack.c.l.b16 %v756
  %v4795 = vunpack.c.h.b16 %v756
  %v4796 = vunpack.c.l.b16 %v757
  %v4797 = vunpack.c.h.b16 %v757
  %v4798 = vunpack.c.l.b16 %v758
  %v4799 = vunpack.c.h.b16 %v758
  %v4800 = vunpack.c.l.b16 %v759
  %v4801 = vunpack.c.h.b16 %v759
  %v4802 = vunpack.c.l.b16 %v760
  %v4803 = vunpack.c.h.b16 %v760
  %v4804 = vunpack.c.l.b16 %v761
  %v4805 = vunpack.c.h.b16 %v761
  %v4806 = vunpack.c.l.b16 %v762
  %v4807 = vunpack.c.h.b16 %v762
  %v4808 = vunpack.c.l.b16 %v763
  %v4809 = vunpack.c.h.b16 %v763
  %v4810 = vunpack.c.l.b16 %v764
  %v4811 = vunpack.c.h.b16 %v764
  %v4812 = vunpack.c.l.b16 %v765
  %v4813 = vunpack.c.h.b16 %v765
  %v4814 = vunpack.c.l.b16 %v766
  %v4815 = vunpack.c.h.b16 %v766
  %v4816 = vunpack.c.l.b16 %v767
  %v4817 = vunpack.c.h.b16 %v767
  %v4818 = vunpack.c.l.b16 %v768
  %v4819 = vunpack.c.h.b16 %v768
  %v4820 = vunpack.c.l.b16 %v769
  %v4821 = vunpack.c.h.b16 %v769
  %v4822 = vunpack.c.l.b16 %v770
  %v4823 = vunpack.c.h.b16 %v770
  %v4824 = vunpack.c.l.b16 %v771
  %v4825 = vunpack.c.h.b16 %v771
  %v4826 = vunpack.c.l.b16 %v772
  %v4827 = vunpack.c.h.b16 %v772
  %v4828 = vunpack.c.l.b16 %v773
  %v4829 = vunpack.c.h.b16 %v773
  %v4830 = vunpack.c.l.b16 %v774
  %v4831 = vunpack.c.h.b16 %v774
  %v4832 = vunpack.c.l.b16 %v775
  %v4833 = vunpack.c.h.b16 %v775
  %v4834 = vunpack.c.l.b16 %v776
  %v4835 = vunpack.c.h.b16 %v776
  %v4836 = vunpack.c.l.b16 %v777
  %v4837 = vunpack.c.h.b16 %v777
  %v4838 = vunpack.c.l.b16 %v778
  %v4839 = vunpack.c.h.b16 %v778
  %v4840 = vunpack.c.l.b16 %v779
  %v4841 = vunpack.c.h.b16 %v779
  %v4842 = vunpack.c.l.b16 %v780
  %v4843 = vunpack.c.h.b16 %v780
  %v4844 = vunpack.c.l.b16 %v781
  %v4845 = vunpack.c.h.b16 %v781
  %v4846 = vunpack.c.l.b16 %v782
  %v4847 = vunpack.c.h.b16 %v782
  %v4848 = vunpack.c.l.b16 %v783
  %v4849 = vunpack.c.h.b16 %v783
  %v4850 = vunpack.c.l.b16 %v784
  %v4851 = vunpack.c.h.b16 %v784
  %v4852 = vunpack.c.l.b16 %v785
  %v4853 = vunpack.c.h.b16 %v785
  %v4854 = vunpack.c.l.b16 %v786
  %v4855 = vunpack.c.h.b16 %v786
  %v4856 = vunpack.c.l.b16 %v787
  %v4857 = vunpack.c.h.b16 %v787
  %v4858 = vunpack.c.l.b16 %v788
  %v4859 = vunpack.c.h.b16 %v788
  %v4860 = vunpack.c.l.b16 %v789
  %v4861 = vunpack.c.h.b16 %v789
  %v4862 = vunpack.c.l.b16 %v790
  %v4863 = vunpack.c.h.b16 %v790
  %v4864 = vunpack.c.l.b16 %v791
  %v4865 = vunpack.c.h.b16 %v791
  %v4866 = vunpack.c.l.b16 %v792
  %v4867 = vunpack.c.h.b16 %v792
  %v4868 = vunpack.c.l.b16 %v793
  %v4869 = vunpack.c.h.b16 %v793
  %v4870 = vunpack.c.l.b16 %v794
  %v4871 = vunpack.c.h.b16 %v794
  %v4872 = vunpack.c.l.b16 %v795
  %v4873 = vunpack.c.h.b16 %v795
  %v4874 = vunpack.c.l.b16 %v796
  %v4875 = vunpack.c.h.b16 %v796
  %v4876 = vunpack.c.l.b16 %v797
  %v4877 = vunpack.c.h.b16 %v797
  %v4878 = vunpack.c.l.b16 %v798
  %v4879 = vunpack.c.h.b16 %v798
  %v4880 = vunpack.c.l.b16 %v799
  %v4881 = vunpack.c.h.b16 %v799
  %v4882 = vunpack.c.l.b16 %v800
  %v4883 = vunpack.c.h.b16 %v800
  %v4884 = vunpack.c.l.b16 %v801
  %v4885 = vunpack.c.h.b16 %v801
  %v4886 = vunpack.c.l.b16 %v802
  %v4887 = vunpack.c.h.b16 %v802
  %v4888 = vunpack.c.l.b16 %v803
  %v4889 = vunpack.c.h.b16 %v803
  %v4890 = vunpack.c.l.b16 %v804
  %v4891 = vunpack.c.h.b16 %v804
  %v4892 = vunpack.c.l.b16 %v805
  %v4893 = vunpack.c.h.b16 %v805
  %v4894 = vunpack.c.l.b16 %v806
  %v4895 = vunpack.c.h.b16 %v806
  %v4896 = vunpack.c.l.b16 %v807
  %v4897 = vunpack.c.h.b16 %v807
  %v4898 = vunpack.c.l.b16 %v808
  %v4899 = vunpack.c.h.b16 %v808
  %v4900 = vunpack.c.l.b16 %v809
  %v4901 = vunpack.c.h.b16 %v809
  %v4902 = vunpack.c.l.b16 %v810
  %v4903 = vunpack.c.h.b16 %v810
  %v4904 = vunpack.c.l.b16 %v811
  %v4905 = vunpack.c.h.b16 %v811
  %v4906 = vunpack.c.l.b16 %v812
  %v4907 = vunpack.c.h.b16 %v812
  %v4908 = vunpack.c.l.b16 %v813
  %v4909 = vunpack.c.h.b16 %v813
  %v4910 = vunpack.c.l.b16 %v814
  %v4911 = vunpack.c.h.b16 %v814
  %v4912 = vunpack.c.l.b16 %v815
  %v4913 = vunpack.c.h.b16 %v815
  %v4914 = vunpack.c.l.b16 %v816
  %v4915 = vunpack.c.h.b16 %v816
  %v4916 = vunpack.c.l.b16 %v817
  %v4917 = vunpack.c.h.b16 %v817
  %v4918 = vunpack.c.l.b16 %v818
  %v4919 = vunpack.c.h.b16 %v818
  %v4920 = vunpack.c.l.b16 %v819
  %v4921 = vunpack.c.h.b16 %v819
  %v4922 = vunpack.c.l.b16 %v820
  %v4923 = vunpack.c.h.b16 %v820
  %v4924 = vunpack.c.l.b16 %v821
  %v4925 = vunpack.c.h.b16 %v821
  %v4926 = vunpack.c.l.b16 %v822
  %v4927 = vunpack.c.h.b16 %v822
  %v4928 = vunpack.c.l.b16 %v823
  %v4929 = vunpack.c.h.b16 %v823
  %v4930 = vunpack.c.l.b16 %v824
  %v4931 = vunpack.c.h.b16 %v824
  %v4932 = vunpack.c.l.b16 %v825
  %v4933 = vunpack.c.h.b16 %v825
  %v4934 = vunpack.c.l.b16 %v826
  %v4935 = vunpack.c.h.b16 %v826
  %v4936 = vunpack.c.l.b16 %v827
  %v4937 = vunpack.c.h.b16 %v827
  %v4938 = vunpack.c.l.b16 %v828
  %v4939 = vunpack.c.h.b16 %v828
  %v4940 = vunpack.c.l.b16 %v829
  %v4941 = vunpack.c.h.b16 %v829
  %v4942 = vunpack.c.l.b16 %v830
  %v4943 = vunpack.c.h.b16 %v830
  %v4944 = vunpack.c.l.b16 %v831
  %v4945 = vunpack.c.h.b16 %v831
  %v4946 = vunpack.c.l.b16 %v832
  %v4947 = vunpack.c.h.b16 %v832
  %v4948 = vunpack.c.l.b16 %v833
  %v4949 = vunpack.c.h.b16 %v833
  %v4950 = vunpack.c.l.b16 %v834
  %v4951 = vunpack.c.h.b16 %v834
  %v4952 = vunpack.c.l.b16 %v835
  %v4953 = vunpack.c.h.b16 %v835
  %v4954 = vunpack.c.l.b16 %v836
  %v4955 = vunpack.c.h.b16 %v836
  %v4956 = vunpack.c.l.b16 %v837
  %v4957 = vunpack.c.h.b16 %v837
  %v4958 = vunpack.c.l.b16 %v838
  %v4959 = vunpack.c.h.b16 %v838
  %v4960 = vunpack.c.l.b16 %v839
  %v4961 = vunpack.c.h.b16 %v839
  %v4962 = vunpack.c.l.b16 %v840
  %v4963 = vunpack.c.h.b16 %v840
  %v4964 = vunpack.c.l.b16 %v841
  %v4965 = vunpack.c.h.b16 %v841
  %v4966 = vunpack.c.l.b16 %v842
  %v4967 = vunpack.c.h.b16 %v842
  %v4968 = vunpack.c.l.b16 %v843
  %v4969 = vunpack.c.h.b16 %v843
  %v4970 = vunpack.c.l.b16 %v844
  %v4971 = vunpack.c.h.b16 %v844
  %v4972 = vunpack.c.l.b16 %v845
  %v4973 = vunpack.c.h.b16 %v845
  %v4974 = vunpack.c.l.b16 %v846
  %v4975 = vunpack.c.h.b16 %v846
  %v4976 = vunpack.c.l.b16 %v847
  %v4977 = vunpack.c.h.b16 %v847
  %v4978 = vunpack.c.l.b16 %v848
  %v4979 = vunpack.c.h.b16 %v848
  %v4980 = vunpack.c.l.b16 %v849
  %v4981 = vunpack.c.h.b16 %v849
  %v4982 = vunpack.c.l.b16 %v850
  %v4983 = vunpack.c.h.b16 %v850
  %v4984 = vunpack.c.l.b16 %v851
  %v4985 = vunpack.c.h.b16 %v851
  %v4986 = vunpack.c.l.b16 %v852
  %v4987 = vunpack.c.h.b16 %v852
  %v4988 = vunpack.c.l.b16 %v853
  %v4989 = vunpack.c.h.b16 %v853
  %v4990 = vunpack.c.l.b16 %v854
  %v4991 = vunpack.c.h.b16 %v854
  %v4992 = vunpack.c.l.b16 %v855
  %v4993 = vunpack.c.h.b16 %v855
  %v4994 = vunpack.c.l.b16 %v856
  %v4995 = vunpack.c.h.b16 %v856
  %v4996 = vunpack.c.l.b16 %v857
  %v4997 = vunpack.c.h.b16 %v857
  %v4998 = vunpack.c.l.b16 %v858
  %v4999 = vunpack.c.h.b16 %v858
  %v5000 = vunpack.c.l.b16 %v859
  %v5001 = vunpack.c.h.b16 %v859
  %v5002 = vunpack.c.l.b16 %v860
  %v5003 = vunpack.c.h.b16 %v860
  %v5004 = vunpack.c.l.b16 %v861
  %v5005 = vunpack.c.h.b16 %v861
  %v5006 = vunpack.c.l.b16 %v862
  %v5007 = vunpack.c.h.b16 %v862
  %v5008 = vunpack.c.l.b16 %v863
  %v5009 = vunpack.c.h.b16 %v863
  %v5010 = vunpack.c.l.b16 %v864
  %v5011 = vunpack.c.h.b16 %v864
  %v5012 = vunpack.c.l.b16 %v865
  %v5013 = vunpack.c.h.b16 %v865
  %v5014 = vunpack.c.l.b16 %v866
  %v5015 = vunpack.c.h.b16 %v866
  %v5016 = vunpack.c.l.b16 %v867
  %v5017 = vunpack.c.h.b16 %v867
  %v5018 = vunpack.c.l.b16 %v868
  %v5019 = vunpack.c.h.b16 %v868
  %v5020 = vunpack.c.l.b16 %v869
  %v5021 = vunpack.c.h.b16 %v869
  %v5022 = vunpack.c.l.b16 %v870
  %v5023 = vunpack.c.h.b16 %v870
  %v5024 = vunpack.c.l.b16 %v871
  %v5025 = vunpack.c.h.b16 %v871
  %v5026 = vunpack.c.l.b16 %v872
  %v5027 = vunpack.c.h.b16 %v872
  %v5028 = vunpack.c.l.b16 %v873
  %v5029 = vunpack.c.h.b16 %v873
  %v5030 = vunpack.c.l.b16 %v874
  %v5031 = vunpack.c.h.b16 %v874
  %v5032 = vunpack.c.l.b16 %v875
  %v5033 = vunpack.c.h.b16 %v875
  %v5034 = vunpack.c.l.b16 %v876
  %v5035 = vunpack.c.h.b16 %v876
  %v5036 = vunpack.c.l.b16 %v877
  %v5037 = vunpack.c.h.b16 %v877
  %v5038 = vunpack.c.l.b16 %v878
  %v5039 = vunpack.c.h.b16 %v878
  %v5040 = vunpack.c.l.b16 %v879
  %v5041 = vunpack.c.h.b16 %v879
  %v5042 = vunpack.c.l.b16 %v880
  %v5043 = vunpack.c.h.b16 %v880
  %v5044 = vunpack.c.l.b16 %v881
  %v5045 = vunpack.c.h.b16 %v881
  %v5046 = vunpack.c.l.b16 %v882
  %v5047 = vunpack.c.h.b16 %v882
  %v5048 = vunpack.c.l.b16 %v883
  %v5049 = vunpack.c.h.b16 %v883
  %v5050 = vunpack.c.l.b16 %v884
  %v5051 = vunpack.c.h.b16 %v884
  %v5052 = vunpack.c.l.b16 %v885
  %v5053 = vunpack.c.h.b16 %v885
  %v5054 = vunpack.c.l.b16 %v886
  %v5055 = vunpack.c.h.b16 %v886
  %v5056 = vunpack.c.l.b16 %v887
  %v5057 = vunpack.c.h.b16 %v887
  %v5058 = vunpack.c.l.b16 %v888
  %v5059 = vunpack.c.h.b16 %v888
  %v5060 = vunpack.c.l.b16 %v889
  %v5061 = vunpack.c.h.b16 %v889
  %v5062 = vunpack.c.l.b16 %v890
  %v5063 = vunpack.c.h.b16 %v890
  %v5064 = vunpack.c.l.b16 %v891
  %v5065 = vunpack.c.h.b16 %v891
  %v5066 = vunpack.c.l.b16 %v892
  %v5067 = vunpack.c.h.b16 %v892
  %v5068 = vunpack.c.l.b16 %v893
  %v5069 = vunpack.c.h.b16 %v893
  %v5070 = vunpack.c.l.b16 %v894
  %v5071 = vunpack.c.h.b16 %v894
  %v5072 = vunpack.c.l.b16 %v895
  %v5073 = vunpack.c.h.b16 %v895
  %v5074 = vunpack.c.l.b16 %v896
  %v5075 = vunpack.c.h.b16 %v896
  %v5076 = vunpack.c.l.b16 %v897
  %v5077 = vunpack.c.h.b16 %v897
  %v5078 = vunpack.c.l.b16 %v898
  %v5079 = vunpack.c.h.b16 %v898
  %v5080 = vunpack.c.l.b16 %v899
  %v5081 = vunpack.c.h.b16 %v899
  %v5082 = vunpack.c.l.b16 %v900
  %v5083 = vunpack.c.h.b16 %v900
  %v5084 = vunpack.c.l.b16 %v901
  %v5085 = vunpack.c.h.b16 %v901
  %v5086 = vunpack.c.l.b16 %v902
  %v5087 = vunpack.c.h.b16 %v902
  %v5088 = vunpack.c.l.b16 %v903
  %v5089 = vunpack.c.h.b16 %v903
  %v5090 = vunpack.c.l.b16 %v904
  %v5091 = vunpack.c.h.b16 %v904
  %v5092 = vunpack.c.l.b16 %v905
  %v5093 = vunpack.c.h.b16 %v905
  %v5094 = vunpack.c.l.b16 %v906
  %v5095 = vunpack.c.h.b16 %v906
  %v5096 = vunpack.c.l.b16 %v907
  %v5097 = vunpack.c.h.b16 %v907
  %v5098 = vunpack.c.l.b16 %v908
  %v5099 = vunpack.c.h.b16 %v908
  %v5100 = vunpack.c.l.b16 %v909
  %v5101 = vunpack.c.h.b16 %v909
  %v5102 = vunpack.c.l.b16 %v910
  %v5103 = vunpack.c.h.b16 %v910
  %v5104 = vunpack.c.l.b16 %v911
  %v5105 = vunpack.c.h.b16 %v911
  %v5106 = vunpack.c.l.b16 %v912
  %v5107 = vunpack.c.h.b16 %v912
  %v5108 = vunpack.c.l.b16 %v913
  %v5109 = vunpack.c.h.b16 %v913
  %v5110 = vunpack.c.l.b16 %v914
  %v5111 = vunpack.c.h.b16 %v914
  %v5112 = vunpack.c.l.b16 %v915
  %v5113 = vunpack.c.h.b16 %v915
  %v5114 = vunpack.c.l.b16 %v916
  %v5115 = vunpack.c.h.b16 %v916
  %v5116 = vunpack.c.l.b16 %v917
  %v5117 = vunpack.c.h.b16 %v917
  %v5118 = vunpack.c.l.b16 %v918
  %v5119 = vunpack.c.h.b16 %v918
  %v5120 = vunpack.c.l.b16 %v919
  %v5121 = vunpack.c.h.b16 %v919
  %v5122 = vunpack.c.l.b16 %v920
  %v5123 = vunpack.c.h.b16 %v920
  %v5124 = vunpack.c.l.b16 %v921
  %v5125 = vunpack.c.h.b16 %v921
  %v5126 = vunpack.c.l.b16 %v922
  %v5127 = vunpack.c.h.b16 %v922
  %v5128 = vunpack.c.l.b16 %v923
  %v5129 = vunpack.c.h.b16 %v923
  %v5130 = vunpack.c.l.b16 %v924
  %v5131 = vunpack.c.h.b16 %v924
  %v5132 = vunpack.c.l.b16 %v925
  %v5133 = vunpack.c.h.b16 %v925
  %v5134 = vunpack.c.l.b16 %v926
  %v5135 = vunpack.c.h.b16 %v926
  %v5136 = vunpack.c.l.b16 %v927
  %v5137 = vunpack.c.h.b16 %v927
  %v5138 = vunpack.c.l.b16 %v928
  %v5139 = vunpack.c.h.b16 %v928
  %v5140 = vunpack.c.l.b16 %v929
  %v5141 = vunpack.c.h.b16 %v929
  %v5142 = vunpack.c.l.b16 %v930
  %v5143 = vunpack.c.h.b16 %v930
  %v5144 = vunpack.c.l.b16 %v931
  %v5145 = vunpack.c.h.b16 %v931
  %v5146 = vunpack.c.l.b16 %v932
  %v5147 = vunpack.c.h.b16 %v932
  %v5148 = vunpack.c.l.b16 %v933
  %v5149 = vunpack.c.h.b16 %v933
  %v5150 = vunpack.c.l.b16 %v934
  %v5151 = vunpack.c.h.b16 %v934
  %v5152 = vunpack.c.l.b16 %v935
  %v5153 = vunpack.c.h.b16 %v935
  %v5154 = vunpack.c.l.b16 %v936
  %v5155 = vunpack.c.h.b16 %v936
  %v5156 = vunpack.c.l.b16 %v937
  %v5157 = vunpack.c.h.b16 %v937
  %v5158 = vunpack.c.l.b16 %v938
  %v5159 = vunpack.c.h.b16 %v938
  %v5160 = vunpack.c.l.b16 %v939
  %v5161 = vunpack.c.h.b16 %v939
  %v5162 = vunpack.c.l.b16 %v940
  %v5163 = vunpack.c.h.b16 %v940
  %v5164 = vunpack.c.l.b16 %v941
  %v5165 = vunpack.c.h.b16 %v941
  %v5166 = vunpack.c.l.b16 %v942
  %v5167 = vunpack.c.h.b16 %v942
  %v5168 = vunpack.c.l.b16 %v943
  %v5169 = vunpack.c.h.b16 %v943
  %v5170 = vunpack.c.l.b16 %v944
  %v5171 = vunpack.c.h.b16 %v944
  %v5172 = vunpack.c.l.b16 %v945
  %v5173 = vunpack.c.h.b16 %v945
  %v5174 = vunpack.c.l.b16 %v946
  %v5175 = vunpack.c.h.b16 %v946
  %v5176 = vunpack.c.l.b16 %v947
  %v5177 = vunpack.c.h.b16 %v947
  %v5178 = vunpack.c.l.b16 %v948
  %v5179 = vunpack.c.h.b16 %v948
  %v5180 = vunpack.c.l.b16 %v949
  %v5181 = vunpack.c.h.b16 %v949
  %v5182 = vunpack.c.l.b16 %v950
  %v5183 = vunpack.c.h.b16 %v950
  %v5184 = vunpack.c.l.b16 %v951
  %v5185 = vunpack.c.h.b16 %v951
  %v5186 = vunpack.c.l.b16 %v952
  %v5187 = vunpack.c.h.b16 %v952
  %v5188 = vunpack.c.l.b16 %v953
  %v5189 = vunpack.c.h.b16 %v953
  %v5190 = vunpack.c.l.b16 %v954
  %v5191 = vunpack.c.h.b16 %v954
  %v5192 = vunpack.c.l.b16 %v955
  %v5193 = vunpack.c.h.b16 %v955
  %v5194 = vunpack.c.l.b16 %v956
  %v5195 = vunpack.c.h.b16 %v956
  %v5196 = vunpack.c.l.b16 %v957
  %v5197 = vunpack.c.h.b16 %v957
  %v5198 = vunpack.c.l.b16 %v958
  %v5199 = vunpack.c.h.b16 %v958
  %v5200 = vunpack.c.l.b16 %v959
  %v5201 = vunpack.c.h.b16 %v959
  %v5202 = vunpack.c.l.b16 %v960
  %v5203 = vunpack.c.h.b16 %v960
  %v5204 = vunpack.c.l.b16 %v961
  %v5205 = vunpack.c.h.b16 %v961
  %v5206 = vunpack.c.l.b16 %v962
  %v5207 = vunpack.c.h.b16 %v962
  %v5208 = vunpack.c.l.b16 %v963
  %v5209 = vunpack.c.h.b16 %v963
  %v5210 = vunpack.c.l.b16 %v964
  %v5211 = vunpack.c.h.b16 %v964
  %v5212 = vunpack.c.l.b16 %v965
  %v5213 = vunpack.c.h.b16 %v965
  %v5214 = vunpack.c.l.b16 %v966
  %v5215 = vunpack.c.h.b16 %v966
  %v5216 = vunpack.c.l.b16 %v967
  %v5217 = vunpack.c.h.b16 %v967
  %v5218 = vunpack.c.l.b16 %v968
  %v5219 = vunpack.c.h.b16 %v968
  %v5220 = vunpack.c.l.b16 %v969
  %v5221 = vunpack.c.h.b16 %v969
  %v5222 = vunpack.c.l.b16 %v970
  %v5223 = vunpack.c.h.b16 %v970
  %v5224 = vunpack.c.l.b16 %v971
  %v5225 = vunpack.c.h.b16 %v971
  %v5226 = vunpack.c.l.b16 %v972
  %v5227 = vunpack.c.h.b16 %v972
  %v5228 = vunpack.c.l.b16 %v973
  %v5229 = vunpack.c.h.b16 %v973
  %v5230 = vunpack.c.l.b16 %v974
  %v5231 = vunpack.c.h.b16 %v974
  %v5232 = vunpack.c.l.b16 %v975
  %v5233 = vunpack.c.h.b16 %v975
  %v5234 = vunpack.c.l.b16 %v976
  %v5235 = vunpack.c.h.b16 %v976
  %v5236 = vunpack.c.l.b16 %v977
  %v5237 = vunpack.c.h.b16 %v977
  %v5238 = vunpack.c.l.b16 %v978
  %v5239 = vunpack.c.h.b16 %v978
  %v5240 = vunpack.c.l.b16 %v979
  %v5241 = vunpack.c.h.b16 %v979
  %v5242 = vunpack.c.l.b16 %v980
  %v5243 = vunpack.c.h.b16 %v980
  %v5244 = vunpack.c.l.b16 %v981
  %v5245 = vunpack.c.h.b16 %v981
  %v5246 = vunpack.c.l.b16 %v982
  %v5247 = vunpack.c.h.b16 %v982
  %v5248 = vunpack.c.l.b16 %v983
  %v5249 = vunpack.c.h.b16 %v983
  %v5250 = vunpack.c.l.b16 %v984
  %v5251 = vunpack.c.h.b16 %v984
  %v5252 = vunpack.c.l.b16 %v985
  %v5253 = vunpack.c.h.b16 %v985
  %v5254 = vunpack.c.l.b16 %v986
  %v5255 = vunpack.c.h.b16 %v986
  %v5256 = vunpack.c.l.b16 %v987
  %v5257 = vunpack.c.h.b16 %v987
  %v5258 = vunpack.c.l.b16 %v988
  %v5259 = vunpack.c.h.b16 %v988
  %v5260 = vunpack.c.l.b16 %v989
  %v5261 = vunpack.c.h.b16 %v989
  %v5262 = vunpack.c.l.b16 %v990
  %v5263 = vunpack.c.h.b16 %v990
  %v5264 = vunpack.c.l.b16 %v991
  %v5265 = vunpack.c.h.b16 %v991
  %v5266 = vunpack.c.l.b16 %v992
  %v5267 = vunpack.c.h.b16 %v992
  %v5268 = vunpack.c.l.b16 %v993
  %v5269 = vunpack.c.h.b16 %v993
  %v5270 = vunpack.c.l.b16 %v994
  %v5271 = vunpack.c.h.b16 %v994
  %v5272 = vunpack.c.l.b16 %v995
  %v5273 = vunpack.c.h.b16 %v995
  %v5274 = vunpack.c.l.b16 %v996
  %v5275 = vunpack.c.h.b16 %v996
  %v5276 = vunpack.c.l.b16 %v997
  %v5277 = vunpack.c.h.b16 %v997
  %v5278 = vunpack.c.l.b16 %v998
  %v5279 = vunpack.c.h.b16 %v998
  %v5280 = vunpack.c.l.b16 %v999
  %v5281 = vunpack.c.h.b16 %v999
  %v5282 = vunpack.c.l.b16 %v1000
  %v5283 = vunpack.c.h.b16 %v1000
  %v5284 = vunpack.c.l.b16 %v1001
  %v5285 = vunpack.c.h.b16 %v1001
  %v5286 = vunpack.c.l.b16 %v1002
  %v5287 = vunpack.c.h.b16 %v1002
  %v5288 = vunpack.c.l.b16 %v1003
  %v5289 = vunpack.c.h.b16 %v1003
  %v5290 = vunpack.c.l.b16 %v1004
  %v5291 = vunpack.c.h.b16 %v1004
  %v5292 = vunpack.c.l.b16 %v1005
  %v5293 = vunpack.c.h.b16 %v1005
  %v5294 = vunpack.c.l.b16 %v1006
  %v5295 = vunpack.c.h.b16 %v1006
  %v5296 = vunpack.c.l.b16 %v1007
  %v5297 = vunpack.c.h.b16 %v1007
  %v5298 = vunpack.c.l.b16 %v1008
  %v5299 = vunpack.c.h.b16 %v1008
  %v5300 = vunpack.c.l.b16 %v1009
  %v5301 = vunpack.c.h.b16 %v1009
  %v5302 = vunpack.c.l.b16 %v1010
  %v5303 = vunpack.c.h.b16 %v1010
  %v5304 = vunpack.c.l.b16 %v1011
  %v5305 = vunpack.c.h.b16 %v1011
  %v5306 = vunpack.c.l.b16 %v1012
  %v5307 = vunpack.c.h.b16 %v1012
  %v5308 = vunpack.c.l.b16 %v1013
  %v5309 = vunpack.c.h.b16 %v1013
  %v5310 = vunpack.c.l.b16 %v1014
  %v5311 = vunpack.c.h.b16 %v1014
  %v5312 = vunpack.c.l.b16 %v1015
  %v5313 = vunpack.c.h.b16 %v1015
  %v5314 = vunpack.c.l.b16 %v1016
  %v5315 = vunpack.c.h.b16 %v1016
  %v5316 = vunpack.c.l.b16 %v1017
  %v5317 = vunpack.c.h.b16 %v1017
  %v5318 = vunpack.c.l.b16 %v1018
  %v5319 = vunpack.c.h.b16 %v1018
  %v5320 = vunpack.c.l.b16 %v1019
  %v5321 = vunpack.c.h.b16 %v1019
  %v5322 = vunpack.c.l.b16 %v1020
  %v5323 = vunpack.c.h.b16 %v1020
  %v5324 = vunpack.c.l.b16 %v1021
  %v5325 = vunpack.c.h.b16 %v1021
  %v5326 = vunpack.c.l.b16 %v1022
  %v5327 = vunpack.c.h.b16 %v1022
  %v5328 = vunpack.c.l.b16 %v1023
  %v5329 = vunpack.c.h.b16 %v1023
  %v5330 = vunpack.c.l.b16 %v1024
  %v5331 = vunpack.c.h.b16 %v1024
  %v5332 = vunpack.c.l.b16 %v1025
  %v5333 = vunpack.c.h.b16 %v1025
  %v5334 = vunpack.c.l.b16 %v1026
  %v5335 = vunpack.c.h.b16 %v1026
  %v5336 = vunpack.c.l.b16 %v1027
  %v5337 = vunpack.c.h.b16 %v1027
  %v5338 = vunpack.c.l.b16 %v1028
  %v5339 = vunpack.c.h.b16 %v1028
  %v5340 = vunpack.c.l.b16 %v1029
  %v5341 = vunpack.c.h.b16 %v1029
  %v5342 = vunpack.c.l.b16 %v1030
  %v5343 = vunpack.c.h.b16 %v1030
  %v5344 = vunpack.c.l.b16 %v1031
  %v5345 = vunpack.c.h.b16 %v1031
  %v5346 = vunpack.c.l.b16 %v1032
  %v5347 = vunpack.c.h.b16 %v1032
  %v5348 = vunpack.c.l.b16 %v1033
  %v5349 = vunpack.c.h.b16 %v1033
  %v5350 = vunpack.c.l.b16 %v1034
  %v5351 = vunpack.c.h.b16 %v1034
  %v5352 = vunpack.c.l.b16 %v1035
  %v5353 = vunpack.c.h.b16 %v1035
  %v5354 = vunpack.c.l.b16 %v1036
  %v5355 = vunpack.c.h.b16 %v1036
  %v5356 = vunpack.c.l.b16 %v1037
  %v5357 = vunpack.c.h.b16 %v1037
  %v5358 = vunpack.c.l.b16 %v1038
  %v5359 = vunpack.c.h.b16 %v1038
  %v5360 = vunpack.c.l.b16 %v1039
  %v5361 = vunpack.c.h.b16 %v1039
  %v5362 = vunpack.c.l.b16 %v1040
  %v5363 = vunpack.c.h.b16 %v1040
  %v5364 = vunpack.c.l.b16 %v1041
  %v5365 = vunpack.c.h.b16 %v1041
  %v5366 = vunpack.c.l.b16 %v1042
  %v5367 = vunpack.c.h.b16 %v1042
  %v5368 = vunpack.c.l.b16 %v1043
  %v5369 = vunpack.c.h.b16 %v1043
  %v5370 = vunpack.c.l.b16 %v1044
  %v5371 = vunpack.c.h.b16 %v1044
  %v5372 = vunpack.c.l.b16 %v1045
  %v5373 = vunpack.c.h.b16 %v1045
  %v5374 = vunpack.c.l.b16 %v1046
  %v5375 = vunpack.c.h.b16 %v1046
  %v5376 = vunpack.c.l.b16 %v1047
  %v5377 = vunpack.c.h.b16 %v1047
  %v5378 = vunpack.c.l.b16 %v1048
  %v5379 = vunpack.c.h.b16 %v1048
  %v5380 = vunpack.c.l.b16 %v1049
  %v5381 = vunpack.c.h.b16 %v1049
  %v5382 = vunpack.c.l.b16 %v1050
  %v5383 = vunpack.c.h.b16 %v1050
  %v5384 = vunpack.c.l.b16 %v1051
  %v5385 = vunpack.c.h.b16 %v1051
  %v5386 = vunpack.c.l.b16 %v1052
  %v5387 = vunpack.c.h.b16 %v1052
  %v5388 = vunpack.c.l.b16 %v1053
  %v5389 = vunpack.c.h.b16 %v1053
  %v5390 = vunpack.c.l.b16 %v1054
  %v5391 = vunpack.c.h.b16 %v1054
  %v5392 = vunpack.c.l.b16 %v1055
  %v5393 = vunpack.c.h.b16 %v1055
  %v5394 = vunpack.c.l.b16 %v1056
  %v5395 = vunpack.c.h.b16 %v1056
  %v5396 = vunpack.c.l.b16 %v1057
  %v5397 = vunpack.c.h.b16 %v1057
  %v5398 = vunpack.c.l.b16 %v1058
  %v5399 = vunpack.c.h.b16 %v1058
  %v5400 = vunpack.c.l.b16 %v1059
  %v5401 = vunpack.c.h.b16 %v1059
  %v5402 = vunpack.c.l.b16 %v1060
  %v5403 = vunpack.c.h.b16 %v1060
  %v5404 = vunpack.c.l.b16 %v1061
  %v5405 = vunpack.c.h.b16 %v1061
  %v5406 = vunpack.c.l.b16 %v1062
  %v5407 = vunpack.c.h.b16 %v1062
  %v5408 = vunpack.c.l.b16 %v1063
  %v5409 = vunpack.c.h.b16 %v1063
  %v5410 = vunpack.c.l.b16 %v1064
  %v5411 = vunpack.c.h.b16 %v1064
  %v5412 = vunpack.c.l.b16 %v1065
  %v5413 = vunpack.c.h.b16 %v1065
  %v5414 = vunpack.c.l.b16 %v1066
  %v5415 = vunpack.c.h.b16 %v1066
  %v5416 = vunpack.c.l.b16 %v1067
  %v5417 = vunpack.c.h.b16 %v1067
  %v5418 = vunpack.c.l.b16 %v1068
  %v5419 = vunpack.c.h.b16 %v1068
  %v5420 = vunpack.c.l.b16 %v1069
  %v5421 = vunpack.c.h.b16 %v1069
  %v5422 = vunpack.c.l.b16 %v1070
  %v5423 = vunpack.c.h.b16 %v1070
  %v5424 = vunpack.c.l.b16 %v1071
  %v5425 = vunpack.c.h.b16 %v1071
  %v5426 = vunpack.c.l.b16 %v1072
  %v5427 = vunpack.c.h.b16 %v1072
  %v5428 = vunpack.c.l.b16 %v1073
  %v5429 = vunpack.c.h.b16 %v1073
  %v5430 = vunpack.c.l.b16 %v1074
  %v5431 = vunpack.c.h.b16 %v1074
  %v5432 = vunpack.c.l.b16 %v1075
  %v5433 = vunpack.c.h.b16 %v1075
  %v5434 = vunpack.c.l.b16 %v1076
  %v5435 = vunpack.c.h.b16 %v1076
  %v5436 = vunpack.c.l.b16 %v1077
  %v5437 = vunpack.c.h.b16 %v1077
  %v5438 = vunpack.c.l.b16 %v1078
  %v5439 = vunpack.c.h.b16 %v1078
  %v5440 = vunpack.c.l.b16 %v1079
  %v5441 = vunpack.c.h.b16 %v1079
  %v5442 = vunpack.c.l.b16 %v1080
  %v5443 = vunpack.c.h.b16 %v1080
  %v5444 = vunpack.c.l.b16 %v1081
  %v5445 = vunpack.c.h.b16 %v1081
  %v5446 = vunpack.c.l.b16 %v1082
  %v5447 = vunpack.c.h.b16 %v1082
  %v5448 = vunpack.c.l.b16 %v1083
  %v5449 = vunpack.c.h.b16 %v1083
  %v5450 = vunpack.c.l.b16 %v1084
  %v5451 = vunpack.c.h.b16 %v1084
  %v5452 = vunpack.c.l.b16 %v1085
  %v5453 = vunpack.c.h.b16 %v1085
  %v5454 = vunpack.c.l.b16 %v1086
  %v5455 = vunpack.c.h.b16 %v1086
  %v5456 = vunpack.c.l.b16 %v1087
  %v5457 = vunpack.c.h.b16 %v1087
  %v5458 = vunpack.c.l.b16 %v1088
  %v5459 = vunpack.c.h.b16 %v1088
  %v5460 = vunpack.c.l.b16 %v1089
  %v5461 = vunpack.c.h.b16 %v1089
  %v5462 = vunpack.c.l.b16 %v1090
  %v5463 = vunpack.c.h.b16 %v1090
  %v5464 = vunpack.c.l.b16 %v1091
  %v5465 = vunpack.c.h.b16 %v1091
  %v5466 = vunpack.c.l.b16 %v1092
  %v5467 = vunpack.c.h.b16 %v1092
  %v5468 = vunpack.c.l.b16 %v1093
  %v5469 = vunpack.c.h.b16 %v1093
  %v5470 = vunpack.c.l.b16 %v1094
  %v5471 = vunpack.c.h.b16 %v1094
  %v5472 = vunpack.c.l.b16 %v1095
  %v5473 = vunpack.c.h.b16 %v1095
  %v5474 = vunpack.c.l.b16 %v1096
  %v5475 = vunpack.c.h.b16 %v1096
  %v5476 = vunpack.c.l.b16 %v1097
  %v5477 = vunpack.c.h.b16 %v1097
  %v5478 = vunpack.c.l.b16 %v1098
  %v5479 = vunpack.c.h.b16 %v1098
  %v5480 = vunpack.c.l.b16 %v1099
  %v5481 = vunpack.c.h.b16 %v1099
  %v5482 = vunpack.c.l.b16 %v1100
  %v5483 = vunpack.c.h.b16 %v1100
  %v5484 = vunpack.c.l.b16 %v1101
  %v5485 = vunpack.c.h.b16 %v1101
  %v5486 = vunpack.c.l.b16 %v1102
  %v5487 = vunpack.c.h.b16 %v1102
  %v5488 = vunpack.c.l.b16 %v1103
  %v5489 = vunpack.c.h.b16 %v1103
  %v5490 = vunpack.c.l.b16 %v1104
  %v5491 = vunpack.c.h.b16 %v1104
  %v5492 = vunpack.c.l.b16 %v1105
  %v5493 = vunpack.c.h.b16 %v1105
  %v5494 = vunpack.c.l.b16 %v1106
  %v5495 = vunpack.c.h.b16 %v1106
  %v5496 = vunpack.c.l.b16 %v1107
  %v5497 = vunpack.c.h.b16 %v1107
  %v5498 = vunpack.c.l.b16 %v1108
  %v5499 = vunpack.c.h.b16 %v1108
  %v5500 = vunpack.c.l.b16 %v1109
  %v5501 = vunpack.c.h.b16 %v1109
  %v5502 = vunpack.c.l.b16 %v1110
  %v5503 = vunpack.c.h.b16 %v1110
  %v5504 = vunpack.c.l.b16 %v1111
  %v5505 = vunpack.c.h.b16 %v1111
  %v5506 = vunpack.c.l.b16 %v1112
  %v5507 = vunpack.c.h.b16 %v1112
  %v5508 = vunpack.c.l.b16 %v1113
  %v5509 = vunpack.c.h.b16 %v1113
  %v5510 = vunpack.c.l.b16 %v1114
  %v5511 = vunpack.c.h.b16 %v1114
  %v5512 = vunpack.c.l.b16 %v1115
  %v5513 = vunpack.c.h.b16 %v1115
  %v5514 = vunpack.c.l.b16 %v1116
  %v5515 = vunpack.c.h.b16 %v1116
  %v5516 = vunpack.c.l.b16 %v1117
  %v5517 = vunpack.c.h.b16 %v1117
  %v5518 = vunpack.c.l.b16 %v1118
  %v5519 = vunpack.c.h.b16 %v1118
  %v5520 = vunpack.c.l.b16 %v1119
  %v5521 = vunpack.c.h.b16 %v1119
  %v5522 = vunpack.c.l.b16 %v1120
  %v5523 = vunpack.c.h.b16 %v1120
  %v5524 = vunpack.c.l.b16 %v1121
  %v5525 = vunpack.c.h.b16 %v1121
  %v5526 = vunpack.c.l.b16 %v1122
  %v5527 = vunpack.c.h.b16 %v1122
  %v5528 = vunpack.c.l.b16 %v1123
  %v5529 = vunpack.c.h.b16 %v1123
  %v5530 = vunpack.c.l.b16 %v1124
  %v5531 = vunpack.c.h.b16 %v1124
  %v5532 = vunpack.c.l.b16 %v1125
  %v5533 = vunpack.c.h.b16 %v1125
  %v5534 = vunpack.c.l.b16 %v1126
  %v5535 = vunpack.c.h.b16 %v1126
  %v5536 = vunpack.c.l.b16 %v1127
  %v5537 = vunpack.c.h.b16 %v1127
  %v5538 = vunpack.c.l.b16 %v1128
  %v5539 = vunpack.c.h.b16 %v1128
  %v5540 = vunpack.c.l.b16 %v1129
  %v5541 = vunpack.c.h.b16 %v1129
  %v5542 = vunpack.c.l.b16 %v1130
  %v5543 = vunpack.c.h.b16 %v1130
  %v5544 = vunpack.c.l.b16 %v1131
  %v5545 = vunpack.c.h.b16 %v1131
  %v5546 = vunpack.c.l.b16 %v1132
  %v5547 = vunpack.c.h.b16 %v1132
  %v5548 = vunpack.c.l.b16 %v1133
  %v5549 = vunpack.c.h.b16 %v1133
  %v5550 = vunpack.c.l.b16 %v1134
  %v5551 = vunpack.c.h.b16 %v1134
  %v5552 = vunpack.c.l.b16 %v1135
  %v5553 = vunpack.c.h.b16 %v1135
  %v5554 = vunpack.c.l.b16 %v1136
  %v5555 = vunpack.c.h.b16 %v1136
  %v5556 = vunpack.c.l.b16 %v1137
  %v5557 = vunpack.c.h.b16 %v1137
  %v5558 = vunpack.c.l.b16 %v1138
  %v5559 = vunpack.c.h.b16 %v1138
  %v5560 = vunpack.c.l.b16 %v1139
  %v5561 = vunpack.c.h.b16 %v1139
  %v5562 = vunpack.c.l.b16 %v1140
  %v5563 = vunpack.c.h.b16 %v1140
  %v5564 = vunpack.c.l.b16 %v1141
  %v5565 = vunpack.c.h.b16 %v1141
  %v5566 = vunpack.c.l.b16 %v1142
  %v5567 = vunpack.c.h.b16 %v1142
  %v5568 = vunpack.c.l.b16 %v1143
  %v5569 = vunpack.c.h.b16 %v1143
  %v5570 = vunpack.c.l.b16 %v1144
  %v5571 = vunpack.c.h.b16 %v1144
  %v5572 = vunpack.c.l.b16 %v1145
  %v5573 = vunpack.c.h.b16 %v1145
  %v5574 = vunpack.c.l.b16 %v1146
  %v5575 = vunpack.c.h.b16 %v1146
  %v5576 = vunpack.c.l.b16 %v1147
  %v5577 = vunpack.c.h.b16 %v1147
  %v5578 = vunpack.c.l.b16 %v1148
  %v5579 = vunpack.c.h.b16 %v1148
  %v5580 = vunpack.c.l.b16 %v1149
  %v5581 = vunpack.c.h.b16 %v1149
  %v5582 = vunpack.c.l.b16 %v1150
  %v5583 = vunpack.c.h.b16 %v1150
  %v5584 = vunpack.c.l.b16 %v1151
  %v5585 = vunpack.c.h.b16 %v1151
  %v5586 = vunpack.c.l.b16 %v1152
  %v5587 = vunpack.c.h.b16 %v1152
  %v5588 = vunpack.c.l.b16 %v1153
  %v5589 = vunpack.c.h.b16 %v1153
  %v5590 = vunpack.c.l.b16 %v1154
  %v5591 = vunpack.c.h.b16 %v1154
  %v5592 = vunpack.c.l.b16 %v1155
  %v5593 = vunpack.c.h.b16 %v1155
  %v5594 = vunpack.c.l.b16 %v1156
  %v5595 = vunpack.c.h.b16 %v1156
  %v5596 = vunpack.c.l.b16 %v1157
  %v5597 = vunpack.c.h.b16 %v1157
  %v5598 = vunpack.c.l.b16 %v1158
  %v5599 = vunpack.c.h.b16 %v1158
  %v5600 = vunpack.c.l.b16 %v1159
  %v5601 = vunpack.c.h.b16 %v1159
  %v5602 = vunpack.c.l.b16 %v1160
  %v5603 = vunpack.c.h.b16 %v1160
  %v5604 = vunpack.c.l.b16 %v1161
  %v5605 = vunpack.c.h.b16 %v1161
  %v5606 = vunpack.c.l.b16 %v1162
  %v5607 = vunpack.c.h.b16 %v1162
  %v5608 = vunpack.c.l.b16 %v1163
  %v5609 = vunpack.c.h.b16 %v1163
  %v5610 = vunpack.c.l.b16 %v1164
  %v5611 = vunpack.c.h.b16 %v1164
  %v5612 = vunpack.c.l.b16 %v1165
  %v5613 = vunpack.c.h.b16 %v1165
  %v5614 = vunpack.c.l.b16 %v1166
  %v5615 = vunpack.c.h.b16 %v1166
  %v5616 = vunpack.c.l.b16 %v1167
  %v5617 = vunpack.c.h.b16 %v1167
  %v5618 = vunpack.c.l.b16 %v1168
  %v5619 = vunpack.c.h.b16 %v1168
  %v5620 = vunpack.c.l.b16 %v1169
  %v5621 = vunpack.c.h.b16 %v1169
  %v5622 = vunpack.c.l.b16 %v1170
  %v5623 = vunpack.c.h.b16 %v1170
  %v5624 = vunpack.c.l.b16 %v1171
  %v5625 = vunpack.c.h.b16 %v1171
  %v5626 = vunpack.c.l.b16 %v1172
  %v5627 = vunpack.c.h.b16 %v1172
  %v5628 = vunpack.c.l.b16 %v1173
  %v5629 = vunpack.c.h.b16 %v1173
  %v5630 = vunpack.c.l.b16 %v1174
  %v5631 = vunpack.c.h.b16 %v1174
  %v5632 = vunpack.c.l.b16 %v1175
  %v5633 = vunpack.c.h.b16 %v1175
  %v5634 = vunpack.c.l.b16 %v1176
  %v5635 = vunpack.c.h.b16 %v1176
  %v5636 = vunpack.c.l.b16 %v1177
  %v5637 = vunpack.c.h.b16 %v1177
  %v5638 = vunpack.c.l.b16 %v1178
  %v5639 = vunpack.c.h.b16 %v1178
  %v5640 = vunpack.c.l.b16 %v1179
  %v5641 = vunpack.c.h.b16 %v1179
  %v5642 = vunpack.c.l.b16 %v1180
  %v5643 = vunpack.c.h.b16 %v1180
  %v5644 = vunpack.c.l.b16 %v1181
  %v5645 = vunpack.c.h.b16 %v1181
  %v5646 = vunpack.c.l.b16 %v1182
  %v5647 = vunpack.c.h.b16 %v1182
  %v5648 = vunpack.c.l.b16 %v1183
  %v5649 = vunpack.c.h.b16 %v1183
  %v5650 = vunpack.c.l.b16 %v1184
  %v5651 = vunpack.c.h.b16 %v1184
  %v5652 = vunpack.c.l.b16 %v1185
  %v5653 = vunpack.c.h.b16 %v1185
  %v5654 = vunpack.c.l.b16 %v1186
  %v5655 = vunpack.c.h.b16 %v1186
  %v5656 = vunpack.c.l.b16 %v1187
  %v5657 = vunpack.c.h.b16 %v1187
  %v5658 = vunpack.c.l.b16 %v1188
  %v5659 = vunpack.c.h.b16 %v1188
  %v5660 = vunpack.c.l.b16 %v1189
  %v5661 = vunpack.c.h.b16 %v1189
  %v5662 = vunpack.c.l.b16 %v1190
  %v5663 = vunpack.c.h.b16 %v1190
  %v5664 = vunpack.c.l.b16 %v1191
  %v5665 = vunpack.c.h.b16 %v1191
  %v5666 = vunpack.c.l.b16 %v1192
  %v5667 = vunpack.c.h.b16 %v1192
  %v5668 = vunpack.c.l.b16 %v1193
  %v5669 = vunpack.c.h.b16 %v1193
  %v5670 = vunpack.c.l.b16 %v1194
  %v5671 = vunpack.c.h.b16 %v1194
  %v5672 = vunpack.c.l.b16 %v1195
  %v5673 = vunpack.c.h.b16 %v1195
  %v5674 = vunpack.c.l.b16 %v1196
  %v5675 = vunpack.c.h.b16 %v1196
  %v5676 = vunpack.c.l.b16 %v1197
  %v5677 = vunpack.c.h.b16 %v1197
  %v5678 = vunpack.c.l.b16 %v1198
  %v5679 = vunpack.c.h.b16 %v1198
  %v5680 = vunpack.c.l.b16 %v1199
  %v5681 = vunpack.c.h.b16 %v1199
  %v5682 = vunpack.c.l.b16 %v1200
  %v5683 = vunpack.c.h.b16 %v1200
  %v5684 = vunpack.c.l.b16 %v1201
  %v5685 = vunpack.c.h.b16 %v1201
  %v5686 = vunpack.c.l.b16 %v1202
  %v5687 = vunpack.c.h.b16 %v1202
  %v5688 = vunpack.c.l.b16 %v1203
  %v5689 = vunpack.c.h.b16 %v1203
  %v5690 = vunpack.c.l.b16 %v1204
  %v5691 = vunpack.c.h.b16 %v1204
  %v5692 = vunpack.c.l.b16 %v1205
  %v5693 = vunpack.c.h.b16 %v1205
  %v5694 = vunpack.c.l.b16 %v1206
  %v5695 = vunpack.c.h.b16 %v1206
  %v5696 = vunpack.c.l.b16 %v1207
  %v5697 = vunpack.c.h.b16 %v1207
  %v5698 = vunpack.c.l.b16 %v1208
  %v5699 = vunpack.c.h.b16 %v1208
  %v5700 = vunpack.c.l.b16 %v1209
  %v5701 = vunpack.c.h.b16 %v1209
  %v5702 = vunpack.c.l.b16 %v1210
  %v5703 = vunpack.c.h.b16 %v1210
  %v5704 = vunpack.c.l.b16 %v1211
  %v5705 = vunpack.c.h.b16 %v1211
  %v5706 = vunpack.c.l.b16 %v1212
  %v5707 = vunpack.c.h.b16 %v1212
  %v5708 = vunpack.c.l.b16 %v1213
  %v5709 = vunpack.c.h.b16 %v1213
  %v5710 = vunpack.c.l.b16 %v1214
  %v5711 = vunpack.c.h.b16 %v1214
  %v5712 = vunpack.c.l.b16 %v1215
  %v5713 = vunpack.c.h.b16 %v1215
  %v5714 = vunpack.c.l.b16 %v1216
  %v5715 = vunpack.c.h.b16 %v1216
  %v5716 = vunpack.c.l.b16 %v1217
  %v5717 = vunpack.c.h.b16 %v1217
  %v5718 = vunpack.c.l.b16 %v1218
  %v5719 = vunpack.c.h.b16 %v1218
  %v5720 = vunpack.c.l.b16 %v1219
  %v5721 = vunpack.c.h.b16 %v1219
  %v5722 = vunpack.c.l.b16 %v1220
  %v5723 = vunpack.c.h.b16 %v1220
  %v5724 = vunpack.c.l.b16 %v1221
  %v5725 = vunpack.c.h.b16 %v1221
  %v5726 = vunpack.c.l.b16 %v1222
  %v5727 = vunpack.c.h.b16 %v1222
  %v5728 = vunpack.c.l.b16 %v1223
  %v5729 = vunpack.c.h.b16 %v1223
  %v5730 = vunpack.c.l.b16 %v1224
  %v5731 = vunpack.c.h.b16 %v1224
  %v5732 = vunpack.c.l.b16 %v1225
  %v5733 = vunpack.c.h.b16 %v1225
  %v5734 = vunpack.c.l.b16 %v1226
  %v5735 = vunpack.c.h.b16 %v1226
  %v5736 = vunpack.c.l.b16 %v1227
  %v5737 = vunpack.c.h.b16 %v1227
  %v5738 = vunpack.c.l.b16 %v1228
  %v5739 = vunpack.c.h.b16 %v1228
  %v5740 = vunpack.c.l.b16 %v1229
  %v5741 = vunpack.c.h.b16 %v1229
  %v5742 = vunpack.c.l.b16 %v1230
  %v5743 = vunpack.c.h.b16 %v1230
  %v5744 = vunpack.c.l.b16 %v1231
  %v5745 = vunpack.c.h.b16 %v1231
  %v5746 = vunpack.c.l.b16 %v1232
  %v5747 = vunpack.c.h.b16 %v1232
  %v5748 = vunpack.c.l.b16 %v1233
  %v5749 = vunpack.c.h.b16 %v1233
  %v5750 = vunpack.c.l.b16 %v1234
  %v5751 = vunpack.c.h.b16 %v1234
  %v5752 = vunpack.c.l.b16 %v1235
  %v5753 = vunpack.c.h.b16 %v1235
  %v5754 = vunpack.c.l.b16 %v1236
  %v5755 = vunpack.c.h.b16 %v1236
  %v5756 = vunpack.c.l.b16 %v1237
  %v5757 = vunpack.c.h.b16 %v1237
  %v5758 = vunpack.c.l.b16 %v1238
  %v5759 = vunpack.c.h.b16 %v1238
  %v5760 = vunpack.c.l.b16 %v1239
  %v5761 = vunpack.c.h.b16 %v1239
  %v5762 = vunpack.c.l.b16 %v1240
  %v5763 = vunpack.c.h.b16 %v1240
  %v5764 = vunpack.c.l.b16 %v1241
  %v5765 = vunpack.c.h.b16 %v1241
  %v5766 = vunpack.c.l.b16 %v1242
  %v5767 = vunpack.c.h.b16 %v1242
  %v5768 = vunpack.c.l.b16 %v1243
  %v5769 = vunpack.c.h.b16 %v1243
  %v5770 = vunpack.c.l.b16 %v1244
  %v5771 = vunpack.c.h.b16 %v1244
  %v5772 = vunpack.c.l.b16 %v1245
  %v5773 = vunpack.c.h.b16 %v1245
  %v5774 = vunpack.c.l.b16 %v1246
  %v5775 = vunpack.c.h.b16 %v1246
  %v5776 = vunpack.c.l.b16 %v1247
  %v5777 = vunpack.c.h.b16 %v1247
  %v5778 = vunpack.c.l.b16 %v1248
  %v5779 = vunpack.c.h.b16 %v1248
  %v5780 = vunpack.c.l.b16 %v1249
  %v5781 = vunpack.c.h.b16 %v1249
  %v5782 = vunpack.c.l.b16 %v1250
  %v5783 = vunpack.c.h.b16 %v1250
  %v5784 = vunpack.c.l.b16 %v1251
  %v5785 = vunpack.c.h.b16 %v1251
  %v5786 = vunpack.c.l.b16 %v1252
  %v5787 = vunpack.c.h.b16 %v1252
  %v5788 = vunpack.c.l.b16 %v1253
  %v5789 = vunpack.c.h.b16 %v1253
  %v5790 = vunpack.c.l.b16 %v1254
  %v5791 = vunpack.c.h.b16 %v1254
  %v5792 = vunpack.c.l.b16 %v1255
  %v5793 = vunpack.c.h.b16 %v1255
  %v5794 = vunpack.c.l.b16 %v1256
  %v5795 = vunpack.c.h.b16 %v1256
  %v5796 = vunpack.c.l.b16 %v1257
  %v5797 = vunpack.c.h.b16 %v1257
  %v5798 = vunpack.c.l.b16 %v1258
  %v5799 = vunpack.c.h.b16 %v1258
  %v5800 = vunpack.c.l.b16 %v1259
  %v5801 = vunpack.c.h.b16 %v1259
  %v5802 = vunpack.c.l.b16 %v1260
  %v5803 = vunpack.c.h.b16 %v1260
  %v5804 = vunpack.c.l.b16 %v1261
  %v5805 = vunpack.c.h.b16 %v1261
  %v5806 = vunpack.c.l.b16 %v1262
  %v5807 = vunpack.c.h.b16 %v1262
  %v5808 = vunpack.c.l.b16 %v1263
  %v5809 = vunpack.c.h.b16 %v1263
  %v5810 = vunpack.c.l.b16 %v1264
  %v5811 = vunpack.c.h.b16 %v1264
  %v5812 = vunpack.c.l.b16 %v1265
  %v5813 = vunpack.c.h.b16 %v1265
  %v5814 = vunpack.c.l.b16 %v1266
  %v5815 = vunpack.c.h.b16 %v1266
  %v5816 = vunpack.c.l.b16 %v1267
  %v5817 = vunpack.c.h.b16 %v1267
  %v5818 = vunpack.c.l.b16 %v1268
  %v5819 = vunpack.c.h.b16 %v1268
  %v5820 = vunpack.c.l.b16 %v1269
  %v5821 = vunpack.c.h.b16 %v1269
  %v5822 = vunpack.c.l.b16 %v1270
  %v5823 = vunpack.c.h.b16 %v1270
  %v5824 = vunpack.c.l.b16 %v1271
  %v5825 = vunpack.c.h.b16 %v1271
  %v5826 = vunpack.c.l.b16 %v1272
  %v5827 = vunpack.c.h.b16 %v1272
  %v5828 = vunpack.c.l.b16 %v1273
  %v5829 = vunpack.c.h.b16 %v1273
  %v5830 = vunpack.c.l.b16 %v1274
  %v5831 = vunpack.c.h.b16 %v1274
  %v5832 = vunpack.c.l.b16 %v1275
  %v5833 = vunpack.c.h.b16 %v1275
  %v5834 = vunpack.c.l.b16 %v1276
  %v5835 = vunpack.c.h.b16 %v1276
  %v5836 = vunpack.c.l.b16 %v1277
  %v5837 = vunpack.c.h.b16 %v1277
  %v5838 = vunpack.c.l.b16 %v1278
  %v5839 = vunpack.c.h.b16 %v1278
  %v5840 = vunpack.c.l.b16 %v1279
  %v5841 = vunpack.c.h.b16 %v1279
  %v5842 = vunpack.c.l.b16 %v1280
  %v5843 = vunpack.c.h.b16 %v1280
  %v5844 = vunpack.c.l.b16 %v1281
  %v5845 = vunpack.c.h.b16 %v1281
  %v5846 = vunpack.c.l.b16 %v1282
  %v5847 = vunpack.c.h.b16 %v1282
  %v5848 = vunpack.c.l.b16 %v1283
  %v5849 = vunpack.c.h.b16 %v1283
  %v5850 = vunpack.c.l.b16 %v1284
  %v5851 = vunpack.c.h.b16 %v1284
  %v5852 = vunpack.c.l.b16 %v1285
  %v5853 = vunpack.c.h.b16 %v1285
  %v5854 = vunpack.c.l.b16 %v1286
  %v5855 = vunpack.c.h.b16 %v1286
  %v5856 = vunpack.c.l.b16 %v1287
  %v5857 = vunpack.c.h.b16 %v1287
  %v5858 = vunpack.c.l.b16 %v1288
  %v5859 = vunpack.c.h.b16 %v1288
  %v5860 = vunpack.c.l.b16 %v1289
  %v5861 = vunpack.c.h.b16 %v1289
  %v5862 = vunpack.c.l.b16 %v1290
  %v5863 = vunpack.c.h.b16 %v1290
  %v5864 = vunpack.c.l.b16 %v1291
  %v5865 = vunpack.c.h.b16 %v1291
  %v5866 = vunpack.c.l.b16 %v1292
  %v5867 = vunpack.c.h.b16 %v1292
  %v5868 = vunpack.c.l.b16 %v1293
  %v5869 = vunpack.c.h.b16 %v1293
  %v5870 = vunpack.c.l.b16 %v1294
  %v5871 = vunpack.c.h.b16 %v1294
  %v5872 = vunpack.c.l.b16 %v1295
  %v5873 = vunpack.c.h.b16 %v1295
  %v5874 = vunpack.c.l.b16 %v1296
  %v5875 = vunpack.c.h.b16 %v1296
  %v5876 = vunpack.c.l.b16 %v1297
  %v5877 = vunpack.c.h.b16 %v1297
  %v5878 = vunpack.c.l.b16 %v1298
  %v5879 = vunpack.c.h.b16 %v1298
  %v5880 = vunpack.c.l.b16 %v1299
  %v5881 = vunpack.c.h.b16 %v1299
  %v5882 = vunpack.c.l.b16 %v1300
  %v5883 = vunpack.c.h.b16 %v1300
  %v5884 = vunpack.c.l.b16 %v1301
  %v5885 = vunpack.c.h.b16 %v1301
  %v5886 = vunpack.c.l.b16 %v1302
  %v5887 = vunpack.c.h.b16 %v1302
  %v5888 = vunpack.c.l.b16 %v1303
  %v5889 = vunpack.c.h.b16 %v1303
  %v5890 = vunpack.c.l.b16 %v1304
  %v5891 = vunpack.c.h.b16 %v1304
  %v5892 = vunpack.c.l.b16 %v1305
  %v5893 = vunpack.c.h.b16 %v1305
  %v5894 = vunpack.c.l.b16 %v1306
  %v5895 = vunpack.c.h.b16 %v1306
  %v5896 = vunpack.c.l.b16 %v1307
  %v5897 = vunpack.c.h.b16 %v1307
  %v5898 = vunpack.c.l.b16 %v1308
  %v5899 = vunpack.c.h.b16 %v1308
  %v5900 = vunpack.c.l.b16 %v1309
  %v5901 = vunpack.c.h.b16 %v1309
  %v5902 = vunpack.c.l.b16 %v1310
  %v5903 = vunpack.c.h.b16 %v1310
  %v5904 = vunpack.c.l.b16 %v1311
  %v5905 = vunpack.c.h.b16 %v1311
  %v5906 = vunpack.c.l.b16 %v1312
  %v5907 = vunpack.c.h.b16 %v1312
  %v5908 = vunpack.c.l.b16 %v1313
  %v5909 = vunpack.c.h.b16 %v1313
  %v5910 = vunpack.c.l.b16 %v1314
  %v5911 = vunpack.c.h.b16 %v1314
  %v5912 = vunpack.c.l.b16 %v1315
  %v5913 = vunpack.c.h.b16 %v1315
  %v5914 = vunpack.c.l.b16 %v1316
  %v5915 = vunpack.c.h.b16 %v1316
  %v5916 = vunpack.c.l.b16 %v1317
  %v5917 = vunpack.c.h.b16 %v1317
  %v5918 = vunpack.c.l.b16 %v1318
  %v5919 = vunpack.c.h.b16 %v1318
  %v5920 = vunpack.c.l.b16 %v1319
  %v5921 = vunpack.c.h.b16 %v1319
  %v5922 = vunpack.c.l.b16 %v1320
  %v5923 = vunpack.c.h.b16 %v1320
  %v5924 = vunpack.c.l.b16 %v1321
  %v5925 = vunpack.c.h.b16 %v1321
  %v5926 = vunpack.c.l.b16 %v1322
  %v5927 = vunpack.c.h.b16 %v1322
  %v5928 = vunpack.c.l.b16 %v1323
  %v5929 = vunpack.c.h.b16 %v1323
  %v5930 = vunpack.c.l.b16 %v1324
  %v5931 = vunpack.c.h.b16 %v1324
  %v5932 = vunpack.c.l.b16 %v1325
  %v5933 = vunpack.c.h.b16 %v1325
  %v5934 = vunpack.c.l.b16 %v1326
  %v5935 = vunpack.c.h.b16 %v1326
  %v5936 = vunpack.c.l.b16 %v1327
  %v5937 = vunpack.c.h.b16 %v1327
  %v5938 = vunpack.c.l.b16 %v1328
  %v5939 = vunpack.c.h.b16 %v1328
  %v5940 = vunpack.c.l.b16 %v1329
  %v5941 = vunpack.c.h.b16 %v1329
  %v5942 = vunpack.c.l.b16 %v1330
  %v5943 = vunpack.c.h.b16 %v1330
  %v5944 = vunpack.c.l.b16 %v1331
  %v5945 = vunpack.c.h.b16 %v1331
  %v5946 = vunpack.c.l.b16 %v1332
  %v5947 = vunpack.c.h.b16 %v1332
  %v5948 = vunpack.c.l.b16 %v1333
  %v5949 = vunpack.c.h.b16 %v1333
  %v5950 = vunpack.c.l.b16 %v1334
  %v5951 = vunpack.c.h.b16 %v1334
  %v5952 = vunpack.c.l.b16 %v1335
  %v5953 = vunpack.c.h.b16 %v1335
  %v5954 = vunpack.c.l.b16 %v1336
  %v5955 = vunpack.c.h.b16 %v1336
  %v5956 = vunpack.c.l.b16 %v1337
  %v5957 = vunpack.c.h.b16 %v1337
  %v5958 = vunpack.c.l.b16 %v1338
  %v5959 = vunpack.c.h.b16 %v1338
  %v5960 = vunpack.c.l.b16 %v1339
  %v5961 = vunpack.c.h.b16 %v1339
  %v5962 = vunpack.c.l.b16 %v1340
  %v5963 = vunpack.c.h.b16 %v1340
  %v5964 = vunpack.c.l.b16 %v1341
  %v5965 = vunpack.c.h.b16 %v1341
  %v5966 = vunpack.c.l.b16 %v1342
  %v5967 = vunpack.c.h.b16 %v1342
  %v5968 = vunpack.c.l.b16 %v1343
  %v5969 = vunpack.c.h.b16 %v1343
  %v5970 = vunpack.c.l.b16 %v1344
  %v5971 = vunpack.c.h.b16 %v1344
  %v5972 = vunpack.c.l.b16 %v1345
  %v5973 = vunpack.c.h.b16 %v1345
  %v5974 = vunpack.c.l.b16 %v1346
  %v5975 = vunpack.c.h.b16 %v1346
  %v5976 = vunpack.c.l.b16 %v1347
  %v5977 = vunpack.c.h.b16 %v1347
  %v5978 = vunpack.c.l.b16 %v1348
  %v5979 = vunpack.c.h.b16 %v1348
  %v5980 = vunpack.c.l.b16 %v1349
  %v5981 = vunpack.c.h.b16 %v1349
  %v5982 = vunpack.c.l.b16 %v1350
  %v5983 = vunpack.c.h.b16 %v1350
  %v5984 = vunpack.c.l.b16 %v1351
  %v5985 = vunpack.c.h.b16 %v1351
  %v5986 = vunpack.c.l.b16 %v1352
  %v5987 = vunpack.c.h.b16 %v1352
  %v5988 = vunpack.c.l.b16 %v1353
  %v5989 = vunpack.c.h.b16 %v1353
  %v5990 = vunpack.c.l.b16 %v1354
  %v5991 = vunpack.c.h.b16 %v1354
  %v5992 = vunpack.c.l.b16 %v1355
  %v5993 = vunpack.c.h.b16 %v1355
  %v5994 = vunpack.c.l.b16 %v1356
  %v5995 = vunpack.c.h.b16 %v1356
  %v5996 = vunpack.c.l.b16 %v1357
  %v5997 = vunpack.c.h.b16 %v1357
  %v5998 = vunpack.c.l.b16 %v1358
  %v5999 = vunpack.c.h.b16 %v1358
  %v6000 = vunpack.c.l.b16 %v1359
  %v6001 = vunpack.c.h.b16 %v1359
  %v6002 = vunpack.c.l.b16 %v1360
  %v6003 = vunpack.c.h.b16 %v1360
  %v6004 = vunpack.c.l.b16 %v1361
  %v6005 = vunpack.c.h.b16 %v1361
  %v6006 = vunpack.c.l.b16 %v1362
  %v6007 = vunpack.c.h.b16 %v1362
  %v6008 = vunpack.c.l.b16 %v1363
  %v6009 = vunpack.c.h.b16 %v1363
  %v6010 = vunpack.c.l.b16 %v1364
  %v6011 = vunpack.c.h.b16 %v1364
  %v6012 = vunpack.c.l.b16 %v1365
  %v6013 = vunpack.c.h.b16 %v1365
  %v6014 = vunpack.c.l.b16 %v1366
  %v6015 = vunpack.c.h.b16 %v1366
  %v6016 = vunpack.c.l.b16 %v1367
  %v6017 = vunpack.c.h.b16 %v1367
  %v6018 = vunpack.c.l.b16 %v1368
  %v6019 = vunpack.c.h.b16 %v1368
  %v6020 = vunpack.c.l.b16 %v1369
  %v6021 = vunpack.c.h.b16 %v1369
  %v6022 = vunpack.c.l.b16 %v1370
  %v6023 = vunpack.c.h.b16 %v1370
  %v6024 = vunpack.c.l.b16 %v1371
  %v6025 = vunpack.c.h.b16 %v1371
  %v6026 = vunpack.c.l.b16 %v1372
  %v6027 = vunpack.c.h.b16 %v1372
  %v6028 = vunpack.c.l.b16 %v1373
  %v6029 = vunpack.c.h.b16 %v1373
  %v6030 = vunpack.c.l.b16 %v1374
  %v6031 = vunpack.c.h.b16 %v1374
  %v6032 = vunpack.c.l.b16 %v1375
  %v6033 = vunpack.c.h.b16 %v1375
  %v6034 = vunpack.c.l.b16 %v1376
  %v6035 = vunpack.c.h.b16 %v1376
  %v6036 = vunpack.c.l.b16 %v1377
  %v6037 = vunpack.c.h.b16 %v1377
  %v6038 = vunpack.c.l.b16 %v1378
  %v6039 = vunpack.c.h.b16 %v1378
  %v6040 = vunpack.c.l.b16 %v1379
  %v6041 = vunpack.c.h.b16 %v1379
  %v6042 = vunpack.c.l.b16 %v1380
  %v6043 = vunpack.c.h.b16 %v1380
  %v6044 = vunpack.c.l.b16 %v1381
  %v6045 = vunpack.c.h.b16 %v1381
  %v6046 = vunpack.c.l.b16 %v1382
  %v6047 = vunpack.c.h.b16 %v1382
  %v6048 = vunpack.c.l.b16 %v1383
  %v6049 = vunpack.c.h.b16 %v1383
  %v6050 = vunpack.c.l.b16 %v1384
  %v6051 = vunpack.c.h.b16 %v1384
  %v6052 = vunpack.c.l.b16 %v1385
  %v6053 = vunpack.c.h.b16 %v1385
  %v6054 = vunpack.c.l.b16 %v1386
  %v6055 = vunpack.c.h.b16 %v1386
  %v6056 = vunpack.c.l.b16 %v1387
  %v6057 = vunpack.c.h.b16 %v1387
  %v6058 = vunpack.c.l.b16 %v1388
  %v6059 = vunpack.c.h.b16 %v1388
  %v6060 = vunpack.c.l.b16 %v1389
  %v6061 = vunpack.c.h.b16 %v1389
  %v6062 = vunpack.c.l.b16 %v1390
  %v6063 = vunpack.c.h.b16 %v1390
  %v6064 = vunpack.c.l.b16 %v1391
  %v6065 = vunpack.c.h.b16 %v1391
  %v6066 = vunpack.c.l.b16 %v1392
  %v6067 = vunpack.c.h.b16 %v1392
  %v6068 = vunpack.c.l.b16 %v1393
  %v6069 = vunpack.c.h.b16 %v1393
  %v6070 = vunpack.c.l.b16 %v1394
  %v6071 = vunpack.c.h.b16 %v1394
  %v6072 = vunpack.c.l.b16 %v1395
  %v6073 = vunpack.c.h.b16 %v1395
  %v6074 = vunpack.c.l.b16 %v1396
  %v6075 = vunpack.c.h.b16 %v1396
  %v6076 = vunpack.c.l.b16 %v1397
  %v6077 = vunpack.c.h.b16 %v1397
  %v6078 = vunpack.c.l.b16 %v1398
  %v6079 = vunpack.c.h.b16 %v1398
  %v6080 = vunpack.c.l.b16 %v1399
  %v6081 = vunpack.c.h.b16 %v1399
  %v6082 = vunpack.c.l.b16 %v1400
  %v6083 = vunpack.c.h.b16 %v1400
  %v6084 = vunpack.c.l.b16 %v1401
  %v6085 = vunpack.c.h.b16 %v1401
  %v6086 = vunpack.c.l.b16 %v1402
  %v6087 = vunpack.c.h.b16 %v1402
  %v6088 = vunpack.c.l.b16 %v1403
  %v6089 = vunpack.c.h.b16 %v1403
  %v6090 = vunpack.c.l.b16 %v1404
  %v6091 = vunpack.c.h.b16 %v1404
  %v6092 = vunpack.c.l.b16 %v1405
  %v6093 = vunpack.c.h.b16 %v1405
  %v6094 = vunpack.c.l.b16 %v1406
  %v6095 = vunpack.c.h.b16 %v1406
  %v6096 = vunpack.c.l.b16 %v1407
  %v6097 = vunpack.c.h.b16 %v1407
  %v6098 = vunpack.c.l.b16 %v1408
  %v6099 = vunpack.c.h.b16 %v1408
  %v6100 = vunpack.c.l.b16 %v1409
  %v6101 = vunpack.c.h.b16 %v1409
  %v6102 = vunpack.c.l.b16 %v1410
  %v6103 = vunpack.c.h.b16 %v1410
  %v6104 = vunpack.c.l.b16 %v1411
  %v6105 = vunpack.c.h.b16 %v1411
  %v6106 = vunpack.c.l.b16 %v1412
  %v6107 = vunpack.c.h.b16 %v1412
  %v6108 = vunpack.c.l.b16 %v1413
  %v6109 = vunpack.c.h.b16 %v1413
  %v6110 = vunpack.c.l.b16 %v1414
  %v6111 = vunpack.c.h.b16 %v1414
  %v6112 = vunpack.c.l.b16 %v1415
  %v6113 = vunpack.c.h.b16 %v1415
  %v6114 = vunpack.c.l.b16 %v1416
  %v6115 = vunpack.c.h.b16 %v1416
  %v6116 = vunpack.c.l.b16 %v1417
  %v6117 = vunpack.c.h.b16 %v1417
  %v6118 = vunpack.c.l.b16 %v1418
  %v6119 = vunpack.c.h.b16 %v1418
  %v6120 = vunpack.c.l.b16 %v1419
  %v6121 = vunpack.c.h.b16 %v1419
  %v6122 = vunpack.c.l.b16 %v1420
  %v6123 = vunpack.c.h.b16 %v1420
  %v6124 = vunpack.c.l.b16 %v1421
  %v6125 = vunpack.c.h.b16 %v1421
  %v6126 = vunpack.c.l.b16 %v1422
  %v6127 = vunpack.c.h.b16 %v1422
  %v6128 = vunpack.c.l.b16 %v1423
  %v6129 = vunpack.c.h.b16 %v1423
  %v6130 = vunpack.c.l.b16 %v1424
  %v6131 = vunpack.c.h.b16 %v1424
  %v6132 = vunpack.c.l.b16 %v1425
  %v6133 = vunpack.c.h.b16 %v1425
  %v6134 = vunpack.c.l.b16 %v1426
  %v6135 = vunpack.c.h.b16 %v1426
  %v6136 = vunpack.c.l.b16 %v1427
  %v6137 = vunpack.c.h.b16 %v1427
  %v6138 = vunpack.c.l.b16 %v1428
  %v6139 = vunpack.c.h.b16 %v1428
  %v6140 = vunpack.c.l.b16 %v1429
  %v6141 = vunpack.c.h.b16 %v1429
  %v6142 = vunpack.c.l.b16 %v1430
  %v6143 = vunpack.c.h.b16 %v1430
  %v6144 = vunpack.c.l.b16 %v1431
  %v6145 = vunpack.c.h.b16 %v1431
  %v6146 = vunpack.c.l.b16 %v1432
  %v6147 = vunpack.c.h.b16 %v1432
  %v6148 = vunpack.c.l.b16 %v1433
  %v6149 = vunpack.c.h.b16 %v1433
  %v6150 = vunpack.c.l.b16 %v1434
  %v6151 = vunpack.c.h.b16 %v1434
  %v6152 = vunpack.c.l.b16 %v1435
  %v6153 = vunpack.c.h.b16 %v1435
  %v6154 = vunpack.c.l.b16 %v1436
  %v6155 = vunpack.c.h.b16 %v1436
  %v6156 = vunpack.c.l.b16 %v1437
  %v6157 = vunpack.c.h.b16 %v1437
  %v6158 = vunpack.c.l.b16 %v1438
  %v6159 = vunpack.c.h.b16 %v1438
  %v6160 = vunpack.c.l.b16 %v1439
  %v6161 = vunpack.c.h.b16 %v1439
  %v6162 = vunpack.c.l.b16 %v1440
  %v6163 = vunpack.c.h.b16 %v1440
  %v6164 = vunpack.c.l.b16 %v1441
  %v6165 = vunpack.c.h.b16 %v1441
  %v6166 = vunpack.c.l.b16 %v1442
  %v6167 = vunpack.c.h.b16 %v1442
  %v6168 = vunpack.c.l.b16 %v1443
  %v6169 = vunpack.c.h.b16 %v1443
  %v6170 = vunpack.c.l.b16 %v1444
  %v6171 = vunpack.c.h.b16 %v1444
  %v6172 = vunpack.c.l.b16 %v1445
  %v6173 = vunpack.c.h.b16 %v1445
  %v6174 = vunpack.c.l.b16 %v1446
  %v6175 = vunpack.c.h.b16 %v1446
  %v6176 = vunpack.c.l.b16 %v1447
  %v6177 = vunpack.c.h.b16 %v1447
  %v6178 = vunpack.c.l.b16 %v1448
  %v6179 = vunpack.c.h.b16 %v1448
  %v6180 = vunpack.c.l.b16 %v1449
  %v6181 = vunpack.c.h.b16 %v1449
  %v6182 = vunpack.c.l.b16 %v1450
  %v6183 = vunpack.c.h.b16 %v1450
  %v6184 = vunpack.c.l.b16 %v1451
  %v6185 = vunpack.c.h.b16 %v1451
  %v6186 = vunpack.c.l.b16 %v1452
  %v6187 = vunpack.c.h.b16 %v1452
  %v6188 = vunpack.c.l.b16 %v1453
  %v6189 = vunpack.c.h.b16 %v1453
  %v6190 = vunpack.c.l.b16 %v1454
  %v6191 = vunpack.c.h.b16 %v1454
  %v6192 = vunpack.c.l.b16 %v1455
  %v6193 = vunpack.c.h.b16 %v1455
  %v6194 = vunpack.c.l.b16 %v1456
  %v6195 = vunpack.c.h.b16 %v1456
  %v6196 = vunpack.c.l.b16 %v1457
  %v6197 = vunpack.c.h.b16 %v1457
  %v6198 = vunpack.c.l.b16 %v1458
  %v6199 = vunpack.c.h.b16 %v1458
  %v6200 = vunpack.c.l.b16 %v1459
  %v6201 = vunpack.c.h.b16 %v1459
  %v6202 = vunpack.c.l.b16 %v1460
  %v6203 = vunpack.c.h.b16 %v1460
  %v6204 = vunpack.c.l.b16 %v1461
  %v6205 = vunpack.c.h.b16 %v1461
  %v6206 = vunpack.c.l.b16 %v1462
  %v6207 = vunpack.c.h.b16 %v1462
  %v6208 = vunpack.c.l.b16 %v1463
  %v6209 = vunpack.c.h.b16 %v1463
  %v6210 = vunpack.c.l.b16 %v1464
  %v6211 = vunpack.c.h.b16 %v1464
  %v6212 = vunpack.c.l.b16 %v1465
  %v6213 = vunpack.c.h.b16 %v1465
  %v6214 = vunpack.c.l.b16 %v1466
  %v6215 = vunpack.c.h.b16 %v1466
  %v6216 = vunpack.c.l.b16 %v1467
  %v6217 = vunpack.c.h.b16 %v1467
  %v6218 = vunpack.c.l.b16 %v1468
  %v6219 = vunpack.c.h.b16 %v1468
  %v6220 = vunpack.c.l.b16 %v1469
  %v6221 = vunpack.c.h.b16 %v1469
  %v6222 = vunpack.c.l.b16 %v1470
  %v6223 = vunpack.c.h.b16 %v1470
  %v6224 = vunpack.c.l.b16 %v1471
  %v6225 = vunpack.c.h.b16 %v1471
  %v6226 = vunpack.c.l.b16 %v1472
  %v6227 = vunpack.c.h.b16 %v1472
  %v6228 = vunpack.c.l.b16 %v1473
  %v6229 = vunpack.c.h.b16 %v1473
  %v6230 = vunpack.c.l.b16 %v1474
  %v6231 = vunpack.c.h.b16 %v1474
  %v6232 = vunpack.c.l.b16 %v1475
  %v6233 = vunpack.c.h.b16 %v1475
  %v6234 = vunpack.c.l.b16 %v1476
  %v6235 = vunpack.c.h.b16 %v1476
  %v6236 = vunpack.c.l.b16 %v1477
  %v6237 = vunpack.c.h.b16 %v1477
  %v6238 = vunpack.c.l.b16 %v1478
  %v6239 = vunpack.c.h.b16 %v1478
  %v6240 = vunpack.c.l.b16 %v1479
  %v6241 = vunpack.c.h.b16 %v1479
  %v6242 = vunpack.c.l.b16 %v1480
  %v6243 = vunpack.c.h.b16 %v1480
  %v6244 = vunpack.c.l.b16 %v1481
  %v6245 = vunpack.c.h.b16 %v1481
  %v6246 = vunpack.c.l.b16 %v1482
  %v6247 = vunpack.c.h.b16 %v1482
  %v6248 = vunpack.c.l.b16 %v1483
  %v6249 = vunpack.c.h.b16 %v1483
  %v6250 = vunpack.c.l.b16 %v1484
  %v6251 = vunpack.c.h.b16 %v1484
  %v6252 = vunpack.c.l.b16 %v1485
  %v6253 = vunpack.c.h.b16 %v1485
  %v6254 = vunpack.c.l.b16 %v1486
  %v6255 = vunpack.c.h.b16 %v1486
  %v6256 = vunpack.c.l.b16 %v1487
  %v6257 = vunpack.c.h.b16 %v1487
  %v6258 = vunpack.c.l.b16 %v1488
  %v6259 = vunpack.c.h.b16 %v1488
  %v6260 = vunpack.c.l.b16 %v1489
  %v6261 = vunpack.c.h.b16 %v1489
  %v6262 = vunpack.c.l.b16 %v1490
  %v6263 = vunpack.c.h.b16 %v1490
  %v6264 = vunpack.c.l.b16 %v1491
  %v6265 = vunpack.c.h.b16 %v1491
  %v6266 = vunpack.c.l.b16 %v1492
  %v6267 = vunpack.c.h.b16 %v1492
  %v6268 = vunpack.c.l.b16 %v1493
  %v6269 = vunpack.c.h.b16 %v1493
  %v6270 = vunpack.c.l.b16 %v1494
  %v6271 = vunpack.c.h.b16 %v1494
  %v6272 = vunpack.c.l.b16 %v1495
  %v6273 = vunpack.c.h.b16 %v1495
  %v6274 = vunpack.c.l.b16 %v1496
  %v6275 = vunpack.c.h.b16 %v1496
  %v6276 = vunpack.c.l.b16 %v1497
  %v6277 = vunpack.c.h.b16 %v1497
  %v6278 = vunpack.c.l.b16 %v1498
  %v6279 = vunpack.c.h.b16 %v1498
  %v6280 = vunpack.c.l.b16 %v1499
  %v6281 = vunpack.c.h.b16 %v1499
  %v6282 = vunpack.c.l.b16 %v1500
  %v6283 = vunpack.c.h.b16 %v1500
  %v6284 = vunpack.c.l.b16 %v1501
  %v6285 = vunpack.c.h.b16 %v1501
  %v6286 = vunpack.c.l.b16 %v1502
  %v6287 = vunpack.c.h.b16 %v1502
  %v6288 = vunpack.c.l.b16 %v1503
  %v6289 = vunpack.c.h.b16 %v1503
  %v6290 = vunpack.c.l.b16 %v1504
  %v6291 = vunpack.c.h.b16 %v1504
  %v6292 = vunpack.c.l.b16 %v1505
  %v6293 = vunpack.c.h.b16 %v1505
  %v6294 = vunpack.c.l.b16 %v1506
  %v6295 = vunpack.c.h.b16 %v1506
  %v6296 = vunpack.c.l.b16 %v1507
  %v6297 = vunpack.c.h.b16 %v1507
  %v6298 = vunpack.c.l.b16 %v1508
  %v6299 = vunpack.c.h.b16 %v1508
  %v6300 = vunpack.c.l.b16 %v1509
  %v6301 = vunpack.c.h.b16 %v1509
  %v6302 = vunpack.c.l.b16 %v1510
  %v6303 = vunpack.c.h.b16 %v1510
  %v6304 = vunpack.c.l.b16 %v1511
  %v6305 = vunpack.c.h.b16 %v1511
  %v6306 = vunpack.c.l.b16 %v1512
  %v6307 = vunpack.c.h.b16 %v1512
  %v6308 = vunpack.c.l.b16 %v1513
  %v6309 = vunpack.c.h.b16 %v1513
  %v6310 = vunpack.c.l.b16 %v1514
  %v6311 = vunpack.c.h.b16 %v1514
  %v6312 = vunpack.c.l.b16 %v1515
  %v6313 = vunpack.c.h.b16 %v1515
  %v6314 = vunpack.c.l.b16 %v1516
  %v6315 = vunpack.c.h.b16 %v1516
  %v6316 = vunpack.c.l.b16 %v1517
  %v6317 = vunpack.c.h.b16 %v1517
  %v6318 = vunpack.c.l.b16 %v1518
  %v6319 = vunpack.c.h.b16 %v1518
  %v6320 = vunpack.c.l.b16 %v1519
  %v6321 = vunpack.c.h.b16 %v1519
  %v6322 = vunpack.c.l.b16 %v1520
  %v6323 = vunpack.c.h.b16 %v1520
  %v6324 = vunpack.c.l.b16 %v1521
  %v6325 = vunpack.c.h.b16 %v1521
  %v6326 = vunpack.c.l.b16 %v1522
  %v6327 = vunpack.c.h.b16 %v1522
  %v6328 = vunpack.c.l.b16 %v1523
  %v6329 = vunpack.c.h.b16 %v1523
  %v6330 = vunpack.c.l.b16 %v1524
  %v6331 = vunpack.c.h.b16 %v1524
  %v6332 = vunpack.c.l.b16 %v1525
  %v6333 = vunpack.c.h.b16 %v1525
  %v6334 = vunpack.c.l.b16 %v1526
  %v6335 = vunpack.c.h.b16 %v1526
  %v6336 = vunpack.c.l.b16 %v1527
  %v6337 = vunpack.c.h.b16 %v1527
  %v6338 = vunpack.c.l.b16 %v1528
  %v6339 = vunpack.c.h.b16 %v1528
  %v6340 = vunpack.c.l.b16 %v1529
  %v6341 = vunpack.c.h.b16 %v1529
  %v6342 = vunpack.c.l.b16 %v1530
  %v6343 = vunpack.c.h.b16 %v1530
  %v6344 = vunpack.c.l.b16 %v1531
  %v6345 = vunpack.c.h.b16 %v1531
  %v6346 = vunpack.c.l.b16 %v1532
  %v6347 = vunpack.c.h.b16 %v1532
  %v6348 = vunpack.c.l.b16 %v1533
  %v6349 = vunpack.c.h.b16 %v1533
  %v6350 = vunpack.c.l.b16 %v1534
  %v6351 = vunpack.c.h.b16 %v1534
  %v6352 = vunpack.c.l.b16 %v1535
  %v6353 = vunpack.c.h.b16 %v1535
  %v6354 = vunpack.c.l.b16 %v1536
  %v6355 = vunpack.c.h.b16 %v1536
  %v6356 = vunpack.c.l.b16 %v1537
  %v6357 = vunpack.c.h.b16 %v1537
  %v6358 = vunpack.c.l.b16 %v1538
  %v6359 = vunpack.c.h.b16 %v1538
  %v6360 = vunpack.c.l.b16 %v1539
  %v6361 = vunpack.c.h.b16 %v1539
  %v6362 = vunpack.c.l.b16 %v1540
  %v6363 = vunpack.c.h.b16 %v1540
  %v6364 = vunpack.c.l.b16 %v1541
  %v6365 = vunpack.c.h.b16 %v1541
  %v6366 = vunpack.c.l.b16 %v1542
  %v6367 = vunpack.c.h.b16 %v1542
  %v6368 = vunpack.c.l.b16 %v1543
  %v6369 = vunpack.c.h.b16 %v1543
  %v6370 = vunpack.c.l.b16 %v1544
  %v6371 = vunpack.c.h.b16 %v1544
  %v6372 = vunpack.c.l.b16 %v1545
  %v6373 = vunpack.c.h.b16 %v1545
  %v6374 = vunpack.c.l.b16 %v1546
  %v6375 = vunpack.c.h.b16 %v1546
  %v6376 = vunpack.c.l.b16 %v1547
  %v6377 = vunpack.c.h.b16 %v1547
  %v6378 = vunpack.c.l.b16 %v1548
  %v6379 = vunpack.c.h.b16 %v1548
  %v6380 = vunpack.c.l.b16 %v1549
  %v6381 = vunpack.c.h.b16 %v1549
  %v6382 = vunpack.c.l.b16 %v1550
  %v6383 = vunpack.c.h.b16 %v1550
  %v6384 = vunpack.c.l.b16 %v1551
  %v6385 = vunpack.c.h.b16 %v1551
  %v6386 = vunpack.c.l.b16 %v1552
  %v6387 = vunpack.c.h.b16 %v1552
  %v6388 = vunpack.c.l.b16 %v1553
  %v6389 = vunpack.c.h.b16 %v1553
  %v6390 = vunpack.c.l.b16 %v1554
  %v6391 = vunpack.c.h.b16 %v1554
  %v6392 = vunpack.c.l.b16 %v1555
  %v6393 = vunpack.c.h.b16 %v1555
  %v6394 = vunpack.c.l.b16 %v1556
  %v6395 = vunpack.c.h.b16 %v1556
  %v6396 = vunpack.c.l.b16 %v1557
  %v6397 = vunpack.c.h.b16 %v1557
  %v6398 = vunpack.c.l.b16 %v1558
  %v6399 = vunpack.c.h.b16 %v1558
  %v6400 = vunpack.c.l.b16 %v1559
  %v6401 = vunpack.c.h.b16 %v1559
  %v6402 = vunpack.c.l.b16 %v1560
  %v6403 = vunpack.c.h.b16 %v1560
  %v6404 = vunpack.c.l.b16 %v1561
  %v6405 = vunpack.c.h.b16 %v1561
  %v6406 = vunpack.c.l.b16 %v1562
  %v6407 = vunpack.c.h.b16 %v1562
  %v6408 = vunpack.c.l.b16 %v1563
  %v6409 = vunpack.c.h.b16 %v1563
  %v6410 = vunpack.c.l.b16 %v1564
  %v6411 = vunpack.c.h.b16 %v1564
  %v6412 = vunpack.c.l.b16 %v1565
  %v6413 = vunpack.c.h.b16 %v1565
  %v6414 = vunpack.c.l.b16 %v1566
  %v6415 = vunpack.c.h.b16 %v1566
  %v6416 = vunpack.c.l.b16 %v1567
  %v6417 = vunpack.c.h.b16 %v1567
  %v6418 = vunpack.c.l.b16 %v1568
  %v6419 = vunpack.c.h.b16 %v1568
  %v6420 = vunpack.c.l.b16 %v1569
  %v6421 = vunpack.c.h.b16 %v1569
  %v6422 = vunpack.c.l.b16 %v1570
  %v6423 = vunpack.c.h.b16 %v1570
  %v6424 = vunpack.c.l.b16 %v1571
  %v6425 = vunpack.c.h.b16 %v1571
  %v6426 = vunpack.c.l.b16 %v1572
  %v6427 = vunpack.c.h.b16 %v1572
  %v6428 = vunpack.c.l.b16 %v1573
  %v6429 = vunpack.c.h.b16 %v1573
  %v6430 = vunpack.c.l.b16 %v1574
  %v6431 = vunpack.c.h.b16 %v1574
  %v6432 = vunpack.c.l.b16 %v1575
  %v6433 = vunpack.c.h.b16 %v1575
  %v6434 = vunpack.c.l.b16 %v1576
  %v6435 = vunpack.c.h.b16 %v1576
  %v6436 = vunpack.c.l.b16 %v1577
  %v6437 = vunpack.c.h.b16 %v1577
  %v6438 = vunpack.c.l.b16 %v1578
  %v6439 = vunpack.c.h.b16 %v1578
  %v6440 = vunpack.c.l.b16 %v1579
  %v6441 = vunpack.c.h.b16 %v1579
  %v6442 = vunpack.c.l.b16 %v1580
  %v6443 = vunpack.c.h.b16 %v1580
  %v6444 = vunpack.c.l.b16 %v1581
  %v6445 = vunpack.c.h.b16 %v1581
  %v6446 = vunpack.c.l.b16 %v1582
  %v6447 = vunpack.c.h.b16 %v1582
  %v6448 = vunpack.c.l.b16 %v1583
  %v6449 = vunpack.c.h.b16 %v1583
  %v6450 = vunpack.c.l.b16 %v1584
  %v6451 = vunpack.c.h.b16 %v1584
  %v6452 = vunpack.c.l.b16 %v1585
  %v6453 = vunpack.c.h.b16 %v1585
  %v6454 = vunpack.c.l.b16 %v1586
  %v6455 = vunpack.c.h.b16 %v1586
  %v6456 = vunpack.c.l.b16 %v1587
  %v6457 = vunpack.c.h.b16 %v1587
  %v6458 = vunpack.c.l.b16 %v1588
  %v6459 = vunpack.c.h.b16 %v1588
  %v6460 = vunpack.c.l.b16 %v1589
  %v6461 = vunpack.c.h.b16 %v1589
  %v6462 = vunpack.c.l.b16 %v1590
  %v6463 = vunpack.c.h.b16 %v1590
  %v6464 = vunpack.c.l.b16 %v1591
  %v6465 = vunpack.c.h.b16 %v1591
  %v6466 = vunpack.c.l.b16 %v1592
  %v6467 = vunpack.c.h.b16 %v1592
  %v6468 = vunpack.c.l.b16 %v1593
  %v6469 = vunpack.c.h.b16 %v1593
  %v6470 = vunpack.c.l.b16 %v1594
  %v6471 = vunpack.c.h.b16 %v1594
  %v6472 = vunpack.c.l.b16 %v1595
  %v6473 = vunpack.c.h.b16 %v1595
  %v6474 = vunpack.c.l.b16 %v1596
  %v6475 = vunpack.c.h.b16 %v1596
  %v6476 = vunpack.c.l.b16 %v1597
  %v6477 = vunpack.c.h.b16 %v1597
  %v6478 = vunpack.c.l.b16 %v1598
  %v6479 = vunpack.c.h.b16 %v1598
  %v6480 = vunpack.c.l.b16 %v1599
  %v6481 = vunpack.c.h.b16 %v1599
  %v6482 = vunpack.c.l.b16 %v1600
  %v6483 = vunpack.c.h.b16 %v1600
  %v6484 = vunpack.c.l.b16 %v1601
  %v6485 = vunpack.c.h.b16 %v1601
  %v6486 = vunpack.c.l.b16 %v1602
  %v6487 = vunpack.c.h.b16 %v1602
  %v6488 = vunpack.c.l.b16 %v1603
  %v6489 = vunpack.c.h.b16 %v1603
  %v6490 = vunpack.c.l.b16 %v1604
  %v6491 = vunpack.c.h.b16 %v1604
  %v6492 = vunpack.c.l.b16 %v1605
  %v6493 = vunpack.c.h.b16 %v1605
  %v6494 = vunpack.c.l.b16 %v1606
  %v6495 = vunpack.c.h.b16 %v1606
  %v6496 = vunpack.c.l.b16 %v1607
  %v6497 = vunpack.c.h.b16 %v1607
  %v6498 = vunpack.c.l.b16 %v1608
  %v6499 = vunpack.c.h.b16 %v1608
  %v6500 = vunpack.c.l.b16 %v1609
  %v6501 = vunpack.c.h.b16 %v1609
  %v6502 = vunpack.c.l.b16 %v1610
  %v6503 = vunpack.c.h.b16 %v1610
  %v6504 = vunpack.c.l.b16 %v1611
  %v6505 = vunpack.c.h.b16 %v1611
  %v6506 = vunpack.c.l.b16 %v1612
  %v6507 = vunpack.c.h.b16 %v1612
  %v6508 = vunpack.c.l.b16 %v1613
  %v6509 = vunpack.c.h.b16 %v1613
  %v6510 = vunpack.c.l.b16 %v1614
  %v6511 = vunpack.c.h.b16 %v1614
  %v6512 = vunpack.c.l.b16 %v1615
  %v6513 = vunpack.c.h.b16 %v1615
  %v6514 = vpack.c.b16 %v3382, %v3378
  %v6515 = vpack.c.b16 %v3383, %v3379
  %v6516 = vpack.c.b16 %v3384, %v3380
  %v6517 = vpack.c.b16 %v3385, %v3381
  %v6518 = vpack.c.b16 %v3390, %v3386
  %v6519 = vpack.c.b16 %v3391, %v3387
  %v6520 = vpack.c.b16 %v3392, %v3388
  %v6521 = vpack.c.b16 %v3393, %v3389
  %v6522 = vpack.c.b16 %v3398, %v3394
  %v6523 = vpack.c.b16 %v3399, %v3395
  %v6524 = vpack.c.b16 %v3400, %v3396
  %v6525 = vpack.c.b16 %v3401, %v3397
  %v6526 = vpack.c.b16 %v3406, %v3402
  %v6527 = vpack.c.b16 %v3407, %v3403
  %v6528 = vpack.c.b16 %v3408, %v3404
  %v6529 = vpack.c.b16 %v3409, %v3405
  %v6530 = vpack.c.b16 %v3414, %v3410
  %v6531 = vpack.c.b16 %v3415, %v3411
  %v6532 = vpack.c.b16 %v3416, %v3412
  %v6533 = vpack.c.b16 %v3417, %v3413
  %v6534 = vpack.c.b16 %v3422, %v3418
  %v6535 = vpack.c.b16 %v3423, %v3419
  %v6536 = vpack.c.b16 %v3424, %v3420
  %v6537 = vpack.c.b16 %v3425, %v3421
  %v6538 = vpack.c.b16 %v3430, %v3426
  %v6539 = vpack.c.b16 %v3431, %v3427
  %v6540 = vpack.c.b16 %v3432, %v3428
  %v6541 = vpack.c.b16 %v3433, %v3429
  %v6542 = vpack.c.b16 %v3438, %v3434
  %v6543 = vpack.c.b16 %v3439, %v3435
  %v6544 = vpack.c.b16 %v3440, %v3436
  %v6545 = vpack.c.b16 %v3441, %v3437
  %v6546 = vpack.c.b16 %v3446, %v3442
  %v6547 = vpack.c.b16 %v3447, %v3443
  %v6548 = vpack.c.b16 %v3448, %v3444
  %v6549 = vpack.c.b16 %v3449, %v3445
  %v6550 = vpack.c.b16 %v3454, %v3450
  %v6551 = vpack.c.b16 %v3455, %v3451
  %v6552 = vpack.c.b16 %v3456, %v3452
  %v6553 = vpack.c.b16 %v3457, %v3453
  %v6554 = vpack.c.b16 %v3462, %v3458
  %v6555 = vpack.c.b16 %v3463, %v3459
  %v6556 = vpack.c.b16 %v3464, %v3460
  %v6557 = vpack.c.b16 %v3465, %v3461
  %v6558 = vpack.c.b16 %v3470, %v3466
  %v6559 = vpack.c.b16 %v3471, %v3467
  %v6560 = vpack.c.b16 %v3472, %v3468
  %v6561 = vpack.c.b16 %v3473, %v3469
  %v6562 = vpack.c.b16 %v3478, %v3474
  %v6563 = vpack.c.b16 %v3479, %v3475
  %v6564 = vpack.c.b16 %v3480, %v3476
  %v6565 = vpack.c.b16 %v3481, %v3477
  %v6566 = vpack.c.b16 %v3486, %v3482
  %v6567 = vpack.c.b16 %v3487, %v3483
  %v6568 = vpack.c.b16 %v3488, %v3484
  %v6569 = vpack.c.b16 %v3489, %v3485
  %v6570 = vpack.c.b16 %v3494, %v3490
  %v6571 = vpack.c.b16 %v3495, %v3491
  %v6572 = vpack.c.b16 %v3496, %v3492
  %v6573 = vpack.c.b16 %v3497, %v3493
  %v6574 = vpack.c.b16 %v3502, %v3498
  %v6575 = vpack.c.b16 %v3503, %v3499
  %v6576 = vpack.c.b16 %v3504, %v3500
  %v6577 = vpack.c.b16 %v3505, %v3501
  %v6578 = vpack.c.b16 %v3510, %v3506
  %v6579 = vpack.c.b16 %v3511, %v3507
  %v6580 = vpack.c.b16 %v3512, %v3508
  %v6581 = vpack.c.b16 %v3513, %v3509
  %v6582 = vpack.c.b16 %v3518, %v3514
  %v6583 = vpack.c.b16 %v3519, %v3515
  %v6584 = vpack.c.b16 %v3520, %v3516
  %v6585 = vpack.c.b16 %v3521, %v3517
  %v6586 = vpack.c.b16 %v3526, %v3522
  %v6587 = vpack.c.b16 %v3527, %v3523
  %v6588 = vpack.c.b16 %v3528, %v3524
  %v6589 = vpack.c.b16 %v3529, %v3525
  %v6590 = vpack.c.b16 %v3534, %v3530
  %v6591 = vpack.c.b16 %v3535, %v3531
  %v6592 = vpack.c.b16 %v3536, %v3532
  %v6593 = vpack.c.b16 %v3537, %v3533
  %v6594 = vpack.c.b16 %v3542, %v3538
  %v6595 = vpack.c.b16 %v3543, %v3539
  %v6596 = vpack.c.b16 %v3544, %v3540
  %v6597 = vpack.c.b16 %v3545, %v3541
  %v6598 = vpack.c.b16 %v3550, %v3546
  %v6599 = vpack.c.b16 %v3551, %v3547
  %v6600 = vpack.c.b16 %v3552, %v3548
  %v6601 = vpack.c.b16 %v3553, %v3549
  %v6602 = vpack.c.b16 %v3558, %v3554
  %v6603 = vpack.c.b16 %v3559, %v3555
  %v6604 = vpack.c.b16 %v3560, %v3556
  %v6605 = vpack.c.b16 %v3561, %v3557
  %v6606 = vpack.c.b16 %v3566, %v3562
  %v6607 = vpack.c.b16 %v3567, %v3563
  %v6608 = vpack.c.b16 %v3568, %v3564
  %v6609 = vpack.c.b16 %v3569, %v3565
  %v6610 = vpack.c.b16 %v3574, %v3570
  %v6611 = vpack.c.b16 %v3575, %v3571
  %v6612 = vpack.c.b16 %v3576, %v3572
  %v6613 = vpack.c.b16 %v3577, %v3573
  %v6614 = vpack.c.b16 %v3582, %v3578
  %v6615 = vpack.c.b16 %v3583, %v3579
  %v6616 = vpack.c.b16 %v3584, %v3580
  %v6617 = vpack.c.b16 %v3585, %v3581
  %v6618 = vpack.c.b16 %v3590, %v3586
  %v6619 = vpack.c.b16 %v3591, %v3587
  %v6620 = vpack.c.b16 %v3592, %v3588
  %v6621 = vpack.c.b16 %v3593, %v3589
  %v6622 = vpack.c.b16 %v3598, %v3594
  %v6623 = vpack.c.b16 %v3599, %v3595
  %v6624 = vpack.c.b16 %v3600, %v3596
  %v6625 = vpack.c.b16 %v3601, %v3597
  %v6626 = vpack.c.b16 %v3606, %v3602
  %v6627 = vpack.c.b16 %v3607, %v3603
  %v6628 = vpack.c.b16 %v3608, %v3604
  %v6629 = vpack.c.b16 %v3609, %v3605
  %v6630 = vpack.c.b16 %v3614, %v3610
  %v6631 = vpack.c.b16 %v3615, %v3611
  %v6632 = vpack.c.b16 %v3616, %v3612
  %v6633 = vpack.c.b16 %v3617, %v3613
  %v6634 = vpack.c.b16 %v3622, %v3618
  %v6635 = vpack.c.b16 %v3623, %v3619
  %v6636 = vpack.c.b16 %v3624, %v3620
  %v6637 = vpack.c.b16 %v3625, %v3621
  %v6638 = vpack.c.b16 %v3630, %v3626
  %v6639 = vpack.c.b16 %v3631, %v3627
  %v6640 = vpack.c.b16 %v3632, %v3628
  %v6641 = vpack.c.b16 %v3633, %v3629
  %v6642 = vpack.c.b16 %v3638, %v3634
  %v6643 = vpack.c.b16 %v3639, %v3635
  %v6644 = vpack.c.b16 %v3640, %v3636
  %v6645 = vpack.c.b16 %v3641, %v3637
  %v6646 = vpack.c.b16 %v3646, %v3642
  %v6647 = vpack.c.b16 %v3647, %v3643
  %v6648 = vpack.c.b16 %v3648, %v3644
  %v6649 = vpack.c.b16 %v3649, %v3645
  %v6650 = vpack.c.b16 %v3654, %v3650
  %v6651 = vpack.c.b16 %v3655, %v3651
  %v6652 = vpack.c.b16 %v3656, %v3652
  %v6653 = vpack.c.b16 %v3657, %v3653
  %v6654 = vpack.c.b16 %v3662, %v3658
  %v6655 = vpack.c.b16 %v3663, %v3659
  %v6656 = vpack.c.b16 %v3664, %v3660
  %v6657 = vpack.c.b16 %v3665, %v3661
  %v6658 = vpack.c.b16 %v3670, %v3666
  %v6659 = vpack.c.b16 %v3671, %v3667
  %v6660 = vpack.c.b16 %v3672, %v3668
  %v6661 = vpack.c.b16 %v3673, %v3669
  %v6662 = vpack.c.b16 %v3678, %v3674
  %v6663 = vpack.c.b16 %v3679, %v3675
  %v6664 = vpack.c.b16 %v3680, %v3676
  %v6665 = vpack.c.b16 %v3681, %v3677
  %v6666 = vpack.c.b16 %v3686, %v3682
  %v6667 = vpack.c.b16 %v3687, %v3683
  %v6668 = vpack.c.b16 %v3688, %v3684
  %v6669 = vpack.c.b16 %v3689, %v3685
  %v6670 = vpack.c.b16 %v3694, %v3690
  %v6671 = vpack.c.b16 %v3695, %v3691
  %v6672 = vpack.c.b16 %v3696, %v3692
  %v6673 = vpack.c.b16 %v3697, %v3693
  %v6674 = vpack.c.b16 %v3702, %v3698
  %v6675 = vpack.c.b16 %v3703, %v3699
  %v6676 = vpack.c.b16 %v3704, %v3700
  %v6677 = vpack.c.b16 %v3705, %v3701
  %v6678 = vpack.c.b16 %v3710, %v3706
  %v6679 = vpack.c.b16 %v3711, %v3707
  %v6680 = vpack.c.b16 %v3712, %v3708
  %v6681 = vpack.c.b16 %v3713, %v3709
  %v6682 = vpack.c.b16 %v3718, %v3714
  %v6683 = vpack.c.b16 %v3719, %v3715
  %v6684 = vpack.c.b16 %v3720, %v3716
  %v6685 = vpack.c.b16 %v3721, %v3717
  %v6686 = vpack.c.b16 %v3726, %v3722
  %v6687 = vpack.c.b16 %v3727, %v3723
  %v6688 = vpack.c.b16 %v3728, %v3724
  %v6689 = vpack.c.b16 %v3729, %v3725
  %v6690 = vpack.c.b16 %v3734, %v3730
  %v6691 = vpack.c.b16 %v3735, %v3731
  %v6692 = vpack.c.b16 %v3736, %v3732
  %v6693 = vpack.c.b16 %v3737, %v3733
  %v6694 = vpack.c.b16 %v3742, %v3738
  %v6695 = vpack.c.b16 %v3743, %v3739
  %v6696 = vpack.c.b16 %v3744, %v3740
  %v6697 = vpack.c.b16 %v3745, %v3741
  %v6698 = vpack.c.b16 %v3750, %v3746
  %v6699 = vpack.c.b16 %v3751, %v3747
  %v6700 = vpack.c.b16 %v3752, %v3748
  %v6701 = vpack.c.b16 %v3753, %v3749
  %v6702 = vpack.c.b16 %v3758, %v3754
  %v6703 = vpack.c.b16 %v3759, %v3755
  %v6704 = vpack.c.b16 %v3760, %v3756
  %v6705 = vpack.c.b16 %v3761, %v3757
  %v6706 = vpack.c.b16 %v3766, %v3762
  %v6707 = vpack.c.b16 %v3767, %v3763
  %v6708 = vpack.c.b16 %v3768, %v3764
  %v6709 = vpack.c.b16 %v3769, %v3765
  %v6710 = vpack.c.b16 %v3774, %v3770
  %v6711 = vpack.c.b16 %v3775, %v3771
  %v6712 = vpack.c.b16 %v3776, %v3772
  %v6713 = vpack.c.b16 %v3777, %v3773
  %v6714 = vpack.c.b16 %v3782, %v3778
  %v6715 = vpack.c.b16 %v3783, %v3779
  %v6716 = vpack.c.b16 %v3784, %v3780
  %v6717 = vpack.c.b16 %v3785, %v3781
  %v6718 = vpack.c.b16 %v3790, %v3786
  %v6719 = vpack.c.b16 %v3791, %v3787
  %v6720 = vpack.c.b16 %v3792, %v3788
  %v6721 = vpack.c.b16 %v3793, %v3789
  %v6722 = vpack.c.b16 %v3798, %v3794
  %v6723 = vpack.c.b16 %v3799, %v3795
  %v6724 = vpack.c.b16 %v3800, %v3796
  %v6725 = vpack.c.b16 %v3801, %v3797
  %v6726 = vpack.c.b16 %v3806, %v3802
  %v6727 = vpack.c.b16 %v3807, %v3803
  %v6728 = vpack.c.b16 %v3808, %v3804
  %v6729 = vpack.c.b16 %v3809, %v3805
  %v6730 = vpack.c.b16 %v3814, %v3810
  %v6731 = vpack.c.b16 %v3815, %v3811
  %v6732 = vpack.c.b16 %v3816, %v3812
  %v6733 = vpack.c.b16 %v3817, %v3813
  %v6734 = vpack.c.b16 %v3822, %v3818
  %v6735 = vpack.c.b16 %v3823, %v3819
  %v6736 = vpack.c.b16 %v3824, %v3820
  %v6737 = vpack.c.b16 %v3825, %v3821
  %v6738 = vpack.c.b16 %v3830, %v3826
  %v6739 = vpack.c.b16 %v3831, %v3827
  %v6740 = vpack.c.b16 %v3832, %v3828
  %v6741 = vpack.c.b16 %v3833, %v3829
  %v6742 = vpack.c.b16 %v3838, %v3834
  %v6743 = vpack.c.b16 %v3839, %v3835
  %v6744 = vpack.c.b16 %v3840, %v3836
  %v6745 = vpack.c.b16 %v3841, %v3837
  %v6746 = vpack.c.b16 %v3846, %v3842
  %v6747 = vpack.c.b16 %v3847, %v3843
  %v6748 = vpack.c.b16 %v3848, %v3844
  %v6749 = vpack.c.b16 %v3849, %v3845
  %v6750 = vpack.c.b16 %v3854, %v3850
  %v6751 = vpack.c.b16 %v3855, %v3851
  %v6752 = vpack.c.b16 %v3856, %v3852
  %v6753 = vpack.c.b16 %v3857, %v3853
  %v6754 = vpack.c.b16 %v3862, %v3858
  %v6755 = vpack.c.b16 %v3863, %v3859
  %v6756 = vpack.c.b16 %v3864, %v3860
  %v6757 = vpack.c.b16 %v3865, %v3861
  %v6758 = vpack.c.b16 %v3870, %v3866
  %v6759 = vpack.c.b16 %v3871, %v3867
  %v6760 = vpack.c.b16 %v3872, %v3868
  %v6761 = vpack.c.b16 %v3873, %v3869
  %v6762 = vpack.c.b16 %v3878, %v3874
  %v6763 = vpack.c.b16 %v3879, %v3875
  %v6764 = vpack.c.b16 %v3880, %v3876
  %v6765 = vpack.c.b16 %v3881, %v3877
  %v6766 = vpack.c.b16 %v3886, %v3882
  %v6767 = vpack.c.b16 %v3887, %v3883
  %v6768 = vpack.c.b16 %v3888, %v3884
  %v6769 = vpack.c.b16 %v3889, %v3885
  %v6770 = vpack.c.b16 %v3894, %v3890
  %v6771 = vpack.c.b16 %v3895, %v3891
  %v6772 = vpack.c.b16 %v3896, %v3892
  %v6773 = vpack.c.b16 %v3897, %v3893
  %v6774 = vpack.c.b16 %v3902, %v3898
  %v6775 = vpack.c.b16 %v3903, %v3899
  %v6776 = vpack.c.b16 %v3904, %v3900
  %v6777 = vpack.c.b16 %v3905, %v3901
  %v6778 = vpack.c.b16 %v3910, %v3906
  %v6779 = vpack.c.b16 %v3911, %v3907
  %v6780 = vpack.c.b16 %v3912, %v3908
  %v6781 = vpack.c.b16 %v3913, %v3909
  %v6782 = vpack.c.b16 %v3918, %v3914
  %v6783 = vpack.c.b16 %v3919, %v3915
  %v6784 = vpack.c.b16 %v3920, %v3916
  %v6785 = vpack.c.b16 %v3921, %v3917
  %v6786 = vpack.c.b16 %v3926, %v3922
  %v6787 = vpack.c.b16 %v3927, %v3923
  %v6788 = vpack.c.b16 %v3928, %v3924
  %v6789 = vpack.c.b16 %v3929, %v3925
  %v6790 = vpack.c.b16 %v3934, %v3930
  %v6791 = vpack.c.b16 %v3935, %v3931
  %v6792 = vpack.c.b16 %v3936, %v3932
  %v6793 = vpack.c.b16 %v3937, %v3933
  %v6794 = vpack.c.b16 %v3942, %v3938
  %v6795 = vpack.c.b16 %v3943, %v3939
  %v6796 = vpack.c.b16 %v3944, %v3940
  %v6797 = vpack.c.b16 %v3945, %v3941
  %v6798 = vpack.c.b16 %v3950, %v3946
  %v6799 = vpack.c.b16 %v3951, %v3947
  %v6800 = vpack.c.b16 %v3952, %v3948
  %v6801 = vpack.c.b16 %v3953, %v3949
  %v6802 = vpack.c.b16 %v3958, %v3954
  %v6803 = vpack.c.b16 %v3959, %v3955
  %v6804 = vpack.c.b16 %v3960, %v3956
  %v6805 = vpack.c.b16 %v3961, %v3957
  %v6806 = vpack.c.b16 %v3966, %v3962
  %v6807 = vpack.c.b16 %v3967, %v3963
  %v6808 = vpack.c.b16 %v3968, %v3964
  %v6809 = vpack.c.b16 %v3969, %v3965
  %v6810 = vpack.c.b16 %v3974, %v3970
  %v6811 = vpack.c.b16 %v3975, %v3971
  %v6812 = vpack.c.b16 %v3976, %v3972
  %v6813 = vpack.c.b16 %v3977, %v3973
  %v6814 = vpack.c.b16 %v3982, %v3978
  %v6815 = vpack.c.b16 %v3983, %v3979
  %v6816 = vpack.c.b16 %v3984, %v3980
  %v6817 = vpack.c.b16 %v3985, %v3981
  %v6818 = vpack.c.b16 %v3990, %v3986
  %v6819 = vpack.c.b16 %v3991, %v3987
  %v6820 = vpack.c.b16 %v3992, %v3988
  %v6821 = vpack.c.b16 %v3993, %v3989
  %v6822 = vpack.c.b16 %v3998, %v3994
  %v6823 = vpack.c.b16 %v3999, %v3995
  %v6824 = vpack.c.b16 %v4000, %v3996
  %v6825 = vpack.c.b16 %v4001, %v3997
  %v6826 = vpack.c.b16 %v4006, %v4002
  %v6827 = vpack.c.b16 %v4007, %v4003
  %v6828 = vpack.c.b16 %v4008, %v4004
  %v6829 = vpack.c.b16 %v4009, %v4005
  %v6830 = vpack.c.b16 %v4014, %v4010
  %v6831 = vpack.c.b16 %v4015, %v4011
  %v6832 = vpack.c.b16 %v4016, %v4012
  %v6833 = vpack.c.b16 %v4017, %v4013
  %v6834 = vpack.c.b16 %v4022, %v4018
  %v6835 = vpack.c.b16 %v4023, %v4019
  %v6836 = vpack.c.b16 %v4024, %v4020
  %v6837 = vpack.c.b16 %v4025, %v4021
  %v6838 = vpack.c.b16 %v4030, %v4026
  %v6839 = vpack.c.b16 %v4031, %v4027
  %v6840 = vpack.c.b16 %v4032, %v4028
  %v6841 = vpack.c.b16 %v4033, %v4029
  %v6842 = vpack.c.b16 %v4038, %v4034
  %v6843 = vpack.c.b16 %v4039, %v4035
  %v6844 = vpack.c.b16 %v4040, %v4036
  %v6845 = vpack.c.b16 %v4041, %v4037
  %v6846 = vpack.c.b16 %v4046, %v4042
  %v6847 = vpack.c.b16 %v4047, %v4043
  %v6848 = vpack.c.b16 %v4048, %v4044
  %v6849 = vpack.c.b16 %v4049, %v4045
  %v6850 = vpack.c.b16 %v4054, %v4050
  %v6851 = vpack.c.b16 %v4055, %v4051
  %v6852 = vpack.c.b16 %v4056, %v4052
  %v6853 = vpack.c.b16 %v4057, %v4053
  %v6854 = vpack.c.b16 %v4062, %v4058
  %v6855 = vpack.c.b16 %v4063, %v4059
  %v6856 = vpack.c.b16 %v4064, %v4060
  %v6857 = vpack.c.b16 %v4065, %v4061
  %v6858 = vpack.c.b16 %v4070, %v4066
  %v6859 = vpack.c.b16 %v4071, %v4067
  %v6860 = vpack.c.b16 %v4072, %v4068
  %v6861 = vpack.c.b16 %v4073, %v4069
  %v6862 = vpack.c.b16 %v4078, %v4074
  %v6863 = vpack.c.b16 %v4079, %v4075
  %v6864 = vpack.c.b16 %v4080, %v4076
  %v6865 = vpack.c.b16 %v4081, %v4077
  %v6866 = vpack.c.b16 %v4086, %v4082
  %v6867 = vpack.c.b16 %v4087, %v4083
  %v6868 = vpack.c.b16 %v4088, %v4084
  %v6869 = vpack.c.b16 %v4089, %v4085
  %v6870 = vpack.c.b16 %v4094, %v4090
  %v6871 = vpack.c.b16 %v4095, %v4091
  %v6872 = vpack.c.b16 %v4096, %v4092
  %v6873 = vpack.c.b16 %v4097, %v4093
  %v6874 = vpack.c.b16 %v4102, %v4098
  %v6875 = vpack.c.b16 %v4103, %v4099
  %v6876 = vpack.c.b16 %v4104, %v4100
  %v6877 = vpack.c.b16 %v4105, %v4101
  %v6878 = vpack.c.b16 %v4110, %v4106
  %v6879 = vpack.c.b16 %v4111, %v4107
  %v6880 = vpack.c.b16 %v4112, %v4108
  %v6881 = vpack.c.b16 %v4113, %v4109
  %v6882 = vpack.c.b16 %v4118, %v4114
  %v6883 = vpack.c.b16 %v4119, %v4115
  %v6884 = vpack.c.b16 %v4120, %v4116
  %v6885 = vpack.c.b16 %v4121, %v4117
  %v6886 = vpack.c.b16 %v4126, %v4122
  %v6887 = vpack.c.b16 %v4127, %v4123
  %v6888 = vpack.c.b16 %v4128, %v4124
  %v6889 = vpack.c.b16 %v4129, %v4125
  %v6890 = vpack.c.b16 %v4134, %v4130
  %v6891 = vpack.c.b16 %v4135, %v4131
  %v6892 = vpack.c.b16 %v4136, %v4132
  %v6893 = vpack.c.b16 %v4137, %v4133
  %v6894 = vpack.c.b16 %v4142, %v4138
  %v6895 = vpack.c.b16 %v4143, %v4139
  %v6896 = vpack.c.b16 %v4144, %v4140
  %v6897 = vpack.c.b16 %v4145, %v4141
  %v6898 = vpack.c.b16 %v4150, %v4146
  %v6899 = vpack.c.b16 %v4151, %v4147
  %v6900 = vpack.c.b16 %v4152, %v4148
  %v6901 = vpack.c.b16 %v4153, %v4149
  %v6902 = vpack.c.b16 %v4158, %v4154
  %v6903 = vpack.c.b16 %v4159, %v4155
  %v6904 = vpack.c.b16 %v4160, %v4156
  %v6905 = vpack.c.b16 %v4161, %v4157
  %v6906 = vpack.c.b16 %v4166, %v4162
  %v6907 = vpack.c.b16 %v4167, %v4163
  %v6908 = vpack.c.b16 %v4168, %v4164
  %v6909 = vpack.c.b16 %v4169, %v4165
  %v6910 = vpack.c.b16 %v4174, %v4170
  %v6911 = vpack.c.b16 %v4175, %v4171
  %v6912 = vpack.c.b16 %v4176, %v4172
  %v6913 = vpack.c.b16 %v4177, %v4173
  %v6914 = vpack.c.b16 %v4182, %v4178
  %v6915 = vpack.c.b16 %v4183, %v4179
  %v6916 = vpack.c.b16 %v4184, %v4180
  %v6917 = vpack.c.b16 %v4185, %v4181
  %v6918 = vpack.c.b16 %v4190, %v4186
  %v6919 = vpack.c.b16 %v4191, %v4187
  %v6920 = vpack.c.b16 %v4192, %v4188
  %v6921 = vpack.c.b16 %v4193, %v4189
  %v6922 = vpack.c.b16 %v4198, %v4194
  %v6923 = vpack.c.b16 %v4199, %v4195
  %v6924 = vpack.c.b16 %v4200, %v4196
  %v6925 = vpack.c.b16 %v4201, %v4197
  %v6926 = vpack.c.b16 %v4206, %v4202
  %v6927 = vpack.c.b16 %v4207, %v4203
  %v6928 = vpack.c.b16 %v4208, %v4204
  %v6929 = vpack.c.b16 %v4209, %v4205
  %v6930 = vpack.c.b16 %v4214, %v4210
  %v6931 = vpack.c.b16 %v4215, %v4211
  %v6932 = vpack.c.b16 %v4216, %v4212
  %v6933 = vpack.c.b16 %v4217, %v4213
  %v6934 = vpack.c.b16 %v4222, %v4218
  %v6935 = vpack.c.b16 %v4223, %v4219
  %v6936 = vpack.c.b16 %v4224, %v4220
  %v6937 = vpack.c.b16 %v4225, %v4221
  %v6938 = vpack.c.b16 %v4230, %v4226
  %v6939 = vpack.c.b16 %v4231, %v4227
  %v6940 = vpack.c.b16 %v4232, %v4228
  %v6941 = vpack.c.b16 %v4233, %v4229
  %v6942 = vpack.c.b16 %v4238, %v4234
  %v6943 = vpack.c.b16 %v4239, %v4235
  %v6944 = vpack.c.b16 %v4240, %v4236
  %v6945 = vpack.c.b16 %v4241, %v4237
  %v6946 = vpack.c.b16 %v4246, %v4242
  %v6947 = vpack.c.b16 %v4247, %v4243
  %v6948 = vpack.c.b16 %v4248, %v4244
  %v6949 = vpack.c.b16 %v4249, %v4245
  %v6950 = vpack.c.b16 %v4254, %v4250
  %v6951 = vpack.c.b16 %v4255, %v4251
  %v6952 = vpack.c.b16 %v4256, %v4252
  %v6953 = vpack.c.b16 %v4257, %v4253
  %v6954 = vpack.c.b16 %v4262, %v4258
  %v6955 = vpack.c.b16 %v4263, %v4259
  %v6956 = vpack.c.b16 %v4264, %v4260
  %v6957 = vpack.c.b16 %v4265, %v4261
  %v6958 = vpack.c.b16 %v4270, %v4266
  %v6959 = vpack.c.b16 %v4271, %v4267
  %v6960 = vpack.c.b16 %v4272, %v4268
  %v6961 = vpack.c.b16 %v4273, %v4269
  %v6962 = vpack.c.b16 %v4278, %v4274
  %v6963 = vpack.c.b16 %v4279, %v4275
  %v6964 = vpack.c.b16 %v4280, %v4276
  %v6965 = vpack.c.b16 %v4281, %v4277
  %v6966 = vpack.c.b16 %v4286, %v4282
  %v6967 = vpack.c.b16 %v4287, %v4283
  %v6968 = vpack.c.b16 %v4288, %v4284
  %v6969 = vpack.c.b16 %v4289, %v4285
  %v6970 = vpack.c.b16 %v4294, %v4290
  %v6971 = vpack.c.b16 %v4295, %v4291
  %v6972 = vpack.c.b16 %v4296, %v4292
  %v6973 = vpack.c.b16 %v4297, %v4293
  %v6974 = vpack.c.b16 %v4302, %v4298
  %v6975 = vpack.c.b16 %v4303, %v4299
  %v6976 = vpack.c.b16 %v4304, %v4300
  %v6977 = vpack.c.b16 %v4305, %v4301
  %v6978 = vpack.c.b16 %v4310, %v4306
  %v6979 = vpack.c.b16 %v4311, %v4307
  %v6980 = vpack.c.b16 %v4312, %v4308
  %v6981 = vpack.c.b16 %v4313, %v4309
  %v6982 = vpack.c.b16 %v4318, %v4314
  %v6983 = vpack.c.b16 %v4319, %v4315
  %v6984 = vpack.c.b16 %v4320, %v4316
  %v6985 = vpack.c.b16 %v4321, %v4317
  %v6986 = vpack.c.b16 %v4326, %v4322
  %v6987 = vpack.c.b16 %v4327, %v4323
  %v6988 = vpack.c.b16 %v4328, %v4324
  %v6989 = vpack.c.b16 %v4329, %v4325
  %v6990 = vpack.c.b16 %v4334, %v4330
  %v6991 = vpack.c.b16 %v4335, %v4331
  %v6992 = vpack.c.b16 %v4336, %v4332
  %v6993 = vpack.c.b16 %v4337, %v4333
  %v6994 = vpack.c.b16 %v4342, %v4338
  %v6995 = vpack.c.b16 %v4343, %v4339
  %v6996 = vpack.c.b16 %v4344, %v4340
  %v6997 = vpack.c.b16 %v4345, %v4341
  %v6998 = vpack.c.b16 %v4350, %v4346
  %v6999 = vpack.c.b16 %v4351, %v4347
  %v7000 = vpack.c.b16 %v4352, %v4348
  %v7001 = vpack.c.b16 %v4353, %v4349
  %v7002 = vpack.c.b16 %v4358, %v4354
  %v7003 = vpack.c.b16 %v4359, %v4355
  %v7004 = vpack.c.b16 %v4360, %v4356
  %v7005 = vpack.c.b16 %v4361, %v4357
  %v7006 = vpack.c.b16 %v4366, %v4362
  %v7007 = vpack.c.b16 %v4367, %v4363
  %v7008 = vpack.c.b16 %v4368, %v4364
  %v7009 = vpack.c.b16 %v4369, %v4365
  %v7010 = vpack.c.b16 %v4374, %v4370
  %v7011 = vpack.c.b16 %v4375, %v4371
  %v7012 = vpack.c.b16 %v4376, %v4372
  %v7013 = vpack.c.b16 %v4377, %v4373
  %v7014 = vpack.c.b16 %v4382, %v4378
  %v7015 = vpack.c.b16 %v4383, %v4379
  %v7016 = vpack.c.b16 %v4384, %v4380
  %v7017 = vpack.c.b16 %v4385, %v4381
  %v7018 = vpack.c.b16 %v4390, %v4386
  %v7019 = vpack.c.b16 %v4391, %v4387
  %v7020 = vpack.c.b16 %v4392, %v4388
  %v7021 = vpack.c.b16 %v4393, %v4389
  %v7022 = vpack.c.b16 %v4398, %v4394
  %v7023 = vpack.c.b16 %v4399, %v4395
  %v7024 = vpack.c.b16 %v4400, %v4396
  %v7025 = vpack.c.b16 %v4401, %v4397
  %v7026 = vpack.c.b16 %v4406, %v4402
  %v7027 = vpack.c.b16 %v4407, %v4403
  %v7028 = vpack.c.b16 %v4408, %v4404
  %v7029 = vpack.c.b16 %v4409, %v4405
  %v7030 = vpack.c.b16 %v4414, %v4410
  %v7031 = vpack.c.b16 %v4415, %v4411
  %v7032 = vpack.c.b16 %v4416, %v4412
  %v7033 = vpack.c.b16 %v4417, %v4413
  %v7034 = vpack.c.b16 %v4422, %v4418
  %v7035 = vpack.c.b16 %v4423, %v4419
  %v7036 = vpack.c.b16 %v4424, %v4420
  %v7037 = vpack.c.b16 %v4425, %v4421
  %v7038 = vpack.c.b16 %v4430, %v4426
  %v7039 = vpack.c.b16 %v4431, %v4427
  %v7040 = vpack.c.b16 %v4432, %v4428
  %v7041 = vpack.c.b16 %v4433, %v4429
  %v7042 = vpack.c.b16 %v4438, %v4434
  %v7043 = vpack.c.b16 %v4439, %v4435
  %v7044 = vpack.c.b16 %v4440, %v4436
  %v7045 = vpack.c.b16 %v4441, %v4437
  %v7046 = vpack.c.b16 %v4446, %v4442
  %v7047 = vpack.c.b16 %v4447, %v4443
  %v7048 = vpack.c.b16 %v4448, %v4444
  %v7049 = vpack.c.b16 %v4449, %v4445
  %v7050 = vpack.c.b16 %v4454, %v4450
  %v7051 = vpack.c.b16 %v4455, %v4451
  %v7052 = vpack.c.b16 %v4456, %v4452
  %v7053 = vpack.c.b16 %v4457, %v4453
  %v7054 = vpack.c.b16 %v4462, %v4458
  %v7055 = vpack.c.b16 %v4463, %v4459
  %v7056 = vpack.c.b16 %v4464, %v4460
  %v7057 = vpack.c.b16 %v4465, %v4461
  %v7058 = vpack.c.b16 %v4470, %v4466
  %v7059 = vpack.c.b16 %v4471, %v4467
  %v7060 = vpack.c.b16 %v4472, %v4468
  %v7061 = vpack.c.b16 %v4473, %v4469
  %v7062 = vpack.c.b16 %v4478, %v4474
  %v7063 = vpack.c.b16 %v4479, %v4475
  %v7064 = vpack.c.b16 %v4480, %v4476
  %v7065 = vpack.c.b16 %v4481, %v4477
  %v7066 = vpack.c.b16 %v4486, %v4482
  %v7067 = vpack.c.b16 %v4487, %v4483
  %v7068 = vpack.c.b16 %v4488, %v4484
  %v7069 = vpack.c.b16 %v4489, %v4485
  %v7070 = vpack.c.b16 %v4494, %v4490
  %v7071 = vpack.c.b16 %v4495, %v4491
  %v7072 = vpack.c.b16 %v4496, %v4492
  %v7073 = vpack.c.b16 %v4497, %v4493
  %v7074 = vpack.c.b16 %v4502, %v4498
  %v7075 = vpack.c.b16 %v4503, %v4499
  %v7076 = vpack.c.b16 %v4504, %v4500
  %v7077 = vpack.c.b16 %v4505, %v4501
  %v7078 = vpack.c.b16 %v4510, %v4506
  %v7079 = vpack.c.b16 %v4511, %v4507
  %v7080 = vpack.c.b16 %v4512, %v4508
  %v7081 = vpack.c.b16 %v4513, %v4509
  %v7082 = vpack.c.b16 %v4518, %v4514
  %v7083 = vpack.c.b16 %v4519, %v4515
  %v7084 = vpack.c.b16 %v4520, %v4516
  %v7085 = vpack.c.b16 %v4521, %v4517
  %v7086 = vpack.c.b16 %v4526, %v4522
  %v7087 = vpack.c.b16 %v4527, %v4523
  %v7088 = vpack.c.b16 %v4528, %v4524
  %v7089 = vpack.c.b16 %v4529, %v4525
  %v7090 = vpack.c.b16 %v4534, %v4530
  %v7091 = vpack.c.b16 %v4535, %v4531
  %v7092 = vpack.c.b16 %v4536, %v4532
  %v7093 = vpack.c.b16 %v4537, %v4533
  %v7094 = vpack.c.b16 %v4542, %v4538
  %v7095 = vpack.c.b16 %v4543, %v4539
  %v7096 = vpack.c.b16 %v4544, %v4540
  %v7097 = vpack.c.b16 %v4545, %v4541
  %v7098 = vpack.c.b16 %v4550, %v4546
  %v7099 = vpack.c.b16 %v4551, %v4547
  %v7100 = vpack.c.b16 %v4552, %v4548
  %v7101 = vpack.c.b16 %v4553, %v4549
  %v7102 = vpack.c.b16 %v4558, %v4554
  %v7103 = vpack.c.b16 %v4559, %v4555
  %v7104 = vpack.c.b16 %v4560, %v4556
  %v7105 = vpack.c.b16 %v4561, %v4557
  %v7106 = vpack.c.b16 %v4566, %v4562
  %v7107 = vpack.c.b16 %v4567, %v4563
  %v7108 = vpack.c.b16 %v4568, %v4564
  %v7109 = vpack.c.b16 %v4569, %v4565
  %v7110 = vpack.c.b16 %v4574, %v4570
  %v7111 = vpack.c.b16 %v4575, %v4571
  %v7112 = vpack.c.b16 %v4576, %v4572
  %v7113 = vpack.c.b16 %v4577, %v4573
  %v7114 = vpack.c.b16 %v4582, %v4578
  %v7115 = vpack.c.b16 %v4583, %v4579
  %v7116 = vpack.c.b16 %v4584, %v4580
  %v7117 = vpack.c.b16 %v4585, %v4581
  %v7118 = vpack.c.b16 %v4590, %v4586
  %v7119 = vpack.c.b16 %v4591, %v4587
  %v7120 = vpack.c.b16 %v4592, %v4588
  %v7121 = vpack.c.b16 %v4593, %v4589
  %v7122 = vpack.c.b16 %v4598, %v4594
  %v7123 = vpack.c.b16 %v4599, %v4595
  %v7124 = vpack.c.b16 %v4600, %v4596
  %v7125 = vpack.c.b16 %v4601, %v4597
  %v7126 = vpack.c.b16 %v4606, %v4602
  %v7127 = vpack.c.b16 %v4607, %v4603
  %v7128 = vpack.c.b16 %v4608, %v4604
  %v7129 = vpack.c.b16 %v4609, %v4605
  %v7130 = vpack.c.b16 %v4614, %v4610
  %v7131 = vpack.c.b16 %v4615, %v4611
  %v7132 = vpack.c.b16 %v4616, %v4612
  %v7133 = vpack.c.b16 %v4617, %v4613
  %v7134 = vpack.c.b16 %v4622, %v4618
  %v7135 = vpack.c.b16 %v4623, %v4619
  %v7136 = vpack.c.b16 %v4624, %v4620
  %v7137 = vpack.c.b16 %v4625, %v4621
  %v7138 = vpack.c.b16 %v4630, %v4626
  %v7139 = vpack.c.b16 %v4631, %v4627
  %v7140 = vpack.c.b16 %v4632, %v4628
  %v7141 = vpack.c.b16 %v4633, %v4629
  %v7142 = vpack.c.b16 %v4638, %v4634
  %v7143 = vpack.c.b16 %v4639, %v4635
  %v7144 = vpack.c.b16 %v4640, %v4636
  %v7145 = vpack.c.b16 %v4641, %v4637
  %v7146 = vpack.c.b16 %v4646, %v4642
  %v7147 = vpack.c.b16 %v4647, %v4643
  %v7148 = vpack.c.b16 %v4648, %v4644
  %v7149 = vpack.c.b16 %v4649, %v4645
  %v7150 = vpack.c.b16 %v4654, %v4650
  %v7151 = vpack.c.b16 %v4655, %v4651
  %v7152 = vpack.c.b16 %v4656, %v4652
  %v7153 = vpack.c.b16 %v4657, %v4653
  %v7154 = vpack.c.b16 %v4662, %v4658
  %v7155 = vpack.c.b16 %v4663, %v4659
  %v7156 = vpack.c.b16 %v4664, %v4660
  %v7157 = vpack.c.b16 %v4665, %v4661
  %v7158 = vpack.c.b16 %v4670, %v4666
  %v7159 = vpack.c.b16 %v4671, %v4667
  %v7160 = vpack.c.b16 %v4672, %v4668
  %v7161 = vpack.c.b16 %v4673, %v4669
  %v7162 = vpack.c.b16 %v4678, %v4674
  %v7163 = vpack.c.b16 %v4679, %v4675
  %v7164 = vpack.c.b16 %v4680, %v4676
  %v7165 = vpack.c.b16 %v4681, %v4677
  %v7166 = vpack.c.b16 %v4686, %v4682
  %v7167 = vpack.c.b16 %v4687, %v4683
  %v7168 = vpack.c.b16 %v4688, %v4684
  %v7169 = vpack.c.b16 %v4689, %v4685
  %v7170 = vpack.c.b16 %v4694, %v4690
  %v7171 = vpack.c.b16 %v4695, %v4691
  %v7172 = vpack.c.b16 %v4696, %v4692
  %v7173 = vpack.c.b16 %v4697, %v4693
  %v7174 = vpack.c.b16 %v4702, %v4698
  %v7175 = vpack.c.b16 %v4703, %v4699
  %v7176 = vpack.c.b16 %v4704, %v4700
  %v7177 = vpack.c.b16 %v4705, %v4701
  %v7178 = vpack.c.b16 %v4710, %v4706
  %v7179 = vpack.c.b16 %v4711, %v4707
  %v7180 = vpack.c.b16 %v4712, %v4708
  %v7181 = vpack.c.b16 %v4713, %v4709
  %v7182 = vpack.c.b16 %v4718, %v4714
  %v7183 = vpack.c.b16 %v4719, %v4715
  %v7184 = vpack.c.b16 %v4720, %v4716
  %v7185 = vpack.c.b16 %v4721, %v4717
  %v7186 = vpack.c.b16 %v4726, %v4722
  %v7187 = vpack.c.b16 %v4727, %v4723
  %v7188 = vpack.c.b16 %v4728, %v4724
  %v7189 = vpack.c.b16 %v4729, %v4725
  %v7190 = vpack.c.b16 %v4734, %v4730
  %v7191 = vpack.c.b16 %v4735, %v4731
  %v7192 = vpack.c.b16 %v4736, %v4732
  %v7193 = vpack.c.b16 %v4737, %v4733
  %v7194 = vpack.c.b16 %v4742, %v4738
  %v7195 = vpack.c.b16 %v4743, %v4739
  %v7196 = vpack.c.b16 %v4744, %v4740
  %v7197 = vpack.c.b16 %v4745, %v4741
  %v7198 = vpack.c.b16 %v4750, %v4746
  %v7199 = vpack.c.b16 %v4751, %v4747
  %v7200 = vpack.c.b16 %v4752, %v4748
  %v7201 = vpack.c.b16 %v4753, %v4749
  %v7202 = vpack.c.b16 %v4758, %v4754
  %v7203 = vpack.c.b16 %v4759, %v4755
  %v7204 = vpack.c.b16 %v4760, %v4756
  %v7205 = vpack.c.b16 %v4761, %v4757
  %v7206 = vpack.c.b16 %v4766, %v4762
  %v7207 = vpack.c.b16 %v4767, %v4763
  %v7208 = vpack.c.b16 %v4768, %v4764
  %v7209 = vpack.c.b16 %v4769, %v4765
  %v7210 = vpack.c.b16 %v4774, %v4770
  %v7211 = vpack.c.b16 %v4775, %v4771
  %v7212 = vpack.c.b16 %v4776, %v4772
  %v7213 = vpack.c.b16 %v4777, %v4773
  %v7214 = vpack.c.b16 %v4782, %v4778
  %v7215 = vpack.c.b16 %v4783, %v4779
  %v7216 = vpack.c.b16 %v4784, %v4780
  %v7217 = vpack.c.b16 %v4785, %v4781
  %v7218 = vpack.c.b16 %v4790, %v4786
  %v7219 = vpack.c.b16 %v4791, %v4787
  %v7220 = vpack.c.b16 %v4792, %v4788
  %v7221 = vpack.c.b16 %v4793, %v4789
  %v7222 = vpack.c.b16 %v4798, %v4794
  %v7223 = vpack.c.b16 %v4799, %v4795
  %v7224 = vpack.c.b16 %v4800, %v4796
  %v7225 = vpack.c.b16 %v4801, %v4797
  %v7226 = vpack.c.b16 %v4806, %v4802
  %v7227 = vpack.c.b16 %v4807, %v4803
  %v7228 = vpack.c.b16 %v4808, %v4804
  %v7229 = vpack.c.b16 %v4809, %v4805
  %v7230 = vpack.c.b16 %v4814, %v4810
  %v7231 = vpack.c.b16 %v4815, %v4811
  %v7232 = vpack.c.b16 %v4816, %v4812
  %v7233 = vpack.c.b16 %v4817, %v4813
  %v7234 = vpack.c.b16 %v4822, %v4818
  %v7235 = vpack.c.b16 %v4823, %v4819
  %v7236 = vpack.c.b16 %v4824, %v4820
  %v7237 = vpack.c.b16 %v4825, %v4821
  %v7238 = vpack.c.b16 %v4830, %v4826
  %v7239 = vpack.c.b16 %v4831, %v4827
  %v7240 = vpack.c.b16 %v4832, %v4828
  %v7241 = vpack.c.b16 %v4833, %v4829
  %v7242 = vpack.c.b16 %v4838, %v4834
  %v7243 = vpack.c.b16 %v4839, %v4835
  %v7244 = vpack.c.b16 %v4840, %v4836
  %v7245 = vpack.c.b16 %v4841, %v4837
  %v7246 = vpack.c.b16 %v4846, %v4842
  %v7247 = vpack.c.b16 %v4847, %v4843
  %v7248 = vpack.c.b16 %v4848, %v4844
  %v7249 = vpack.c.b16 %v4849, %v4845
  %v7250 = vpack.c.b16 %v4854, %v4850
  %v7251 = vpack.c.b16 %v4855, %v4851
  %v7252 = vpack.c.b16 %v4856, %v4852
  %v7253 = vpack.c.b16 %v4857, %v4853
  %v7254 = vpack.c.b16 %v4862, %v4858
  %v7255 = vpack.c.b16 %v4863, %v4859
  %v7256 = vpack.c.b16 %v4864, %v4860
  %v7257 = vpack.c.b16 %v4865, %v4861
  %v7258 = vpack.c.b16 %v4870, %v4866
  %v7259 = vpack.c.b16 %v4871, %v4867
  %v7260 = vpack.c.b16 %v4872, %v4868
  %v7261 = vpack.c.b16 %v4873, %v4869
  %v7262 = vpack.c.b16 %v4878, %v4874
  %v7263 = vpack.c.b16 %v4879, %v4875
  %v7264 = vpack.c.b16 %v4880, %v4876
  %v7265 = vpack.c.b16 %v4881, %v4877
  %v7266 = vpack.c.b16 %v4886, %v4882
  %v7267 = vpack.c.b16 %v4887, %v4883
  %v7268 = vpack.c.b16 %v4888, %v4884
  %v7269 = vpack.c.b16 %v4889, %v4885
  %v7270 = vpack.c.b16 %v4894, %v4890
  %v7271 = vpack.c.b16 %v4895, %v4891
  %v7272 = vpack.c.b16 %v4896, %v4892
  %v7273 = vpack.c.b16 %v4897, %v4893
  %v7274 = vpack.c.b16 %v4902, %v4898
  %v7275 = vpack.c.b16 %v4903, %v4899
  %v7276 = vpack.c.b16 %v4904, %v4900
  %v7277 = vpack.c.b16 %v4905, %v4901
  %v7278 = vpack.c.b16 %v4910, %v4906
  %v7279 = vpack.c.b16 %v4911, %v4907
  %v7280 = vpack.c.b16 %v4912, %v4908
  %v7281 = vpack.c.b16 %v4913, %v4909
  %v7282 = vpack.c.b16 %v4918, %v4914
  %v7283 = vpack.c.b16 %v4919, %v4915
  %v7284 = vpack.c.b16 %v4920, %v4916
  %v7285 = vpack.c.b16 %v4921, %v4917
  %v7286 = vpack.c.b16 %v4926, %v4922
  %v7287 = vpack.c.b16 %v4927, %v4923
  %v7288 = vpack.c.b16 %v4928, %v4924
  %v7289 = vpack.c.b16 %v4929, %v4925
  %v7290 = vpack.c.b16 %v4934, %v4930
  %v7291 = vpack.c.b16 %v4935, %v4931
  %v7292 = vpack.c.b16 %v4936, %v4932
  %v7293 = vpack.c.b16 %v4937, %v4933
  %v7294 = vpack.c.b16 %v4942, %v4938
  %v7295 = vpack.c.b16 %v4943, %v4939
  %v7296 = vpack.c.b16 %v4944, %v4940
  %v7297 = vpack.c.b16 %v4945, %v4941
  %v7298 = vpack.c.b16 %v4950, %v4946
  %v7299 = vpack.c.b16 %v4951, %v4947
  %v7300 = vpack.c.b16 %v4952, %v4948
  %v7301 = vpack.c.b16 %v4953, %v4949
  %v7302 = vpack.c.b16 %v4958, %v4954
  %v7303 = vpack.c.b16 %v4959, %v4955
  %v7304 = vpack.c.b16 %v4960, %v4956
  %v7305 = vpack.c.b16 %v4961, %v4957
  %v7306 = vpack.c.b16 %v4966, %v4962
  %v7307 = vpack.c.b16 %v4967, %v4963
  %v7308 = vpack.c.b16 %v4968, %v4964
  %v7309 = vpack.c.b16 %v4969, %v4965
  %v7310 = vpack.c.b16 %v4974, %v4970
  %v7311 = vpack.c.b16 %v4975, %v4971
  %v7312 = vpack.c.b16 %v4976, %v4972
  %v7313 = vpack.c.b16 %v4977, %v4973
  %v7314 = vpack.c.b16 %v4982, %v4978
  %v7315 = vpack.c.b16 %v4983, %v4979
  %v7316 = vpack.c.b16 %v4984, %v4980
  %v7317 = vpack.c.b16 %v4985, %v4981
  %v7318 = vpack.c.b16 %v4990, %v4986
  %v7319 = vpack.c.b16 %v4991, %v4987
  %v7320 = vpack.c.b16 %v4992, %v4988
  %v7321 = vpack.c.b16 %v4993, %v4989
  %v7322 = vpack.c.b16 %v4998, %v4994
  %v7323 = vpack.c.b16 %v4999, %v4995
  %v7324 = vpack.c.b16 %v5000, %v4996
  %v7325 = vpack.c.b16 %v5001, %v4997
  %v7326 = vpack.c.b16 %v5006, %v5002
  %v7327 = vpack.c.b16 %v5007, %v5003
  %v7328 = vpack.c.b16 %v5008, %v5004
  %v7329 = vpack.c.b16 %v5009, %v5005
  %v7330 = vpack.c.b16 %v5014, %v5010
  %v7331 = vpack.c.b16 %v5015, %v5011
  %v7332 = vpack.c.b16 %v5016, %v5012
  %v7333 = vpack.c.b16 %v5017, %v5013
  %v7334 = vpack.c.b16 %v5022, %v5018
  %v7335 = vpack.c.b16 %v5023, %v5019
  %v7336 = vpack.c.b16 %v5024, %v5020
  %v7337 = vpack.c.b16 %v5025, %v5021
  %v7338 = vpack.c.b16 %v5030, %v5026
  %v7339 = vpack.c.b16 %v5031, %v5027
  %v7340 = vpack.c.b16 %v5032, %v5028
  %v7341 = vpack.c.b16 %v5033, %v5029
  %v7342 = vpack.c.b16 %v5038, %v5034
  %v7343 = vpack.c.b16 %v5039, %v5035
  %v7344 = vpack.c.b16 %v5040, %v5036
  %v7345 = vpack.c.b16 %v5041, %v5037
  %v7346 = vpack.c.b16 %v5046, %v5042
  %v7347 = vpack.c.b16 %v5047, %v5043
  %v7348 = vpack.c.b16 %v5048, %v5044
  %v7349 = vpack.c.b16 %v5049, %v5045
  %v7350 = vpack.c.b16 %v5054, %v5050
  %v7351 = vpack.c.b16 %v5055, %v5051
  %v7352 = vpack.c.b16 %v5056, %v5052
  %v7353 = vpack.c.b16 %v5057, %v5053
  %v7354 = vpack.c.b16 %v5062, %v5058
  %v7355 = vpack.c.b16 %v5063, %v5059
  %v7356 = vpack.c.b16 %v5064, %v5060
  %v7357 = vpack.c.b16 %v5065, %v5061
  %v7358 = vpack.c.b16 %v5070, %v5066
  %v7359 = vpack.c.b16 %v5071, %v5067
  %v7360 = vpack.c.b16 %v5072, %v5068
  %v7361 = vpack.c.b16 %v5073, %v5069
  %v7362 = vpack.c.b16 %v5078, %v5074
  %v7363 = vpack.c.b16 %v5079, %v5075
  %v7364 = vpack.c.b16 %v5080, %v5076
  %v7365 = vpack.c.b16 %v5081, %v5077
  %v7366 = vpack.c.b16 %v5086, %v5082
  %v7367 = vpack.c.b16 %v5087, %v5083
  %v7368 = vpack.c.b16 %v5088, %v5084
  %v7369 = vpack.c.b16 %v5089, %v5085
  %v7370 = vpack.c.b16 %v5094, %v5090
  %v7371 = vpack.c.b16 %v5095, %v5091
  %v7372 = vpack.c.b16 %v5096, %v5092
  %v7373 = vpack.c.b16 %v5097, %v5093
  %v7374 = vpack.c.b16 %v5102, %v5098
  %v7375 = vpack.c.b16 %v5103, %v5099
  %v7376 = vpack.c.b16 %v5104, %v5100
  %v7377 = vpack.c.b16 %v5105, %v5101
  %v7378 = vpack.c.b16 %v5110, %v5106
  %v7379 = vpack.c.b16 %v5111, %v5107
  %v7380 = vpack.c.b16 %v5112, %v5108
  %v7381 = vpack.c.b16 %v5113, %v5109
  %v7382 = vpack.c.b16 %v5118, %v5114
  %v7383 = vpack.c.b16 %v5119, %v5115
  %v7384 = vpack.c.b16 %v5120, %v5116
  %v7385 = vpack.c.b16 %v5121, %v5117
  %v7386 = vpack.c.b16 %v5126, %v5122
  %v7387 = vpack.c.b16 %v5127, %v5123
  %v7388 = vpack.c.b16 %v5128, %v5124
  %v7389 = vpack.c.b16 %v5129, %v5125
  %v7390 = vpack.c.b16 %v5134, %v5130
  %v7391 = vpack.c.b16 %v5135, %v5131
  %v7392 = vpack.c.b16 %v5136, %v5132
  %v7393 = vpack.c.b16 %v5137, %v5133
  %v7394 = vpack.c.b16 %v5142, %v5138
  %v7395 = vpack.c.b16 %v5143, %v5139
  %v7396 = vpack.c.b16 %v5144, %v5140
  %v7397 = vpack.c.b16 %v5145, %v5141
  %v7398 = vpack.c.b16 %v5150, %v5146
  %v7399 = vpack.c.b16 %v5151, %v5147
  %v7400 = vpack.c.b16 %v5152, %v5148
  %v7401 = vpack.c.b16 %v5153, %v5149
  %v7402 = vpack.c.b16 %v5158, %v5154
  %v7403 = vpack.c.b16 %v5159, %v5155
  %v7404 = vpack.c.b16 %v5160, %v5156
  %v7405 = vpack.c.b16 %v5161, %v5157
  %v7406 = vpack.c.b16 %v5166, %v5162
  %v7407 = vpack.c.b16 %v5167, %v5163
  %v7408 = vpack.c.b16 %v5168, %v5164
  %v7409 = vpack.c.b16 %v5169, %v5165
  %v7410 = vpack.c.b16 %v5174, %v5170
  %v7411 = vpack.c.b16 %v5175, %v5171
  %v7412 = vpack.c.b16 %v5176, %v5172
  %v7413 = vpack.c.b16 %v5177, %v5173
  %v7414 = vpack.c.b16 %v5182, %v5178
  %v7415 = vpack.c.b16 %v5183, %v5179
  %v7416 = vpack.c.b16 %v5184, %v5180
  %v7417 = vpack.c.b16 %v5185, %v5181
  %v7418 = vpack.c.b16 %v5190, %v5186
  %v7419 = vpack.c.b16 %v5191, %v5187
  %v7420 = vpack.c.b16 %v5192, %v5188
  %v7421 = vpack.c.b16 %v5193, %v5189
  %v7422 = vpack.c.b16 %v5198, %v5194
  %v7423 = vpack.c.b16 %v5199, %v5195
  %v7424 = vpack.c.b16 %v5200, %v5196
  %v7425 = vpack.c.b16 %v5201, %v5197
  %v7426 = vpack.c.b16 %v5206, %v5202
  %v7427 = vpack.c.b16 %v5207, %v5203
  %v7428 = vpack.c.b16 %v5208, %v5204
  %v7429 = vpack.c.b16 %v5209, %v5205
  %v7430 = vpack.c.b16 %v5214, %v5210
  %v7431 = vpack.c.b16 %v5215, %v5211
  %v7432 = vpack.c.b16 %v5216, %v5212
  %v7433 = vpack.c.b16 %v5217, %v5213
  %v7434 = vpack.c.b16 %v5222, %v5218
  %v7435 = vpack.c.b16 %v5223, %v5219
  %v7436 = vpack.c.b16 %v5224, %v5220
  %v7437 = vpack.c.b16 %v5225, %v5221
  %v7438 = vpack.c.b16 %v5230, %v5226
  %v7439 = vpack.c.b16 %v5231, %v5227
  %v7440 = vpack.c.b16 %v5232, %v5228
  %v7441 = vpack.c.b16 %v5233, %v5229
  %v7442 = vpack.c.b16 %v5238, %v5234
  %v7443 = vpack.c.b16 %v5239, %v5235
  %v7444 = vpack.c.b16 %v5240, %v5236
  %v7445 = vpack.c.b16 %v5241, %v5237
  %v7446 = vpack.c.b16 %v5246, %v5242
  %v7447 = vpack.c.b16 %v5247, %v5243
  %v7448 = vpack.c.b16 %v5248, %v5244
  %v7449 = vpack.c.b16 %v5249, %v5245
  %v7450 = vpack.c.b16 %v5254, %v5250
  %v7451 = vpack.c.b16 %v5255, %v5251
  %v7452 = vpack.c.b16 %v5256, %v5252
  %v7453 = vpack.c.b16 %v5257, %v5253
  %v7454 = vpack.c.b16 %v5262, %v5258
  %v7455 = vpack.c.b16 %v5263, %v5259
  %v7456 = vpack.c.b16 %v5264, %v5260
  %v7457 = vpack.c.b16 %v5265, %v5261
  %v7458 = vpack.c.b16 %v5270, %v5266
  %v7459 = vpack.c.b16 %v5271, %v5267
  %v7460 = vpack.c.b16 %v5272, %v5268
  %v7461 = vpack.c.b16 %v5273, %v5269
  %v7462 = vpack.c.b16 %v5278, %v5274
  %v7463 = vpack.c.b16 %v5279, %v5275
  %v7464 = vpack.c.b16 %v5280, %v5276
  %v7465 = vpack.c.b16 %v5281, %v5277
  %v7466 = vpack.c.b16 %v5286, %v5282
  %v7467 = vpack.c.b16 %v5287, %v5283
  %v7468 = vpack.c.b16 %v5288, %v5284
  %v7469 = vpack.c.b16 %v5289, %v5285
  %v7470 = vpack.c.b16 %v5294, %v5290
  %v7471 = vpack.c.b16 %v5295, %v5291
  %v7472 = vpack.c.b16 %v5296, %v5292
  %v7473 = vpack.c.b16 %v5297, %v5293
  %v7474 = vpack.c.b16 %v5302, %v5298
  %v7475 = vpack.c.b16 %v5303, %v5299
  %v7476 = vpack.c.b16 %v5304, %v5300
  %v7477 = vpack.c.b16 %v5305, %v5301
  %v7478 = vpack.c.b16 %v5310, %v5306
  %v7479 = vpack.c.b16 %v5311, %v5307
  %v7480 = vpack.c.b16 %v5312, %v5308
  %v7481 = vpack.c.b16 %v5313, %v5309
  %v7482 = vpack.c.b16 %v5318, %v5314
  %v7483 = vpack.c.b16 %v5319, %v5315
  %v7484 = vpack.c.b16 %v5320, %v5316
  %v7485 = vpack.c.b16 %v5321, %v5317
  %v7486 = vpack.c.b16 %v5326, %v5322
  %v7487 = vpack.c.b16 %v5327, %v5323
  %v7488 = vpack.c.b16 %v5328, %v5324
  %v7489 = vpack.c.b16 %v5329, %v5325
  %v7490 = vpack.c.b16 %v5334, %v5330
  %v7491 = vpack.c.b16 %v5335, %v5331
  %v7492 = vpack.c.b16 %v5336, %v5332
  %v7493 = vpack.c.b16 %v5337, %v5333
  %v7494 = vpack.c.b16 %v5342, %v5338
  %v7495 = vpack.c.b16 %v5343, %v5339
  %v7496 = vpack.c.b16 %v5344, %v5340
  %v7497 = vpack.c.b16 %v5345, %v5341
  %v7498 = vpack.c.b16 %v5350, %v5346
  %v7499 = vpack.c.b16 %v5351, %v5347
  %v7500 = vpack.c.b16 %v5352, %v5348
  %v7501 = vpack.c.b16 %v5353, %v5349
  %v7502 = vpack.c.b16 %v5358, %v5354
  %v7503 = vpack.c.b16 %v5359, %v5355
  %v7504 = vpack.c.b16 %v5360, %v5356
  %v7505 = vpack.c.b16 %v5361, %v5357
  %v7506 = vpack.c.b16 %v5366, %v5362
  %v7507 = vpack.c.b16 %v5367, %v5363
  %v7508 = vpack.c.b16 %v5368, %v5364
  %v7509 = vpack.c.b16 %v5369, %v5365
  %v7510 = vpack.c.b16 %v5374, %v5370
  %v7511 = vpack.c.b16 %v5375, %v5371
  %v7512 = vpack.c.b16 %v5376, %v5372
  %v7513 = vpack.c.b16 %v5377, %v5373
  %v7514 = vpack.c.b16 %v5382, %v5378
  %v7515 = vpack.c.b16 %v5383, %v5379
  %v7516 = vpack.c.b16 %v5384, %v5380
  %v7517 = vpack.c.b16 %v5385, %v5381
  %v7518 = vpack.c.b16 %v5390, %v5386
  %v7519 = vpack.c.b16 %v5391, %v5387
  %v7520 = vpack.c.b16 %v5392, %v5388
  %v7521 = vpack.c.b16 %v5393, %v5389
  %v7522 = vpack.c.b16 %v5398, %v5394
  %v7523 = vpack.c.b16 %v5399, %v5395
  %v7524 = vpack.c.b16 %v5400, %v5396
  %v7525 = vpack.c.b16 %v5401, %v5397
  %v7526 = vpack.c.b16 %v5406, %v5402
  %v7527 = vpack.c.b16 %v5407, %v5403
  %v7528 = vpack.c.b16 %v5408, %v5404
  %v7529 = vpack.c.b16 %v5409, %v5405
  %v7530 = vpack.c.b16 %v5414, %v5410
  %v7531 = vpack.c.b16 %v5415, %v5411
  %v7532 = vpack.c.b16 %v5416, %v5412
  %v7533 = vpack.c.b16 %v5417, %v5413
  %v7534 = vpack.c.b16 %v5422, %v5418
  %v7535 = vpack.c.b16 %v5423, %v5419
  %v7536 = vpack.c.b16 %v5424, %v5420
  %v7537 = vpack.c.b16 %v5425, %v5421
  %v7538 = vpack.c.b16 %v5430, %v5426
  %v7539 = vpack.c.b16 %v5431, %v5427
  %v7540 = vpack.c.b16 %v5432, %v5428
  %v7541 = vpack.c.b16 %v5433, %v5429
  %v7542 = vpack.c.b16 %v5438, %v5434
  %v7543 = vpack.c.b16 %v5439, %v5435
  %v7544 = vpack.c.b16 %v5440, %v5436
  %v7545 = vpack.c.b16 %v5441, %v5437
  %v7546 = vpack.c.b16 %v5446, %v5442
  %v7547 = vpack.c.b16 %v5447, %v5443
  %v7548 = vpack.c.b16 %v5448, %v5444
  %v7549 = vpack.c.b16 %v5449, %v5445
  %v7550 = vpack.c.b16 %v5454, %v5450
  %v7551 = vpack.c.b16 %v5455, %v5451
  %v7552 = vpack.c.b16 %v5456, %v5452
  %v7553 = vpack.c.b16 %v5457, %v5453
  %v7554 = vpack.c.b16 %v5462, %v5458
  %v7555 = vpack.c.b16 %v5463, %v5459
  %v7556 = vpack.c.b16 %v5464, %v5460
  %v7557 = vpack.c.b16 %v5465, %v5461
  %v7558 = vpack.c.b16 %v5470, %v5466
  %v7559 = vpack.c.b16 %v5471, %v5467
  %v7560 = vpack.c.b16 %v5472, %v5468
  %v7561 = vpack.c.b16 %v5473, %v5469
  %v7562 = vpack.c.b16 %v5478, %v5474
  %v7563 = vpack.c.b16 %v5479, %v5475
  %v7564 = vpack.c.b16 %v5480, %v5476
  %v7565 = vpack.c.b16 %v5481, %v5477
  %v7566 = vpack.c.b16 %v5486, %v5482
  %v7567 = vpack.c.b16 %v5487, %v5483
  %v7568 = vpack.c.b16 %v5488, %v5484
  %v7569 = vpack.c.b16 %v5489, %v5485
  %v7570 = vpack.c.b16 %v5494, %v5490
  %v7571 = vpack.c.b16 %v5495, %v5491
  %v7572 = vpack.c.b16 %v5496, %v5492
  %v7573 = vpack.c.b16 %v5497, %v5493
  %v7574 = vpack.c.b16 %v5502, %v5498
  %v7575 = vpack.c.b16 %v5503, %v5499
  %v7576 = vpack.c.b16 %v5504, %v5500
  %v7577 = vpack.c.b16 %v5505, %v5501
  %v7578 = vpack.c.b16 %v5510, %v5506
  %v7579 = vpack.c.b16 %v5511, %v5507
  %v7580 = vpack.c.b16 %v5512, %v5508
  %v7581 = vpack.c.b16 %v5513, %v5509
  %v7582 = vpack.c.b16 %v5518, %v5514
  %v7583 = vpack.c.b16 %v5519, %v5515
  %v7584 = vpack.c.b16 %v5520, %v5516
  %v7585 = vpack.c.b16 %v5521, %v5517
  %v7586 = vpack.c.b16 %v5526, %v5522
  %v7587 = vpack.c.b16 %v5527, %v5523
  %v7588 = vpack.c.b16 %v5528, %v5524
  %v7589 = vpack.c.b16 %v5529, %v5525
  %v7590 = vpack.c.b16 %v5534, %v5530
  %v7591 = vpack.c.b16 %v5535, %v5531
  %v7592 = vpack.c.b16 %v5536, %v5532
  %v7593 = vpack.c.b16 %v5537, %v5533
  %v7594 = vpack.c.b16 %v5542, %v5538
  %v7595 = vpack.c.b16 %v5543, %v5539
  %v7596 = vpack.c.b16 %v5544, %v5540
  %v7597 = vpack.c.b16 %v5545, %v5541
  %v7598 = vpack.c.b16 %v5550, %v5546
  %v7599 = vpack.c.b16 %v5551, %v5547
  %v7600 = vpack.c.b16 %v5552, %v5548
  %v7601 = vpack.c.b16 %v5553, %v5549
  %v7602 = vpack.c.b16 %v5558, %v5554
  %v7603 = vpack.c.b16 %v5559, %v5555
  %v7604 = vpack.c.b16 %v5560, %v5556
  %v7605 = vpack.c.b16 %v5561, %v5557
  %v7606 = vpack.c.b16 %v5566, %v5562
  %v7607 = vpack.c.b16 %v5567, %v5563
  %v7608 = vpack.c.b16 %v5568, %v5564
  %v7609 = vpack.c.b16 %v5569, %v5565
  %v7610 = vpack.c.b16 %v5574, %v5570
  %v7611 = vpack.c.b16 %v5575, %v5571
  %v7612 = vpack.c.b16 %v5576, %v5572
  %v7613 = vpack.c.b16 %v5577, %v5573
  %v7614 = vpack.c.b16 %v5582, %v5578
  %v7615 = vpack.c.b16 %v5583, %v5579
  %v7616 = vpack.c.b16 %v5584, %v5580
  %v7617 = vpack.c.b16 %v5585, %v5581
  %v7618 = vpack.c.b16 %v5590, %v5586
  %v7619 = vpack.c.b16 %v5591, %v5587
  %v7620 = vpack.c.b16 %v5592, %v5588
  %v7621 = vpack.c.b16 %v5593, %v5589
  %v7622 = vpack.c.b16 %v5598, %v5594
  %v7623 = vpack.c.b16 %v5599, %v5595
  %v7624 = vpack.c.b16 %v5600, %v5596
  %v7625 = vpack.c.b16 %v5601, %v5597
  %v7626 = vpack.c.b16 %v5606, %v5602
  %v7627 = vpack.c.b16 %v5607, %v5603
  %v7628 = vpack.c.b16 %v5608, %v5604
  %v7629 = vpack.c.b16 %v5609, %v5605
  %v7630 = vpack.c.b16 %v5614, %v5610
  %v7631 = vpack.c.b16 %v5615, %v5611
  %v7632 = vpack.c.b16 %v5616, %v5612
  %v7633 = vpack.c.b16 %v5617, %v5613
  %v7634 = vpack.c.b16 %v5622, %v5618
  %v7635 = vpack.c.b16 %v5623, %v5619
  %v7636 = vpack.c.b16 %v5624, %v5620
  %v7637 = vpack.c.b16 %v5625, %v5621
  %v7638 = vpack.c.b16 %v5630, %v5626
  %v7639 = vpack.c.b16 %v5631, %v5627
  %v7640 = vpack.c.b16 %v5632, %v5628
  %v7641 = vpack.c.b16 %v5633, %v5629
  %v7642 = vpack.c.b16 %v5638, %v5634
  %v7643 = vpack.c.b16 %v5639, %v5635
  %v7644 = vpack.c.b16 %v5640, %v5636
  %v7645 = vpack.c.b16 %v5641, %v5637
  %v7646 = vpack.c.b16 %v5646, %v5642
  %v7647 = vpack.c.b16 %v5647, %v5643
  %v7648 = vpack.c.b16 %v5648, %v5644
  %v7649 = vpack.c.b16 %v5649, %v5645
  %v7650 = vpack.c.b16 %v5654, %v5650
  %v7651 = vpack.c.b16 %v5655, %v5651
  %v7652 = vpack.c.b16 %v5656, %v5652
  %v7653 = vpack.c.b16 %v5657, %v5653
  %v7654 = vpack.c.b16 %v5662, %v5658
  %v7655 = vpack.c.b16 %v5663, %v5659
  %v7656 = vpack.c.b16 %v5664, %v5660
  %v7657 = vpack.c.b16 %v5665, %v5661
  %v7658 = vpack.c.b16 %v5670, %v5666
  %v7659 = vpack.c.b16 %v5671, %v5667
  %v7660 = vpack.c.b16 %v5672, %v5668
  %v7661 = vpack.c.b16 %v5673, %v5669
  %v7662 = vpack.c.b16 %v5678, %v5674
  %v7663 = vpack.c.b16 %v5679, %v5675
  %v7664 = vpack.c.b16 %v5680, %v5676
  %v7665 = vpack.c.b16 %v5681, %v5677
  %v7666 = vpack.c.b16 %v5686, %v5682
  %v7667 = vpack.c.b16 %v5687, %v5683
  %v7668 = vpack.c.b16 %v5688, %v5684
  %v7669 = vpack.c.b16 %v5689, %v5685
  %v7670 = vpack.c.b16 %v5694, %v5690
  %v7671 = vpack.c.b16 %v5695, %v5691
  %v7672 = vpack.c.b16 %v5696, %v5692
  %v7673 = vpack.c.b16 %v5697, %v5693
  %v7674 = vpack.c.b16 %v5702, %v5698
  %v7675 = vpack.c.b16 %v5703, %v5699
  %v7676 = vpack.c.b16 %v5704, %v5700
  %v7677 = vpack.c.b16 %v5705, %v5701
  %v7678 = vpack.c.b16 %v5710, %v5706
  %v7679 = vpack.c.b16 %v5711, %v5707
  %v7680 = vpack.c.b16 %v5712, %v5708
  %v7681 = vpack.c.b16 %v5713, %v5709
  %v7682 = vpack.c.b16 %v5718, %v5714
  %v7683 = vpack.c.b16 %v5719, %v5715
  %v7684 = vpack.c.b16 %v5720, %v5716
  %v7685 = vpack.c.b16 %v5721, %v5717
  %v7686 = vpack.c.b16 %v5726, %v5722
  %v7687 = vpack.c.b16 %v5727, %v5723
  %v7688 = vpack.c.b16 %v5728, %v5724
  %v7689 = vpack.c.b16 %v5729, %v5725
  %v7690 = vpack.c.b16 %v5734, %v5730
  %v7691 = vpack.c.b16 %v5735, %v5731
  %v7692 = vpack.c.b16 %v5736, %v5732
  %v7693 = vpack.c.b16 %v5737, %v5733
  %v7694 = vpack.c.b16 %v5742, %v5738
  %v7695 = vpack.c.b16 %v5743, %v5739
  %v7696 = vpack.c.b16 %v5744, %v5740
  %v7697 = vpack.c.b16 %v5745, %v5741
  %v7698 = vpack.c.b16 %v5750, %v5746
  %v7699 = vpack.c.b16 %v5751, %v5747
  %v7700 = vpack.c.b16 %v5752, %v5748
  %v7701 = vpack.c.b16 %v5753, %v5749
  %v7702 = vpack.c.b16 %v5758, %v5754
  %v7703 = vpack.c.b16 %v5759, %v5755
  %v7704 = vpack.c.b16 %v5760, %v5756
  %v7705 = vpack.c.b16 %v5761, %v5757
  %v7706 = vpack.c.b16 %v5766, %v5762
  %v7707 = vpack.c.b16 %v5767, %v5763
  %v7708 = vpack.c.b16 %v5768, %v5764
  %v7709 = vpack.c.b16 %v5769, %v5765
  %v7710 = vpack.c.b16 %v5774, %v5770
  %v7711 = vpack.c.b16 %v5775, %v5771
  %v7712 = vpack.c.b16 %v5776, %v5772
  %v7713 = vpack.c.b16 %v5777, %v5773
  %v7714 = vpack.c.b16 %v5782, %v5778
  %v7715 = vpack.c.b16 %v5783, %v5779
  %v7716 = vpack.c.b16 %v5784, %v5780
  %v7717 = vpack.c.b16 %v5785, %v5781
  %v7718 = vpack.c.b16 %v5790, %v5786
  %v7719 = vpack.c.b16 %v5791, %v5787
  %v7720 = vpack.c.b16 %v5792, %v5788
  %v7721 = vpack.c.b16 %v5793, %v5789
  %v7722 = vpack.c.b16 %v5798, %v5794
  %v7723 = vpack.c.b16 %v5799, %v5795
  %v7724 = vpack.c.b16 %v5800, %v5796
  %v7725 = vpack.c.b16 %v5801, %v5797
  %v7726 = vpack.c.b16 %v5806, %v5802
  %v7727 = vpack.c.b16 %v5807, %v5803
  %v7728 = vpack.c.b16 %v5808, %v5804
  %v7729 = vpack.c.b16 %v5809, %v5805
  %v7730 = vpack.c.b16 %v5814, %v5810
  %v7731 = vpack.c.b16 %v5815, %v5811
  %v7732 = vpack.c.b16 %v5816, %v5812
  %v7733 = vpack.c.b16 %v5817, %v5813
  %v7734 = vpack.c.b16 %v5822, %v5818
  %v7735 = vpack.c.b16 %v5823, %v5819
  %v7736 = vpack.c.b16 %v5824, %v5820
  %v7737 = vpack.c.b16 %v5825, %v5821
  %v7738 = vpack.c.b16 %v5830, %v5826
  %v7739 = vpack.c.b16 %v5831, %v5827
  %v7740 = vpack.c.b16 %v5832, %v5828
  %v7741 = vpack.c.b16 %v5833, %v5829
  %v7742 = vpack.c.b16 %v5838, %v5834
  %v7743 = vpack.c.b16 %v5839, %v5835
  %v7744 = vpack.c.b16 %v5840, %v5836
  %v7745 = vpack.c.b16 %v5841, %v5837
  %v7746 = vpack.c.b16 %v5846, %v5842
  %v7747 = vpack.c.b16 %v5847, %v5843
  %v7748 = vpack.c.b16 %v5848, %v5844
  %v7749 = vpack.c.b16 %v5849, %v5845
  %v7750 = vpack.c.b16 %v5854, %v5850
  %v7751 = vpack.c.b16 %v5855, %v5851
  %v7752 = vpack.c.b16 %v5856, %v5852
  %v7753 = vpack.c.b16 %v5857, %v5853
  %v7754 = vpack.c.b16 %v5862, %v5858
  %v7755 = vpack.c.b16 %v5863, %v5859
  %v7756 = vpack.c.b16 %v5864, %v5860
  %v7757 = vpack.c.b16 %v5865, %v5861
  %v7758 = vpack.c.b16 %v5870, %v5866
  %v7759 = vpack.c.b16 %v5871, %v5867
  %v7760 = vpack.c.b16 %v5872, %v5868
  %v7761 = vpack.c.b16 %v5873, %v5869
  %v7762 = vpack.c.b16 %v5878, %v5874
  %v7763 = vpack.c.b16 %v5879, %v5875
  %v7764 = vpack.c.b16 %v5880, %v5876
  %v7765 = vpack.c.b16 %v5881, %v5877
  %v7766 = vpack.c.b16 %v5886, %v5882
  %v7767 = vpack.c.b16 %v5887, %v5883
  %v7768 = vpack.c.b16 %v5888, %v5884
  %v7769 = vpack.c.b16 %v5889, %v5885
  %v7770 = vpack.c.b16 %v5894, %v5890
  %v7771 = vpack.c.b16 %v5895, %v5891
  %v7772 = vpack.c.b16 %v5896, %v5892
  %v7773 = vpack.c.b16 %v5897, %v5893
  %v7774 = vpack.c.b16 %v5902, %v5898
  %v7775 = vpack.c.b16 %v5903, %v5899
  %v7776 = vpack.c.b16 %v5904, %v5900
  %v7777 = vpack.c.b16 %v5905, %v5901
  %v7778 = vpack.c.b16 %v5910, %v5906
  %v7779 = vpack.c.b16 %v5911, %v5907
  %v7780 = vpack.c.b16 %v5912, %v5908
  %v7781 = vpack.c.b16 %v5913, %v5909
  %v7782 = vpack.c.b16 %v5918, %v5914
  %v7783 = vpack.c.b16 %v5919, %v5915
  %v7784 = vpack.c.b16 %v5920, %v5916
  %v7785 = vpack.c.b16 %v5921, %v5917
  %v7786 = vpack.c.b16 %v5926, %v5922
  %v7787 = vpack.c.b16 %v5927, %v5923
  %v7788 = vpack.c.b16 %v5928, %v5924
  %v7789 = vpack.c.b16 %v5929, %v5925
  %v7790 = vpack.c.b16 %v5934, %v5930
  %v7791 = vpack.c.b16 %v5935, %v5931
  %v7792 = vpack.c.b16 %v5936, %v5932
  %v7793 = vpack.c.b16 %v5937, %v5933
  %v7794 = vpack.c.b16 %v5942, %v5938
  %v7795 = vpack.c.b16 %v5943, %v5939
  %v7796 = vpack.c.b16 %v5944, %v5940
  %v7797 = vpack.c.b16 %v5945, %v5941
  %v7798 = vpack.c.b16 %v5950, %v5946
  %v7799 = vpack.c.b16 %v5951, %v5947
  %v7800 = vpack.c.b16 %v5952, %v5948
  %v7801 = vpack.c.b16 %v5953, %v5949
  %v7802 = vpack.c.b16 %v5958, %v5954
  %v7803 = vpack.c.b16 %v5959, %v5955
  %v7804 = vpack.c.b16 %v5960, %v5956
  %v7805 = vpack.c.b16 %v5961, %v5957
  %v7806 = vpack.c.b16 %v5966, %v5962
  %v7807 = vpack.c.b16 %v5967, %v5963
  %v7808 = vpack.c.b16 %v5968, %v5964
  %v7809 = vpack.c.b16 %v5969, %v5965
  %v7810 = vpack.c.b16 %v5974, %v5970
  %v7811 = vpack.c.b16 %v5975, %v5971
  %v7812 = vpack.c.b16 %v5976, %v5972
  %v7813 = vpack.c.b16 %v5977, %v5973
  %v7814 = vpack.c.b16 %v5982, %v5978
  %v7815 = vpack.c.b16 %v5983, %v5979
  %v7816 = vpack.c.b16 %v5984, %v5980
  %v7817 = vpack.c.b16 %v5985, %v5981
  %v7818 = vpack.c.b16 %v5990, %v5986
  %v7819 = vpack.c.b16 %v5991, %v5987
  %v7820 = vpack.c.b16 %v5992, %v5988
  %v7821 = vpack.c.b16 %v5993, %v5989
  %v7822 = vpack.c.b16 %v5998, %v5994
  %v7823 = vpack.c.b16 %v5999, %v5995
  %v7824 = vpack.c.b16 %v6000, %v5996
  %v7825 = vpack.c.b16 %v6001, %v5997
  %v7826 = vpack.c.b16 %v6006, %v6002
  %v7827 = vpack.c.b16 %v6007, %v6003
  %v7828 = vpack.c.b16 %v6008, %v6004
  %v7829 = vpack.c.b16 %v6009, %v6005
  %v7830 = vpack.c.b16 %v6014, %v6010
  %v7831 = vpack.c.b16 %v6015, %v6011
  %v7832 = vpack.c.b16 %v6016, %v6012
  %v7833 = vpack.c.b16 %v6017, %v6013
  %v7834 = vpack.c.b16 %v6022, %v6018
  %v7835 = vpack.c.b16 %v6023, %v6019
  %v7836 = vpack.c.b16 %v6024, %v6020
  %v7837 = vpack.c.b16 %v6025, %v6021
  %v7838 = vpack.c.b16 %v6030, %v6026
  %v7839 = vpack.c.b16 %v6031, %v6027
  %v7840 = vpack.c.b16 %v6032, %v6028
  %v7841 = vpack.c.b16 %v6033, %v6029
  %v7842 = vpack.c.b16 %v6038, %v6034
  %v7843 = vpack.c.b16 %v6039, %v6035
  %v7844 = vpack.c.b16 %v6040, %v6036
  %v7845 = vpack.c.b16 %v6041, %v6037
  %v7846 = vpack.c.b16 %v6046, %v6042
  %v7847 = vpack.c.b16 %v6047, %v6043
  %v7848 = vpack.c.b16 %v6048, %v6044
  %v7849 = vpack.c.b16 %v6049, %v6045
  %v7850 = vpack.c.b16 %v6054, %v6050
  %v7851 = vpack.c.b16 %v6055, %v6051
  %v7852 = vpack.c.b16 %v6056, %v6052
  %v7853 = vpack.c.b16 %v6057, %v6053
  %v7854 = vpack.c.b16 %v6062, %v6058
  %v7855 = vpack.c.b16 %v6063, %v6059
  %v7856 = vpack.c.b16 %v6064, %v6060
  %v7857 = vpack.c.b16 %v6065, %v6061
  %v7858 = vpack.c.b16 %v6070, %v6066
  %v7859 = vpack.c.b16 %v6071, %v6067
  %v7860 = vpack.c.b16 %v6072, %v6068
  %v7861 = vpack.c.b16 %v6073, %v6069
  %v7862 = vpack.c.b16 %v6078, %v6074
  %v7863 = vpack.c.b16 %v6079, %v6075
  %v7864 = vpack.c.b16 %v6080, %v6076
  %v7865 = vpack.c.b16 %v6081, %v6077
  %v7866 = vpack.c.b16 %v6086, %v6082
  %v7867 = vpack.c.b16 %v6087, %v6083
  %v7868 = vpack.c.b16 %v6088, %v6084
  %v7869 = vpack.c.b16 %v6089, %v6085
  %v7870 = vpack.c.b16 %v6094, %v6090
  %v7871 = vpack.c.b16 %v6095, %v6091
  %v7872 = vpack.c.b16 %v6096, %v6092
  %v7873 = vpack.c.b16 %v6097, %v6093
  %v7874 = vpack.c.b16 %v6102, %v6098
  %v7875 = vpack.c.b16 %v6103, %v6099
  %v7876 = vpack.c.b16 %v6104, %v6100
  %v7877 = vpack.c.b16 %v6105, %v6101
  %v7878 = vpack.c.b16 %v6110, %v6106
  %v7879 = vpack.c.b16 %v6111, %v6107
  %v7880 = vpack.c.b16 %v6112, %v6108
  %v7881 = vpack.c.b16 %v6113, %v6109
  %v7882 = vpack.c.b16 %v6118, %v6114
  %v7883 = vpack.c.b16 %v6119, %v6115
  %v7884 = vpack.c.b16 %v6120, %v6116
  %v7885 = vpack.c.b16 %v6121, %v6117
  %v7886 = vpack.c.b16 %v6126, %v6122
  %v7887 = vpack.c.b16 %v6127, %v6123
  %v7888 = vpack.c.b16 %v6128, %v6124
  %v7889 = vpack.c.b16 %v6129, %v6125
  %v7890 = vpack.c.b16 %v6134, %v6130
  %v7891 = vpack.c.b16 %v6135, %v6131
  %v7892 = vpack.c.b16 %v6136, %v6132
  %v7893 = vpack.c.b16 %v6137, %v6133
  %v7894 = vpack.c.b16 %v6142, %v6138
  %v7895 = vpack.c.b16 %v6143, %v6139
  %v7896 = vpack.c.b16 %v6144, %v6140
  %v7897 = vpack.c.b16 %v6145, %v6141
  %v7898 = vpack.c.b16 %v6150, %v6146
  %v7899 = vpack.c.b16 %v6151, %v6147
  %v7900 = vpack.c.b16 %v6152, %v6148
  %v7901 = vpack.c.b16 %v6153, %v6149
  %v7902 = vpack.c.b16 %v6158, %v6154
  %v7903 = vpack.c.b16 %v6159, %v6155
  %v7904 = vpack.c.b16 %v6160, %v6156
  %v7905 = vpack.c.b16 %v6161, %v6157
  %v7906 = vpack.c.b16 %v6166, %v6162
  %v7907 = vpack.c.b16 %v6167, %v6163
  %v7908 = vpack.c.b16 %v6168, %v6164
  %v7909 = vpack.c.b16 %v6169, %v6165
  %v7910 = vpack.c.b16 %v6174, %v6170
  %v7911 = vpack.c.b16 %v6175, %v6171
  %v7912 = vpack.c.b16 %v6176, %v6172
  %v7913 = vpack.c.b16 %v6177, %v6173
  %v7914 = vpack.c.b16 %v6182, %v6178
  %v7915 = vpack.c.b16 %v6183, %v6179
  %v7916 = vpack.c.b16 %v6184, %v6180
  %v7917 = vpack.c.b16 %v6185, %v6181
  %v7918 = vpack.c.b16 %v6190, %v6186
  %v7919 = vpack.c.b16 %v6191, %v6187
  %v7920 = vpack.c.b16 %v6192, %v6188
  %v7921 = vpack.c.b16 %v6193, %v6189
  %v7922 = vpack.c.b16 %v6198, %v6194
  %v7923 = vpack.c.b16 %v6199, %v6195
  %v7924 = vpack.c.b16 %v6200, %v6196
  %v7925 = vpack.c.b16 %v6201, %v6197
  %v7926 = vpack.c.b16 %v6206, %v6202
  %v7927 = vpack.c.b16 %v6207, %v6203
  %v7928 = vpack.c.b16 %v6208, %v6204
  %v7929 = vpack.c.b16 %v6209, %v6205
  %v7930 = vpack.c.b16 %v6214, %v6210
  %v7931 = vpack.c.b16 %v6215, %v6211
  %v7932 = vpack.c.b16 %v6216, %v6212
  %v7933 = vpack.c.b16 %v6217, %v6213
  %v7934 = vpack.c.b16 %v6222, %v6218
  %v7935 = vpack.c.b16 %v6223, %v6219
  %v7936 = vpack.c.b16 %v6224, %v6220
  %v7937 = vpack.c.b16 %v6225, %v6221
  %v7938 = vpack.c.b16 %v6230, %v6226
  %v7939 = vpack.c.b16 %v6231, %v6227
  %v7940 = vpack.c.b16 %v6232, %v6228
  %v7941 = vpack.c.b16 %v6233, %v6229
  %v7942 = vpack.c.b16 %v6238, %v6234
  %v7943 = vpack.c.b16 %v6239, %v6235
  %v7944 = vpack.c.b16 %v6240, %v6236
  %v7945 = vpack.c.b16 %v6241, %v6237
  %v7946 = vpack.c.b16 %v6246, %v6242
  %v7947 = vpack.c.b16 %v6247, %v6243
  %v7948 = vpack.c.b16 %v6248, %v6244
  %v7949 = vpack.c.b16 %v6249, %v6245
  %v7950 = vpack.c.b16 %v6254, %v6250
  %v7951 = vpack.c.b16 %v6255, %v6251
  %v7952 = vpack.c.b16 %v6256, %v6252
  %v7953 = vpack.c.b16 %v6257, %v6253
  %v7954 = vpack.c.b16 %v6262, %v6258
  %v7955 = vpack.c.b16 %v6263, %v6259
  %v7956 = vpack.c.b16 %v6264, %v6260
  %v7957 = vpack.c.b16 %v6265, %v6261
  %v7958 = vpack.c.b16 %v6270, %v6266
  %v7959 = vpack.c.b16 %v6271, %v6267
  %v7960 = vpack.c.b16 %v6272, %v6268
  %v7961 = vpack.c.b16 %v6273, %v6269
  %v7962 = vpack.c.b16 %v6278, %v6274
  %v7963 = vpack.c.b16 %v6279, %v6275
  %v7964 = vpack.c.b16 %v6280, %v6276
  %v7965 = vpack.c.b16 %v6281, %v6277
  %v7966 = vpack.c.b16 %v6286, %v6282
  %v7967 = vpack.c.b16 %v6287, %v6283
  %v7968 = vpack.c.b16 %v6288, %v6284
  %v7969 = vpack.c.b16 %v6289, %v6285
  %v7970 = vpack.c.b16 %v6294, %v6290
  %v7971 = vpack.c.b16 %v6295, %v6291
  %v7972 = vpack.c.b16 %v6296, %v6292
  %v7973 = vpack.c.b16 %v6297, %v6293
  %v7974 = vpack.c.b16 %v6302, %v6298
  %v7975 = vpack.c.b16 %v6303, %v6299
  %v7976 = vpack.c.b16 %v6304, %v6300
  %v7977 = vpack.c.b16 %v6305, %v6301
  %v7978 = vpack.c.b16 %v6310, %v6306
  %v7979 = vpack.c.b16 %v6311, %v6307
  %v7980 = vpack.c.b16 %v6312, %v6308
  %v7981 = vpack.c.b16 %v6313, %v6309
  %v7982 = vpack.c.b16 %v6318, %v6314
  %v7983 = vpack.c.b16 %v6319, %v6315
  %v7984 = vpack.c.b16 %v6320, %v6316
  %v7985 = vpack.c.b16 %v6321, %v6317
  %v7986 = vpack.c.b16 %v6326, %v6322
  %v7987 = vpack.c.b16 %v6327, %v6323
  %v7988 = vpack.c.b16 %v6328, %v6324
  %v7989 = vpack.c.b16 %v6329, %v6325
  %v7990 = vpack.c.b16 %v6334, %v6330
  %v7991 = vpack.c.b16 %v6335, %v6331
  %v7992 = vpack.c.b16 %v6336, %v6332
  %v7993 = vpack.c.b16 %v6337, %v6333
  %v7994 = vpack.c.b16 %v6342, %v6338
  %v7995 = vpack.c.b16 %v6343, %v6339
  %v7996 = vpack.c.b16 %v6344, %v6340
  %v7997 = vpack.c.b16 %v6345, %v6341
  %v7998 = vpack.c.b16 %v6350, %v6346
  %v7999 = vpack.c.b16 %v6351, %v6347
  %v8000 = vpack.c.b16 %v6352, %v6348
  %v8001 = vpack.c.b16 %v6353, %v6349
  %v8002 = vpack.c.b16 %v6358, %v6354
  %v8003 = vpack.c.b16 %v6359, %v6355
  %v8004 = vpack.c.b16 %v6360, %v6356
  %v8005 = vpack.c.b16 %v6361, %v6357
  %v8006 = vpack.c.b16 %v6366, %v6362
  %v8007 = vpack.c.b16 %v6367, %v6363
  %v8008 = vpack.c.b16 %v6368, %v6364
  %v8009 = vpack.c.b16 %v6369, %v6365
  %v8010 = vpack.c.b16 %v6374, %v6370
  %v8011 = vpack.c.b16 %v6375, %v6371
  %v8012 = vpack.c.b16 %v6376, %v6372
  %v8013 = vpack.c.b16 %v6377, %v6373
  %v8014 = vpack.c.b16 %v6382, %v6378
  %v8015 = vpack.c.b16 %v6383, %v6379
  %v8016 = vpack.c.b16 %v6384, %v6380
  %v8017 = vpack.c.b16 %v6385, %v6381
  %v8018 = vpack.c.b16 %v6390, %v6386
  %v8019 = vpack.c.b16 %v6391, %v6387
  %v8020 = vpack.c.b16 %v6392, %v6388
  %v8021 = vpack.c.b16 %v6393, %v6389
  %v8022 = vpack.c.b16 %v6398, %v6394
  %v8023 = vpack.c.b16 %v6399, %v6395
  %v8024 = vpack.c.b16 %v6400, %v6396
  %v8025 = vpack.c.b16 %v6401, %v6397
  %v8026 = vpack.c.b16 %v6406, %v6402
  %v8027 = vpack.c.b16 %v6407, %v6403
  %v8028 = vpack.c.b16 %v6408, %v6404
  %v8029 = vpack.c.b16 %v6409, %v6405
  %v8030 = vpack.c.b16 %v6414, %v6410
  %v8031 = vpack.c.b16 %v6415, %v6411
  %v8032 = vpack.c.b16 %v6416, %v6412
  %v8033 = vpack.c.b16 %v6417, %v6413
  %v8034 = vpack.c.b16 %v6422, %v6418
  %v8035 = vpack.c.b16 %v6423, %v6419
  %v8036 = vpack.c.b16 %v6424, %v6420
  %v8037 = vpack.c.b16 %v6425, %v6421
  %v8038 = vpack.c.b16 %v6430, %v6426
  %v8039 = vpack.c.b16 %v6431, %v6427
  %v8040 = vpack.c.b16 %v6432, %v6428
  %v8041 = vpack.c.b16 %v6433, %v6429
  %v8042 = vpack.c.b16 %v6438, %v6434
  %v8043 = vpack.c.b16 %v6439, %v6435
  %v8044 = vpack.c.b16 %v6440, %v6436
  %v8045 = vpack.c.b16 %v6441, %v6437
  %v8046 = vpack.c.b16 %v6446, %v6442
  %v8047 = vpack.c.b16 %v6447, %v6443
  %v8048 = vpack.c.b16 %v6448, %v6444
  %v8049 = vpack.c.b16 %v6449, %v6445
  %v8050 = vpack.c.b16 %v6454, %v6450
  %v8051 = vpack.c.b16 %v6455, %v6451
  %v8052 = vpack.c.b16 %v6456, %v6452
  %v8053 = vpack.c.b16 %v6457, %v6453
  %v8054 = vpack.c.b16 %v6462, %v6458
  %v8055 = vpack.c.b16 %v6463, %v6459
  %v8056 = vpack.c.b16 %v6464, %v6460
  %v8057 = vpack.c.b16 %v6465, %v6461
  %v8058 = vpack.c.b16 %v6470, %v6466
  %v8059 = vpack.c.b16 %v6471, %v6467
  %v8060 = vpack.c.b16 %v6472, %v6468
  %v8061 = vpack.c.b16 %v6473, %v6469
  %v8062 = vpack.c.b16 %v6478, %v6474
  %v8063 = vpack.c.b16 %v6479, %v6475
  %v8064 = vpack.c.b16 %v6480, %v6476
  %v8065 = vpack.c.b16 %v6481, %v6477
  %v8066 = vpack.c.b16 %v6486, %v6482
  %v8067 = vpack.c.b16 %v6487, %v6483
  %v8068 = vpack.c.b16 %v6488, %v6484
  %v8069 = vpack.c.b16 %v6489, %v6485
  %v8070 = vpack.c.b16 %v6494, %v6490
  %v8071 = vpack.c.b16 %v6495, %v6491
  %v8072 = vpack.c.b16 %v6496, %v6492
  %v8073 = vpack.c.b16 %v6497, %v6493
  %v8074 = vpack.c.b16 %v6502, %v6498
  %v8075 = vpack.c.b16 %v6503, %v6499
  %v8076 = vpack.c.b16 %v6504, %v6500
  %v8077 = vpack.c.b16 %v6505, %v6501
  %v8078 = vpack.c.b16 %v6510, %v6506
  %v8079 = vpack.c.b16 %v6511, %v6507
  %v8080 = vpack.c.b16 %v6512, %v6508
  %v8081 = vpack.c.b16 %v6513, %v6509
  %9650 = vmatprep.subr.bf16.mxu0 %v6543
  %9651 = vmatpush1.bf16.msra.mxu0 %v6542
  %9652 = vmatprep.subr.bf16.mxu0 %v6539
  %9653 = vmatpush1.bf16.msra.mxu0 %v6538
  %9654 = vmatprep.subr.bf16.mxu0 %v6535
  %9655 = vmatpush1.bf16.msra.mxu0 %v6534
  %9656 = vmatprep.subr.bf16.mxu0 %v6531
  %9657 = vmatpush1.bf16.msra.mxu0 %v6530
  %9658 = vmatprep.subr.bf16.mxu0 %v6527
  %9659 = vmatpush1.bf16.msra.mxu0 %v6526
  %9660 = vmatprep.subr.bf16.mxu0 %v6523
  %9661 = vmatpush1.bf16.msra.mxu0 %v6522
  %9662 = vmatprep.subr.bf16.mxu0 %v6519
  %9663 = vmatpush1.bf16.msra.mxu0 %v6518
  %9664 = vmatprep.subr.bf16.mxu0 %v6515
  %9665 = vmatpush1.bf16.msra.mxu0 %v6514
  %9666 = vmatprep.subr.bf16.mxu0 %v6575
  %9667 = vmatpush2.bf16.msra.mxu0 %v6574
  %9668 = vmatprep.subr.bf16.mxu0 %v6571
  %9669 = vmatpush2.bf16.msra.mxu0 %v6570
  %9670 = vmatprep.subr.bf16.mxu0 %v6567
  %9671 = vmatpush2.bf16.msra.mxu0 %v6566
  %9672 = vmatprep.subr.bf16.mxu0 %v6563
  %9673 = vmatpush2.bf16.msra.mxu0 %v6562
  %9674 = vmatprep.subr.bf16.mxu0 %v6559
  %9675 = vmatpush2.bf16.msra.mxu0 %v6558
  %9676 = vmatprep.subr.bf16.mxu0 %v6555
  %9677 = vmatpush2.bf16.msra.mxu0 %v6554
  %9678 = vmatprep.subr.bf16.mxu0 %v6551
  %9679 = vmatpush2.bf16.msra.mxu0 %v6550
  %9680 = vmatprep.subr.bf16.mxu0 %v6547
  %9681 = vmatpush2.bf16.msra.mxu0 %v6546
  %9682 = vmatprep.mubr.bf16.mxu0 %v1713
  %9683 = vmatmul.mubr.bf16.gmra.mxu0 %v1712
  %v9684 = vpop.f32.mrf.mxu0
  %v9685 = vadd.f32 %v1621, %v9684
  %v9686 = vpop.f32.mrf.mxu0
  %v9687 = vadd.f32 %v1625, %v9686
  %v9688 = vpop.f32.mrf.mxu0
  %v9689 = vpop.f32.mrf.mxu0
  %9690 = vdwg.mxu0
  %9691 = vmatprep.subr.bf16.mxu0 %v6607
  %9692 = vmatpush1.bf16.msra.mxu0 %v6606
  %9693 = vmatprep.subr.bf16.mxu0 %v6603
  %9694 = vmatpush1.bf16.msra.mxu0 %v6602
  %9695 = vmatprep.subr.bf16.mxu0 %v6599
  %9696 = vmatpush1.bf16.msra.mxu0 %v6598
  %9697 = vmatprep.subr.bf16.mxu0 %v6595
  %9698 = vmatpush1.bf16.msra.mxu0 %v6594
  %9699 = vmatprep.subr.bf16.mxu0 %v6591
  %9700 = vmatpush1.bf16.msra.mxu0 %v6590
  %9701 = vmatprep.subr.bf16.mxu0 %v6587
  %9702 = vmatpush1.bf16.msra.mxu0 %v6586
  %9703 = vmatprep.subr.bf16.mxu0 %v6583
  %9704 = vmatpush1.bf16.msra.mxu0 %v6582
  %9705 = vmatprep.subr.bf16.mxu0 %v6579
  %9706 = vmatpush1.bf16.msra.mxu0 %v6578
  %9707 = vmatprep.subr.bf16.mxu0 %v6639
  %9708 = vmatpush2.bf16.msra.mxu0 %v6638
  %9709 = vmatprep.subr.bf16.mxu0 %v6635
  %9710 = vmatpush2.bf16.msra.mxu0 %v6634
  %9711 = vmatprep.subr.bf16.mxu0 %v6631
  %9712 = vmatpush2.bf16.msra.mxu0 %v6630
  %9713 = vmatprep.subr.bf16.mxu0 %v6627
  %9714 = vmatpush2.bf16.msra.mxu0 %v6626
  %9715 = vmatprep.subr.bf16.mxu0 %v6623
  %9716 = vmatpush2.bf16.msra.mxu0 %v6622
  %9717 = vmatprep.subr.bf16.mxu0 %v6619
  %9718 = vmatpush2.bf16.msra.mxu0 %v6618
  %9719 = vmatprep.subr.bf16.mxu0 %v6615
  %9720 = vmatpush2.bf16.msra.mxu0 %v6614
  %9721 = vmatprep.subr.bf16.mxu0 %v6611
  %9722 = vmatpush2.bf16.msra.mxu0 %v6610
  %9723 = vmatprep.mubr.bf16.mxu0 %v1715
  %9724 = vmatmul.mubr.bf16.gmra.mxu0 %v1714
  %v9725 = vpop.f32.mrf.mxu0
  %v9726 = vadd.f32 %v9685, %v9725
  %v9727 = vpop.f32.mrf.mxu0
  %v9728 = vadd.f32 %v9687, %v9727
  %v9729 = vpop.f32.mrf.mxu0
  %v9730 = vpop.f32.mrf.mxu0
  %9731 = vdwg.mxu0
  %9732 = vmatprep.subr.bf16.mxu0 %v6671
  %9733 = vmatpush1.bf16.msra.mxu0 %v6670
  %9734 = vmatprep.subr.bf16.mxu0 %v6667
  %9735 = vmatpush1.bf16.msra.mxu0 %v6666
  %9736 = vmatprep.subr.bf16.mxu0 %v6663
  %9737 = vmatpush1.bf16.msra.mxu0 %v6662
  %9738 = vmatprep.subr.bf16.mxu0 %v6659
  %9739 = vmatpush1.bf16.msra.mxu0 %v6658
  %9740 = vmatprep.subr.bf16.mxu0 %v6655
  %9741 = vmatpush1.bf16.msra.mxu0 %v6654
  %9742 = vmatprep.subr.bf16.mxu0 %v6651
  %9743 = vmatpush1.bf16.msra.mxu0 %v6650
  %9744 = vmatprep.subr.bf16.mxu0 %v6647
  %9745 = vmatpush1.bf16.msra.mxu0 %v6646
  %9746 = vmatprep.subr.bf16.mxu0 %v6643
  %9747 = vmatpush1.bf16.msra.mxu0 %v6642
  %9748 = vmatprep.subr.bf16.mxu0 %v6703
  %9749 = vmatpush2.bf16.msra.mxu0 %v6702
  %9750 = vmatprep.subr.bf16.mxu0 %v6699
  %9751 = vmatpush2.bf16.msra.mxu0 %v6698
  %9752 = vmatprep.subr.bf16.mxu0 %v6695
  %9753 = vmatpush2.bf16.msra.mxu0 %v6694
  %9754 = vmatprep.subr.bf16.mxu0 %v6691
  %9755 = vmatpush2.bf16.msra.mxu0 %v6690
  %9756 = vmatprep.subr.bf16.mxu0 %v6687
  %9757 = vmatpush2.bf16.msra.mxu0 %v6686
  %9758 = vmatprep.subr.bf16.mxu0 %v6683
  %9759 = vmatpush2.bf16.msra.mxu0 %v6682
  %9760 = vmatprep.subr.bf16.mxu0 %v6679
  %9761 = vmatpush2.bf16.msra.mxu0 %v6678
  %9762 = vmatprep.subr.bf16.mxu0 %v6675
  %9763 = vmatpush2.bf16.msra.mxu0 %v6674
  %9764 = vmatprep.mubr.bf16.mxu0 %v1717
  %9765 = vmatmul.mubr.bf16.gmra.mxu0 %v1716
  %v9766 = vpop.f32.mrf.mxu0
  %v9767 = vadd.f32 %v9726, %v9766
  %v9768 = vpop.f32.mrf.mxu0
  %v9769 = vadd.f32 %v9728, %v9768
  %v9770 = vpop.f32.mrf.mxu0
  %v9771 = vpop.f32.mrf.mxu0
  %9772 = vdwg.mxu0
  %9773 = vmatprep.subr.bf16.mxu0 %v6735
  %9774 = vmatpush1.bf16.msra.mxu0 %v6734
  %9775 = vmatprep.subr.bf16.mxu0 %v6731
  %9776 = vmatpush1.bf16.msra.mxu0 %v6730
  %9777 = vmatprep.subr.bf16.mxu0 %v6727
  %9778 = vmatpush1.bf16.msra.mxu0 %v6726
  %9779 = vmatprep.subr.bf16.mxu0 %v6723
  %9780 = vmatpush1.bf16.msra.mxu0 %v6722
  %9781 = vmatprep.subr.bf16.mxu0 %v6719
  %9782 = vmatpush1.bf16.msra.mxu0 %v6718
  %9783 = vmatprep.subr.bf16.mxu0 %v6715
  %9784 = vmatpush1.bf16.msra.mxu0 %v6714
  %9785 = vmatprep.subr.bf16.mxu0 %v6711
  %9786 = vmatpush1.bf16.msra.mxu0 %v6710
  %9787 = vmatprep.subr.bf16.mxu0 %v6707
  %9788 = vmatpush1.bf16.msra.mxu0 %v6706
  %9789 = vmatprep.subr.bf16.mxu0 %v6767
  %9790 = vmatpush2.bf16.msra.mxu0 %v6766
  %9791 = vmatprep.subr.bf16.mxu0 %v6763
  %9792 = vmatpush2.bf16.msra.mxu0 %v6762
  %9793 = vmatprep.subr.bf16.mxu0 %v6759
  %9794 = vmatpush2.bf16.msra.mxu0 %v6758
  %9795 = vmatprep.subr.bf16.mxu0 %v6755
  %9796 = vmatpush2.bf16.msra.mxu0 %v6754
  %9797 = vmatprep.subr.bf16.mxu0 %v6751
  %9798 = vmatpush2.bf16.msra.mxu0 %v6750
  %9799 = vmatprep.subr.bf16.mxu0 %v6747
  %9800 = vmatpush2.bf16.msra.mxu0 %v6746
  %9801 = vmatprep.subr.bf16.mxu0 %v6743
  %9802 = vmatpush2.bf16.msra.mxu0 %v6742
  %9803 = vmatprep.subr.bf16.mxu0 %v6739
  %9804 = vmatpush2.bf16.msra.mxu0 %v6738
  %9805 = vmatprep.mubr.bf16.mxu0 %v1719
  %9806 = vmatmul.mubr.bf16.gmra.mxu0 %v1718
  %v9807 = vpop.f32.mrf.mxu0
  %v9808 = vadd.f32 %v9767, %v9807
  %v9809 = vpop.f32.mrf.mxu0
  %v9810 = vadd.f32 %v9769, %v9809
  %v9811 = vpop.f32.mrf.mxu0
  %v9812 = vpop.f32.mrf.mxu0
  %9813 = vdwg.mxu0
  %9814 = vmatprep.subr.bf16.mxu0 %v6799
  %9815 = vmatpush1.bf16.msra.mxu0 %v6798
  %9816 = vmatprep.subr.bf16.mxu0 %v6795
  %9817 = vmatpush1.bf16.msra.mxu0 %v6794
  %9818 = vmatprep.subr.bf16.mxu0 %v6791
  %9819 = vmatpush1.bf16.msra.mxu0 %v6790
  %9820 = vmatprep.subr.bf16.mxu0 %v6787
  %9821 = vmatpush1.bf16.msra.mxu0 %v6786
  %9822 = vmatprep.subr.bf16.mxu0 %v6783
  %9823 = vmatpush1.bf16.msra.mxu0 %v6782
  %9824 = vmatprep.subr.bf16.mxu0 %v6779
  %9825 = vmatpush1.bf16.msra.mxu0 %v6778
  %9826 = vmatprep.subr.bf16.mxu0 %v6775
  %9827 = vmatpush1.bf16.msra.mxu0 %v6774
  %9828 = vmatprep.subr.bf16.mxu0 %v6771
  %9829 = vmatpush1.bf16.msra.mxu0 %v6770
  %9830 = vmatprep.subr.bf16.mxu0 %v6831
  %9831 = vmatpush2.bf16.msra.mxu0 %v6830
  %9832 = vmatprep.subr.bf16.mxu0 %v6827
  %9833 = vmatpush2.bf16.msra.mxu0 %v6826
  %9834 = vmatprep.subr.bf16.mxu0 %v6823
  %9835 = vmatpush2.bf16.msra.mxu0 %v6822
  %9836 = vmatprep.subr.bf16.mxu0 %v6819
  %9837 = vmatpush2.bf16.msra.mxu0 %v6818
  %9838 = vmatprep.subr.bf16.mxu0 %v6815
  %9839 = vmatpush2.bf16.msra.mxu0 %v6814
  %9840 = vmatprep.subr.bf16.mxu0 %v6811
  %9841 = vmatpush2.bf16.msra.mxu0 %v6810
  %9842 = vmatprep.subr.bf16.mxu0 %v6807
  %9843 = vmatpush2.bf16.msra.mxu0 %v6806
  %9844 = vmatprep.subr.bf16.mxu0 %v6803
  %9845 = vmatpush2.bf16.msra.mxu0 %v6802
  %9846 = vmatprep.mubr.bf16.mxu0 %v1721
  %9847 = vmatmul.mubr.bf16.gmra.mxu0 %v1720
  %v9848 = vpop.f32.mrf.mxu0
  %v9849 = vadd.f32 %v9808, %v9848
  %v9850 = vpop.f32.mrf.mxu0
  %v9851 = vadd.f32 %v9810, %v9850
  %v9852 = vpop.f32.mrf.mxu0
  %v9853 = vpop.f32.mrf.mxu0
  %9854 = vdwg.mxu0
  %9855 = vmatprep.subr.bf16.mxu0 %v6863
  %9856 = vmatpush1.bf16.msra.mxu0 %v6862
  %9857 = vmatprep.subr.bf16.mxu0 %v6859
  %9858 = vmatpush1.bf16.msra.mxu0 %v6858
  %9859 = vmatprep.subr.bf16.mxu0 %v6855
  %9860 = vmatpush1.bf16.msra.mxu0 %v6854
  %9861 = vmatprep.subr.bf16.mxu0 %v6851
  %9862 = vmatpush1.bf16.msra.mxu0 %v6850
  %9863 = vmatprep.subr.bf16.mxu0 %v6847
  %9864 = vmatpush1.bf16.msra.mxu0 %v6846
  %9865 = vmatprep.subr.bf16.mxu0 %v6843
  %9866 = vmatpush1.bf16.msra.mxu0 %v6842
  %9867 = vmatprep.subr.bf16.mxu0 %v6839
  %9868 = vmatpush1.bf16.msra.mxu0 %v6838
  %9869 = vmatprep.subr.bf16.mxu0 %v6835
  %9870 = vmatpush1.bf16.msra.mxu0 %v6834
  %9871 = vmatprep.subr.bf16.mxu0 %v6895
  %9872 = vmatpush2.bf16.msra.mxu0 %v6894
  %9873 = vmatprep.subr.bf16.mxu0 %v6891
  %9874 = vmatpush2.bf16.msra.mxu0 %v6890
  %9875 = vmatprep.subr.bf16.mxu0 %v6887
  %9876 = vmatpush2.bf16.msra.mxu0 %v6886
  %9877 = vmatprep.subr.bf16.mxu0 %v6883
  %9878 = vmatpush2.bf16.msra.mxu0 %v6882
  %9879 = vmatprep.subr.bf16.mxu0 %v6879
  %9880 = vmatpush2.bf16.msra.mxu0 %v6878
  %9881 = vmatprep.subr.bf16.mxu0 %v6875
  %9882 = vmatpush2.bf16.msra.mxu0 %v6874
  %9883 = vmatprep.subr.bf16.mxu0 %v6871
  %9884 = vmatpush2.bf16.msra.mxu0 %v6870
  %9885 = vmatprep.subr.bf16.mxu0 %v6867
  %9886 = vmatpush2.bf16.msra.mxu0 %v6866
  %9887 = vmatprep.mubr.bf16.mxu0 %v1723
  %9888 = vmatmul.mubr.bf16.gmra.mxu0 %v1722
  %v9889 = vpop.f32.mrf.mxu0
  %v9890 = vadd.f32 %v9849, %v9889
  %v9891 = vpop.f32.mrf.mxu0
  %v9892 = vadd.f32 %v9851, %v9891
  %v9893 = vpop.f32.mrf.mxu0
  %v9894 = vpop.f32.mrf.mxu0
  %9895 = vdwg.mxu0
  %9896 = vmatprep.subr.bf16.mxu0 %v6927
  %9897 = vmatpush1.bf16.msra.mxu0 %v6926
  %9898 = vmatprep.subr.bf16.mxu0 %v6923
  %9899 = vmatpush1.bf16.msra.mxu0 %v6922
  %9900 = vmatprep.subr.bf16.mxu0 %v6919
  %9901 = vmatpush1.bf16.msra.mxu0 %v6918
  %9902 = vmatprep.subr.bf16.mxu0 %v6915
  %9903 = vmatpush1.bf16.msra.mxu0 %v6914
  %9904 = vmatprep.subr.bf16.mxu0 %v6911
  %9905 = vmatpush1.bf16.msra.mxu0 %v6910
  %9906 = vmatprep.subr.bf16.mxu0 %v6907
  %9907 = vmatpush1.bf16.msra.mxu0 %v6906
  %9908 = vmatprep.subr.bf16.mxu0 %v6903
  %9909 = vmatpush1.bf16.msra.mxu0 %v6902
  %9910 = vmatprep.subr.bf16.mxu0 %v6899
  %9911 = vmatpush1.bf16.msra.mxu0 %v6898
  %9912 = vmatprep.subr.bf16.mxu0 %v6959
  %9913 = vmatpush2.bf16.msra.mxu0 %v6958
  %9914 = vmatprep.subr.bf16.mxu0 %v6955
  %9915 = vmatpush2.bf16.msra.mxu0 %v6954
  %9916 = vmatprep.subr.bf16.mxu0 %v6951
  %9917 = vmatpush2.bf16.msra.mxu0 %v6950
  %9918 = vmatprep.subr.bf16.mxu0 %v6947
  %9919 = vmatpush2.bf16.msra.mxu0 %v6946
  %9920 = vmatprep.subr.bf16.mxu0 %v6943
  %9921 = vmatpush2.bf16.msra.mxu0 %v6942
  %9922 = vmatprep.subr.bf16.mxu0 %v6939
  %9923 = vmatpush2.bf16.msra.mxu0 %v6938
  %9924 = vmatprep.subr.bf16.mxu0 %v6935
  %9925 = vmatpush2.bf16.msra.mxu0 %v6934
  %9926 = vmatprep.subr.bf16.mxu0 %v6931
  %9927 = vmatpush2.bf16.msra.mxu0 %v6930
  %9928 = vmatprep.mubr.bf16.mxu0 %v1725
  %9929 = vmatmul.mubr.bf16.gmra.mxu0 %v1724
  %v9930 = vpop.f32.mrf.mxu0
  %v9931 = vadd.f32 %v9890, %v9930
  %v9932 = vpop.f32.mrf.mxu0
  %v9933 = vadd.f32 %v9892, %v9932
  %v9934 = vpop.f32.mrf.mxu0
  %v9935 = vpop.f32.mrf.mxu0
  %9936 = vdwg.mxu0
  %9937 = vmatprep.subr.bf16.mxu0 %v6991
  %9938 = vmatpush1.bf16.msra.mxu0 %v6990
  %9939 = vmatprep.subr.bf16.mxu0 %v6987
  %9940 = vmatpush1.bf16.msra.mxu0 %v6986
  %9941 = vmatprep.subr.bf16.mxu0 %v6983
  %9942 = vmatpush1.bf16.msra.mxu0 %v6982
  %9943 = vmatprep.subr.bf16.mxu0 %v6979
  %9944 = vmatpush1.bf16.msra.mxu0 %v6978
  %9945 = vmatprep.subr.bf16.mxu0 %v6975
  %9946 = vmatpush1.bf16.msra.mxu0 %v6974
  %9947 = vmatprep.subr.bf16.mxu0 %v6971
  %9948 = vmatpush1.bf16.msra.mxu0 %v6970
  %9949 = vmatprep.subr.bf16.mxu0 %v6967
  %9950 = vmatpush1.bf16.msra.mxu0 %v6966
  %9951 = vmatprep.subr.bf16.mxu0 %v6963
  %9952 = vmatpush1.bf16.msra.mxu0 %v6962
  %9953 = vmatprep.subr.bf16.mxu0 %v7023
  %9954 = vmatpush2.bf16.msra.mxu0 %v7022
  %9955 = vmatprep.subr.bf16.mxu0 %v7019
  %9956 = vmatpush2.bf16.msra.mxu0 %v7018
  %9957 = vmatprep.subr.bf16.mxu0 %v7015
  %9958 = vmatpush2.bf16.msra.mxu0 %v7014
  %9959 = vmatprep.subr.bf16.mxu0 %v7011
  %9960 = vmatpush2.bf16.msra.mxu0 %v7010
  %9961 = vmatprep.subr.bf16.mxu0 %v7007
  %9962 = vmatpush2.bf16.msra.mxu0 %v7006
  %9963 = vmatprep.subr.bf16.mxu0 %v7003
  %9964 = vmatpush2.bf16.msra.mxu0 %v7002
  %9965 = vmatprep.subr.bf16.mxu0 %v6999
  %9966 = vmatpush2.bf16.msra.mxu0 %v6998
  %9967 = vmatprep.subr.bf16.mxu0 %v6995
  %9968 = vmatpush2.bf16.msra.mxu0 %v6994
  %9969 = vmatprep.mubr.bf16.mxu0 %v1727
  %9970 = vmatmul.mubr.bf16.gmra.mxu0 %v1726
  %v9971 = vpop.f32.mrf.mxu0
  %v9972 = vadd.f32 %v9931, %v9971
  %v9973 = vpop.f32.mrf.mxu0
  %v9974 = vadd.f32 %v9933, %v9973
  %v9975 = vpop.f32.mrf.mxu0
  %v9976 = vpop.f32.mrf.mxu0
  %9977 = vdwg.mxu0
  %9978 = vmatprep.subr.bf16.mxu0 %v7055
  %9979 = vmatpush1.bf16.msra.mxu0 %v7054
  %9980 = vmatprep.subr.bf16.mxu0 %v7051
  %9981 = vmatpush1.bf16.msra.mxu0 %v7050
  %9982 = vmatprep.subr.bf16.mxu0 %v7047
  %9983 = vmatpush1.bf16.msra.mxu0 %v7046
  %9984 = vmatprep.subr.bf16.mxu0 %v7043
  %9985 = vmatpush1.bf16.msra.mxu0 %v7042
  %9986 = vmatprep.subr.bf16.mxu0 %v7039
  %9987 = vmatpush1.bf16.msra.mxu0 %v7038
  %9988 = vmatprep.subr.bf16.mxu0 %v7035
  %9989 = vmatpush1.bf16.msra.mxu0 %v7034
  %9990 = vmatprep.subr.bf16.mxu0 %v7031
  %9991 = vmatpush1.bf16.msra.mxu0 %v7030
  %9992 = vmatprep.subr.bf16.mxu0 %v7027
  %9993 = vmatpush1.bf16.msra.mxu0 %v7026
  %9994 = vmatprep.subr.bf16.mxu0 %v7087
  %9995 = vmatpush2.bf16.msra.mxu0 %v7086
  %9996 = vmatprep.subr.bf16.mxu0 %v7083
  %9997 = vmatpush2.bf16.msra.mxu0 %v7082
  %9998 = vmatprep.subr.bf16.mxu0 %v7079
  %9999 = vmatpush2.bf16.msra.mxu0 %v7078
  %10000 = vmatprep.subr.bf16.mxu0 %v7075
  %10001 = vmatpush2.bf16.msra.mxu0 %v7074
  %10002 = vmatprep.subr.bf16.mxu0 %v7071
  %10003 = vmatpush2.bf16.msra.mxu0 %v7070
  %10004 = vmatprep.subr.bf16.mxu0 %v7067
  %10005 = vmatpush2.bf16.msra.mxu0 %v7066
  %10006 = vmatprep.subr.bf16.mxu0 %v7063
  %10007 = vmatpush2.bf16.msra.mxu0 %v7062
  %10008 = vmatprep.subr.bf16.mxu0 %v7059
  %10009 = vmatpush2.bf16.msra.mxu0 %v7058
  %10010 = vmatprep.mubr.bf16.mxu0 %v1729
  %10011 = vmatmul.mubr.bf16.gmra.mxu0 %v1728
  %v10012 = vpop.f32.mrf.mxu0
  %v10013 = vadd.f32 %v9972, %v10012
  %v10014 = vpop.f32.mrf.mxu0
  %v10015 = vadd.f32 %v9974, %v10014
  %v10016 = vpop.f32.mrf.mxu0
  %v10017 = vpop.f32.mrf.mxu0
  %10018 = vdwg.mxu0
  %10019 = vmatprep.subr.bf16.mxu0 %v7119
  %10020 = vmatpush1.bf16.msra.mxu0 %v7118
  %10021 = vmatprep.subr.bf16.mxu0 %v7115
  %10022 = vmatpush1.bf16.msra.mxu0 %v7114
  %10023 = vmatprep.subr.bf16.mxu0 %v7111
  %10024 = vmatpush1.bf16.msra.mxu0 %v7110
  %10025 = vmatprep.subr.bf16.mxu0 %v7107
  %10026 = vmatpush1.bf16.msra.mxu0 %v7106
  %10027 = vmatprep.subr.bf16.mxu0 %v7103
  %10028 = vmatpush1.bf16.msra.mxu0 %v7102
  %10029 = vmatprep.subr.bf16.mxu0 %v7099
  %10030 = vmatpush1.bf16.msra.mxu0 %v7098
  %10031 = vmatprep.subr.bf16.mxu0 %v7095
  %10032 = vmatpush1.bf16.msra.mxu0 %v7094
  %10033 = vmatprep.subr.bf16.mxu0 %v7091
  %10034 = vmatpush1.bf16.msra.mxu0 %v7090
  %10035 = vmatprep.subr.bf16.mxu0 %v7151
  %10036 = vmatpush2.bf16.msra.mxu0 %v7150
  %10037 = vmatprep.subr.bf16.mxu0 %v7147
  %10038 = vmatpush2.bf16.msra.mxu0 %v7146
  %10039 = vmatprep.subr.bf16.mxu0 %v7143
  %10040 = vmatpush2.bf16.msra.mxu0 %v7142
  %10041 = vmatprep.subr.bf16.mxu0 %v7139
  %10042 = vmatpush2.bf16.msra.mxu0 %v7138
  %10043 = vmatprep.subr.bf16.mxu0 %v7135
  %10044 = vmatpush2.bf16.msra.mxu0 %v7134
  %10045 = vmatprep.subr.bf16.mxu0 %v7131
  %10046 = vmatpush2.bf16.msra.mxu0 %v7130
  %10047 = vmatprep.subr.bf16.mxu0 %v7127
  %10048 = vmatpush2.bf16.msra.mxu0 %v7126
  %10049 = vmatprep.subr.bf16.mxu0 %v7123
  %10050 = vmatpush2.bf16.msra.mxu0 %v7122
  %10051 = vmatprep.mubr.bf16.mxu0 %v1731
  %10052 = vmatmul.mubr.bf16.gmra.mxu0 %v1730
  %v10053 = vpop.f32.mrf.mxu0
  %v10054 = vadd.f32 %v10013, %v10053
  %v10055 = vpop.f32.mrf.mxu0
  %v10056 = vadd.f32 %v10015, %v10055
  %v10057 = vpop.f32.mrf.mxu0
  %v10058 = vpop.f32.mrf.mxu0
  %10059 = vdwg.mxu0
  %10060 = vmatprep.subr.bf16.mxu0 %v7183
  %10061 = vmatpush1.bf16.msra.mxu0 %v7182
  %10062 = vmatprep.subr.bf16.mxu0 %v7179
  %10063 = vmatpush1.bf16.msra.mxu0 %v7178
  %10064 = vmatprep.subr.bf16.mxu0 %v7175
  %10065 = vmatpush1.bf16.msra.mxu0 %v7174
  %10066 = vmatprep.subr.bf16.mxu0 %v7171
  %10067 = vmatpush1.bf16.msra.mxu0 %v7170
  %10068 = vmatprep.subr.bf16.mxu0 %v7167
  %10069 = vmatpush1.bf16.msra.mxu0 %v7166
  %10070 = vmatprep.subr.bf16.mxu0 %v7163
  %10071 = vmatpush1.bf16.msra.mxu0 %v7162
  %10072 = vmatprep.subr.bf16.mxu0 %v7159
  %10073 = vmatpush1.bf16.msra.mxu0 %v7158
  %10074 = vmatprep.subr.bf16.mxu0 %v7155
  %10075 = vmatpush1.bf16.msra.mxu0 %v7154
  %10076 = vmatprep.subr.bf16.mxu0 %v7215
  %10077 = vmatpush2.bf16.msra.mxu0 %v7214
  %10078 = vmatprep.subr.bf16.mxu0 %v7211
  %10079 = vmatpush2.bf16.msra.mxu0 %v7210
  %10080 = vmatprep.subr.bf16.mxu0 %v7207
  %10081 = vmatpush2.bf16.msra.mxu0 %v7206
  %10082 = vmatprep.subr.bf16.mxu0 %v7203
  %10083 = vmatpush2.bf16.msra.mxu0 %v7202
  %10084 = vmatprep.subr.bf16.mxu0 %v7199
  %10085 = vmatpush2.bf16.msra.mxu0 %v7198
  %10086 = vmatprep.subr.bf16.mxu0 %v7195
  %10087 = vmatpush2.bf16.msra.mxu0 %v7194
  %10088 = vmatprep.subr.bf16.mxu0 %v7191
  %10089 = vmatpush2.bf16.msra.mxu0 %v7190
  %10090 = vmatprep.subr.bf16.mxu0 %v7187
  %10091 = vmatpush2.bf16.msra.mxu0 %v7186
  %10092 = vmatprep.mubr.bf16.mxu0 %v1733
  %10093 = vmatmul.mubr.bf16.gmra.mxu0 %v1732
  %v10094 = vpop.f32.mrf.mxu0
  %v10095 = vadd.f32 %v10054, %v10094
  %v10096 = vpop.f32.mrf.mxu0
  %v10097 = vadd.f32 %v10056, %v10096
  %v10098 = vpop.f32.mrf.mxu0
  %v10099 = vpop.f32.mrf.mxu0
  %10100 = vdwg.mxu0
  %10101 = vmatprep.subr.bf16.mxu0 %v7247
  %10102 = vmatpush1.bf16.msra.mxu0 %v7246
  %10103 = vmatprep.subr.bf16.mxu0 %v7243
  %10104 = vmatpush1.bf16.msra.mxu0 %v7242
  %10105 = vmatprep.subr.bf16.mxu0 %v7239
  %10106 = vmatpush1.bf16.msra.mxu0 %v7238
  %10107 = vmatprep.subr.bf16.mxu0 %v7235
  %10108 = vmatpush1.bf16.msra.mxu0 %v7234
  %10109 = vmatprep.subr.bf16.mxu0 %v7231
  %10110 = vmatpush1.bf16.msra.mxu0 %v7230
  %10111 = vmatprep.subr.bf16.mxu0 %v7227
  %10112 = vmatpush1.bf16.msra.mxu0 %v7226
  %10113 = vmatprep.subr.bf16.mxu0 %v7223
  %10114 = vmatpush1.bf16.msra.mxu0 %v7222
  %10115 = vmatprep.subr.bf16.mxu0 %v7219
  %10116 = vmatpush1.bf16.msra.mxu0 %v7218
  %10117 = vmatprep.subr.bf16.mxu0 %v7279
  %10118 = vmatpush2.bf16.msra.mxu0 %v7278
  %10119 = vmatprep.subr.bf16.mxu0 %v7275
  %10120 = vmatpush2.bf16.msra.mxu0 %v7274
  %10121 = vmatprep.subr.bf16.mxu0 %v7271
  %10122 = vmatpush2.bf16.msra.mxu0 %v7270
  %10123 = vmatprep.subr.bf16.mxu0 %v7267
  %10124 = vmatpush2.bf16.msra.mxu0 %v7266
  %10125 = vmatprep.subr.bf16.mxu0 %v7263
  %10126 = vmatpush2.bf16.msra.mxu0 %v7262
  %10127 = vmatprep.subr.bf16.mxu0 %v7259
  %10128 = vmatpush2.bf16.msra.mxu0 %v7258
  %10129 = vmatprep.subr.bf16.mxu0 %v7255
  %10130 = vmatpush2.bf16.msra.mxu0 %v7254
  %10131 = vmatprep.subr.bf16.mxu0 %v7251
  %10132 = vmatpush2.bf16.msra.mxu0 %v7250
  %10133 = vmatprep.mubr.bf16.mxu0 %v1735
  %10134 = vmatmul.mubr.bf16.gmra.mxu0 %v1734
  %v10135 = vpop.f32.mrf.mxu0
  %v10136 = vadd.f32 %v10095, %v10135
  %v10137 = vpop.f32.mrf.mxu0
  %v10138 = vadd.f32 %v10097, %v10137
  %v10139 = vpop.f32.mrf.mxu0
  %v10140 = vpop.f32.mrf.mxu0
  %10141 = vdwg.mxu0
  %10142 = vmatprep.subr.bf16.mxu0 %v7311
  %10143 = vmatpush1.bf16.msra.mxu0 %v7310
  %10144 = vmatprep.subr.bf16.mxu0 %v7307
  %10145 = vmatpush1.bf16.msra.mxu0 %v7306
  %10146 = vmatprep.subr.bf16.mxu0 %v7303
  %10147 = vmatpush1.bf16.msra.mxu0 %v7302
  %10148 = vmatprep.subr.bf16.mxu0 %v7299
  %10149 = vmatpush1.bf16.msra.mxu0 %v7298
  %10150 = vmatprep.subr.bf16.mxu0 %v7295
  %10151 = vmatpush1.bf16.msra.mxu0 %v7294
  %10152 = vmatprep.subr.bf16.mxu0 %v7291
  %10153 = vmatpush1.bf16.msra.mxu0 %v7290
  %10154 = vmatprep.subr.bf16.mxu0 %v7287
  %10155 = vmatpush1.bf16.msra.mxu0 %v7286
  %10156 = vmatprep.subr.bf16.mxu0 %v7283
  %10157 = vmatpush1.bf16.msra.mxu0 %v7282
  %10158 = vmatprep.subr.bf16.mxu0 %v7343
  %10159 = vmatpush2.bf16.msra.mxu0 %v7342
  %10160 = vmatprep.subr.bf16.mxu0 %v7339
  %10161 = vmatpush2.bf16.msra.mxu0 %v7338
  %10162 = vmatprep.subr.bf16.mxu0 %v7335
  %10163 = vmatpush2.bf16.msra.mxu0 %v7334
  %10164 = vmatprep.subr.bf16.mxu0 %v7331
  %10165 = vmatpush2.bf16.msra.mxu0 %v7330
  %10166 = vmatprep.subr.bf16.mxu0 %v7327
  %10167 = vmatpush2.bf16.msra.mxu0 %v7326
  %10168 = vmatprep.subr.bf16.mxu0 %v7323
  %10169 = vmatpush2.bf16.msra.mxu0 %v7322
  %10170 = vmatprep.subr.bf16.mxu0 %v7319
  %10171 = vmatpush2.bf16.msra.mxu0 %v7318
  %10172 = vmatprep.subr.bf16.mxu0 %v7315
  %10173 = vmatpush2.bf16.msra.mxu0 %v7314
  %10174 = vmatprep.mubr.bf16.mxu0 %v1737
  %10175 = vmatmul.mubr.bf16.gmra.mxu0 %v1736
  %v10176 = vpop.f32.mrf.mxu0
  %v10177 = vadd.f32 %v10136, %v10176
  %v10178 = vpop.f32.mrf.mxu0
  %v10179 = vadd.f32 %v10138, %v10178
  %v10180 = vpop.f32.mrf.mxu0
  %v10181 = vpop.f32.mrf.mxu0
  %10182 = vdwg.mxu0
  %10183 = vmatprep.subr.bf16.mxu0 %v7375
  %10184 = vmatpush1.bf16.msra.mxu0 %v7374
  %10185 = vmatprep.subr.bf16.mxu0 %v7371
  %10186 = vmatpush1.bf16.msra.mxu0 %v7370
  %10187 = vmatprep.subr.bf16.mxu0 %v7367
  %10188 = vmatpush1.bf16.msra.mxu0 %v7366
  %10189 = vmatprep.subr.bf16.mxu0 %v7363
  %10190 = vmatpush1.bf16.msra.mxu0 %v7362
  %10191 = vmatprep.subr.bf16.mxu0 %v7359
  %10192 = vmatpush1.bf16.msra.mxu0 %v7358
  %10193 = vmatprep.subr.bf16.mxu0 %v7355
  %10194 = vmatpush1.bf16.msra.mxu0 %v7354
  %10195 = vmatprep.subr.bf16.mxu0 %v7351
  %10196 = vmatpush1.bf16.msra.mxu0 %v7350
  %10197 = vmatprep.subr.bf16.mxu0 %v7347
  %10198 = vmatpush1.bf16.msra.mxu0 %v7346
  %10199 = vmatprep.subr.bf16.mxu0 %v7407
  %10200 = vmatpush2.bf16.msra.mxu0 %v7406
  %10201 = vmatprep.subr.bf16.mxu0 %v7403
  %10202 = vmatpush2.bf16.msra.mxu0 %v7402
  %10203 = vmatprep.subr.bf16.mxu0 %v7399
  %10204 = vmatpush2.bf16.msra.mxu0 %v7398
  %10205 = vmatprep.subr.bf16.mxu0 %v7395
  %10206 = vmatpush2.bf16.msra.mxu0 %v7394
  %10207 = vmatprep.subr.bf16.mxu0 %v7391
  %10208 = vmatpush2.bf16.msra.mxu0 %v7390
  %10209 = vmatprep.subr.bf16.mxu0 %v7387
  %10210 = vmatpush2.bf16.msra.mxu0 %v7386
  %10211 = vmatprep.subr.bf16.mxu0 %v7383
  %10212 = vmatpush2.bf16.msra.mxu0 %v7382
  %10213 = vmatprep.subr.bf16.mxu0 %v7379
  %10214 = vmatpush2.bf16.msra.mxu0 %v7378
  %10215 = vmatprep.mubr.bf16.mxu0 %v1739
  %10216 = vmatmul.mubr.bf16.gmra.mxu0 %v1738
  %v10217 = vpop.f32.mrf.mxu0
  %v10218 = vadd.f32 %v10177, %v10217
  %v10219 = vpop.f32.mrf.mxu0
  %v10220 = vadd.f32 %v10179, %v10219
  %v10221 = vpop.f32.mrf.mxu0
  %v10222 = vpop.f32.mrf.mxu0
  %10223 = vdwg.mxu0
  %10224 = vmatprep.subr.bf16.mxu0 %v7439
  %10225 = vmatpush1.bf16.msra.mxu0 %v7438
  %10226 = vmatprep.subr.bf16.mxu0 %v7435
  %10227 = vmatpush1.bf16.msra.mxu0 %v7434
  %10228 = vmatprep.subr.bf16.mxu0 %v7431
  %10229 = vmatpush1.bf16.msra.mxu0 %v7430
  %10230 = vmatprep.subr.bf16.mxu0 %v7427
  %10231 = vmatpush1.bf16.msra.mxu0 %v7426
  %10232 = vmatprep.subr.bf16.mxu0 %v7423
  %10233 = vmatpush1.bf16.msra.mxu0 %v7422
  %10234 = vmatprep.subr.bf16.mxu0 %v7419
  %10235 = vmatpush1.bf16.msra.mxu0 %v7418
  %10236 = vmatprep.subr.bf16.mxu0 %v7415
  %10237 = vmatpush1.bf16.msra.mxu0 %v7414
  %10238 = vmatprep.subr.bf16.mxu0 %v7411
  %10239 = vmatpush1.bf16.msra.mxu0 %v7410
  %10240 = vmatprep.subr.bf16.mxu0 %v7471
  %10241 = vmatpush2.bf16.msra.mxu0 %v7470
  %10242 = vmatprep.subr.bf16.mxu0 %v7467
  %10243 = vmatpush2.bf16.msra.mxu0 %v7466
  %10244 = vmatprep.subr.bf16.mxu0 %v7463
  %10245 = vmatpush2.bf16.msra.mxu0 %v7462
  %10246 = vmatprep.subr.bf16.mxu0 %v7459
  %10247 = vmatpush2.bf16.msra.mxu0 %v7458
  %10248 = vmatprep.subr.bf16.mxu0 %v7455
  %10249 = vmatpush2.bf16.msra.mxu0 %v7454
  %10250 = vmatprep.subr.bf16.mxu0 %v7451
  %10251 = vmatpush2.bf16.msra.mxu0 %v7450
  %10252 = vmatprep.subr.bf16.mxu0 %v7447
  %10253 = vmatpush2.bf16.msra.mxu0 %v7446
  %10254 = vmatprep.subr.bf16.mxu0 %v7443
  %10255 = vmatpush2.bf16.msra.mxu0 %v7442
  %10256 = vmatprep.mubr.bf16.mxu0 %v1741
  %10257 = vmatmul.mubr.bf16.gmra.mxu0 %v1740
  %v10258 = vpop.f32.mrf.mxu0
  %v10259 = vadd.f32 %v10218, %v10258
  %v10260 = vpop.f32.mrf.mxu0
  %v10261 = vadd.f32 %v10220, %v10260
  %v10262 = vpop.f32.mrf.mxu0
  %v10263 = vpop.f32.mrf.mxu0
  %10264 = vdwg.mxu0
  %10265 = vmatprep.subr.bf16.mxu0 %v7503
  %10266 = vmatpush1.bf16.msra.mxu0 %v7502
  %10267 = vmatprep.subr.bf16.mxu0 %v7499
  %10268 = vmatpush1.bf16.msra.mxu0 %v7498
  %10269 = vmatprep.subr.bf16.mxu0 %v7495
  %10270 = vmatpush1.bf16.msra.mxu0 %v7494
  %10271 = vmatprep.subr.bf16.mxu0 %v7491
  %10272 = vmatpush1.bf16.msra.mxu0 %v7490
  %10273 = vmatprep.subr.bf16.mxu0 %v7487
  %10274 = vmatpush1.bf16.msra.mxu0 %v7486
  %10275 = vmatprep.subr.bf16.mxu0 %v7483
  %10276 = vmatpush1.bf16.msra.mxu0 %v7482
  %10277 = vmatprep.subr.bf16.mxu0 %v7479
  %10278 = vmatpush1.bf16.msra.mxu0 %v7478
  %10279 = vmatprep.subr.bf16.mxu0 %v7475
  %10280 = vmatpush1.bf16.msra.mxu0 %v7474
  %10281 = vmatprep.subr.bf16.mxu0 %v7535
  %10282 = vmatpush2.bf16.msra.mxu0 %v7534
  %10283 = vmatprep.subr.bf16.mxu0 %v7531
  %10284 = vmatpush2.bf16.msra.mxu0 %v7530
  %10285 = vmatprep.subr.bf16.mxu0 %v7527
  %10286 = vmatpush2.bf16.msra.mxu0 %v7526
  %10287 = vmatprep.subr.bf16.mxu0 %v7523
  %10288 = vmatpush2.bf16.msra.mxu0 %v7522
  %10289 = vmatprep.subr.bf16.mxu0 %v7519
  %10290 = vmatpush2.bf16.msra.mxu0 %v7518
  %10291 = vmatprep.subr.bf16.mxu0 %v7515
  %10292 = vmatpush2.bf16.msra.mxu0 %v7514
  %10293 = vmatprep.subr.bf16.mxu0 %v7511
  %10294 = vmatpush2.bf16.msra.mxu0 %v7510
  %10295 = vmatprep.subr.bf16.mxu0 %v7507
  %10296 = vmatpush2.bf16.msra.mxu0 %v7506
  %10297 = vmatprep.mubr.bf16.mxu0 %v1743
  %10298 = vmatmul.mubr.bf16.gmra.mxu0 %v1742
  %v10299 = vpop.f32.mrf.mxu0
  %v10300 = vadd.f32 %v10259, %v10299
  %v10301 = vpop.f32.mrf.mxu0
  %v10302 = vadd.f32 %v10261, %v10301
  %v10303 = vpop.f32.mrf.mxu0
  %v10304 = vpop.f32.mrf.mxu0
  %10305 = vdwg.mxu0
  %10306 = vmatprep.subr.bf16.mxu0 %v7567
  %10307 = vmatpush1.bf16.msra.mxu0 %v7566
  %10308 = vmatprep.subr.bf16.mxu0 %v7563
  %10309 = vmatpush1.bf16.msra.mxu0 %v7562
  %10310 = vmatprep.subr.bf16.mxu0 %v7559
  %10311 = vmatpush1.bf16.msra.mxu0 %v7558
  %10312 = vmatprep.subr.bf16.mxu0 %v7555
  %10313 = vmatpush1.bf16.msra.mxu0 %v7554
  %10314 = vmatprep.subr.bf16.mxu0 %v7551
  %10315 = vmatpush1.bf16.msra.mxu0 %v7550
  %10316 = vmatprep.subr.bf16.mxu0 %v7547
  %10317 = vmatpush1.bf16.msra.mxu0 %v7546
  %10318 = vmatprep.subr.bf16.mxu0 %v7543
  %10319 = vmatpush1.bf16.msra.mxu0 %v7542
  %10320 = vmatprep.subr.bf16.mxu0 %v7539
  %10321 = vmatpush1.bf16.msra.mxu0 %v7538
  %10322 = vmatprep.subr.bf16.mxu0 %v7599
  %10323 = vmatpush2.bf16.msra.mxu0 %v7598
  %10324 = vmatprep.subr.bf16.mxu0 %v7595
  %10325 = vmatpush2.bf16.msra.mxu0 %v7594
  %10326 = vmatprep.subr.bf16.mxu0 %v7591
  %10327 = vmatpush2.bf16.msra.mxu0 %v7590
  %10328 = vmatprep.subr.bf16.mxu0 %v7587
  %10329 = vmatpush2.bf16.msra.mxu0 %v7586
  %10330 = vmatprep.subr.bf16.mxu0 %v7583
  %10331 = vmatpush2.bf16.msra.mxu0 %v7582
  %10332 = vmatprep.subr.bf16.mxu0 %v7579
  %10333 = vmatpush2.bf16.msra.mxu0 %v7578
  %10334 = vmatprep.subr.bf16.mxu0 %v7575
  %10335 = vmatpush2.bf16.msra.mxu0 %v7574
  %10336 = vmatprep.subr.bf16.mxu0 %v7571
  %10337 = vmatpush2.bf16.msra.mxu0 %v7570
  %10338 = vmatprep.mubr.bf16.mxu0 %v1745
  %10339 = vmatmul.mubr.bf16.gmra.mxu0 %v1744
  %v10340 = vpop.f32.mrf.mxu0
  %v10341 = vadd.f32 %v10300, %v10340
  %v10342 = vpop.f32.mrf.mxu0
  %v10343 = vadd.f32 %v10302, %v10342
  %v10344 = vpop.f32.mrf.mxu0
  %v10345 = vpop.f32.mrf.mxu0
  %10346 = vdwg.mxu0
  %10347 = vmatprep.subr.bf16.mxu0 %v7631
  %10348 = vmatpush1.bf16.msra.mxu0 %v7630
  %10349 = vmatprep.subr.bf16.mxu0 %v7627
  %10350 = vmatpush1.bf16.msra.mxu0 %v7626
  %10351 = vmatprep.subr.bf16.mxu0 %v7623
  %10352 = vmatpush1.bf16.msra.mxu0 %v7622
  %10353 = vmatprep.subr.bf16.mxu0 %v7619
  %10354 = vmatpush1.bf16.msra.mxu0 %v7618
  %10355 = vmatprep.subr.bf16.mxu0 %v7615
  %10356 = vmatpush1.bf16.msra.mxu0 %v7614
  %10357 = vmatprep.subr.bf16.mxu0 %v7611
  %10358 = vmatpush1.bf16.msra.mxu0 %v7610
  %10359 = vmatprep.subr.bf16.mxu0 %v7607
  %10360 = vmatpush1.bf16.msra.mxu0 %v7606
  %10361 = vmatprep.subr.bf16.mxu0 %v7603
  %10362 = vmatpush1.bf16.msra.mxu0 %v7602
  %10363 = vmatprep.subr.bf16.mxu0 %v7663
  %10364 = vmatpush2.bf16.msra.mxu0 %v7662
  %10365 = vmatprep.subr.bf16.mxu0 %v7659
  %10366 = vmatpush2.bf16.msra.mxu0 %v7658
  %10367 = vmatprep.subr.bf16.mxu0 %v7655
  %10368 = vmatpush2.bf16.msra.mxu0 %v7654
  %10369 = vmatprep.subr.bf16.mxu0 %v7651
  %10370 = vmatpush2.bf16.msra.mxu0 %v7650
  %10371 = vmatprep.subr.bf16.mxu0 %v7647
  %10372 = vmatpush2.bf16.msra.mxu0 %v7646
  %10373 = vmatprep.subr.bf16.mxu0 %v7643
  %10374 = vmatpush2.bf16.msra.mxu0 %v7642
  %10375 = vmatprep.subr.bf16.mxu0 %v7639
  %10376 = vmatpush2.bf16.msra.mxu0 %v7638
  %10377 = vmatprep.subr.bf16.mxu0 %v7635
  %10378 = vmatpush2.bf16.msra.mxu0 %v7634
  %10379 = vmatprep.mubr.bf16.mxu0 %v1747
  %10380 = vmatmul.mubr.bf16.gmra.mxu0 %v1746
  %v10381 = vpop.f32.mrf.mxu0
  %v10382 = vadd.f32 %v10341, %v10381
  %v10383 = vpop.f32.mrf.mxu0
  %v10384 = vadd.f32 %v10343, %v10383
  %v10385 = vpop.f32.mrf.mxu0
  %v10386 = vpop.f32.mrf.mxu0
  %10387 = vdwg.mxu0
  %10388 = vmatprep.subr.bf16.mxu0 %v7695
  %10389 = vmatpush1.bf16.msra.mxu0 %v7694
  %10390 = vmatprep.subr.bf16.mxu0 %v7691
  %10391 = vmatpush1.bf16.msra.mxu0 %v7690
  %10392 = vmatprep.subr.bf16.mxu0 %v7687
  %10393 = vmatpush1.bf16.msra.mxu0 %v7686
  %10394 = vmatprep.subr.bf16.mxu0 %v7683
  %10395 = vmatpush1.bf16.msra.mxu0 %v7682
  %10396 = vmatprep.subr.bf16.mxu0 %v7679
  %10397 = vmatpush1.bf16.msra.mxu0 %v7678
  %10398 = vmatprep.subr.bf16.mxu0 %v7675
  %10399 = vmatpush1.bf16.msra.mxu0 %v7674
  %10400 = vmatprep.subr.bf16.mxu0 %v7671
  %10401 = vmatpush1.bf16.msra.mxu0 %v7670
  %10402 = vmatprep.subr.bf16.mxu0 %v7667
  %10403 = vmatpush1.bf16.msra.mxu0 %v7666
  %10404 = vmatprep.subr.bf16.mxu0 %v7727
  %10405 = vmatpush2.bf16.msra.mxu0 %v7726
  %10406 = vmatprep.subr.bf16.mxu0 %v7723
  %10407 = vmatpush2.bf16.msra.mxu0 %v7722
  %10408 = vmatprep.subr.bf16.mxu0 %v7719
  %10409 = vmatpush2.bf16.msra.mxu0 %v7718
  %10410 = vmatprep.subr.bf16.mxu0 %v7715
  %10411 = vmatpush2.bf16.msra.mxu0 %v7714
  %10412 = vmatprep.subr.bf16.mxu0 %v7711
  %10413 = vmatpush2.bf16.msra.mxu0 %v7710
  %10414 = vmatprep.subr.bf16.mxu0 %v7707
  %10415 = vmatpush2.bf16.msra.mxu0 %v7706
  %10416 = vmatprep.subr.bf16.mxu0 %v7703
  %10417 = vmatpush2.bf16.msra.mxu0 %v7702
  %10418 = vmatprep.subr.bf16.mxu0 %v7699
  %10419 = vmatpush2.bf16.msra.mxu0 %v7698
  %10420 = vmatprep.mubr.bf16.mxu0 %v1749
  %10421 = vmatmul.mubr.bf16.gmra.mxu0 %v1748
  %v10422 = vpop.f32.mrf.mxu0
  %v10423 = vadd.f32 %v10382, %v10422
  %v10424 = vpop.f32.mrf.mxu0
  %v10425 = vadd.f32 %v10384, %v10424
  %v10426 = vpop.f32.mrf.mxu0
  %v10427 = vpop.f32.mrf.mxu0
  %10428 = vdwg.mxu0
  %10429 = vmatprep.subr.bf16.mxu0 %v7759
  %10430 = vmatpush1.bf16.msra.mxu0 %v7758
  %10431 = vmatprep.subr.bf16.mxu0 %v7755
  %10432 = vmatpush1.bf16.msra.mxu0 %v7754
  %10433 = vmatprep.subr.bf16.mxu0 %v7751
  %10434 = vmatpush1.bf16.msra.mxu0 %v7750
  %10435 = vmatprep.subr.bf16.mxu0 %v7747
  %10436 = vmatpush1.bf16.msra.mxu0 %v7746
  %10437 = vmatprep.subr.bf16.mxu0 %v7743
  %10438 = vmatpush1.bf16.msra.mxu0 %v7742
  %10439 = vmatprep.subr.bf16.mxu0 %v7739
  %10440 = vmatpush1.bf16.msra.mxu0 %v7738
  %10441 = vmatprep.subr.bf16.mxu0 %v7735
  %10442 = vmatpush1.bf16.msra.mxu0 %v7734
  %10443 = vmatprep.subr.bf16.mxu0 %v7731
  %10444 = vmatpush1.bf16.msra.mxu0 %v7730
  %10445 = vmatprep.subr.bf16.mxu0 %v7791
  %10446 = vmatpush2.bf16.msra.mxu0 %v7790
  %10447 = vmatprep.subr.bf16.mxu0 %v7787
  %10448 = vmatpush2.bf16.msra.mxu0 %v7786
  %10449 = vmatprep.subr.bf16.mxu0 %v7783
  %10450 = vmatpush2.bf16.msra.mxu0 %v7782
  %10451 = vmatprep.subr.bf16.mxu0 %v7779
  %10452 = vmatpush2.bf16.msra.mxu0 %v7778
  %10453 = vmatprep.subr.bf16.mxu0 %v7775
  %10454 = vmatpush2.bf16.msra.mxu0 %v7774
  %10455 = vmatprep.subr.bf16.mxu0 %v7771
  %10456 = vmatpush2.bf16.msra.mxu0 %v7770
  %10457 = vmatprep.subr.bf16.mxu0 %v7767
  %10458 = vmatpush2.bf16.msra.mxu0 %v7766
  %10459 = vmatprep.subr.bf16.mxu0 %v7763
  %10460 = vmatpush2.bf16.msra.mxu0 %v7762
  %10461 = vmatprep.mubr.bf16.mxu0 %v1751
  %10462 = vmatmul.mubr.bf16.gmra.mxu0 %v1750
  %v10463 = vpop.f32.mrf.mxu0
  %v10464 = vadd.f32 %v10423, %v10463
  %v10465 = vpop.f32.mrf.mxu0
  %v10466 = vadd.f32 %v10425, %v10465
  %v10467 = vpop.f32.mrf.mxu0
  %v10468 = vpop.f32.mrf.mxu0
  %10469 = vdwg.mxu0
  %10470 = vmatprep.subr.bf16.mxu0 %v7823
  %10471 = vmatpush1.bf16.msra.mxu0 %v7822
  %10472 = vmatprep.subr.bf16.mxu0 %v7819
  %10473 = vmatpush1.bf16.msra.mxu0 %v7818
  %10474 = vmatprep.subr.bf16.mxu0 %v7815
  %10475 = vmatpush1.bf16.msra.mxu0 %v7814
  %10476 = vmatprep.subr.bf16.mxu0 %v7811
  %10477 = vmatpush1.bf16.msra.mxu0 %v7810
  %10478 = vmatprep.subr.bf16.mxu0 %v7807
  %10479 = vmatpush1.bf16.msra.mxu0 %v7806
  %10480 = vmatprep.subr.bf16.mxu0 %v7803
  %10481 = vmatpush1.bf16.msra.mxu0 %v7802
  %10482 = vmatprep.subr.bf16.mxu0 %v7799
  %10483 = vmatpush1.bf16.msra.mxu0 %v7798
  %10484 = vmatprep.subr.bf16.mxu0 %v7795
  %10485 = vmatpush1.bf16.msra.mxu0 %v7794
  %10486 = vmatprep.subr.bf16.mxu0 %v7855
  %10487 = vmatpush2.bf16.msra.mxu0 %v7854
  %10488 = vmatprep.subr.bf16.mxu0 %v7851
  %10489 = vmatpush2.bf16.msra.mxu0 %v7850
  %10490 = vmatprep.subr.bf16.mxu0 %v7847
  %10491 = vmatpush2.bf16.msra.mxu0 %v7846
  %10492 = vmatprep.subr.bf16.mxu0 %v7843
  %10493 = vmatpush2.bf16.msra.mxu0 %v7842
  %10494 = vmatprep.subr.bf16.mxu0 %v7839
  %10495 = vmatpush2.bf16.msra.mxu0 %v7838
  %10496 = vmatprep.subr.bf16.mxu0 %v7835
  %10497 = vmatpush2.bf16.msra.mxu0 %v7834
  %10498 = vmatprep.subr.bf16.mxu0 %v7831
  %10499 = vmatpush2.bf16.msra.mxu0 %v7830
  %10500 = vmatprep.subr.bf16.mxu0 %v7827
  %10501 = vmatpush2.bf16.msra.mxu0 %v7826
  %10502 = vmatprep.mubr.bf16.mxu0 %v1753
  %10503 = vmatmul.mubr.bf16.gmra.mxu0 %v1752
  %v10504 = vpop.f32.mrf.mxu0
  %v10505 = vadd.f32 %v10464, %v10504
  %v10506 = vpop.f32.mrf.mxu0
  %v10507 = vadd.f32 %v10466, %v10506
  %v10508 = vpop.f32.mrf.mxu0
  %v10509 = vpop.f32.mrf.mxu0
  %10510 = vdwg.mxu0
  %10511 = vmatprep.subr.bf16.mxu0 %v7887
  %10512 = vmatpush1.bf16.msra.mxu0 %v7886
  %10513 = vmatprep.subr.bf16.mxu0 %v7883
  %10514 = vmatpush1.bf16.msra.mxu0 %v7882
  %10515 = vmatprep.subr.bf16.mxu0 %v7879
  %10516 = vmatpush1.bf16.msra.mxu0 %v7878
  %10517 = vmatprep.subr.bf16.mxu0 %v7875
  %10518 = vmatpush1.bf16.msra.mxu0 %v7874
  %10519 = vmatprep.subr.bf16.mxu0 %v7871
  %10520 = vmatpush1.bf16.msra.mxu0 %v7870
  %10521 = vmatprep.subr.bf16.mxu0 %v7867
  %10522 = vmatpush1.bf16.msra.mxu0 %v7866
  %10523 = vmatprep.subr.bf16.mxu0 %v7863
  %10524 = vmatpush1.bf16.msra.mxu0 %v7862
  %10525 = vmatprep.subr.bf16.mxu0 %v7859
  %10526 = vmatpush1.bf16.msra.mxu0 %v7858
  %10527 = vmatprep.subr.bf16.mxu0 %v7919
  %10528 = vmatpush2.bf16.msra.mxu0 %v7918
  %10529 = vmatprep.subr.bf16.mxu0 %v7915
  %10530 = vmatpush2.bf16.msra.mxu0 %v7914
  %10531 = vmatprep.subr.bf16.mxu0 %v7911
  %10532 = vmatpush2.bf16.msra.mxu0 %v7910
  %10533 = vmatprep.subr.bf16.mxu0 %v7907
  %10534 = vmatpush2.bf16.msra.mxu0 %v7906
  %10535 = vmatprep.subr.bf16.mxu0 %v7903
  %10536 = vmatpush2.bf16.msra.mxu0 %v7902
  %10537 = vmatprep.subr.bf16.mxu0 %v7899
  %10538 = vmatpush2.bf16.msra.mxu0 %v7898
  %10539 = vmatprep.subr.bf16.mxu0 %v7895
  %10540 = vmatpush2.bf16.msra.mxu0 %v7894
  %10541 = vmatprep.subr.bf16.mxu0 %v7891
  %10542 = vmatpush2.bf16.msra.mxu0 %v7890
  %10543 = vmatprep.mubr.bf16.mxu0 %v1755
  %10544 = vmatmul.mubr.bf16.gmra.mxu0 %v1754
  %v10545 = vpop.f32.mrf.mxu0
  %v10546 = vadd.f32 %v10505, %v10545
  %v10547 = vpop.f32.mrf.mxu0
  %v10548 = vadd.f32 %v10507, %v10547
  %v10549 = vpop.f32.mrf.mxu0
  %v10550 = vpop.f32.mrf.mxu0
  %10551 = vdwg.mxu0
  %10552 = vmatprep.subr.bf16.mxu0 %v7951
  %10553 = vmatpush1.bf16.msra.mxu0 %v7950
  %10554 = vmatprep.subr.bf16.mxu0 %v7947
  %10555 = vmatpush1.bf16.msra.mxu0 %v7946
  %10556 = vmatprep.subr.bf16.mxu0 %v7943
  %10557 = vmatpush1.bf16.msra.mxu0 %v7942
  %10558 = vmatprep.subr.bf16.mxu0 %v7939
  %10559 = vmatpush1.bf16.msra.mxu0 %v7938
  %10560 = vmatprep.subr.bf16.mxu0 %v7935
  %10561 = vmatpush1.bf16.msra.mxu0 %v7934
  %10562 = vmatprep.subr.bf16.mxu0 %v7931
  %10563 = vmatpush1.bf16.msra.mxu0 %v7930
  %10564 = vmatprep.subr.bf16.mxu0 %v7927
  %10565 = vmatpush1.bf16.msra.mxu0 %v7926
  %10566 = vmatprep.subr.bf16.mxu0 %v7923
  %10567 = vmatpush1.bf16.msra.mxu0 %v7922
  %10568 = vmatprep.subr.bf16.mxu0 %v7983
  %10569 = vmatpush2.bf16.msra.mxu0 %v7982
  %10570 = vmatprep.subr.bf16.mxu0 %v7979
  %10571 = vmatpush2.bf16.msra.mxu0 %v7978
  %10572 = vmatprep.subr.bf16.mxu0 %v7975
  %10573 = vmatpush2.bf16.msra.mxu0 %v7974
  %10574 = vmatprep.subr.bf16.mxu0 %v7971
  %10575 = vmatpush2.bf16.msra.mxu0 %v7970
  %10576 = vmatprep.subr.bf16.mxu0 %v7967
  %10577 = vmatpush2.bf16.msra.mxu0 %v7966
  %10578 = vmatprep.subr.bf16.mxu0 %v7963
  %10579 = vmatpush2.bf16.msra.mxu0 %v7962
  %10580 = vmatprep.subr.bf16.mxu0 %v7959
  %10581 = vmatpush2.bf16.msra.mxu0 %v7958
  %10582 = vmatprep.subr.bf16.mxu0 %v7955
  %10583 = vmatpush2.bf16.msra.mxu0 %v7954
  %10584 = vmatprep.mubr.bf16.mxu0 %v1757
  %10585 = vmatmul.mubr.bf16.gmra.mxu0 %v1756
  %v10586 = vpop.f32.mrf.mxu0
  %v10587 = vadd.f32 %v10546, %v10586
  %v10588 = vpop.f32.mrf.mxu0
  %v10589 = vadd.f32 %v10548, %v10588
  %v10590 = vpop.f32.mrf.mxu0
  %v10591 = vpop.f32.mrf.mxu0
  %10592 = vdwg.mxu0
  %10593 = vmatprep.subr.bf16.mxu0 %v8015
  %10594 = vmatpush1.bf16.msra.mxu0 %v8014
  %10595 = vmatprep.subr.bf16.mxu0 %v8011
  %10596 = vmatpush1.bf16.msra.mxu0 %v8010
  %10597 = vmatprep.subr.bf16.mxu0 %v8007
  %10598 = vmatpush1.bf16.msra.mxu0 %v8006
  %10599 = vmatprep.subr.bf16.mxu0 %v8003
  %10600 = vmatpush1.bf16.msra.mxu0 %v8002
  %10601 = vmatprep.subr.bf16.mxu0 %v7999
  %10602 = vmatpush1.bf16.msra.mxu0 %v7998
  %10603 = vmatprep.subr.bf16.mxu0 %v7995
  %10604 = vmatpush1.bf16.msra.mxu0 %v7994
  %10605 = vmatprep.subr.bf16.mxu0 %v7991
  %10606 = vmatpush1.bf16.msra.mxu0 %v7990
  %10607 = vmatprep.subr.bf16.mxu0 %v7987
  %10608 = vmatpush1.bf16.msra.mxu0 %v7986
  %10609 = vmatprep.subr.bf16.mxu0 %v8047
  %10610 = vmatpush2.bf16.msra.mxu0 %v8046
  %10611 = vmatprep.subr.bf16.mxu0 %v8043
  %10612 = vmatpush2.bf16.msra.mxu0 %v8042
  %10613 = vmatprep.subr.bf16.mxu0 %v8039
  %10614 = vmatpush2.bf16.msra.mxu0 %v8038
  %10615 = vmatprep.subr.bf16.mxu0 %v8035
  %10616 = vmatpush2.bf16.msra.mxu0 %v8034
  %10617 = vmatprep.subr.bf16.mxu0 %v8031
  %10618 = vmatpush2.bf16.msra.mxu0 %v8030
  %10619 = vmatprep.subr.bf16.mxu0 %v8027
  %10620 = vmatpush2.bf16.msra.mxu0 %v8026
  %10621 = vmatprep.subr.bf16.mxu0 %v8023
  %10622 = vmatpush2.bf16.msra.mxu0 %v8022
  %10623 = vmatprep.subr.bf16.mxu0 %v8019
  %10624 = vmatpush2.bf16.msra.mxu0 %v8018
  %10625 = vmatprep.mubr.bf16.mxu0 %v1759
  %10626 = vmatmul.mubr.bf16.gmra.mxu0 %v1758
  %v10627 = vpop.f32.mrf.mxu0
  %v10628 = vadd.f32 %v10587, %v10627
  %v10629 = vpop.f32.mrf.mxu0
  %v10630 = vadd.f32 %v10589, %v10629
  %v10631 = vpop.f32.mrf.mxu0
  %v10632 = vpop.f32.mrf.mxu0
  %10633 = vdwg.mxu0
  %10634 = vmatprep.subr.bf16.mxu0 %v8079
  %10635 = vmatpush1.bf16.msra.mxu0 %v8078
  %10636 = vmatprep.subr.bf16.mxu0 %v8075
  %10637 = vmatpush1.bf16.msra.mxu0 %v8074
  %10638 = vmatprep.subr.bf16.mxu0 %v8071
  %10639 = vmatpush1.bf16.msra.mxu0 %v8070
  %10640 = vmatprep.subr.bf16.mxu0 %v8067
  %10641 = vmatpush1.bf16.msra.mxu0 %v8066
  %10642 = vmatprep.subr.bf16.mxu0 %v8063
  %10643 = vmatpush1.bf16.msra.mxu0 %v8062
  %10644 = vmatprep.subr.bf16.mxu0 %v8059
  %10645 = vmatpush1.bf16.msra.mxu0 %v8058
  %10646 = vmatprep.subr.bf16.mxu0 %v8055
  %10647 = vmatpush1.bf16.msra.mxu0 %v8054
  %10648 = vmatprep.subr.bf16.mxu0 %v8051
  %10649 = vmatpush1.bf16.msra.mxu0 %v8050
  %10650 = vmatprep.subr.bf16.mxu0 0
  %10651 = vmatpush2.bf16.msra.mxu0 0
  %10652 = vmatprep.subr.bf16.mxu0 0
  %10653 = vmatpush2.bf16.msra.mxu0 0
  %10654 = vmatprep.subr.bf16.mxu0 0
  %10655 = vmatpush2.bf16.msra.mxu0 0
  %10656 = vmatprep.subr.bf16.mxu0 0
  %10657 = vmatpush2.bf16.msra.mxu0 0
  %10658 = vmatprep.subr.bf16.mxu0 0
  %10659 = vmatpush2.bf16.msra.mxu0 0
  %10660 = vmatprep.subr.bf16.mxu0 0
  %10661 = vmatpush2.bf16.msra.mxu0 0
  %10662 = vmatprep.subr.bf16.mxu0 0
  %10663 = vmatpush2.bf16.msra.mxu0 0
  %10664 = vmatprep.subr.bf16.mxu0 0
  %10665 = vmatpush2.bf16.msra.mxu0 0
  %10666 = vmatprep.mubr.bf16.mxu0 0
  %10667 = vmatmul.mubr.bf16.gmra.mxu0 %v1760
  %v10668 = vpop.f32.mrf.mxu0
  %v10669 = vadd.f32 %v10628, %v10668
  %v10670 = vpop.f32.mrf.mxu0
  %v10671 = vadd.f32 %v10630, %v10670
  %v10672 = vpop.f32.mrf.mxu0
  %v10673 = vpop.f32.mrf.mxu0
  %10674 = vdwg.mxu0
  %10675 = vmatprep.subr.bf16.mxu0 %v6545
  %10676 = vmatpush1.bf16.msra.mxu0 %v6544
  %10677 = vmatprep.subr.bf16.mxu0 %v6541
  %10678 = vmatpush1.bf16.msra.mxu0 %v6540
  %10679 = vmatprep.subr.bf16.mxu0 %v6537
  %10680 = vmatpush1.bf16.msra.mxu0 %v6536
  %10681 = vmatprep.subr.bf16.mxu0 %v6533
  %10682 = vmatpush1.bf16.msra.mxu0 %v6532
  %10683 = vmatprep.subr.bf16.mxu0 %v6529
  %10684 = vmatpush1.bf16.msra.mxu0 %v6528
  %10685 = vmatprep.subr.bf16.mxu0 %v6525
  %10686 = vmatpush1.bf16.msra.mxu0 %v6524
  %10687 = vmatprep.subr.bf16.mxu0 %v6521
  %10688 = vmatpush1.bf16.msra.mxu0 %v6520
  %10689 = vmatprep.subr.bf16.mxu0 %v6517
  %10690 = vmatpush1.bf16.msra.mxu0 %v6516
  %10691 = vmatprep.subr.bf16.mxu0 %v6577
  %10692 = vmatpush2.bf16.msra.mxu0 %v6576
  %10693 = vmatprep.subr.bf16.mxu0 %v6573
  %10694 = vmatpush2.bf16.msra.mxu0 %v6572
  %10695 = vmatprep.subr.bf16.mxu0 %v6569
  %10696 = vmatpush2.bf16.msra.mxu0 %v6568
  %10697 = vmatprep.subr.bf16.mxu0 %v6565
  %10698 = vmatpush2.bf16.msra.mxu0 %v6564
  %10699 = vmatprep.subr.bf16.mxu0 %v6561
  %10700 = vmatpush2.bf16.msra.mxu0 %v6560
  %10701 = vmatprep.subr.bf16.mxu0 %v6557
  %10702 = vmatpush2.bf16.msra.mxu0 %v6556
  %10703 = vmatprep.subr.bf16.mxu0 %v6553
  %10704 = vmatpush2.bf16.msra.mxu0 %v6552
  %10705 = vmatprep.subr.bf16.mxu0 %v6549
  %10706 = vmatpush2.bf16.msra.mxu0 %v6548
  %10707 = vmatprep.mubr.bf16.mxu0 %v1713
  %10708 = vmatmul.mubr.bf16.gmra.mxu0 %v1712
  %v10709 = vpop.f32.mrf.mxu0
  %v10710 = vadd.f32 %v1629, %v10709
  %v10711 = vpop.f32.mrf.mxu0
  %v10712 = vadd.f32 %v1633, %v10711
  %v10713 = vpop.f32.mrf.mxu0
  %v10714 = vpop.f32.mrf.mxu0
  %10715 = vdwg.mxu0
  %10716 = vmatprep.subr.bf16.mxu0 %v6609
  %10717 = vmatpush1.bf16.msra.mxu0 %v6608
  %10718 = vmatprep.subr.bf16.mxu0 %v6605
  %10719 = vmatpush1.bf16.msra.mxu0 %v6604
  %10720 = vmatprep.subr.bf16.mxu0 %v6601
  %10721 = vmatpush1.bf16.msra.mxu0 %v6600
  %10722 = vmatprep.subr.bf16.mxu0 %v6597
  %10723 = vmatpush1.bf16.msra.mxu0 %v6596
  %10724 = vmatprep.subr.bf16.mxu0 %v6593
  %10725 = vmatpush1.bf16.msra.mxu0 %v6592
  %10726 = vmatprep.subr.bf16.mxu0 %v6589
  %10727 = vmatpush1.bf16.msra.mxu0 %v6588
  %10728 = vmatprep.subr.bf16.mxu0 %v6585
  %10729 = vmatpush1.bf16.msra.mxu0 %v6584
  %10730 = vmatprep.subr.bf16.mxu0 %v6581
  %10731 = vmatpush1.bf16.msra.mxu0 %v6580
  %10732 = vmatprep.subr.bf16.mxu0 %v6641
  %10733 = vmatpush2.bf16.msra.mxu0 %v6640
  %10734 = vmatprep.subr.bf16.mxu0 %v6637
  %10735 = vmatpush2.bf16.msra.mxu0 %v6636
  %10736 = vmatprep.subr.bf16.mxu0 %v6633
  %10737 = vmatpush2.bf16.msra.mxu0 %v6632
  %10738 = vmatprep.subr.bf16.mxu0 %v6629
  %10739 = vmatpush2.bf16.msra.mxu0 %v6628
  %10740 = vmatprep.subr.bf16.mxu0 %v6625
  %10741 = vmatpush2.bf16.msra.mxu0 %v6624
  %10742 = vmatprep.subr.bf16.mxu0 %v6621
  %10743 = vmatpush2.bf16.msra.mxu0 %v6620
  %10744 = vmatprep.subr.bf16.mxu0 %v6617
  %10745 = vmatpush2.bf16.msra.mxu0 %v6616
  %10746 = vmatprep.subr.bf16.mxu0 %v6613
  %10747 = vmatpush2.bf16.msra.mxu0 %v6612
  %10748 = vmatprep.mubr.bf16.mxu0 %v1715
  %10749 = vmatmul.mubr.bf16.gmra.mxu0 %v1714
  %v10750 = vpop.f32.mrf.mxu0
  %v10751 = vadd.f32 %v10710, %v10750
  %v10752 = vpop.f32.mrf.mxu0
  %v10753 = vadd.f32 %v10712, %v10752
  %v10754 = vpop.f32.mrf.mxu0
  %v10755 = vpop.f32.mrf.mxu0
  %10756 = vdwg.mxu0
  %10757 = vmatprep.subr.bf16.mxu0 %v6673
  %10758 = vmatpush1.bf16.msra.mxu0 %v6672
  %10759 = vmatprep.subr.bf16.mxu0 %v6669
  %10760 = vmatpush1.bf16.msra.mxu0 %v6668
  %10761 = vmatprep.subr.bf16.mxu0 %v6665
  %10762 = vmatpush1.bf16.msra.mxu0 %v6664
  %10763 = vmatprep.subr.bf16.mxu0 %v6661
  %10764 = vmatpush1.bf16.msra.mxu0 %v6660
  %10765 = vmatprep.subr.bf16.mxu0 %v6657
  %10766 = vmatpush1.bf16.msra.mxu0 %v6656
  %10767 = vmatprep.subr.bf16.mxu0 %v6653
  %10768 = vmatpush1.bf16.msra.mxu0 %v6652
  %10769 = vmatprep.subr.bf16.mxu0 %v6649
  %10770 = vmatpush1.bf16.msra.mxu0 %v6648
  %10771 = vmatprep.subr.bf16.mxu0 %v6645
  %10772 = vmatpush1.bf16.msra.mxu0 %v6644
  %10773 = vmatprep.subr.bf16.mxu0 %v6705
  %10774 = vmatpush2.bf16.msra.mxu0 %v6704
  %10775 = vmatprep.subr.bf16.mxu0 %v6701
  %10776 = vmatpush2.bf16.msra.mxu0 %v6700
  %10777 = vmatprep.subr.bf16.mxu0 %v6697
  %10778 = vmatpush2.bf16.msra.mxu0 %v6696
  %10779 = vmatprep.subr.bf16.mxu0 %v6693
  %10780 = vmatpush2.bf16.msra.mxu0 %v6692
  %10781 = vmatprep.subr.bf16.mxu0 %v6689
  %10782 = vmatpush2.bf16.msra.mxu0 %v6688
  %10783 = vmatprep.subr.bf16.mxu0 %v6685
  %10784 = vmatpush2.bf16.msra.mxu0 %v6684
  %10785 = vmatprep.subr.bf16.mxu0 %v6681
  %10786 = vmatpush2.bf16.msra.mxu0 %v6680
  %10787 = vmatprep.subr.bf16.mxu0 %v6677
  %10788 = vmatpush2.bf16.msra.mxu0 %v6676
  %10789 = vmatprep.mubr.bf16.mxu0 %v1717
  %10790 = vmatmul.mubr.bf16.gmra.mxu0 %v1716
  %v10791 = vpop.f32.mrf.mxu0
  %v10792 = vadd.f32 %v10751, %v10791
  %v10793 = vpop.f32.mrf.mxu0
  %v10794 = vadd.f32 %v10753, %v10793
  %v10795 = vpop.f32.mrf.mxu0
  %v10796 = vpop.f32.mrf.mxu0
  %10797 = vdwg.mxu0
  %10798 = vmatprep.subr.bf16.mxu0 %v6737
  %10799 = vmatpush1.bf16.msra.mxu0 %v6736
  %10800 = vmatprep.subr.bf16.mxu0 %v6733
  %10801 = vmatpush1.bf16.msra.mxu0 %v6732
  %10802 = vmatprep.subr.bf16.mxu0 %v6729
  %10803 = vmatpush1.bf16.msra.mxu0 %v6728
  %10804 = vmatprep.subr.bf16.mxu0 %v6725
  %10805 = vmatpush1.bf16.msra.mxu0 %v6724
  %10806 = vmatprep.subr.bf16.mxu0 %v6721
  %10807 = vmatpush1.bf16.msra.mxu0 %v6720
  %10808 = vmatprep.subr.bf16.mxu0 %v6717
  %10809 = vmatpush1.bf16.msra.mxu0 %v6716
  %10810 = vmatprep.subr.bf16.mxu0 %v6713
  %10811 = vmatpush1.bf16.msra.mxu0 %v6712
  %10812 = vmatprep.subr.bf16.mxu0 %v6709
  %10813 = vmatpush1.bf16.msra.mxu0 %v6708
  %10814 = vmatprep.subr.bf16.mxu0 %v6769
  %10815 = vmatpush2.bf16.msra.mxu0 %v6768
  %10816 = vmatprep.subr.bf16.mxu0 %v6765
  %10817 = vmatpush2.bf16.msra.mxu0 %v6764
  %10818 = vmatprep.subr.bf16.mxu0 %v6761
  %10819 = vmatpush2.bf16.msra.mxu0 %v6760
  %10820 = vmatprep.subr.bf16.mxu0 %v6757
  %10821 = vmatpush2.bf16.msra.mxu0 %v6756
  %10822 = vmatprep.subr.bf16.mxu0 %v6753
  %10823 = vmatpush2.bf16.msra.mxu0 %v6752
  %10824 = vmatprep.subr.bf16.mxu0 %v6749
  %10825 = vmatpush2.bf16.msra.mxu0 %v6748
  %10826 = vmatprep.subr.bf16.mxu0 %v6745
  %10827 = vmatpush2.bf16.msra.mxu0 %v6744
  %10828 = vmatprep.subr.bf16.mxu0 %v6741
  %10829 = vmatpush2.bf16.msra.mxu0 %v6740
  %10830 = vmatprep.mubr.bf16.mxu0 %v1719
  %10831 = vmatmul.mubr.bf16.gmra.mxu0 %v1718
  %v10832 = vpop.f32.mrf.mxu0
  %v10833 = vadd.f32 %v10792, %v10832
  %v10834 = vpop.f32.mrf.mxu0
  %v10835 = vadd.f32 %v10794, %v10834
  %v10836 = vpop.f32.mrf.mxu0
  %v10837 = vpop.f32.mrf.mxu0
  %10838 = vdwg.mxu0
  %10839 = vmatprep.subr.bf16.mxu0 %v6801
  %10840 = vmatpush1.bf16.msra.mxu0 %v6800
  %10841 = vmatprep.subr.bf16.mxu0 %v6797
  %10842 = vmatpush1.bf16.msra.mxu0 %v6796
  %10843 = vmatprep.subr.bf16.mxu0 %v6793
  %10844 = vmatpush1.bf16.msra.mxu0 %v6792
  %10845 = vmatprep.subr.bf16.mxu0 %v6789
  %10846 = vmatpush1.bf16.msra.mxu0 %v6788
  %10847 = vmatprep.subr.bf16.mxu0 %v6785
  %10848 = vmatpush1.bf16.msra.mxu0 %v6784
  %10849 = vmatprep.subr.bf16.mxu0 %v6781
  %10850 = vmatpush1.bf16.msra.mxu0 %v6780
  %10851 = vmatprep.subr.bf16.mxu0 %v6777
  %10852 = vmatpush1.bf16.msra.mxu0 %v6776
  %10853 = vmatprep.subr.bf16.mxu0 %v6773
  %10854 = vmatpush1.bf16.msra.mxu0 %v6772
  %10855 = vmatprep.subr.bf16.mxu0 %v6833
  %10856 = vmatpush2.bf16.msra.mxu0 %v6832
  %10857 = vmatprep.subr.bf16.mxu0 %v6829
  %10858 = vmatpush2.bf16.msra.mxu0 %v6828
  %10859 = vmatprep.subr.bf16.mxu0 %v6825
  %10860 = vmatpush2.bf16.msra.mxu0 %v6824
  %10861 = vmatprep.subr.bf16.mxu0 %v6821
  %10862 = vmatpush2.bf16.msra.mxu0 %v6820
  %10863 = vmatprep.subr.bf16.mxu0 %v6817
  %10864 = vmatpush2.bf16.msra.mxu0 %v6816
  %10865 = vmatprep.subr.bf16.mxu0 %v6813
  %10866 = vmatpush2.bf16.msra.mxu0 %v6812
  %10867 = vmatprep.subr.bf16.mxu0 %v6809
  %10868 = vmatpush2.bf16.msra.mxu0 %v6808
  %10869 = vmatprep.subr.bf16.mxu0 %v6805
  %10870 = vmatpush2.bf16.msra.mxu0 %v6804
  %10871 = vmatprep.mubr.bf16.mxu0 %v1721
  %10872 = vmatmul.mubr.bf16.gmra.mxu0 %v1720
  %v10873 = vpop.f32.mrf.mxu0
  %v10874 = vadd.f32 %v10833, %v10873
  %v10875 = vpop.f32.mrf.mxu0
  %v10876 = vadd.f32 %v10835, %v10875
  %v10877 = vpop.f32.mrf.mxu0
  %v10878 = vpop.f32.mrf.mxu0
  %10879 = vdwg.mxu0
  %10880 = vmatprep.subr.bf16.mxu0 %v6865
  %10881 = vmatpush1.bf16.msra.mxu0 %v6864
  %10882 = vmatprep.subr.bf16.mxu0 %v6861
  %10883 = vmatpush1.bf16.msra.mxu0 %v6860
  %10884 = vmatprep.subr.bf16.mxu0 %v6857
  %10885 = vmatpush1.bf16.msra.mxu0 %v6856
  %10886 = vmatprep.subr.bf16.mxu0 %v6853
  %10887 = vmatpush1.bf16.msra.mxu0 %v6852
  %10888 = vmatprep.subr.bf16.mxu0 %v6849
  %10889 = vmatpush1.bf16.msra.mxu0 %v6848
  %10890 = vmatprep.subr.bf16.mxu0 %v6845
  %10891 = vmatpush1.bf16.msra.mxu0 %v6844
  %10892 = vmatprep.subr.bf16.mxu0 %v6841
  %10893 = vmatpush1.bf16.msra.mxu0 %v6840
  %10894 = vmatprep.subr.bf16.mxu0 %v6837
  %10895 = vmatpush1.bf16.msra.mxu0 %v6836
  %10896 = vmatprep.subr.bf16.mxu0 %v6897
  %10897 = vmatpush2.bf16.msra.mxu0 %v6896
  %10898 = vmatprep.subr.bf16.mxu0 %v6893
  %10899 = vmatpush2.bf16.msra.mxu0 %v6892
  %10900 = vmatprep.subr.bf16.mxu0 %v6889
  %10901 = vmatpush2.bf16.msra.mxu0 %v6888
  %10902 = vmatprep.subr.bf16.mxu0 %v6885
  %10903 = vmatpush2.bf16.msra.mxu0 %v6884
  %10904 = vmatprep.subr.bf16.mxu0 %v6881
  %10905 = vmatpush2.bf16.msra.mxu0 %v6880
  %10906 = vmatprep.subr.bf16.mxu0 %v6877
  %10907 = vmatpush2.bf16.msra.mxu0 %v6876
  %10908 = vmatprep.subr.bf16.mxu0 %v6873
  %10909 = vmatpush2.bf16.msra.mxu0 %v6872
  %10910 = vmatprep.subr.bf16.mxu0 %v6869
  %10911 = vmatpush2.bf16.msra.mxu0 %v6868
  %10912 = vmatprep.mubr.bf16.mxu0 %v1723
  %10913 = vmatmul.mubr.bf16.gmra.mxu0 %v1722
  %v10914 = vpop.f32.mrf.mxu0
  %v10915 = vadd.f32 %v10874, %v10914
  %v10916 = vpop.f32.mrf.mxu0
  %v10917 = vadd.f32 %v10876, %v10916
  %v10918 = vpop.f32.mrf.mxu0
  %v10919 = vpop.f32.mrf.mxu0
  %10920 = vdwg.mxu0
  %10921 = vmatprep.subr.bf16.mxu0 %v6929
  %10922 = vmatpush1.bf16.msra.mxu0 %v6928
  %10923 = vmatprep.subr.bf16.mxu0 %v6925
  %10924 = vmatpush1.bf16.msra.mxu0 %v6924
  %10925 = vmatprep.subr.bf16.mxu0 %v6921
  %10926 = vmatpush1.bf16.msra.mxu0 %v6920
  %10927 = vmatprep.subr.bf16.mxu0 %v6917
  %10928 = vmatpush1.bf16.msra.mxu0 %v6916
  %10929 = vmatprep.subr.bf16.mxu0 %v6913
  %10930 = vmatpush1.bf16.msra.mxu0 %v6912
  %10931 = vmatprep.subr.bf16.mxu0 %v6909
  %10932 = vmatpush1.bf16.msra.mxu0 %v6908
  %10933 = vmatprep.subr.bf16.mxu0 %v6905
  %10934 = vmatpush1.bf16.msra.mxu0 %v6904
  %10935 = vmatprep.subr.bf16.mxu0 %v6901
  %10936 = vmatpush1.bf16.msra.mxu0 %v6900
  %10937 = vmatprep.subr.bf16.mxu0 %v6961
  %10938 = vmatpush2.bf16.msra.mxu0 %v6960
  %10939 = vmatprep.subr.bf16.mxu0 %v6957
  %10940 = vmatpush2.bf16.msra.mxu0 %v6956
  %10941 = vmatprep.subr.bf16.mxu0 %v6953
  %10942 = vmatpush2.bf16.msra.mxu0 %v6952
  %10943 = vmatprep.subr.bf16.mxu0 %v6949
  %10944 = vmatpush2.bf16.msra.mxu0 %v6948
  %10945 = vmatprep.subr.bf16.mxu0 %v6945
  %10946 = vmatpush2.bf16.msra.mxu0 %v6944
  %10947 = vmatprep.subr.bf16.mxu0 %v6941
  %10948 = vmatpush2.bf16.msra.mxu0 %v6940
  %10949 = vmatprep.subr.bf16.mxu0 %v6937
  %10950 = vmatpush2.bf16.msra.mxu0 %v6936
  %10951 = vmatprep.subr.bf16.mxu0 %v6933
  %10952 = vmatpush2.bf16.msra.mxu0 %v6932
  %10953 = vmatprep.mubr.bf16.mxu0 %v1725
  %10954 = vmatmul.mubr.bf16.gmra.mxu0 %v1724
  %v10955 = vpop.f32.mrf.mxu0
  %v10956 = vadd.f32 %v10915, %v10955
  %v10957 = vpop.f32.mrf.mxu0
  %v10958 = vadd.f32 %v10917, %v10957
  %v10959 = vpop.f32.mrf.mxu0
  %v10960 = vpop.f32.mrf.mxu0
  %10961 = vdwg.mxu0
  %10962 = vmatprep.subr.bf16.mxu0 %v6993
  %10963 = vmatpush1.bf16.msra.mxu0 %v6992
  %10964 = vmatprep.subr.bf16.mxu0 %v6989
  %10965 = vmatpush1.bf16.msra.mxu0 %v6988
  %10966 = vmatprep.subr.bf16.mxu0 %v6985
  %10967 = vmatpush1.bf16.msra.mxu0 %v6984
  %10968 = vmatprep.subr.bf16.mxu0 %v6981
  %10969 = vmatpush1.bf16.msra.mxu0 %v6980
  %10970 = vmatprep.subr.bf16.mxu0 %v6977
  %10971 = vmatpush1.bf16.msra.mxu0 %v6976
  %10972 = vmatprep.subr.bf16.mxu0 %v6973
  %10973 = vmatpush1.bf16.msra.mxu0 %v6972
  %10974 = vmatprep.subr.bf16.mxu0 %v6969
  %10975 = vmatpush1.bf16.msra.mxu0 %v6968
  %10976 = vmatprep.subr.bf16.mxu0 %v6965
  %10977 = vmatpush1.bf16.msra.mxu0 %v6964
  %10978 = vmatprep.subr.bf16.mxu0 %v7025
  %10979 = vmatpush2.bf16.msra.mxu0 %v7024
  %10980 = vmatprep.subr.bf16.mxu0 %v7021
  %10981 = vmatpush2.bf16.msra.mxu0 %v7020
  %10982 = vmatprep.subr.bf16.mxu0 %v7017
  %10983 = vmatpush2.bf16.msra.mxu0 %v7016
  %10984 = vmatprep.subr.bf16.mxu0 %v7013
  %10985 = vmatpush2.bf16.msra.mxu0 %v7012
  %10986 = vmatprep.subr.bf16.mxu0 %v7009
  %10987 = vmatpush2.bf16.msra.mxu0 %v7008
  %10988 = vmatprep.subr.bf16.mxu0 %v7005
  %10989 = vmatpush2.bf16.msra.mxu0 %v7004
  %10990 = vmatprep.subr.bf16.mxu0 %v7001
  %10991 = vmatpush2.bf16.msra.mxu0 %v7000
  %10992 = vmatprep.subr.bf16.mxu0 %v6997
  %10993 = vmatpush2.bf16.msra.mxu0 %v6996
  %10994 = vmatprep.mubr.bf16.mxu0 %v1727
  %10995 = vmatmul.mubr.bf16.gmra.mxu0 %v1726
  %v10996 = vpop.f32.mrf.mxu0
  %v10997 = vadd.f32 %v10956, %v10996
  %v10998 = vpop.f32.mrf.mxu0
  %v10999 = vadd.f32 %v10958, %v10998
  %v11000 = vpop.f32.mrf.mxu0
  %v11001 = vpop.f32.mrf.mxu0
  %11002 = vdwg.mxu0
  %11003 = vmatprep.subr.bf16.mxu0 %v7057
  %11004 = vmatpush1.bf16.msra.mxu0 %v7056
  %11005 = vmatprep.subr.bf16.mxu0 %v7053
  %11006 = vmatpush1.bf16.msra.mxu0 %v7052
  %11007 = vmatprep.subr.bf16.mxu0 %v7049
  %11008 = vmatpush1.bf16.msra.mxu0 %v7048
  %11009 = vmatprep.subr.bf16.mxu0 %v7045
  %11010 = vmatpush1.bf16.msra.mxu0 %v7044
  %11011 = vmatprep.subr.bf16.mxu0 %v7041
  %11012 = vmatpush1.bf16.msra.mxu0 %v7040
  %11013 = vmatprep.subr.bf16.mxu0 %v7037
  %11014 = vmatpush1.bf16.msra.mxu0 %v7036
  %11015 = vmatprep.subr.bf16.mxu0 %v7033
  %11016 = vmatpush1.bf16.msra.mxu0 %v7032
  %11017 = vmatprep.subr.bf16.mxu0 %v7029
  %11018 = vmatpush1.bf16.msra.mxu0 %v7028
  %11019 = vmatprep.subr.bf16.mxu0 %v7089
  %11020 = vmatpush2.bf16.msra.mxu0 %v7088
  %11021 = vmatprep.subr.bf16.mxu0 %v7085
  %11022 = vmatpush2.bf16.msra.mxu0 %v7084
  %11023 = vmatprep.subr.bf16.mxu0 %v7081
  %11024 = vmatpush2.bf16.msra.mxu0 %v7080
  %11025 = vmatprep.subr.bf16.mxu0 %v7077
  %11026 = vmatpush2.bf16.msra.mxu0 %v7076
  %11027 = vmatprep.subr.bf16.mxu0 %v7073
  %11028 = vmatpush2.bf16.msra.mxu0 %v7072
  %11029 = vmatprep.subr.bf16.mxu0 %v7069
  %11030 = vmatpush2.bf16.msra.mxu0 %v7068
  %11031 = vmatprep.subr.bf16.mxu0 %v7065
  %11032 = vmatpush2.bf16.msra.mxu0 %v7064
  %11033 = vmatprep.subr.bf16.mxu0 %v7061
  %11034 = vmatpush2.bf16.msra.mxu0 %v7060
  %11035 = vmatprep.mubr.bf16.mxu0 %v1729
  %11036 = vmatmul.mubr.bf16.gmra.mxu0 %v1728
  %v11037 = vpop.f32.mrf.mxu0
  %v11038 = vadd.f32 %v10997, %v11037
  %v11039 = vpop.f32.mrf.mxu0
  %v11040 = vadd.f32 %v10999, %v11039
  %v11041 = vpop.f32.mrf.mxu0
  %v11042 = vpop.f32.mrf.mxu0
  %11043 = vdwg.mxu0
  %11044 = vmatprep.subr.bf16.mxu0 %v7121
  %11045 = vmatpush1.bf16.msra.mxu0 %v7120
  %11046 = vmatprep.subr.bf16.mxu0 %v7117
  %11047 = vmatpush1.bf16.msra.mxu0 %v7116
  %11048 = vmatprep.subr.bf16.mxu0 %v7113
  %11049 = vmatpush1.bf16.msra.mxu0 %v7112
  %11050 = vmatprep.subr.bf16.mxu0 %v7109
  %11051 = vmatpush1.bf16.msra.mxu0 %v7108
  %11052 = vmatprep.subr.bf16.mxu0 %v7105
  %11053 = vmatpush1.bf16.msra.mxu0 %v7104
  %11054 = vmatprep.subr.bf16.mxu0 %v7101
  %11055 = vmatpush1.bf16.msra.mxu0 %v7100
  %11056 = vmatprep.subr.bf16.mxu0 %v7097
  %11057 = vmatpush1.bf16.msra.mxu0 %v7096
  %11058 = vmatprep.subr.bf16.mxu0 %v7093
  %11059 = vmatpush1.bf16.msra.mxu0 %v7092
  %11060 = vmatprep.subr.bf16.mxu0 %v7153
  %11061 = vmatpush2.bf16.msra.mxu0 %v7152
  %11062 = vmatprep.subr.bf16.mxu0 %v7149
  %11063 = vmatpush2.bf16.msra.mxu0 %v7148
  %11064 = vmatprep.subr.bf16.mxu0 %v7145
  %11065 = vmatpush2.bf16.msra.mxu0 %v7144
  %11066 = vmatprep.subr.bf16.mxu0 %v7141
  %11067 = vmatpush2.bf16.msra.mxu0 %v7140
  %11068 = vmatprep.subr.bf16.mxu0 %v7137
  %11069 = vmatpush2.bf16.msra.mxu0 %v7136
  %11070 = vmatprep.subr.bf16.mxu0 %v7133
  %11071 = vmatpush2.bf16.msra.mxu0 %v7132
  %11072 = vmatprep.subr.bf16.mxu0 %v7129
  %11073 = vmatpush2.bf16.msra.mxu0 %v7128
  %11074 = vmatprep.subr.bf16.mxu0 %v7125
  %11075 = vmatpush2.bf16.msra.mxu0 %v7124
  %11076 = vmatprep.mubr.bf16.mxu0 %v1731
  %11077 = vmatmul.mubr.bf16.gmra.mxu0 %v1730
  %v11078 = vpop.f32.mrf.mxu0
  %v11079 = vadd.f32 %v11038, %v11078
  %v11080 = vpop.f32.mrf.mxu0
  %v11081 = vadd.f32 %v11040, %v11080
  %v11082 = vpop.f32.mrf.mxu0
  %v11083 = vpop.f32.mrf.mxu0
  %11084 = vdwg.mxu0
  %11085 = vmatprep.subr.bf16.mxu0 %v7185
  %11086 = vmatpush1.bf16.msra.mxu0 %v7184
  %11087 = vmatprep.subr.bf16.mxu0 %v7181
  %11088 = vmatpush1.bf16.msra.mxu0 %v7180
  %11089 = vmatprep.subr.bf16.mxu0 %v7177
  %11090 = vmatpush1.bf16.msra.mxu0 %v7176
  %11091 = vmatprep.subr.bf16.mxu0 %v7173
  %11092 = vmatpush1.bf16.msra.mxu0 %v7172
  %11093 = vmatprep.subr.bf16.mxu0 %v7169
  %11094 = vmatpush1.bf16.msra.mxu0 %v7168
  %11095 = vmatprep.subr.bf16.mxu0 %v7165
  %11096 = vmatpush1.bf16.msra.mxu0 %v7164
  %11097 = vmatprep.subr.bf16.mxu0 %v7161
  %11098 = vmatpush1.bf16.msra.mxu0 %v7160
  %11099 = vmatprep.subr.bf16.mxu0 %v7157
  %11100 = vmatpush1.bf16.msra.mxu0 %v7156
  %11101 = vmatprep.subr.bf16.mxu0 %v7217
  %11102 = vmatpush2.bf16.msra.mxu0 %v7216
  %11103 = vmatprep.subr.bf16.mxu0 %v7213
  %11104 = vmatpush2.bf16.msra.mxu0 %v7212
  %11105 = vmatprep.subr.bf16.mxu0 %v7209
  %11106 = vmatpush2.bf16.msra.mxu0 %v7208
  %11107 = vmatprep.subr.bf16.mxu0 %v7205
  %11108 = vmatpush2.bf16.msra.mxu0 %v7204
  %11109 = vmatprep.subr.bf16.mxu0 %v7201
  %11110 = vmatpush2.bf16.msra.mxu0 %v7200
  %11111 = vmatprep.subr.bf16.mxu0 %v7197
  %11112 = vmatpush2.bf16.msra.mxu0 %v7196
  %11113 = vmatprep.subr.bf16.mxu0 %v7193
  %11114 = vmatpush2.bf16.msra.mxu0 %v7192
  %11115 = vmatprep.subr.bf16.mxu0 %v7189
  %11116 = vmatpush2.bf16.msra.mxu0 %v7188
  %11117 = vmatprep.mubr.bf16.mxu0 %v1733
  %11118 = vmatmul.mubr.bf16.gmra.mxu0 %v1732
  %v11119 = vpop.f32.mrf.mxu0
  %v11120 = vadd.f32 %v11079, %v11119
  %v11121 = vpop.f32.mrf.mxu0
  %v11122 = vadd.f32 %v11081, %v11121
  %v11123 = vpop.f32.mrf.mxu0
  %v11124 = vpop.f32.mrf.mxu0
  %11125 = vdwg.mxu0
  %11126 = vmatprep.subr.bf16.mxu0 %v7249
  %11127 = vmatpush1.bf16.msra.mxu0 %v7248
  %11128 = vmatprep.subr.bf16.mxu0 %v7245
  %11129 = vmatpush1.bf16.msra.mxu0 %v7244
  %11130 = vmatprep.subr.bf16.mxu0 %v7241
  %11131 = vmatpush1.bf16.msra.mxu0 %v7240
  %11132 = vmatprep.subr.bf16.mxu0 %v7237
  %11133 = vmatpush1.bf16.msra.mxu0 %v7236
  %11134 = vmatprep.subr.bf16.mxu0 %v7233
  %11135 = vmatpush1.bf16.msra.mxu0 %v7232
  %11136 = vmatprep.subr.bf16.mxu0 %v7229
  %11137 = vmatpush1.bf16.msra.mxu0 %v7228
  %11138 = vmatprep.subr.bf16.mxu0 %v7225
  %11139 = vmatpush1.bf16.msra.mxu0 %v7224
  %11140 = vmatprep.subr.bf16.mxu0 %v7221
  %11141 = vmatpush1.bf16.msra.mxu0 %v7220
  %11142 = vmatprep.subr.bf16.mxu0 %v7281
  %11143 = vmatpush2.bf16.msra.mxu0 %v7280
  %11144 = vmatprep.subr.bf16.mxu0 %v7277
  %11145 = vmatpush2.bf16.msra.mxu0 %v7276
  %11146 = vmatprep.subr.bf16.mxu0 %v7273
  %11147 = vmatpush2.bf16.msra.mxu0 %v7272
  %11148 = vmatprep.subr.bf16.mxu0 %v7269
  %11149 = vmatpush2.bf16.msra.mxu0 %v7268
  %11150 = vmatprep.subr.bf16.mxu0 %v7265
  %11151 = vmatpush2.bf16.msra.mxu0 %v7264
  %11152 = vmatprep.subr.bf16.mxu0 %v7261
  %11153 = vmatpush2.bf16.msra.mxu0 %v7260
  %11154 = vmatprep.subr.bf16.mxu0 %v7257
  %11155 = vmatpush2.bf16.msra.mxu0 %v7256
  %11156 = vmatprep.subr.bf16.mxu0 %v7253
  %11157 = vmatpush2.bf16.msra.mxu0 %v7252
  %11158 = vmatprep.mubr.bf16.mxu0 %v1735
  %11159 = vmatmul.mubr.bf16.gmra.mxu0 %v1734
  %v11160 = vpop.f32.mrf.mxu0
  %v11161 = vadd.f32 %v11120, %v11160
  %v11162 = vpop.f32.mrf.mxu0
  %v11163 = vadd.f32 %v11122, %v11162
  %v11164 = vpop.f32.mrf.mxu0
  %v11165 = vpop.f32.mrf.mxu0
  %11166 = vdwg.mxu0
  %11167 = vmatprep.subr.bf16.mxu0 %v7313
  %11168 = vmatpush1.bf16.msra.mxu0 %v7312
  %11169 = vmatprep.subr.bf16.mxu0 %v7309
  %11170 = vmatpush1.bf16.msra.mxu0 %v7308
  %11171 = vmatprep.subr.bf16.mxu0 %v7305
  %11172 = vmatpush1.bf16.msra.mxu0 %v7304
  %11173 = vmatprep.subr.bf16.mxu0 %v7301
  %11174 = vmatpush1.bf16.msra.mxu0 %v7300
  %11175 = vmatprep.subr.bf16.mxu0 %v7297
  %11176 = vmatpush1.bf16.msra.mxu0 %v7296
  %11177 = vmatprep.subr.bf16.mxu0 %v7293
  %11178 = vmatpush1.bf16.msra.mxu0 %v7292
  %11179 = vmatprep.subr.bf16.mxu0 %v7289
  %11180 = vmatpush1.bf16.msra.mxu0 %v7288
  %11181 = vmatprep.subr.bf16.mxu0 %v7285
  %11182 = vmatpush1.bf16.msra.mxu0 %v7284
  %11183 = vmatprep.subr.bf16.mxu0 %v7345
  %11184 = vmatpush2.bf16.msra.mxu0 %v7344
  %11185 = vmatprep.subr.bf16.mxu0 %v7341
  %11186 = vmatpush2.bf16.msra.mxu0 %v7340
  %11187 = vmatprep.subr.bf16.mxu0 %v7337
  %11188 = vmatpush2.bf16.msra.mxu0 %v7336
  %11189 = vmatprep.subr.bf16.mxu0 %v7333
  %11190 = vmatpush2.bf16.msra.mxu0 %v7332
  %11191 = vmatprep.subr.bf16.mxu0 %v7329
  %11192 = vmatpush2.bf16.msra.mxu0 %v7328
  %11193 = vmatprep.subr.bf16.mxu0 %v7325
  %11194 = vmatpush2.bf16.msra.mxu0 %v7324
  %11195 = vmatprep.subr.bf16.mxu0 %v7321
  %11196 = vmatpush2.bf16.msra.mxu0 %v7320
  %11197 = vmatprep.subr.bf16.mxu0 %v7317
  %11198 = vmatpush2.bf16.msra.mxu0 %v7316
  %11199 = vmatprep.mubr.bf16.mxu0 %v1737
  %11200 = vmatmul.mubr.bf16.gmra.mxu0 %v1736
  %v11201 = vpop.f32.mrf.mxu0
  %v11202 = vadd.f32 %v11161, %v11201
  %v11203 = vpop.f32.mrf.mxu0
  %v11204 = vadd.f32 %v11163, %v11203
  %v11205 = vpop.f32.mrf.mxu0
  %v11206 = vpop.f32.mrf.mxu0
  %11207 = vdwg.mxu0
  %11208 = vmatprep.subr.bf16.mxu0 %v7377
  %11209 = vmatpush1.bf16.msra.mxu0 %v7376
  %11210 = vmatprep.subr.bf16.mxu0 %v7373
  %11211 = vmatpush1.bf16.msra.mxu0 %v7372
  %11212 = vmatprep.subr.bf16.mxu0 %v7369
  %11213 = vmatpush1.bf16.msra.mxu0 %v7368
  %11214 = vmatprep.subr.bf16.mxu0 %v7365
  %11215 = vmatpush1.bf16.msra.mxu0 %v7364
  %11216 = vmatprep.subr.bf16.mxu0 %v7361
  %11217 = vmatpush1.bf16.msra.mxu0 %v7360
  %11218 = vmatprep.subr.bf16.mxu0 %v7357
  %11219 = vmatpush1.bf16.msra.mxu0 %v7356
  %11220 = vmatprep.subr.bf16.mxu0 %v7353
  %11221 = vmatpush1.bf16.msra.mxu0 %v7352
  %11222 = vmatprep.subr.bf16.mxu0 %v7349
  %11223 = vmatpush1.bf16.msra.mxu0 %v7348
  %11224 = vmatprep.subr.bf16.mxu0 %v7409
  %11225 = vmatpush2.bf16.msra.mxu0 %v7408
  %11226 = vmatprep.subr.bf16.mxu0 %v7405
  %11227 = vmatpush2.bf16.msra.mxu0 %v7404
  %11228 = vmatprep.subr.bf16.mxu0 %v7401
  %11229 = vmatpush2.bf16.msra.mxu0 %v7400
  %11230 = vmatprep.subr.bf16.mxu0 %v7397
  %11231 = vmatpush2.bf16.msra.mxu0 %v7396
  %11232 = vmatprep.subr.bf16.mxu0 %v7393
  %11233 = vmatpush2.bf16.msra.mxu0 %v7392
  %11234 = vmatprep.subr.bf16.mxu0 %v7389
  %11235 = vmatpush2.bf16.msra.mxu0 %v7388
  %11236 = vmatprep.subr.bf16.mxu0 %v7385
  %11237 = vmatpush2.bf16.msra.mxu0 %v7384
  %11238 = vmatprep.subr.bf16.mxu0 %v7381
  %11239 = vmatpush2.bf16.msra.mxu0 %v7380
  %11240 = vmatprep.mubr.bf16.mxu0 %v1739
  %11241 = vmatmul.mubr.bf16.gmra.mxu0 %v1738
  %v11242 = vpop.f32.mrf.mxu0
  %v11243 = vadd.f32 %v11202, %v11242
  %v11244 = vpop.f32.mrf.mxu0
  %v11245 = vadd.f32 %v11204, %v11244
  %v11246 = vpop.f32.mrf.mxu0
  %v11247 = vpop.f32.mrf.mxu0
  %11248 = vdwg.mxu0
  %11249 = vmatprep.subr.bf16.mxu0 %v7441
  %11250 = vmatpush1.bf16.msra.mxu0 %v7440
  %11251 = vmatprep.subr.bf16.mxu0 %v7437
  %11252 = vmatpush1.bf16.msra.mxu0 %v7436
  %11253 = vmatprep.subr.bf16.mxu0 %v7433
  %11254 = vmatpush1.bf16.msra.mxu0 %v7432
  %11255 = vmatprep.subr.bf16.mxu0 %v7429
  %11256 = vmatpush1.bf16.msra.mxu0 %v7428
  %11257 = vmatprep.subr.bf16.mxu0 %v7425
  %11258 = vmatpush1.bf16.msra.mxu0 %v7424
  %11259 = vmatprep.subr.bf16.mxu0 %v7421
  %11260 = vmatpush1.bf16.msra.mxu0 %v7420
  %11261 = vmatprep.subr.bf16.mxu0 %v7417
  %11262 = vmatpush1.bf16.msra.mxu0 %v7416
  %11263 = vmatprep.subr.bf16.mxu0 %v7413
  %11264 = vmatpush1.bf16.msra.mxu0 %v7412
  %11265 = vmatprep.subr.bf16.mxu0 %v7473
  %11266 = vmatpush2.bf16.msra.mxu0 %v7472
  %11267 = vmatprep.subr.bf16.mxu0 %v7469
  %11268 = vmatpush2.bf16.msra.mxu0 %v7468
  %11269 = vmatprep.subr.bf16.mxu0 %v7465
  %11270 = vmatpush2.bf16.msra.mxu0 %v7464
  %11271 = vmatprep.subr.bf16.mxu0 %v7461
  %11272 = vmatpush2.bf16.msra.mxu0 %v7460
  %11273 = vmatprep.subr.bf16.mxu0 %v7457
  %11274 = vmatpush2.bf16.msra.mxu0 %v7456
  %11275 = vmatprep.subr.bf16.mxu0 %v7453
  %11276 = vmatpush2.bf16.msra.mxu0 %v7452
  %11277 = vmatprep.subr.bf16.mxu0 %v7449
  %11278 = vmatpush2.bf16.msra.mxu0 %v7448
  %11279 = vmatprep.subr.bf16.mxu0 %v7445
  %11280 = vmatpush2.bf16.msra.mxu0 %v7444
  %11281 = vmatprep.mubr.bf16.mxu0 %v1741
  %11282 = vmatmul.mubr.bf16.gmra.mxu0 %v1740
  %v11283 = vpop.f32.mrf.mxu0
  %v11284 = vadd.f32 %v11243, %v11283
  %v11285 = vpop.f32.mrf.mxu0
  %v11286 = vadd.f32 %v11245, %v11285
  %v11287 = vpop.f32.mrf.mxu0
  %v11288 = vpop.f32.mrf.mxu0
  %11289 = vdwg.mxu0
  %11290 = vmatprep.subr.bf16.mxu0 %v7505
  %11291 = vmatpush1.bf16.msra.mxu0 %v7504
  %11292 = vmatprep.subr.bf16.mxu0 %v7501
  %11293 = vmatpush1.bf16.msra.mxu0 %v7500
  %11294 = vmatprep.subr.bf16.mxu0 %v7497
  %11295 = vmatpush1.bf16.msra.mxu0 %v7496
  %11296 = vmatprep.subr.bf16.mxu0 %v7493
  %11297 = vmatpush1.bf16.msra.mxu0 %v7492
  %11298 = vmatprep.subr.bf16.mxu0 %v7489
  %11299 = vmatpush1.bf16.msra.mxu0 %v7488
  %11300 = vmatprep.subr.bf16.mxu0 %v7485
  %11301 = vmatpush1.bf16.msra.mxu0 %v7484
  %11302 = vmatprep.subr.bf16.mxu0 %v7481
  %11303 = vmatpush1.bf16.msra.mxu0 %v7480
  %11304 = vmatprep.subr.bf16.mxu0 %v7477
  %11305 = vmatpush1.bf16.msra.mxu0 %v7476
  %11306 = vmatprep.subr.bf16.mxu0 %v7537
  %11307 = vmatpush2.bf16.msra.mxu0 %v7536
  %11308 = vmatprep.subr.bf16.mxu0 %v7533
  %11309 = vmatpush2.bf16.msra.mxu0 %v7532
  %11310 = vmatprep.subr.bf16.mxu0 %v7529
  %11311 = vmatpush2.bf16.msra.mxu0 %v7528
  %11312 = vmatprep.subr.bf16.mxu0 %v7525
  %11313 = vmatpush2.bf16.msra.mxu0 %v7524
  %11314 = vmatprep.subr.bf16.mxu0 %v7521
  %11315 = vmatpush2.bf16.msra.mxu0 %v7520
  %11316 = vmatprep.subr.bf16.mxu0 %v7517
  %11317 = vmatpush2.bf16.msra.mxu0 %v7516
  %11318 = vmatprep.subr.bf16.mxu0 %v7513
  %11319 = vmatpush2.bf16.msra.mxu0 %v7512
  %11320 = vmatprep.subr.bf16.mxu0 %v7509
  %11321 = vmatpush2.bf16.msra.mxu0 %v7508
  %11322 = vmatprep.mubr.bf16.mxu0 %v1743
  %11323 = vmatmul.mubr.bf16.gmra.mxu0 %v1742
  %v11324 = vpop.f32.mrf.mxu0
  %v11325 = vadd.f32 %v11284, %v11324
  %v11326 = vpop.f32.mrf.mxu0
  %v11327 = vadd.f32 %v11286, %v11326
  %v11328 = vpop.f32.mrf.mxu0
  %v11329 = vpop.f32.mrf.mxu0
  %11330 = vdwg.mxu0
  %11331 = vmatprep.subr.bf16.mxu0 %v7569
  %11332 = vmatpush1.bf16.msra.mxu0 %v7568
  %11333 = vmatprep.subr.bf16.mxu0 %v7565
  %11334 = vmatpush1.bf16.msra.mxu0 %v7564
  %11335 = vmatprep.subr.bf16.mxu0 %v7561
  %11336 = vmatpush1.bf16.msra.mxu0 %v7560
  %11337 = vmatprep.subr.bf16.mxu0 %v7557
  %11338 = vmatpush1.bf16.msra.mxu0 %v7556
  %11339 = vmatprep.subr.bf16.mxu0 %v7553
  %11340 = vmatpush1.bf16.msra.mxu0 %v7552
  %11341 = vmatprep.subr.bf16.mxu0 %v7549
  %11342 = vmatpush1.bf16.msra.mxu0 %v7548
  %11343 = vmatprep.subr.bf16.mxu0 %v7545
  %11344 = vmatpush1.bf16.msra.mxu0 %v7544
  %11345 = vmatprep.subr.bf16.mxu0 %v7541
  %11346 = vmatpush1.bf16.msra.mxu0 %v7540
  %11347 = vmatprep.subr.bf16.mxu0 %v7601
  %11348 = vmatpush2.bf16.msra.mxu0 %v7600
  %11349 = vmatprep.subr.bf16.mxu0 %v7597
  %11350 = vmatpush2.bf16.msra.mxu0 %v7596
  %11351 = vmatprep.subr.bf16.mxu0 %v7593
  %11352 = vmatpush2.bf16.msra.mxu0 %v7592
  %11353 = vmatprep.subr.bf16.mxu0 %v7589
  %11354 = vmatpush2.bf16.msra.mxu0 %v7588
  %11355 = vmatprep.subr.bf16.mxu0 %v7585
  %11356 = vmatpush2.bf16.msra.mxu0 %v7584
  %11357 = vmatprep.subr.bf16.mxu0 %v7581
  %11358 = vmatpush2.bf16.msra.mxu0 %v7580
  %11359 = vmatprep.subr.bf16.mxu0 %v7577
  %11360 = vmatpush2.bf16.msra.mxu0 %v7576
  %11361 = vmatprep.subr.bf16.mxu0 %v7573
  %11362 = vmatpush2.bf16.msra.mxu0 %v7572
  %11363 = vmatprep.mubr.bf16.mxu0 %v1745
  %11364 = vmatmul.mubr.bf16.gmra.mxu0 %v1744
  %v11365 = vpop.f32.mrf.mxu0
  %v11366 = vadd.f32 %v11325, %v11365
  %v11367 = vpop.f32.mrf.mxu0
  %v11368 = vadd.f32 %v11327, %v11367
  %v11369 = vpop.f32.mrf.mxu0
  %v11370 = vpop.f32.mrf.mxu0
  %11371 = vdwg.mxu0
  %11372 = vmatprep.subr.bf16.mxu0 %v7633
  %11373 = vmatpush1.bf16.msra.mxu0 %v7632
  %11374 = vmatprep.subr.bf16.mxu0 %v7629
  %11375 = vmatpush1.bf16.msra.mxu0 %v7628
  %11376 = vmatprep.subr.bf16.mxu0 %v7625
  %11377 = vmatpush1.bf16.msra.mxu0 %v7624
  %11378 = vmatprep.subr.bf16.mxu0 %v7621
  %11379 = vmatpush1.bf16.msra.mxu0 %v7620
  %11380 = vmatprep.subr.bf16.mxu0 %v7617
  %11381 = vmatpush1.bf16.msra.mxu0 %v7616
  %11382 = vmatprep.subr.bf16.mxu0 %v7613
  %11383 = vmatpush1.bf16.msra.mxu0 %v7612
  %11384 = vmatprep.subr.bf16.mxu0 %v7609
  %11385 = vmatpush1.bf16.msra.mxu0 %v7608
  %11386 = vmatprep.subr.bf16.mxu0 %v7605
  %11387 = vmatpush1.bf16.msra.mxu0 %v7604
  %11388 = vmatprep.subr.bf16.mxu0 %v7665
  %11389 = vmatpush2.bf16.msra.mxu0 %v7664
  %11390 = vmatprep.subr.bf16.mxu0 %v7661
  %11391 = vmatpush2.bf16.msra.mxu0 %v7660
  %11392 = vmatprep.subr.bf16.mxu0 %v7657
  %11393 = vmatpush2.bf16.msra.mxu0 %v7656
  %11394 = vmatprep.subr.bf16.mxu0 %v7653
  %11395 = vmatpush2.bf16.msra.mxu0 %v7652
  %11396 = vmatprep.subr.bf16.mxu0 %v7649
  %11397 = vmatpush2.bf16.msra.mxu0 %v7648
  %11398 = vmatprep.subr.bf16.mxu0 %v7645
  %11399 = vmatpush2.bf16.msra.mxu0 %v7644
  %11400 = vmatprep.subr.bf16.mxu0 %v7641
  %11401 = vmatpush2.bf16.msra.mxu0 %v7640
  %11402 = vmatprep.subr.bf16.mxu0 %v7637
  %11403 = vmatpush2.bf16.msra.mxu0 %v7636
  %11404 = vmatprep.mubr.bf16.mxu0 %v1747
  %11405 = vmatmul.mubr.bf16.gmra.mxu0 %v1746
  %v11406 = vpop.f32.mrf.mxu0
  %v11407 = vadd.f32 %v11366, %v11406
  %v11408 = vpop.f32.mrf.mxu0
  %v11409 = vadd.f32 %v11368, %v11408
  %v11410 = vpop.f32.mrf.mxu0
  %v11411 = vpop.f32.mrf.mxu0
  %11412 = vdwg.mxu0
  %11413 = vmatprep.subr.bf16.mxu0 %v7697
  %11414 = vmatpush1.bf16.msra.mxu0 %v7696
  %11415 = vmatprep.subr.bf16.mxu0 %v7693
  %11416 = vmatpush1.bf16.msra.mxu0 %v7692
  %11417 = vmatprep.subr.bf16.mxu0 %v7689
  %11418 = vmatpush1.bf16.msra.mxu0 %v7688
  %11419 = vmatprep.subr.bf16.mxu0 %v7685
  %11420 = vmatpush1.bf16.msra.mxu0 %v7684
  %11421 = vmatprep.subr.bf16.mxu0 %v7681
  %11422 = vmatpush1.bf16.msra.mxu0 %v7680
  %11423 = vmatprep.subr.bf16.mxu0 %v7677
  %11424 = vmatpush1.bf16.msra.mxu0 %v7676
  %11425 = vmatprep.subr.bf16.mxu0 %v7673
  %11426 = vmatpush1.bf16.msra.mxu0 %v7672
  %11427 = vmatprep.subr.bf16.mxu0 %v7669
  %11428 = vmatpush1.bf16.msra.mxu0 %v7668
  %11429 = vmatprep.subr.bf16.mxu0 %v7729
  %11430 = vmatpush2.bf16.msra.mxu0 %v7728
  %11431 = vmatprep.subr.bf16.mxu0 %v7725
  %11432 = vmatpush2.bf16.msra.mxu0 %v7724
  %11433 = vmatprep.subr.bf16.mxu0 %v7721
  %11434 = vmatpush2.bf16.msra.mxu0 %v7720
  %11435 = vmatprep.subr.bf16.mxu0 %v7717
  %11436 = vmatpush2.bf16.msra.mxu0 %v7716
  %11437 = vmatprep.subr.bf16.mxu0 %v7713
  %11438 = vmatpush2.bf16.msra.mxu0 %v7712
  %11439 = vmatprep.subr.bf16.mxu0 %v7709
  %11440 = vmatpush2.bf16.msra.mxu0 %v7708
  %11441 = vmatprep.subr.bf16.mxu0 %v7705
  %11442 = vmatpush2.bf16.msra.mxu0 %v7704
  %11443 = vmatprep.subr.bf16.mxu0 %v7701
  %11444 = vmatpush2.bf16.msra.mxu0 %v7700
  %11445 = vmatprep.mubr.bf16.mxu0 %v1749
  %11446 = vmatmul.mubr.bf16.gmra.mxu0 %v1748
  %v11447 = vpop.f32.mrf.mxu0
  %v11448 = vadd.f32 %v11407, %v11447
  %v11449 = vpop.f32.mrf.mxu0
  %v11450 = vadd.f32 %v11409, %v11449
  %v11451 = vpop.f32.mrf.mxu0
  %v11452 = vpop.f32.mrf.mxu0
  %11453 = vdwg.mxu0
  %11454 = vmatprep.subr.bf16.mxu0 %v7761
  %11455 = vmatpush1.bf16.msra.mxu0 %v7760
  %11456 = vmatprep.subr.bf16.mxu0 %v7757
  %11457 = vmatpush1.bf16.msra.mxu0 %v7756
  %11458 = vmatprep.subr.bf16.mxu0 %v7753
  %11459 = vmatpush1.bf16.msra.mxu0 %v7752
  %11460 = vmatprep.subr.bf16.mxu0 %v7749
  %11461 = vmatpush1.bf16.msra.mxu0 %v7748
  %11462 = vmatprep.subr.bf16.mxu0 %v7745
  %11463 = vmatpush1.bf16.msra.mxu0 %v7744
  %11464 = vmatprep.subr.bf16.mxu0 %v7741
  %11465 = vmatpush1.bf16.msra.mxu0 %v7740
  %11466 = vmatprep.subr.bf16.mxu0 %v7737
  %11467 = vmatpush1.bf16.msra.mxu0 %v7736
  %11468 = vmatprep.subr.bf16.mxu0 %v7733
  %11469 = vmatpush1.bf16.msra.mxu0 %v7732
  %11470 = vmatprep.subr.bf16.mxu0 %v7793
  %11471 = vmatpush2.bf16.msra.mxu0 %v7792
  %11472 = vmatprep.subr.bf16.mxu0 %v7789
  %11473 = vmatpush2.bf16.msra.mxu0 %v7788
  %11474 = vmatprep.subr.bf16.mxu0 %v7785
  %11475 = vmatpush2.bf16.msra.mxu0 %v7784
  %11476 = vmatprep.subr.bf16.mxu0 %v7781
  %11477 = vmatpush2.bf16.msra.mxu0 %v7780
  %11478 = vmatprep.subr.bf16.mxu0 %v7777
  %11479 = vmatpush2.bf16.msra.mxu0 %v7776
  %11480 = vmatprep.subr.bf16.mxu0 %v7773
  %11481 = vmatpush2.bf16.msra.mxu0 %v7772
  %11482 = vmatprep.subr.bf16.mxu0 %v7769
  %11483 = vmatpush2.bf16.msra.mxu0 %v7768
  %11484 = vmatprep.subr.bf16.mxu0 %v7765
  %11485 = vmatpush2.bf16.msra.mxu0 %v7764
  %11486 = vmatprep.mubr.bf16.mxu0 %v1751
  %11487 = vmatmul.mubr.bf16.gmra.mxu0 %v1750
  %v11488 = vpop.f32.mrf.mxu0
  %v11489 = vadd.f32 %v11448, %v11488
  %v11490 = vpop.f32.mrf.mxu0
  %v11491 = vadd.f32 %v11450, %v11490
  %v11492 = vpop.f32.mrf.mxu0
  %v11493 = vpop.f32.mrf.mxu0
  %11494 = vdwg.mxu0
  %11495 = vmatprep.subr.bf16.mxu0 %v7825
  %11496 = vmatpush1.bf16.msra.mxu0 %v7824
  %11497 = vmatprep.subr.bf16.mxu0 %v7821
  %11498 = vmatpush1.bf16.msra.mxu0 %v7820
  %11499 = vmatprep.subr.bf16.mxu0 %v7817
  %11500 = vmatpush1.bf16.msra.mxu0 %v7816
  %11501 = vmatprep.subr.bf16.mxu0 %v7813
  %11502 = vmatpush1.bf16.msra.mxu0 %v7812
  %11503 = vmatprep.subr.bf16.mxu0 %v7809
  %11504 = vmatpush1.bf16.msra.mxu0 %v7808
  %11505 = vmatprep.subr.bf16.mxu0 %v7805
  %11506 = vmatpush1.bf16.msra.mxu0 %v7804
  %11507 = vmatprep.subr.bf16.mxu0 %v7801
  %11508 = vmatpush1.bf16.msra.mxu0 %v7800
  %11509 = vmatprep.subr.bf16.mxu0 %v7797
  %11510 = vmatpush1.bf16.msra.mxu0 %v7796
  %11511 = vmatprep.subr.bf16.mxu0 %v7857
  %11512 = vmatpush2.bf16.msra.mxu0 %v7856
  %11513 = vmatprep.subr.bf16.mxu0 %v7853
  %11514 = vmatpush2.bf16.msra.mxu0 %v7852
  %11515 = vmatprep.subr.bf16.mxu0 %v7849
  %11516 = vmatpush2.bf16.msra.mxu0 %v7848
  %11517 = vmatprep.subr.bf16.mxu0 %v7845
  %11518 = vmatpush2.bf16.msra.mxu0 %v7844
  %11519 = vmatprep.subr.bf16.mxu0 %v7841
  %11520 = vmatpush2.bf16.msra.mxu0 %v7840
  %11521 = vmatprep.subr.bf16.mxu0 %v7837
  %11522 = vmatpush2.bf16.msra.mxu0 %v7836
  %11523 = vmatprep.subr.bf16.mxu0 %v7833
  %11524 = vmatpush2.bf16.msra.mxu0 %v7832
  %11525 = vmatprep.subr.bf16.mxu0 %v7829
  %11526 = vmatpush2.bf16.msra.mxu0 %v7828
  %11527 = vmatprep.mubr.bf16.mxu0 %v1753
  %11528 = vmatmul.mubr.bf16.gmra.mxu0 %v1752
  %v11529 = vpop.f32.mrf.mxu0
  %v11530 = vadd.f32 %v11489, %v11529
  %v11531 = vpop.f32.mrf.mxu0
  %v11532 = vadd.f32 %v11491, %v11531
  %v11533 = vpop.f32.mrf.mxu0
  %v11534 = vpop.f32.mrf.mxu0
  %11535 = vdwg.mxu0
  %11536 = vmatprep.subr.bf16.mxu0 %v7889
  %11537 = vmatpush1.bf16.msra.mxu0 %v7888
  %11538 = vmatprep.subr.bf16.mxu0 %v7885
  %11539 = vmatpush1.bf16.msra.mxu0 %v7884
  %11540 = vmatprep.subr.bf16.mxu0 %v7881
  %11541 = vmatpush1.bf16.msra.mxu0 %v7880
  %11542 = vmatprep.subr.bf16.mxu0 %v7877
  %11543 = vmatpush1.bf16.msra.mxu0 %v7876
  %11544 = vmatprep.subr.bf16.mxu0 %v7873
  %11545 = vmatpush1.bf16.msra.mxu0 %v7872
  %11546 = vmatprep.subr.bf16.mxu0 %v7869
  %11547 = vmatpush1.bf16.msra.mxu0 %v7868
  %11548 = vmatprep.subr.bf16.mxu0 %v7865
  %11549 = vmatpush1.bf16.msra.mxu0 %v7864
  %11550 = vmatprep.subr.bf16.mxu0 %v7861
  %11551 = vmatpush1.bf16.msra.mxu0 %v7860
  %11552 = vmatprep.subr.bf16.mxu0 %v7921
  %11553 = vmatpush2.bf16.msra.mxu0 %v7920
  %11554 = vmatprep.subr.bf16.mxu0 %v7917
  %11555 = vmatpush2.bf16.msra.mxu0 %v7916
  %11556 = vmatprep.subr.bf16.mxu0 %v7913
  %11557 = vmatpush2.bf16.msra.mxu0 %v7912
  %11558 = vmatprep.subr.bf16.mxu0 %v7909
  %11559 = vmatpush2.bf16.msra.mxu0 %v7908
  %11560 = vmatprep.subr.bf16.mxu0 %v7905
  %11561 = vmatpush2.bf16.msra.mxu0 %v7904
  %11562 = vmatprep.subr.bf16.mxu0 %v7901
  %11563 = vmatpush2.bf16.msra.mxu0 %v7900
  %11564 = vmatprep.subr.bf16.mxu0 %v7897
  %11565 = vmatpush2.bf16.msra.mxu0 %v7896
  %11566 = vmatprep.subr.bf16.mxu0 %v7893
  %11567 = vmatpush2.bf16.msra.mxu0 %v7892
  %11568 = vmatprep.mubr.bf16.mxu0 %v1755
  %11569 = vmatmul.mubr.bf16.gmra.mxu0 %v1754
  %v11570 = vpop.f32.mrf.mxu0
  %v11571 = vadd.f32 %v11530, %v11570
  %v11572 = vpop.f32.mrf.mxu0
  %v11573 = vadd.f32 %v11532, %v11572
  %v11574 = vpop.f32.mrf.mxu0
  %v11575 = vpop.f32.mrf.mxu0
  %11576 = vdwg.mxu0
  %11577 = vmatprep.subr.bf16.mxu0 %v7953
  %11578 = vmatpush1.bf16.msra.mxu0 %v7952
  %11579 = vmatprep.subr.bf16.mxu0 %v7949
  %11580 = vmatpush1.bf16.msra.mxu0 %v7948
  %11581 = vmatprep.subr.bf16.mxu0 %v7945
  %11582 = vmatpush1.bf16.msra.mxu0 %v7944
  %11583 = vmatprep.subr.bf16.mxu0 %v7941
  %11584 = vmatpush1.bf16.msra.mxu0 %v7940
  %11585 = vmatprep.subr.bf16.mxu0 %v7937
  %11586 = vmatpush1.bf16.msra.mxu0 %v7936
  %11587 = vmatprep.subr.bf16.mxu0 %v7933
  %11588 = vmatpush1.bf16.msra.mxu0 %v7932
  %11589 = vmatprep.subr.bf16.mxu0 %v7929
  %11590 = vmatpush1.bf16.msra.mxu0 %v7928
  %11591 = vmatprep.subr.bf16.mxu0 %v7925
  %11592 = vmatpush1.bf16.msra.mxu0 %v7924
  %11593 = vmatprep.subr.bf16.mxu0 %v7985
  %11594 = vmatpush2.bf16.msra.mxu0 %v7984
  %11595 = vmatprep.subr.bf16.mxu0 %v7981
  %11596 = vmatpush2.bf16.msra.mxu0 %v7980
  %11597 = vmatprep.subr.bf16.mxu0 %v7977
  %11598 = vmatpush2.bf16.msra.mxu0 %v7976
  %11599 = vmatprep.subr.bf16.mxu0 %v7973
  %11600 = vmatpush2.bf16.msra.mxu0 %v7972
  %11601 = vmatprep.subr.bf16.mxu0 %v7969
  %11602 = vmatpush2.bf16.msra.mxu0 %v7968
  %11603 = vmatprep.subr.bf16.mxu0 %v7965
  %11604 = vmatpush2.bf16.msra.mxu0 %v7964
  %11605 = vmatprep.subr.bf16.mxu0 %v7961
  %11606 = vmatpush2.bf16.msra.mxu0 %v7960
  %11607 = vmatprep.subr.bf16.mxu0 %v7957
  %11608 = vmatpush2.bf16.msra.mxu0 %v7956
  %11609 = vmatprep.mubr.bf16.mxu0 %v1757
  %11610 = vmatmul.mubr.bf16.gmra.mxu0 %v1756
  %v11611 = vpop.f32.mrf.mxu0
  %v11612 = vadd.f32 %v11571, %v11611
  %v11613 = vpop.f32.mrf.mxu0
  %v11614 = vadd.f32 %v11573, %v11613
  %v11615 = vpop.f32.mrf.mxu0
  %v11616 = vpop.f32.mrf.mxu0
  %11617 = vdwg.mxu0
  %11618 = vmatprep.subr.bf16.mxu0 %v8017
  %11619 = vmatpush1.bf16.msra.mxu0 %v8016
  %11620 = vmatprep.subr.bf16.mxu0 %v8013
  %11621 = vmatpush1.bf16.msra.mxu0 %v8012
  %11622 = vmatprep.subr.bf16.mxu0 %v8009
  %11623 = vmatpush1.bf16.msra.mxu0 %v8008
  %11624 = vmatprep.subr.bf16.mxu0 %v8005
  %11625 = vmatpush1.bf16.msra.mxu0 %v8004
  %11626 = vmatprep.subr.bf16.mxu0 %v8001
  %11627 = vmatpush1.bf16.msra.mxu0 %v8000
  %11628 = vmatprep.subr.bf16.mxu0 %v7997
  %11629 = vmatpush1.bf16.msra.mxu0 %v7996
  %11630 = vmatprep.subr.bf16.mxu0 %v7993
  %11631 = vmatpush1.bf16.msra.mxu0 %v7992
  %11632 = vmatprep.subr.bf16.mxu0 %v7989
  %11633 = vmatpush1.bf16.msra.mxu0 %v7988
  %11634 = vmatprep.subr.bf16.mxu0 %v8049
  %11635 = vmatpush2.bf16.msra.mxu0 %v8048
  %11636 = vmatprep.subr.bf16.mxu0 %v8045
  %11637 = vmatpush2.bf16.msra.mxu0 %v8044
  %11638 = vmatprep.subr.bf16.mxu0 %v8041
  %11639 = vmatpush2.bf16.msra.mxu0 %v8040
  %11640 = vmatprep.subr.bf16.mxu0 %v8037
  %11641 = vmatpush2.bf16.msra.mxu0 %v8036
  %11642 = vmatprep.subr.bf16.mxu0 %v8033
  %11643 = vmatpush2.bf16.msra.mxu0 %v8032
  %11644 = vmatprep.subr.bf16.mxu0 %v8029
  %11645 = vmatpush2.bf16.msra.mxu0 %v8028
  %11646 = vmatprep.subr.bf16.mxu0 %v8025
  %11647 = vmatpush2.bf16.msra.mxu0 %v8024
  %11648 = vmatprep.subr.bf16.mxu0 %v8021
  %11649 = vmatpush2.bf16.msra.mxu0 %v8020
  %11650 = vmatprep.mubr.bf16.mxu0 %v1759
  %11651 = vmatmul.mubr.bf16.gmra.mxu0 %v1758
  %v11652 = vpop.f32.mrf.mxu0
  %v11653 = vadd.f32 %v11612, %v11652
  %v11654 = vpop.f32.mrf.mxu0
  %v11655 = vadd.f32 %v11614, %v11654
  %v11656 = vpop.f32.mrf.mxu0
  %v11657 = vpop.f32.mrf.mxu0
  %11658 = vdwg.mxu0
  %11659 = vmatprep.subr.bf16.mxu0 %v8081
  %11660 = vmatpush1.bf16.msra.mxu0 %v8080
  %11661 = vmatprep.subr.bf16.mxu0 %v8077
  %11662 = vmatpush1.bf16.msra.mxu0 %v8076
  %11663 = vmatprep.subr.bf16.mxu0 %v8073
  %11664 = vmatpush1.bf16.msra.mxu0 %v8072
  %11665 = vmatprep.subr.bf16.mxu0 %v8069
  %11666 = vmatpush1.bf16.msra.mxu0 %v8068
  %11667 = vmatprep.subr.bf16.mxu0 %v8065
  %11668 = vmatpush1.bf16.msra.mxu0 %v8064
  %11669 = vmatprep.subr.bf16.mxu0 %v8061
  %11670 = vmatpush1.bf16.msra.mxu0 %v8060
  %11671 = vmatprep.subr.bf16.mxu0 %v8057
  %11672 = vmatpush1.bf16.msra.mxu0 %v8056
  %11673 = vmatprep.subr.bf16.mxu0 %v8053
  %11674 = vmatpush1.bf16.msra.mxu0 %v8052
  %11675 = vmatprep.subr.bf16.mxu0 0
  %11676 = vmatpush2.bf16.msra.mxu0 0
  %11677 = vmatprep.subr.bf16.mxu0 0
  %11678 = vmatpush2.bf16.msra.mxu0 0
  %11679 = vmatprep.subr.bf16.mxu0 0
  %11680 = vmatpush2.bf16.msra.mxu0 0
  %11681 = vmatprep.subr.bf16.mxu0 0
  %11682 = vmatpush2.bf16.msra.mxu0 0
  %11683 = vmatprep.subr.bf16.mxu0 0
  %11684 = vmatpush2.bf16.msra.mxu0 0
  %11685 = vmatprep.subr.bf16.mxu0 0
  %11686 = vmatpush2.bf16.msra.mxu0 0
  %11687 = vmatprep.subr.bf16.mxu0 0
  %11688 = vmatpush2.bf16.msra.mxu0 0
  %11689 = vmatprep.subr.bf16.mxu0 0
  %11690 = vmatpush2.bf16.msra.mxu0 0
  %11691 = vmatprep.mubr.bf16.mxu0 0
  %11692 = vmatmul.mubr.bf16.gmra.mxu0 %v1760
  %v11693 = vpop.f32.mrf.mxu0
  %v11694 = vadd.f32 %v11653, %v11693
  %v11695 = vpop.f32.mrf.mxu0
  %v11696 = vadd.f32 %v11655, %v11695
  %v11697 = vpop.f32.mrf.mxu0
  %v11698 = vpop.f32.mrf.mxu0
  %11699 = vdwg.mxu0
  %v11700 = vmax.f32 %v10669, 0.0
  %v11701 = vmax.f32 %v10671, 0.0
  %v11702 = vmax.f32 %v11694, 0.0
  %v11703 = vmax.f32 %v11696, 0.0
  %v11704 = vld [vmem:[%s3] sm:$0xf]
  %v11706 = vlaneseq
  %v11707 = vshrl.u32 %v11706, 7
  %v11708 = vsub.s32 0, %v11707
  %v11709 = vrot.slane %v11704, %v11708
  %v11710 = vlaneseq
  %v11711 = vshrl.u32 %v11710, 7
  %v11712 = vsub.s32 1, %v11711
  %v11713 = vrot.slane %v11704, %v11712
  %v11714 = vlaneseq
  %v11715 = vshrl.u32 %v11714, 7
  %v11716 = vsub.s32 2, %v11715
  %v11717 = vrot.slane %v11704, %v11716
  %v11718 = vlaneseq
  %v11719 = vshrl.u32 %v11718, 7
  %v11720 = vsub.s32 3, %v11719
  %v11721 = vrot.slane %v11704, %v11720
  %v11726 = vmul.f32 %v11700, %v11709
  %v11727 = vmul.f32 %v11701, %v11713
  %v11728 = vmul.f32 %v11702, %v11717
  %v11729 = vmul.f32 %v11703, %v11721
  %v11730 = vadd.f32 %v11726, %v11727
  %v11731 = vadd.f32 %v11730, %v11728
  %v11732 = vadd.f32 %v11731, %v11729
  %11733 = vadd.xlane.f32.xlu0 %v11732
  %v11734 = vpop.xlane.xlu0 %11733
  %v11735 = vld [vmem:[#allocation2] sm:$0x1]
  %v11737 = vlaneseq
  %v11738 = vshrl.u32 %v11737, 7
  %v11739 = vsub.s32 0, %v11738
  %v11740 = vrot.slane %v11735, %v11739
  %v11742 = vadd.f32 %v11734, %v11740
  %vm11743 = vcmask 7168
  %11744 = vst.msk [vmem:[%s5] sm:$0xff] %vm11743, %v11742
  // Predicated region
  $region22: #{critic_forward.3} parent=0 // pred_check
    _
  $region23: #{critic_forward.3} parent=0 // pred_check_branch
    %11746 = sbr.rel (0) target = $region25
  $region24: #{critic_forward.3} parent=0 // pred_region
    _
  $region25: #{critic_forward.3} parent=0 // pred_fallthru
    _
  // Predicated region
  $region26: #{critic_forward.3} parent=0 // pred_check
    _
  $region27: #{critic_forward.3} parent=0 // pred_check_branch
    %11748 = sbr.rel (0) target = $region29
  $region28: #{critic_forward.3} parent=0 // pred_region
    _
  $region29: #{critic_forward.3} parent=0 // pred_fallthru
    _

</llo_original>
